<compile_context>
chip_gen: v6e
topology: v6e:2x2x1
jax: 0.10.0
libtpu: 0.0.40
codegen_flags: <defaults>
</compile_context>

<pallas_src>
import functools

import jax
import jax.numpy as jnp
import numpy as np
from jax.experimental import pallas as pl
from jax.experimental.pallas import tpu as pltpu


# ---------------------------------------------------------------------------
# Per-group forward (shared by both kernel variants)
# ---------------------------------------------------------------------------
def _group_forward(x, x0, x1, expand, gi, geom_ref, w_in_ref, b_in_ref,
                   w_hid_ref, b_hid_ref, w_out_ref, b_out_ref,
                   *, num_hidden_blocks, group_size, mm_dtype):
    G = group_size

    # One EUP sigmoid pass over all 4*G packed affine window arguments.
    geom = geom_ref[gi]                                            # (3, 4G) f32
    args = x0 * geom[0:1, :] + x1 * geom[1:2, :] + geom[2:3, :]    # (TN, 4G)
    sg = jax.nn.sigmoid(args)
    window = (sg[:, 0:G] * sg[:, G:2 * G]
              * sg[:, 2 * G:3 * G] * sg[:, 3 * G:4 * G])           # (TN, G) f32

    # Expand each subdomain's window across its HID lanes via a tiny MXU matmul.
    window_gh = jnp.dot(window, expand, preferred_element_type=jnp.float32)

    # First layer in f32 (normalization folded into W_IN, shift folded into B_IN).
    h = jnp.tanh(jnp.dot(x, w_in_ref[gi], preferred_element_type=jnp.float32)
                 + b_in_ref[gi])                                   # (TN, GH) f32

    # Hidden layers: bf16 block-diagonal matmuls, f32 accumulation / biases.
    for l in range(num_hidden_blocks):                             # static unroll
        h = jnp.tanh(jnp.dot(h.astype(mm_dtype), w_hid_ref[gi, l],
                             preferred_element_type=jnp.float32)
                     + b_hid_ref[gi, l])

    # Window-weighted output: sum_k window_k * (h_k @ w_out_k + b_out_k),
    # computed as two MXU matmuls (dense stacked W_OUT + stacked b_out).
    hw = (h * window_gh).astype(mm_dtype)
    return (jnp.dot(hw, w_out_ref[gi], preferred_element_type=jnp.float32)
            + jnp.dot(window, b_out_ref[gi], preferred_element_type=jnp.float32))


# ---------------------------------------------------------------------------
# Kernels
# ---------------------------------------------------------------------------
def _fbpinn_resident_kernel(x_ref, geom_ref, expand_ref, w_in_ref, b_in_ref,
                            w_hid_ref, b_hid_ref, w_out_ref, b_out_ref, out_ref,
                            *, n_groups, num_hidden_blocks, group_size, mm_dtype):
    """All weights VMEM-resident; loop over subdomain groups inside the kernel."""
    x = x_ref[...]                     # (TN, D) f32
    x0 = x[:, 0:1]
    x1 = x[:, 1:2]
    expand = expand_ref[...]           # (G, GH) f32

    acc = jnp.zeros(out_ref.shape, jnp.float32)
    for g in range(n_groups):          # static unroll; weights already in VMEM
        acc = acc + _group_forward(
            x, x0, x1, expand, g, geom_ref, w_in_ref, b_in_ref,
            w_hid_ref, b_hid_ref, w_out_ref, b_out_ref,
            num_hidden_blocks=num_hidden_blocks, group_size=group_size,
            mm_dtype=mm_dtype)
    out_ref[...] = acc.astype(out_ref.dtype)


def _fbpinn_stream_kernel(x_ref, geom_ref, expand_ref, w_in_ref, b_in_ref,
                          w_hid_ref, b_hid_ref, w_out_ref, b_out_ref, out_ref,
                          *, num_hidden_blocks, group_size, mm_dtype):
    """Weights streamed per group over the trailing 'arbitrary' grid axis."""
    g = pl.program_id(1)
    x = x_ref[...]
    x0 = x[:, 0:1]
    x1 = x[:, 1:2]

    contrib = _group_forward(
        x, x0, x1, expand_ref[...], 0, geom_ref, w_in_ref, b_in_ref,
        w_hid_ref, b_hid_ref, w_out_ref, b_out_ref,
        num_hidden_blocks=num_hidden_blocks, group_size=group_size,
        mm_dtype=mm_dtype)

    @pl.when(g == 0)
    def _():
        out_ref[...] = jnp.zeros_like(out_ref)

    out_ref[...] += contrib            # out block is resident across the g axis


# ---------------------------------------------------------------------------
# Host-side parameter packing (one-time)
# ---------------------------------------------------------------------------
def pack_fbpinn_params(lb, ub, shift, scale, w_in, b_in, w_hid, b_hid,
                       w_out, b_out, sigma, G, weight_dtype=jnp.bfloat16):
    lb = np.asarray(lb, np.float64); ub = np.asarray(ub, np.float64)
    shift = np.asarray(shift, np.float64); scale = np.asarray(scale, np.float64)
    w_in = np.asarray(w_in, np.float64); b_in = np.asarray(b_in, np.float64)
    w_hid = np.asarray(w_hid, np.float64); b_hid = np.asarray(b_hid, np.float64)
    w_out = np.asarray(w_out, np.float64); b_out = np.asarray(b_out, np.float64)

    S, D, HID = w_in.shape
    NLm1 = w_hid.shape[1]
    OUT = w_out.shape[-1]
    NL_eff = max(NLm1, 1)
    n_groups = -(-S // G)
    GH = G * HID
    inv_sigma = 1.0 / float(sigma)

    # Fold xn = (x - shift) / scale into the first layer (weights stay f32;
    # the folded bias is kept as a separate f32 vector for precision).
    inv_scale = 1.0 / scale[:, 0, :]                               # (S, D)
    w_in_eff = w_in * inv_scale[:, :, None]                        # (S, D, HID)
    b_in_eff = b_in[:, 0, :] - np.einsum(
        'sd,sdh->sh', shift[:, 0, :] * inv_scale, w_in)            # (S, HID)

    W_IN = np.zeros((n_groups, D, GH), np.float64)
    B_IN = np.zeros((n_groups, 1, GH), np.float64)
    W_HID = np.zeros((n_groups, NL_eff, GH, GH), np.float64)
    B_HID = np.zeros((n_groups, NL_eff, 1, GH), np.float64)
    W_OUT = np.zeros((n_groups, GH, OUT), np.float64)              # dense stacked
    B_OUT = np.zeros((n_groups, G, OUT), np.float64)
    GEOM = np.zeros((n_groups, 3, 4 * G), np.float64)              # [cx, cy, off]
    EXPAND = np.zeros((G, GH), np.float64)                         # 0/1 expansion

    for k in range(G):
        EXPAND[k, k * HID:(k + 1) * HID] = 1.0

    for s in range(S):
        gi, k = divmod(s, G)
        W_IN[gi, :, k * HID:(k + 1) * HID] = w_in_eff[s]
        B_IN[gi, 0, k * HID:(k + 1) * HID] = b_in_eff[s]
        for l in range(NLm1):
            W_HID[gi, l, k * HID:(k + 1) * HID, k * HID:(k + 1) * HID] = w_hid[s, l]
            B_HID[gi, l, 0, k * HID:(k + 1) * HID] = b_hid[s, l, 0]
        W_OUT[gi, k * HID:(k + 1) * HID, :] = w_out[s]
        B_OUT[gi, k, :] = b_out[s, 0]
        # Packed window sigmoid arguments (per lane):
        #   lane k     : (x0 - lbx)/sigma      lane G+k  : (ubx - x0)/sigma
        #   lane 2G+k  : (x1 - lby)/sigma      lane 3G+k : (uby - x1)/sigma
        lbx, lby = lb[s, 0, 0], lb[s, 0, 1]
        ubx, uby = ub[s, 0, 0], ub[s, 0, 1]
        GEOM[gi, 0, k] = inv_sigma;           GEOM[gi, 2, k] = -lbx * inv_sigma
        GEOM[gi, 0, G + k] = -inv_sigma;      GEOM[gi, 2, G + k] = ubx * inv_sigma
        GEOM[gi, 1, 2 * G + k] = inv_sigma;   GEOM[gi, 2, 2 * G + k] = -lby * inv_sigma
        GEOM[gi, 1, 3 * G + k] = -inv_sigma;  GEOM[gi, 2, 3 * G + k] = uby * inv_sigma
    # Padded subdomain slots keep all-zero weights/biases -> exactly zero contribution.

    return dict(
        GEOM=jnp.asarray(GEOM, jnp.float32),
        EXPAND=jnp.asarray(EXPAND, jnp.float32),
        W_IN=jnp.asarray(W_IN, jnp.float32),
        B_IN=jnp.asarray(B_IN, jnp.float32),
        W_HID=jnp.asarray(W_HID, weight_dtype),
        B_HID=jnp.asarray(B_HID, jnp.float32),
        W_OUT=jnp.asarray(W_OUT, weight_dtype),
        B_OUT=jnp.asarray(B_OUT, jnp.float32),
        n_groups=n_groups, NLm1=NLm1, NL_eff=NL_eff, GH=GH)


def _default_group_width():
    """Fused lane width matched to the MXU: 256 on v6e/v7x, 128 otherwise (v5e)."""
    try:
        kind = jax.devices()[0].device_kind.lower()
    except Exception:
        return 128
    if ("v6" in kind) or ("v7" in kind) or ("7x" in kind):
        return 256
    return 128


def _round_up(v, m):
    return -(-v // m) * m


# ---------------------------------------------------------------------------
# Wrapper
# ---------------------------------------------------------------------------
def fbpinn_forward(x, lb, ub, shift, scale,
                   w_in, b_in, w_hid, b_hid, w_out, b_out, sigma,
                   *, group_width=None, batch_tile=1024,
                   weight_dtype=jnp.bfloat16,
                   resident_vmem_budget=40 * 2**20):
    N, D = x.shape
    S, _, HID = w_in.shape
    OUT = w_out.shape[-1]

    if group_width is None:
        group_width = _default_group_width()
    if batch_tile is None:
        batch_tile = 1024
    G = max(1, group_width // HID)               # subdomains fused per MXU pass

    packs = pack_fbpinn_params(lb, ub, shift, scale, w_in, b_in, w_hid, b_hid,
                               w_out, b_out, sigma, G, weight_dtype)
    n_groups = packs["n_groups"]
    NLm1 = packs["NLm1"]
    NL_eff = packs["NL_eff"]
    GH = packs["GH"]

    # ---- batch tiling: pad N up; keep >= 2 tiles for v7x's two TensorCores ----
    TN = max(8, min(int(batch_tile), _round_up(N, 8)))
    TN = _round_up(TN, 8)
    if N > 256 and -(-N // TN) < 2:
        TN = _round_up(-(-N // 2), 8)
    n_btiles = -(-N // TN)
    N_pad = n_btiles * TN

    x_f32 = x.astype(jnp.float32)
    if N_pad != N:
        x_f32 = jnp.concatenate(
            [x_f32, jnp.zeros((N_pad - N, D), jnp.float32)], axis=0)

    weights = (packs["GEOM"], packs["EXPAND"], packs["W_IN"], packs["B_IN"],
               packs["W_HID"], packs["B_HID"], packs["W_OUT"], packs["B_OUT"])
    weight_bytes = int(sum(int(a.size) * a.dtype.itemsize for a in weights))
    io_bytes = 2 * (TN * D * 4 + TN * OUT * 4)          # double-buffered x / out
    work_bytes = 8 * TN * max(GH, 128) * 4              # rough f32 intermediates
    resident_need = 2 * weight_bytes + io_bytes + work_bytes
    use_resident = resident_need <= resident_vmem_budget
    mm_dtype = packs["W_HID"].dtype

    if use_resident:
        need = resident_need
        kernel = functools.partial(
            _fbpinn_resident_kernel, n_groups=n_groups,
            num_hidden_blocks=NLm1, group_size=G, mm_dtype=mm_dtype)
        grid = (n_btiles,)
        dim_sem = ("parallel",)

        def const_spec(arr):
            zeros = (0,) * arr.ndim
            return pl.BlockSpec(arr.shape, lambda i, _z=zeros: _z)

        in_specs = [pl.BlockSpec((TN, D), lambda i: (i, 0))]
        in_specs += [const_spec(a) for a in weights]
        out_spec = pl.BlockSpec((TN, OUT), lambda i: (i, 0))
    else:
        need = 2 * (weight_bytes // max(n_groups, 1)) + io_bytes + work_bytes
        kernel = functools.partial(
            _fbpinn_stream_kernel,
            num_hidden_blocks=NLm1, group_size=G, mm_dtype=mm_dtype)
        grid = (n_btiles, n_groups)
        dim_sem = ("parallel", "arbitrary")
        in_specs = [
            pl.BlockSpec((TN, D), lambda i, g: (i, 0)),
            pl.BlockSpec((1, 3, 4 * G), lambda i, g: (g, 0, 0)),
            pl.BlockSpec((G, GH), lambda i, g: (0, 0)),
            pl.BlockSpec((1, D, GH), lambda i, g: (g, 0, 0)),
            pl.BlockSpec((1, 1, GH), lambda i, g: (g, 0, 0)),
            pl.BlockSpec((1, NL_eff, GH, GH), lambda i, g: (g, 0, 0, 0)),
            pl.BlockSpec((1, NL_eff, 1, GH), lambda i, g: (g, 0, 0, 0)),
            pl.BlockSpec((1, GH, OUT), lambda i, g: (g, 0, 0)),
            pl.BlockSpec((1, G, OUT), lambda i, g: (g, 0, 0)),
        ]
        out_spec = pl.BlockSpec((TN, OUT), lambda i, g: (i, 0))

    vmem_limit = int(min(48 * 2**20, max(24 * 2**20, need + (8 << 20))))

    out = pl.pallas_call(
        kernel,
        out_shape=jax.ShapeDtypeStruct((N_pad, OUT), jnp.float32),
        grid_spec=pltpu.PrefetchScalarGridSpec(
            num_scalar_prefetch=0,
            grid=grid,
            in_specs=in_specs,
            out_specs=out_spec),
        compiler_params=pltpu.CompilerParams(
            dimension_semantics=dim_sem,
            vmem_limit_bytes=vmem_limit),
    )(x_f32, *weights)

    return out[:N] if N_pad != N else out


# ---------------------------------------------------------------------------
# Pure-numpy reference (mirrors the PyTorch forward, float64)
# ---------------------------------------------------------------------------
def fbpinn_reference(x, lb, ub, shift, scale,
                     w_in, b_in, w_hid, b_hid, w_out, b_out, sigma):
    x = np.asarray(x, np.float64)
    lb = np.asarray(lb, np.float64); ub = np.asarray(ub, np.float64)
    shift = np.asarray(shift, np.float64); scale = np.asarray(scale, np.float64)
    w_in = np.asarray(w_in, np.float64); b_in = np.asarray(b_in, np.float64)
    w_hid = np.asarray(w_hid, np.float64); b_hid = np.asarray(b_hid, np.float64)
    w_out = np.asarray(w_out, np.float64); b_out = np.asarray(b_out, np.float64)

    def sig(v):
        return 1.0 / (1.0 + np.exp(-v))

    S = lb.shape[0]
    res = np.zeros((x.shape[0], w_out.shape[-1]), np.float64)
    x2 = x[:, :2]
    for s in range(S):
        l, u = lb[s, 0], ub[s, 0]
        window = (sig((x2[:, 0:1] - l[0]) / sigma) * sig((u[0] - x2[:, 0:1]) / sigma)
                  * sig((x2[:, 1:2] - l[1]) / sigma) * sig((u[1] - x2[:, 1:2]) / sigma))
        xn = (x - shift[s, 0]) / scale[s, 0]
        h = np.tanh(xn @ w_in[s] + b_in[s, 0])
        for lyr in range(w_hid.shape[1]):
            h = np.tanh(h @ w_hid[s, lyr] + b_hid[s, lyr, 0])
        o = h @ w_out[s] + b_out[s, 0]
        res = res + window * o
    return res


# ---------------------------------------------------------------------------
# Demo / self-test
# ---------------------------------------------------------------------------
if __name__ == "__main__":
    # TODO(synk): is_res_net=True (ResNet sub-networks) branch is not implemented;
    # this covers the default dde.nn.FNN sub-network path of FBPINN.forward.
    sigma = 0.1
    L, Hdom = 2.0, 2.0
    n_col, n_row = 4, 2
    num_layers = 2          # number of hidden layers of each sub-FNN
    input_dim = 3           # (x, y, extra) -> exercises the x.shape[1] > 2 branch
    hidden_dim = 32
    output_dim = 1
    N = 1024                # batch of collocation points
    xmin = [-L / 2.0, -Hdom / 2.0]

    S = n_row * n_col
    NLm1 = num_layers - 1

    # Subdomain geometry (ordering s = i * n_col + j, matching the PyTorch loops).
    lb = np.zeros((S, 1, 2), np.float32)
    ub = np.zeros((S, 1, 2), np.float32)
    shift = np.zeros((S, 1, input_dim), np.float32)   # [cx, cy, 0, ...]
    scale = np.ones((S, 1, input_dim), np.float32)    # [sx, sy, 1, ...]
    for i in range(n_row):
        for j in range(n_col):
            s = i * n_col + j
            lx = L * j / n_col + xmin[0]
            ly = Hdom * i / n_row + xmin[1]
            ux = L * (j + 1) / n_col + xmin[0]
            uy = Hdom * (i + 1) / n_row + xmin[1]
            lb[s, 0] = [lx, ly]
            ub[s, 0] = [ux, uy]
            shift[s, 0, 0] = (lx + ux) / 2.0
            shift[s, 0, 1] = (ly + uy) / 2.0
            scale[s, 0, 0] = L / n_col
            scale[s, 0, 1] = Hdom / n_row

    # Deterministic synthetic parameters (Glorot-normal-style weights, small biases).
    key = jax.random.PRNGKey(0)
    keys = jax.random.split(key, 8)

    def glorot(k, shape, fan_in, fan_out):
        std = np.sqrt(2.0 / (fan_in + fan_out))
        return (jax.random.normal(k, shape, jnp.float32) * std).astype(jnp.float32)

    w_in = glorot(keys[0], (S, input_dim, hidden_dim), input_dim, hidden_dim)
    b_in = 0.01 * jax.random.normal(keys[1], (S, 1, hidden_dim), jnp.float32)
    w_hid = glorot(keys[2], (S, NLm1, hidden_dim, hidden_dim), hidden_dim, hidden_dim)
    b_hid = 0.01 * jax.random.normal(keys[3], (S, NLm1, 1, hidden_dim), jnp.float32)
    w_out = glorot(keys[4], (S, hidden_dim, output_dim), hidden_dim, output_dim)
    b_out = 0.01 * jax.random.normal(keys[5], (S, 1, output_dim), jnp.float32)

    # Inputs: spatial coords inside the domain, plus one extra feature column.
    xy = jax.random.uniform(keys[6], (N, 2), jnp.float32,
                            minval=jnp.array(xmin, jnp.float32),
                            maxval=jnp.array([xmin[0] + L, xmin[1] + Hdom], jnp.float32))
    extra = jax.random.uniform(keys[7], (N, 1), jnp.float32)
    x = jnp.concatenate([xy, extra], axis=1)      # (N, 3)

    lb_j = jnp.asarray(lb); ub_j = jnp.asarray(ub)
    shift_j = jnp.asarray(shift); scale_j = jnp.asarray(scale)

    out = fbpinn_forward(x, lb_j, ub_j, shift_j, scale_j,
                         w_in, b_in, w_hid, b_hid, w_out, b_out, sigma)
    out = jax.block_until_ready(out)

    ref = fbpinn_reference(np.asarray(x), lb, ub, shift, scale,
                           np.asarray(w_in), np.asarray(b_in),
                           np.asarray(w_hid), np.asarray(b_hid),
                           np.asarray(w_out), np.asarray(b_out), sigma)

    # Tolerances account for bf16 hidden/output weights (f32 accumulation).
    np.testing.assert_allclose(np.asarray(out), ref, rtol=2e-2, atol=1e-2)
    print("KERNEL_OK")
</pallas_src>

<mosaic_0001>
module attributes {stable_mosaic.version = 11 : i64} {
  func.func @_fbpinn_resident_kernel(%arg0: i32, %arg1: memref<512x3xf32, #tpu.memory_space<vmem>>, %arg2: memref<2x3x16xf32, #tpu.memory_space<vmem>>, %arg3: memref<4x128xf32, #tpu.memory_space<vmem>>, %arg4: memref<2x3x128xf32, #tpu.memory_space<vmem>>, %arg5: memref<2x1x128xf32, #tpu.memory_space<vmem>>, %arg6: memref<2x1x128x128xbf16, #tpu.memory_space<vmem>>, %arg7: memref<2x1x1x128xf32, #tpu.memory_space<vmem>>, %arg8: memref<2x128x1xbf16, #tpu.memory_space<vmem>>, %arg9: memref<2x4x1xf32, #tpu.memory_space<vmem>>, %arg10: memref<512x1xf32, #tpu.memory_space<vmem>>) attributes {dimension_semantics = [#tpu.dimension_semantics<parallel>], iteration_bounds = array<i64: 2>, scalar_prefetch = 0 : i64, scratch_operands = 0 : i64, tpu.core_type = #tpu.core_type<tc>, window_params = [{transform_indices = @transform_0, window_bounds = array<i64: 512, 3>}, {pipeline_mode = #tpu.pipeline_mode<synchronous>, transform_indices = @transform_1, window_bounds = array<i64: 2, 3, 16>}, {pipeline_mode = #tpu.pipeline_mode<synchronous>, transform_indices = @transform_2, window_bounds = array<i64: 4, 128>}, {pipeline_mode = #tpu.pipeline_mode<synchronous>, transform_indices = @transform_3, window_bounds = array<i64: 2, 3, 128>}, {pipeline_mode = #tpu.pipeline_mode<synchronous>, transform_indices = @transform_4, window_bounds = array<i64: 2, 1, 128>}, {pipeline_mode = #tpu.pipeline_mode<synchronous>, transform_indices = @transform_5, window_bounds = array<i64: 2, 1, 128, 128>}, {pipeline_mode = #tpu.pipeline_mode<synchronous>, transform_indices = @transform_6, window_bounds = array<i64: 2, 1, 1, 128>}, {pipeline_mode = #tpu.pipeline_mode<synchronous>, transform_indices = @transform_7, window_bounds = array<i64: 2, 128, 1>}, {pipeline_mode = #tpu.pipeline_mode<synchronous>, transform_indices = @transform_8, window_bounds = array<i64: 2, 4, 1>}, {transform_indices = @transform_9, window_bounds = array<i64: 512, 1>}]} {
    %c0 = arith.constant 0 : index
    %c0_0 = arith.constant 0 : index
    %0 = vector.load %arg1[%c0, %c0_0] : memref<512x3xf32, #tpu.memory_space<vmem>>, vector<512x3xf32>
    %1 = vector.extract_strided_slice %0 {offsets = [0, 0], sizes = [512, 1], strides = [1, 1]} : vector<512x3xf32> to vector<512x1xf32>
    %2 = vector.extract_strided_slice %0 {offsets = [0, 1], sizes = [512, 1], strides = [1, 1]} : vector<512x3xf32> to vector<512x1xf32>
    %c0_1 = arith.constant 0 : index
    %c0_2 = arith.constant 0 : index
    %3 = vector.load %arg3[%c0_1, %c0_2] : memref<4x128xf32, #tpu.memory_space<vmem>>, vector<4x128xf32>
    %cst = arith.constant 0.000000e+00 : f32
    %4 = vector.broadcast %cst : f32 to vector<512x1xf32>
    %c0_3 = arith.constant 0 : index
    %c0_4 = arith.constant 0 : index
    %c0_5 = arith.constant 0 : index
    %5 = vector.load %arg2[%c0_3, %c0_4, %c0_5] : memref<2x3x16xf32, #tpu.memory_space<vmem>>, vector<1x3x16xf32>
    %6 = vector.shape_cast %5 : vector<1x3x16xf32> to vector<3x16xf32>
    %7 = vector.extract_strided_slice %6 {offsets = [0, 0], sizes = [1, 16], strides = [1, 1]} : vector<3x16xf32> to vector<1x16xf32>
    %8 = vector.broadcast %1 : vector<512x1xf32> to vector<512x16xf32>
    %9 = vector.broadcast %7 : vector<1x16xf32> to vector<512x16xf32>
    %10 = arith.mulf %8, %9 : vector<512x16xf32>
    %11 = vector.extract_strided_slice %6 {offsets = [1, 0], sizes = [1, 16], strides = [1, 1]} : vector<3x16xf32> to vector<1x16xf32>
    %12 = vector.broadcast %2 : vector<512x1xf32> to vector<512x16xf32>
    %13 = vector.broadcast %11 : vector<1x16xf32> to vector<512x16xf32>
    %14 = arith.mulf %12, %13 : vector<512x16xf32>
    %15 = arith.addf %10, %14 : vector<512x16xf32>
    %16 = vector.extract_strided_slice %6 {offsets = [2, 0], sizes = [1, 16], strides = [1, 1]} : vector<3x16xf32> to vector<1x16xf32>
    %17 = vector.broadcast %16 : vector<1x16xf32> to vector<512x16xf32>
    %18 = arith.addf %15, %17 : vector<512x16xf32>
    %19 = arith.negf %18 : vector<512x16xf32>
    %20 = math.exp %19 : vector<512x16xf32>
    %cst_6 = arith.constant 1.000000e+00 : f32
    %21 = vector.broadcast %cst_6 : f32 to vector<512x16xf32>
    %22 = arith.addf %21, %20 : vector<512x16xf32>
    %23 = arith.divf %21, %22 : vector<512x16xf32>
    %24 = vector.extract_strided_slice %23 {offsets = [0, 0], sizes = [512, 4], strides = [1, 1]} : vector<512x16xf32> to vector<512x4xf32>
    %25 = vector.extract_strided_slice %23 {offsets = [0, 4], sizes = [512, 4], strides = [1, 1]} : vector<512x16xf32> to vector<512x4xf32>
    %26 = arith.mulf %24, %25 : vector<512x4xf32>
    %27 = vector.extract_strided_slice %23 {offsets = [0, 8], sizes = [512, 4], strides = [1, 1]} : vector<512x16xf32> to vector<512x4xf32>
    %28 = arith.mulf %26, %27 : vector<512x4xf32>
    %29 = vector.extract_strided_slice %23 {offsets = [0, 12], sizes = [512, 4], strides = [1, 1]} : vector<512x16xf32> to vector<512x4xf32>
    %30 = arith.mulf %28, %29 : vector<512x4xf32>
    %cst_7 = arith.constant dense<0.000000e+00> : vector<512x128xf32>
    %31 = tpu.matmul %30, %3, %cst_7 {dimension_numbers = #tpu.dot_dimension_numbers<[1], [0], [0], [1], [0, 0, 1, 1], [], []>} : vector<512x4xf32>, vector<4x128xf32>, vector<512x128xf32> -> vector<512x128xf32>
    %c0_8 = arith.constant 0 : index
    %c0_9 = arith.constant 0 : index
    %c0_10 = arith.constant 0 : index
    %32 = vector.load %arg4[%c0_8, %c0_9, %c0_10] : memref<2x3x128xf32, #tpu.memory_space<vmem>>, vector<1x3x128xf32>
    %33 = vector.shape_cast %32 : vector<1x3x128xf32> to vector<3x128xf32>
    %cst_11 = arith.constant dense<0.000000e+00> : vector<512x128xf32>
    %34 = tpu.matmul %0, %33, %cst_11 {dimension_numbers = #tpu.dot_dimension_numbers<[1], [0], [0], [1], [0, 0, 1, 1], [], []>} : vector<512x3xf32>, vector<3x128xf32>, vector<512x128xf32> -> vector<512x128xf32>
    %c0_12 = arith.constant 0 : index
    %c0_13 = arith.constant 0 : index
    %c0_14 = arith.constant 0 : index
    %35 = vector.load %arg5[%c0_12, %c0_13, %c0_14] : memref<2x1x128xf32, #tpu.memory_space<vmem>>, vector<1x1x128xf32>
    %36 = vector.shape_cast %35 : vector<1x1x128xf32> to vector<1x128xf32>
    %37 = vector.broadcast %36 : vector<1x128xf32> to vector<512x128xf32>
    %38 = arith.addf %34, %37 : vector<512x128xf32>
    %39 = math.tanh %38 : vector<512x128xf32>
    %40 = arith.truncf %39 : vector<512x128xf32> to vector<512x128xbf16>
    %c0_15 = arith.constant 0 : index
    %c0_16 = arith.constant 0 : index
    %c0_17 = arith.constant 0 : index
    %c0_18 = arith.constant 0 : index
    %41 = vector.load %arg6[%c0_15, %c0_16, %c0_17, %c0_18] : memref<2x1x128x128xbf16, #tpu.memory_space<vmem>>, vector<1x1x128x128xbf16>
    %42 = vector.shape_cast %41 : vector<1x1x128x128xbf16> to vector<128x128xbf16>
    %cst_19 = arith.constant dense<0.000000e+00> : vector<512x128xf32>
    %43 = tpu.matmul %40, %42, %cst_19 {dimension_numbers = #tpu.dot_dimension_numbers<[1], [0], [0], [1], [0, 0, 1, 1], [], []>} : vector<512x128xbf16>, vector<128x128xbf16>, vector<512x128xf32> -> vector<512x128xf32>
    %c0_20 = arith.constant 0 : index
    %c0_21 = arith.constant 0 : index
    %c0_22 = arith.constant 0 : index
    %c0_23 = arith.constant 0 : index
    %44 = vector.load %arg7[%c0_20, %c0_21, %c0_22, %c0_23] : memref<2x1x1x128xf32, #tpu.memory_space<vmem>>, vector<1x1x1x128xf32>
    %45 = vector.shape_cast %44 : vector<1x1x1x128xf32> to vector<1x128xf32>
    %46 = vector.broadcast %45 : vector<1x128xf32> to vector<512x128xf32>
    %47 = arith.addf %43, %46 : vector<512x128xf32>
    %48 = math.tanh %47 : vector<512x128xf32>
    %49 = arith.mulf %48, %31 : vector<512x128xf32>
    %50 = arith.truncf %49 : vector<512x128xf32> to vector<512x128xbf16>
    %c0_24 = arith.constant 0 : index
    %c0_25 = arith.constant 0 : index
    %c0_26 = arith.constant 0 : index
    %51 = vector.load %arg8[%c0_24, %c0_25, %c0_26] : memref<2x128x1xbf16, #tpu.memory_space<vmem>>, vector<1x128x1xbf16>
    %52 = vector.shape_cast %51 : vector<1x128x1xbf16> to vector<128x1xbf16>
    %cst_27 = arith.constant dense<0.000000e+00> : vector<512x1xf32>
    %53 = tpu.matmul %50, %52, %cst_27 {dimension_numbers = #tpu.dot_dimension_numbers<[1], [0], [0], [1], [0, 0, 1, 1], [], []>} : vector<512x128xbf16>, vector<128x1xbf16>, vector<512x1xf32> -> vector<512x1xf32>
    %c0_28 = arith.constant 0 : index
    %c0_29 = arith.constant 0 : index
    %c0_30 = arith.constant 0 : index
    %54 = vector.load %arg9[%c0_28, %c0_29, %c0_30] : memref<2x4x1xf32, #tpu.memory_space<vmem>>, vector<1x4x1xf32>
    %55 = vector.shape_cast %54 : vector<1x4x1xf32> to vector<4x1xf32>
    %cst_31 = arith.constant dense<0.000000e+00> : vector<512x1xf32>
    %56 = tpu.matmul %30, %55, %cst_31 {dimension_numbers = #tpu.dot_dimension_numbers<[1], [0], [0], [1], [0, 0, 1, 1], [], []>} : vector<512x4xf32>, vector<4x1xf32>, vector<512x1xf32> -> vector<512x1xf32>
    %57 = arith.addf %53, %56 : vector<512x1xf32>
    %58 = arith.addf %4, %57 : vector<512x1xf32>
    %c1 = arith.constant 1 : index
    %c0_32 = arith.constant 0 : index
    %c0_33 = arith.constant 0 : index
    %59 = vector.load %arg2[%c1, %c0_32, %c0_33] : memref<2x3x16xf32, #tpu.memory_space<vmem>>, vector<1x3x16xf32>
    %60 = vector.shape_cast %59 : vector<1x3x16xf32> to vector<3x16xf32>
    %61 = vector.extract_strided_slice %60 {offsets = [0, 0], sizes = [1, 16], strides = [1, 1]} : vector<3x16xf32> to vector<1x16xf32>
    %62 = vector.broadcast %1 : vector<512x1xf32> to vector<512x16xf32>
    %63 = vector.broadcast %61 : vector<1x16xf32> to vector<512x16xf32>
    %64 = arith.mulf %62, %63 : vector<512x16xf32>
    %65 = vector.extract_strided_slice %60 {offsets = [1, 0], sizes = [1, 16], strides = [1, 1]} : vector<3x16xf32> to vector<1x16xf32>
    %66 = vector.broadcast %2 : vector<512x1xf32> to vector<512x16xf32>
    %67 = vector.broadcast %65 : vector<1x16xf32> to vector<512x16xf32>
    %68 = arith.mulf %66, %67 : vector<512x16xf32>
    %69 = arith.addf %64, %68 : vector<512x16xf32>
    %70 = vector.extract_strided_slice %60 {offsets = [2, 0], sizes = [1, 16], strides = [1, 1]} : vector<3x16xf32> to vector<1x16xf32>
    %71 = vector.broadcast %70 : vector<1x16xf32> to vector<512x16xf32>
    %72 = arith.addf %69, %71 : vector<512x16xf32>
    %73 = arith.negf %72 : vector<512x16xf32>
    %74 = math.exp %73 : vector<512x16xf32>
    %cst_34 = arith.constant 1.000000e+00 : f32
    %75 = vector.broadcast %cst_34 : f32 to vector<512x16xf32>
    %76 = arith.addf %75, %74 : vector<512x16xf32>
    %77 = arith.divf %75, %76 : vector<512x16xf32>
    %78 = vector.extract_strided_slice %77 {offsets = [0, 0], sizes = [512, 4], strides = [1, 1]} : vector<512x16xf32> to vector<512x4xf32>
    %79 = vector.extract_strided_slice %77 {offsets = [0, 4], sizes = [512, 4], strides = [1, 1]} : vector<512x16xf32> to vector<512x4xf32>
    %80 = arith.mulf %78, %79 : vector<512x4xf32>
    %81 = vector.extract_strided_slice %77 {offsets = [0, 8], sizes = [512, 4], strides = [1, 1]} : vector<512x16xf32> to vector<512x4xf32>
    %82 = arith.mulf %80, %81 : vector<512x4xf32>
    %83 = vector.extract_strided_slice %77 {offsets = [0, 12], sizes = [512, 4], strides = [1, 1]} : vector<512x16xf32> to vector<512x4xf32>
    %84 = arith.mulf %82, %83 : vector<512x4xf32>
    %cst_35 = arith.constant dense<0.000000e+00> : vector<512x128xf32>
    %85 = tpu.matmul %84, %3, %cst_35 {dimension_numbers = #tpu.dot_dimension_numbers<[1], [0], [0], [1], [0, 0, 1, 1], [], []>} : vector<512x4xf32>, vector<4x128xf32>, vector<512x128xf32> -> vector<512x128xf32>
    %c1_36 = arith.constant 1 : index
    %c0_37 = arith.constant 0 : index
    %c0_38 = arith.constant 0 : index
    %86 = vector.load %arg4[%c1_36, %c0_37, %c0_38] : memref<2x3x128xf32, #tpu.memory_space<vmem>>, vector<1x3x128xf32>
    %87 = vector.shape_cast %86 : vector<1x3x128xf32> to vector<3x128xf32>
    %cst_39 = arith.constant dense<0.000000e+00> : vector<512x128xf32>
    %88 = tpu.matmul %0, %87, %cst_39 {dimension_numbers = #tpu.dot_dimension_numbers<[1], [0], [0], [1], [0, 0, 1, 1], [], []>} : vector<512x3xf32>, vector<3x128xf32>, vector<512x128xf32> -> vector<512x128xf32>
    %c1_40 = arith.constant 1 : index
    %c0_41 = arith.constant 0 : index
    %c0_42 = arith.constant 0 : index
    %89 = vector.load %arg5[%c1_40, %c0_41, %c0_42] : memref<2x1x128xf32, #tpu.memory_space<vmem>>, vector<1x1x128xf32>
    %90 = vector.shape_cast %89 : vector<1x1x128xf32> to vector<1x128xf32>
    %91 = vector.broadcast %90 : vector<1x128xf32> to vector<512x128xf32>
    %92 = arith.addf %88, %91 : vector<512x128xf32>
    %93 = math.tanh %92 : vector<512x128xf32>
    %94 = arith.truncf %93 : vector<512x128xf32> to vector<512x128xbf16>
    %c1_43 = arith.constant 1 : index
    %c0_44 = arith.constant 0 : index
    %c0_45 = arith.constant 0 : index
    %c0_46 = arith.constant 0 : index
    %95 = vector.load %arg6[%c1_43, %c0_44, %c0_45, %c0_46] : memref<2x1x128x128xbf16, #tpu.memory_space<vmem>>, vector<1x1x128x128xbf16>
    %96 = vector.shape_cast %95 : vector<1x1x128x128xbf16> to vector<128x128xbf16>
    %cst_47 = arith.constant dense<0.000000e+00> : vector<512x128xf32>
    %97 = tpu.matmul %94, %96, %cst_47 {dimension_numbers = #tpu.dot_dimension_numbers<[1], [0], [0], [1], [0, 0, 1, 1], [], []>} : vector<512x128xbf16>, vector<128x128xbf16>, vector<512x128xf32> -> vector<512x128xf32>
    %c1_48 = arith.constant 1 : index
    %c0_49 = arith.constant 0 : index
    %c0_50 = arith.constant 0 : index
    %c0_51 = arith.constant 0 : index
    %98 = vector.load %arg7[%c1_48, %c0_49, %c0_50, %c0_51] : memref<2x1x1x128xf32, #tpu.memory_space<vmem>>, vector<1x1x1x128xf32>
    %99 = vector.shape_cast %98 : vector<1x1x1x128xf32> to vector<1x128xf32>
    %100 = vector.broadcast %99 : vector<1x128xf32> to vector<512x128xf32>
    %101 = arith.addf %97, %100 : vector<512x128xf32>
    %102 = math.tanh %101 : vector<512x128xf32>
    %103 = arith.mulf %102, %85 : vector<512x128xf32>
    %104 = arith.truncf %103 : vector<512x128xf32> to vector<512x128xbf16>
    %c1_52 = arith.constant 1 : index
    %c0_53 = arith.constant 0 : index
    %c0_54 = arith.constant 0 : index
    %105 = vector.load %arg8[%c1_52, %c0_53, %c0_54] : memref<2x128x1xbf16, #tpu.memory_space<vmem>>, vector<1x128x1xbf16>
    %106 = vector.shape_cast %105 : vector<1x128x1xbf16> to vector<128x1xbf16>
    %cst_55 = arith.constant dense<0.000000e+00> : vector<512x1xf32>
    %107 = tpu.matmul %104, %106, %cst_55 {dimension_numbers = #tpu.dot_dimension_numbers<[1], [0], [0], [1], [0, 0, 1, 1], [], []>} : vector<512x128xbf16>, vector<128x1xbf16>, vector<512x1xf32> -> vector<512x1xf32>
    %c1_56 = arith.constant 1 : index
    %c0_57 = arith.constant 0 : index
    %c0_58 = arith.constant 0 : index
    %108 = vector.load %arg9[%c1_56, %c0_57, %c0_58] : memref<2x4x1xf32, #tpu.memory_space<vmem>>, vector<1x4x1xf32>
    %109 = vector.shape_cast %108 : vector<1x4x1xf32> to vector<4x1xf32>
    %cst_59 = arith.constant dense<0.000000e+00> : vector<512x1xf32>
    %110 = tpu.matmul %84, %109, %cst_59 {dimension_numbers = #tpu.dot_dimension_numbers<[1], [0], [0], [1], [0, 0, 1, 1], [], []>} : vector<512x4xf32>, vector<4x1xf32>, vector<512x1xf32> -> vector<512x1xf32>
    %111 = arith.addf %107, %110 : vector<512x1xf32>
    %112 = arith.addf %58, %111 : vector<512x1xf32>
    %c0_60 = arith.constant 0 : index
    %c0_61 = arith.constant 0 : index
    %113 = vector.load %arg10[%c0_60, %c0_61] : memref<512x1xf32, #tpu.memory_space<vmem>>, vector<512x1xf32>
    tpu.vector_store %arg10[%c0_60, %c0_61], %112 {strides = array<i32>} : memref<512x1xf32, #tpu.memory_space<vmem>>, vector<512x1xf32>,
    return
  }
  func.func @transform_0(%arg0: i32) -> (i32, i32) {
    %c0_i32 = arith.constant 0 : i32
    %c0_i32_0 = arith.constant 0 : i32
    return %arg0, %c0_i32 : i32, i32
  }
  func.func @transform_1(%arg0: i32) -> (i32, i32, i32) {
    %c0_i32 = arith.constant 0 : i32
    %c0_i32_0 = arith.constant 0 : i32
    %c0_i32_1 = arith.constant 0 : i32
    %c0_i32_2 = arith.constant 0 : i32
    return %c0_i32, %c0_i32_0, %c0_i32_1 : i32, i32, i32
  }
  func.func @transform_2(%arg0: i32) -> (i32, i32) {
    %c0_i32 = arith.constant 0 : i32
    %c0_i32_0 = arith.constant 0 : i32
    %c0_i32_1 = arith.constant 0 : i32
    return %c0_i32, %c0_i32_0 : i32, i32
  }
  func.func @transform_3(%arg0: i32) -> (i32, i32, i32) {
    %c0_i32 = arith.constant 0 : i32
    %c0_i32_0 = arith.constant 0 : i32
    %c0_i32_1 = arith.constant 0 : i32
    %c0_i32_2 = arith.constant 0 : i32
    return %c0_i32, %c0_i32_0, %c0_i32_1 : i32, i32, i32
  }
  func.func @transform_4(%arg0: i32) -> (i32, i32, i32) {
    %c0_i32 = arith.constant 0 : i32
    %c0_i32_0 = arith.constant 0 : i32
    %c0_i32_1 = arith.constant 0 : i32
    %c0_i32_2 = arith.constant 0 : i32
    return %c0_i32, %c0_i32_0, %c0_i32_1 : i32, i32, i32
  }
  func.func @transform_5(%arg0: i32) -> (i32, i32, i32, i32) {
    %c0_i32 = arith.constant 0 : i32
    %c0_i32_0 = arith.constant 0 : i32
    %c0_i32_1 = arith.constant 0 : i32
    %c0_i32_2 = arith.constant 0 : i32
    %c0_i32_3 = arith.constant 0 : i32
    return %c0_i32, %c0_i32_0, %c0_i32_1, %c0_i32_2 : i32, i32, i32, i32
  }
  func.func @transform_6(%arg0: i32) -> (i32, i32, i32, i32) {
    %c0_i32 = arith.constant 0 : i32
    %c0_i32_0 = arith.constant 0 : i32
    %c0_i32_1 = arith.constant 0 : i32
    %c0_i32_2 = arith.constant 0 : i32
    %c0_i32_3 = arith.constant 0 : i32
    return %c0_i32, %c0_i32_0, %c0_i32_1, %c0_i32_2 : i32, i32, i32, i32
  }
  func.func @transform_7(%arg0: i32) -> (i32, i32, i32) {
    %c0_i32 = arith.constant 0 : i32
    %c0_i32_0 = arith.constant 0 : i32
    %c0_i32_1 = arith.constant 0 : i32
    %c0_i32_2 = arith.constant 0 : i32
    return %c0_i32, %c0_i32_0, %c0_i32_1 : i32, i32, i32
  }
  func.func @transform_8(%arg0: i32) -> (i32, i32, i32) {
    %c0_i32 = arith.constant 0 : i32
    %c0_i32_0 = arith.constant 0 : i32
    %c0_i32_1 = arith.constant 0 : i32
    %c0_i32_2 = arith.constant 0 : i32
    return %c0_i32, %c0_i32_0, %c0_i32_1 : i32, i32, i32
  }
  func.func @transform_9(%arg0: i32) -> (i32, i32) {
    %c0_i32 = arith.constant 0 : i32
    %c0_i32_0 = arith.constant 0 : i32
    return %arg0, %c0_i32 : i32, i32
  }
}

</mosaic_0001>

<llo_original>
// kernel: tpu_custom_call.1
$region0: #{tpu_custom_call.1}
  #allocation0 [shape = 'u32[]', space=smem, size = 0x4, offset = 0x4, fixed_abs, tag = 'smem constant byte address 0x4 - core index']
  #allocation1 [shape = 'u32[144,128]{1,0:T(1,128)}', space=vmem, size = 0x12000, scoped, tag = 'internal scratch']
  %s0 = inlined_call_operand.vmem [shape: f32[1024,3], index: 0, kind: input, shape index: {}]
  %s1 = inlined_call_operand.vmem [shape: f32[2,3,16], index: 1, kind: input, shape index: {}]
  %s2 = inlined_call_operand.vmem [shape: f32[4,128], index: 2, kind: input, shape index: {}]
  %s3 = inlined_call_operand.vmem [shape: f32[2,3,128], index: 3, kind: input, shape index: {}]
  %s4 = inlined_call_operand.vmem [shape: f32[2,1,128], index: 4, kind: input, shape index: {}]
  %s5 = inlined_call_operand.vmem [shape: bf16[2,1,128,128], index: 5, kind: input, shape index: {}]
  %s6 = inlined_call_operand.vmem [shape: f32[2,1,1,128], index: 6, kind: input, shape index: {}]
  %s7 = inlined_call_operand.vmem [shape: bf16[2,128,1], index: 7, kind: input, shape index: {}]
  %s8 = inlined_call_operand.vmem [shape: f32[2,4,1], index: 8, kind: input, shape index: {}]
  %s9 = inlined_call_operand.vmem [shape: f32[1024,1], index: 9, kind: output, shape index: {}]
  %s10 = sld [smem:[#allocation0]]
  $region69: #{tpu_custom_call.1} parent=0
    _
  %s12 = ssub.s32 1, %s10
  %s13 = scalar_select 0, %s12, %s10
  loop: start=0, step=1, limit=4
  $region2: #{tpu_custom_call.1} parent=0 // loop_pre_header
    _
  $region3: #{tpu_custom_call.1} parent=0 // loop_header
    %s15 = sphi 0, %s19
    %p16 = scmp.ge.s32.totalorder %s15, 4
    %s25 = sphi 0, %s27
    %s28 = sphi 0, %s25
    %s29 = sphi 0, %s28
    %s45 = sphi 0, %s29
    %s49 = sphi 0, %s49
    %s51 = sphi 0, %s49
    %s52 = sphi 0, %s51
    %s66 = sphi 0, %s52
    %s70 = sphi 0, %s70
    %s72 = sphi 0, %s70
    %s73 = sphi 0, %s72
    %s87 = sphi 0, %s73
    %s91 = sphi 0, %s91
    %s93 = sphi 0, %s91
    %s94 = sphi 0, %s93
    %s108 = sphi 0, %s94
    %s112 = sphi 0, %s112
    %s114 = sphi 0, %s112
    %s115 = sphi 0, %s114
    %s129 = sphi 0, %s115
    %s133 = sphi 0, %s133
    %s135 = sphi 0, %s133
    %s136 = sphi 0, %s135
    %s150 = sphi 0, %s136
    %s154 = sphi 0, %s154
    %s156 = sphi 0, %s154
    %s157 = sphi 0, %s156
    %s171 = sphi 0, %s157
    %s175 = sphi 0, %s175
    %s177 = sphi 0, %s175
    %s178 = sphi 0, %s177
    %s192 = sphi 0, %s178
    %s196 = sphi 0, %s196
    %s198 = sphi 0, %s196
    %s199 = sphi 0, %s198
    %s213 = sphi 0, %s199
    %s219 = sphi 0, %s221
    %s222 = sphi 0, %s219
    %s223 = sphi 0, %s222
    %s239 = sphi 0, %s223
  $region4: #{tpu_custom_call.1} parent=0 // loop_header_branch
    %18 = sbr.rel (%p16) target = $region8
  $region5: #{tpu_custom_call.1} parent=0 // loop_body
    %s20 = ssub.s32 %s15, 1
    %s21 = ssub.s32 %s15, 2
    %s22 = sadd.s32 %s15, 1
    %s23 = ssub.s32 %s15, %s22
    %p24 = scmp.eq.s32.totalorder %s23, 0
    %s26 = sadd.s32 %s25, 1
    %s27 = scalar_select %p24, %s25, %s26
    %p30 = pneg %p24
    %p31 = scmp.eq.s32.totalorder %s15, 1
    %p32 = por %p30, %p31
    %p33 = scmp.ne.s32.totalorder %s25, %s28
    %p34 = scmp.eq.s32.totalorder %s15, 0
    %p35 = por %p33, %p34
    %p36 = scmp.ne.s32.totalorder %s25, %s28
    %p37 = scmp.eq.s32.totalorder %s20, 1
    %p38 = por %p36, %p37
    %p39 = scmp.ne.s32.totalorder %s28, %s29
    %p40 = scmp.eq.s32.totalorder %s20, 0
    %p41 = por %p39, %p40
    %p42 = scmp.ne.s32.totalorder %s28, %s29
    %p43 = scmp.eq.s32.totalorder %s21, 1
    %p44 = por %p42, %p43
    %p46 = scmp.ne.s32.totalorder %s29, %s45
    %p47 = scmp.eq.s32.totalorder %s21, 0
    %p48 = por %p46, %p47
    %s50 = sadd.s32 %s49, 1
    %p53 = scmp.eq.s32.totalorder %s15, 1
    %p54 = scmp.ne.s32.totalorder %s49, %s51
    %p55 = scmp.eq.s32.totalorder %s15, 0
    %p56 = por %p54, %p55
    %p57 = scmp.ne.s32.totalorder %s49, %s51
    %p58 = scmp.eq.s32.totalorder %s20, 1
    %p59 = por %p57, %p58
    %p60 = scmp.ne.s32.totalorder %s51, %s52
    %p61 = scmp.eq.s32.totalorder %s20, 0
    %p62 = por %p60, %p61
    %p63 = scmp.ne.s32.totalorder %s51, %s52
    %p64 = scmp.eq.s32.totalorder %s21, 1
    %p65 = por %p63, %p64
    %p67 = scmp.ne.s32.totalorder %s52, %s66
    %p68 = scmp.eq.s32.totalorder %s21, 0
    %p69 = por %p67, %p68
    %s71 = sadd.s32 %s70, 1
    %p74 = scmp.eq.s32.totalorder %s15, 1
    %p75 = scmp.ne.s32.totalorder %s70, %s72
    %p76 = scmp.eq.s32.totalorder %s15, 0
    %p77 = por %p75, %p76
    %p78 = scmp.ne.s32.totalorder %s70, %s72
    %p79 = scmp.eq.s32.totalorder %s20, 1
    %p80 = por %p78, %p79
    %p81 = scmp.ne.s32.totalorder %s72, %s73
    %p82 = scmp.eq.s32.totalorder %s20, 0
    %p83 = por %p81, %p82
    %p84 = scmp.ne.s32.totalorder %s72, %s73
    %p85 = scmp.eq.s32.totalorder %s21, 1
    %p86 = por %p84, %p85
    %p88 = scmp.ne.s32.totalorder %s73, %s87
    %p89 = scmp.eq.s32.totalorder %s21, 0
    %p90 = por %p88, %p89
    %s92 = sadd.s32 %s91, 1
    %p95 = scmp.eq.s32.totalorder %s15, 1
    %p96 = scmp.ne.s32.totalorder %s91, %s93
    %p97 = scmp.eq.s32.totalorder %s15, 0
    %p98 = por %p96, %p97
    %p99 = scmp.ne.s32.totalorder %s91, %s93
    %p100 = scmp.eq.s32.totalorder %s20, 1
    %p101 = por %p99, %p100
    %p102 = scmp.ne.s32.totalorder %s93, %s94
    %p103 = scmp.eq.s32.totalorder %s20, 0
    %p104 = por %p102, %p103
    %p105 = scmp.ne.s32.totalorder %s93, %s94
    %p106 = scmp.eq.s32.totalorder %s21, 1
    %p107 = por %p105, %p106
    %p109 = scmp.ne.s32.totalorder %s94, %s108
    %p110 = scmp.eq.s32.totalorder %s21, 0
    %p111 = por %p109, %p110
    %s113 = sadd.s32 %s112, 1
    %p116 = scmp.eq.s32.totalorder %s15, 1
    %p117 = scmp.ne.s32.totalorder %s112, %s114
    %p118 = scmp.eq.s32.totalorder %s15, 0
    %p119 = por %p117, %p118
    %p120 = scmp.ne.s32.totalorder %s112, %s114
    %p121 = scmp.eq.s32.totalorder %s20, 1
    %p122 = por %p120, %p121
    %p123 = scmp.ne.s32.totalorder %s114, %s115
    %p124 = scmp.eq.s32.totalorder %s20, 0
    %p125 = por %p123, %p124
    %p126 = scmp.ne.s32.totalorder %s114, %s115
    %p127 = scmp.eq.s32.totalorder %s21, 1
    %p128 = por %p126, %p127
    %p130 = scmp.ne.s32.totalorder %s115, %s129
    %p131 = scmp.eq.s32.totalorder %s21, 0
    %p132 = por %p130, %p131
    %s134 = sadd.s32 %s133, 1
    %p137 = scmp.eq.s32.totalorder %s15, 1
    %p138 = scmp.ne.s32.totalorder %s133, %s135
    %p139 = scmp.eq.s32.totalorder %s15, 0
    %p140 = por %p138, %p139
    %p141 = scmp.ne.s32.totalorder %s133, %s135
    %p142 = scmp.eq.s32.totalorder %s20, 1
    %p143 = por %p141, %p142
    %p144 = scmp.ne.s32.totalorder %s135, %s136
    %p145 = scmp.eq.s32.totalorder %s20, 0
    %p146 = por %p144, %p145
    %p147 = scmp.ne.s32.totalorder %s135, %s136
    %p148 = scmp.eq.s32.totalorder %s21, 1
    %p149 = por %p147, %p148
    %p151 = scmp.ne.s32.totalorder %s136, %s150
    %p152 = scmp.eq.s32.totalorder %s21, 0
    %p153 = por %p151, %p152
    %s155 = sadd.s32 %s154, 1
    %p158 = scmp.eq.s32.totalorder %s15, 1
    %p159 = scmp.ne.s32.totalorder %s154, %s156
    %p160 = scmp.eq.s32.totalorder %s15, 0
    %p161 = por %p159, %p160
    %p162 = scmp.ne.s32.totalorder %s154, %s156
    %p163 = scmp.eq.s32.totalorder %s20, 1
    %p164 = por %p162, %p163
    %p165 = scmp.ne.s32.totalorder %s156, %s157
    %p166 = scmp.eq.s32.totalorder %s20, 0
    %p167 = por %p165, %p166
    %p168 = scmp.ne.s32.totalorder %s156, %s157
    %p169 = scmp.eq.s32.totalorder %s21, 1
    %p170 = por %p168, %p169
    %p172 = scmp.ne.s32.totalorder %s157, %s171
    %p173 = scmp.eq.s32.totalorder %s21, 0
    %p174 = por %p172, %p173
    %s176 = sadd.s32 %s175, 1
    %p179 = scmp.eq.s32.totalorder %s15, 1
    %p180 = scmp.ne.s32.totalorder %s175, %s177
    %p181 = scmp.eq.s32.totalorder %s15, 0
    %p182 = por %p180, %p181
    %p183 = scmp.ne.s32.totalorder %s175, %s177
    %p184 = scmp.eq.s32.totalorder %s20, 1
    %p185 = por %p183, %p184
    %p186 = scmp.ne.s32.totalorder %s177, %s178
    %p187 = scmp.eq.s32.totalorder %s20, 0
    %p188 = por %p186, %p187
    %p189 = scmp.ne.s32.totalorder %s177, %s178
    %p190 = scmp.eq.s32.totalorder %s21, 1
    %p191 = por %p189, %p190
    %p193 = scmp.ne.s32.totalorder %s178, %s192
    %p194 = scmp.eq.s32.totalorder %s21, 0
    %p195 = por %p193, %p194
    %s197 = sadd.s32 %s196, 1
    %p200 = scmp.eq.s32.totalorder %s15, 1
    %p201 = scmp.ne.s32.totalorder %s196, %s198
    %p202 = scmp.eq.s32.totalorder %s15, 0
    %p203 = por %p201, %p202
    %p204 = scmp.ne.s32.totalorder %s196, %s198
    %p205 = scmp.eq.s32.totalorder %s20, 1
    %p206 = por %p204, %p205
    %p207 = scmp.ne.s32.totalorder %s198, %s199
    %p208 = scmp.eq.s32.totalorder %s20, 0
    %p209 = por %p207, %p208
    %p210 = scmp.ne.s32.totalorder %s198, %s199
    %p211 = scmp.eq.s32.totalorder %s21, 1
    %p212 = por %p210, %p211
    %p214 = scmp.ne.s32.totalorder %s199, %s213
    %p215 = scmp.eq.s32.totalorder %s21, 0
    %p216 = por %p214, %p215
    %s217 = ssub.s32 %s15, %s22
    %p218 = scmp.eq.s32.totalorder %s217, 0
    %s220 = sadd.s32 %s219, 1
    %s221 = scalar_select %p218, %s219, %s220
    %p224 = pneg %p218
    %p225 = scmp.eq.s32.totalorder %s15, 1
    %p226 = por %p224, %p225
    %p227 = scmp.ne.s32.totalorder %s219, %s222
    %p228 = scmp.eq.s32.totalorder %s15, 0
    %p229 = por %p227, %p228
    %p230 = scmp.ne.s32.totalorder %s219, %s222
    %p231 = scmp.eq.s32.totalorder %s20, 1
    %p232 = por %p230, %p231
    %p233 = scmp.ne.s32.totalorder %s222, %s223
    %p234 = scmp.eq.s32.totalorder %s20, 0
    %p235 = por %p233, %p234
    %p236 = scmp.ne.s32.totalorder %s222, %s223
    %p237 = scmp.eq.s32.totalorder %s21, 1
    %p238 = por %p236, %p237
    %p240 = scmp.ne.s32.totalorder %s223, %s239
    %p241 = scmp.eq.s32.totalorder %s21, 0
    %p242 = por %p240, %p241
    %p243 = scmp.le.s32.totalorder 1, %s15
    %p244 = scmp.lt.s32.totalorder %s15, 3
    %p245 = pnand %p243, %p244
    %p246 = pneg %p245
    // Predicated region
    $region9: #{tpu_custom_call.1} parent=5 // pred_check
      _
    $region10: #{tpu_custom_call.1} parent=5 // pred_check_branch
      %248 = sbr.rel (%p245) target = $region12
    $region11: #{tpu_custom_call.1} parent=5 // pred_region
      %s249 = ssub.s32 %s15, 1
      // Predicated region
      $region13: #{tpu_custom_call.1} parent=11 // pred_check
        %p250 = pneg %p62
      $region14: #{tpu_custom_call.1} parent=11 // pred_check_branch
        %252 = sbr.rel (%p250) target = $region16
      $region15: #{tpu_custom_call.1} parent=11 // pred_region
        _
      $region16: #{tpu_custom_call.1} parent=11 // pred_fallthru
        _
      // Predicated region
      $region17: #{tpu_custom_call.1} parent=11 // pred_check
        %p253 = pneg %p83
      $region18: #{tpu_custom_call.1} parent=11 // pred_check_branch
        %255 = sbr.rel (%p253) target = $region20
      $region19: #{tpu_custom_call.1} parent=11 // pred_region
        _
      $region20: #{tpu_custom_call.1} parent=11 // pred_fallthru
        _
      // Predicated region
      $region21: #{tpu_custom_call.1} parent=11 // pred_check
        %p256 = pneg %p104
      $region22: #{tpu_custom_call.1} parent=11 // pred_check_branch
        %258 = sbr.rel (%p256) target = $region24
      $region23: #{tpu_custom_call.1} parent=11 // pred_region
        _
      $region24: #{tpu_custom_call.1} parent=11 // pred_fallthru
        _
      // Predicated region
      $region25: #{tpu_custom_call.1} parent=11 // pred_check
        %p259 = pneg %p125
      $region26: #{tpu_custom_call.1} parent=11 // pred_check_branch
        %261 = sbr.rel (%p259) target = $region28
      $region27: #{tpu_custom_call.1} parent=11 // pred_region
        _
      $region28: #{tpu_custom_call.1} parent=11 // pred_fallthru
        _
      // Predicated region
      $region29: #{tpu_custom_call.1} parent=11 // pred_check
        %p262 = pneg %p146
      $region30: #{tpu_custom_call.1} parent=11 // pred_check_branch
        %264 = sbr.rel (%p262) target = $region32
      $region31: #{tpu_custom_call.1} parent=11 // pred_region
        _
      $region32: #{tpu_custom_call.1} parent=11 // pred_fallthru
        _
      // Predicated region
      $region33: #{tpu_custom_call.1} parent=11 // pred_check
        %p265 = pneg %p167
      $region34: #{tpu_custom_call.1} parent=11 // pred_check_branch
        %267 = sbr.rel (%p265) target = $region36
      $region35: #{tpu_custom_call.1} parent=11 // pred_region
        _
      $region36: #{tpu_custom_call.1} parent=11 // pred_fallthru
        _
      // Predicated region
      $region37: #{tpu_custom_call.1} parent=11 // pred_check
        %p268 = pneg %p188
      $region38: #{tpu_custom_call.1} parent=11 // pred_check_branch
        %270 = sbr.rel (%p268) target = $region40
      $region39: #{tpu_custom_call.1} parent=11 // pred_region
        _
      $region40: #{tpu_custom_call.1} parent=11 // pred_fallthru
        _
      // Predicated region
      $region41: #{tpu_custom_call.1} parent=11 // pred_check
        %p271 = pneg %p209
      $region42: #{tpu_custom_call.1} parent=11 // pred_check_branch
        %273 = sbr.rel (%p271) target = $region44
      $region43: #{tpu_custom_call.1} parent=11 // pred_region
        _
      $region44: #{tpu_custom_call.1} parent=11 // pred_fallthru
        _
    $region12: #{tpu_custom_call.1} parent=5 // pred_fallthru
      _
    %p274 = scmp.lt.s32.totalorder %s15, 2
    // Predicated region
    $region45: #{tpu_custom_call.1} parent=5 // pred_check
      %p275 = pneg %p274
    $region46: #{tpu_custom_call.1} parent=5 // pred_check_branch
      %277 = sbr.rel (%p275) target = $region48
    $region47: #{tpu_custom_call.1} parent=5 // pred_region
      // Predicated region
      $region49: #{tpu_custom_call.1} parent=47 // pred_check
        %p278 = pneg %p35
      $region50: #{tpu_custom_call.1} parent=47 // pred_check_branch
        %280 = sbr.rel (%p278) target = $region52
      $region51: #{tpu_custom_call.1} parent=47 // pred_region
        %s281 = smul.u32 64, %s15
        %p282 = scmp.lt.s32.totalorder %s281, 127
        %s283 = scalar_select %p282, %s281, 127
        %s284 = smul.addr %s283, 8
        %s285 = scalar_lea.vmem %s0, %s284
        %s286 = smul.u32 64, %s15
      $region52: #{tpu_custom_call.1} parent=47 // pred_fallthru
        _
    $region48: #{tpu_custom_call.1} parent=5 // pred_fallthru
      _
    %p287 = scmp.le.s32.totalorder 1, %s15
    %p288 = scmp.lt.s32.totalorder %s15, 3
    %p289 = pnand %p287, %p288
    %p290 = pneg %p289
    // Predicated region
    $region53: #{tpu_custom_call.1} parent=5 // pred_check
      _
    $region54: #{tpu_custom_call.1} parent=5 // pred_check_branch
      %292 = sbr.rel (%p289) target = $region56
    $region55: #{tpu_custom_call.1} parent=5 // pred_region
      %s293 = ssub.s32 %s15, 1
      %s294 = smul.u32 64, %s20
      %p295 = scmp.lt.s32.totalorder %s294, 127
      %s296 = scalar_select %p295, %s294, 127
      %s297 = smul.addr %s296, 8
      %s298 = scalar_lea.vmem %s0, %s297
      %p299 = pneg %p41
      %p300 = pneg %p38
      %p301 = pneg %p62
      %p302 = pneg %p59
      %p303 = pneg %p83
      %p304 = pneg %p80
      %p305 = pneg %p104
      %p306 = pneg %p101
      %p307 = pneg %p125
      %p308 = pneg %p122
      %p309 = pneg %p146
      %p310 = pneg %p143
      %p311 = pneg %p167
      %p312 = pneg %p164
      %p313 = pneg %p188
      %p314 = pneg %p185
      %p315 = pneg %p209
      %p316 = pneg %p206
      %p317 = pneg %p235
      %p318 = pneg %p232
      %s319 = smul.u32 64, %s20
      %p320 = scmp.lt.s32.totalorder %s319, 127
      %s321 = scalar_select %p320, %s319, 127
      %s322 = smul.addr %s321, 8
      %s323 = scalar_lea.vmem %s9, %s322
      %s324 = smul.u32 64, %s20
      %p325 = scmp.lt.s32.totalorder %s324, 127
      %s326 = scalar_select %p325, %s324, 127
      %s327 = smul.addr %s326, 8
      %s328 = scalar_lea.vmem %s0, %s327
      %s329 = smul.u32 64, %s20
      %s330 = smul.u32 64, %s20
      %p331 = scmp.lt.s32.totalorder %s330, 127
      %s332 = scalar_select %p331, %s330, 127
      %s333 = smul.addr %s332, 8
      %s334 = scalar_lea.vmem %s9, %s333
      %s335 = smul.u32 64, %s20
      %v337 = vld [vmem:[%s328] sm:$0xff]
      %v338 = vld [vmem:[%s328 + $0x8] sm:$0xff]
      %v339 = vld [vmem:[%s328 + $0x10] sm:$0xff]
      %v340 = vld [vmem:[%s328 + $0x18] sm:$0xff]
      %v341 = vld [vmem:[%s328 + $0x20] sm:$0xff]
      %v342 = vld [vmem:[%s328 + $0x28] sm:$0xff]
      %v343 = vld [vmem:[%s328 + $0x30] sm:$0xff]
      %v344 = vld [vmem:[%s328 + $0x38] sm:$0xff]
      %v345 = vld [vmem:[%s328 + $0x40] sm:$0xff]
      %v346 = vld [vmem:[%s328 + $0x48] sm:$0xff]
      %v347 = vld [vmem:[%s328 + $0x50] sm:$0xff]
      %v348 = vld [vmem:[%s328 + $0x58] sm:$0xff]
      %v349 = vld [vmem:[%s328 + $0x60] sm:$0xff]
      %v350 = vld [vmem:[%s328 + $0x68] sm:$0xff]
      %v351 = vld [vmem:[%s328 + $0x70] sm:$0xff]
      %v352 = vld [vmem:[%s328 + $0x78] sm:$0xff]
      %v353 = vld [vmem:[%s328 + $0x80] sm:$0xff]
      %v354 = vld [vmem:[%s328 + $0x88] sm:$0xff]
      %v355 = vld [vmem:[%s328 + $0x90] sm:$0xff]
      %v356 = vld [vmem:[%s328 + $0x98] sm:$0xff]
      %v357 = vld [vmem:[%s328 + $0xa0] sm:$0xff]
      %v358 = vld [vmem:[%s328 + $0xa8] sm:$0xff]
      %v359 = vld [vmem:[%s328 + $0xb0] sm:$0xff]
      %v360 = vld [vmem:[%s328 + $0xb8] sm:$0xff]
      %v361 = vld [vmem:[%s328 + $0xc0] sm:$0xff]
      %v362 = vld [vmem:[%s328 + $0xc8] sm:$0xff]
      %v363 = vld [vmem:[%s328 + $0xd0] sm:$0xff]
      %v364 = vld [vmem:[%s328 + $0xd8] sm:$0xff]
      %v365 = vld [vmem:[%s328 + $0xe0] sm:$0xff]
      %v366 = vld [vmem:[%s328 + $0xe8] sm:$0xff]
      %v367 = vld [vmem:[%s328 + $0xf0] sm:$0xff]
      %v368 = vld [vmem:[%s328 + $0xf8] sm:$0xff]
      %v369 = vld [vmem:[%s328 + $0x100] sm:$0xff]
      %v370 = vld [vmem:[%s328 + $0x108] sm:$0xff]
      %v371 = vld [vmem:[%s328 + $0x110] sm:$0xff]
      %v372 = vld [vmem:[%s328 + $0x118] sm:$0xff]
      %v373 = vld [vmem:[%s328 + $0x120] sm:$0xff]
      %v374 = vld [vmem:[%s328 + $0x128] sm:$0xff]
      %v375 = vld [vmem:[%s328 + $0x130] sm:$0xff]
      %v376 = vld [vmem:[%s328 + $0x138] sm:$0xff]
      %v377 = vld [vmem:[%s328 + $0x140] sm:$0xff]
      %v378 = vld [vmem:[%s328 + $0x148] sm:$0xff]
      %v379 = vld [vmem:[%s328 + $0x150] sm:$0xff]
      %v380 = vld [vmem:[%s328 + $0x158] sm:$0xff]
      %v381 = vld [vmem:[%s328 + $0x160] sm:$0xff]
      %v382 = vld [vmem:[%s328 + $0x168] sm:$0xff]
      %v383 = vld [vmem:[%s328 + $0x170] sm:$0xff]
      %v384 = vld [vmem:[%s328 + $0x178] sm:$0xff]
      %v385 = vld [vmem:[%s328 + $0x180] sm:$0xff]
      %v386 = vld [vmem:[%s328 + $0x188] sm:$0xff]
      %v387 = vld [vmem:[%s328 + $0x190] sm:$0xff]
      %v388 = vld [vmem:[%s328 + $0x198] sm:$0xff]
      %v389 = vld [vmem:[%s328 + $0x1a0] sm:$0xff]
      %v390 = vld [vmem:[%s328 + $0x1a8] sm:$0xff]
      %v391 = vld [vmem:[%s328 + $0x1b0] sm:$0xff]
      %v392 = vld [vmem:[%s328 + $0x1b8] sm:$0xff]
      %v393 = vld [vmem:[%s328 + $0x1c0] sm:$0xff]
      %v394 = vld [vmem:[%s328 + $0x1c8] sm:$0xff]
      %v395 = vld [vmem:[%s328 + $0x1d0] sm:$0xff]
      %v396 = vld [vmem:[%s328 + $0x1d8] sm:$0xff]
      %v397 = vld [vmem:[%s328 + $0x1e0] sm:$0xff]
      %v398 = vld [vmem:[%s328 + $0x1e8] sm:$0xff]
      %v399 = vld [vmem:[%s328 + $0x1f0] sm:$0xff]
      %v400 = vld [vmem:[%s328 + $0x1f8] sm:$0xff]
      %v401 = vld [vmem:[%s2] sm:$0xf]
      %v402 = vld [vmem:[%s1] sm:$0x7]
      %404 = vset.pattern.permute.xlu0 0
      %405 = vperm.xlu0 %404, %v337
      %v406 = vpop.permute.xlu0 %405
      %409 = vset.pattern.permute.xlu0 0
      %410 = vperm.xlu0 %409, %v338
      %v411 = vpop.permute.xlu0 %410
      %414 = vset.pattern.permute.xlu0 0
      %415 = vperm.xlu0 %414, %v339
      %v416 = vpop.permute.xlu0 %415
      %419 = vset.pattern.permute.xlu0 0
      %420 = vperm.xlu0 %419, %v340
      %v421 = vpop.permute.xlu0 %420
      %424 = vset.pattern.permute.xlu0 0
      %425 = vperm.xlu0 %424, %v341
      %v426 = vpop.permute.xlu0 %425
      %429 = vset.pattern.permute.xlu0 0
      %430 = vperm.xlu0 %429, %v342
      %v431 = vpop.permute.xlu0 %430
      %434 = vset.pattern.permute.xlu0 0
      %435 = vperm.xlu0 %434, %v343
      %v436 = vpop.permute.xlu0 %435
      %439 = vset.pattern.permute.xlu0 0
      %440 = vperm.xlu0 %439, %v344
      %v441 = vpop.permute.xlu0 %440
      %444 = vset.pattern.permute.xlu0 0
      %445 = vperm.xlu0 %444, %v345
      %v446 = vpop.permute.xlu0 %445
      %449 = vset.pattern.permute.xlu0 0
      %450 = vperm.xlu0 %449, %v346
      %v451 = vpop.permute.xlu0 %450
      %454 = vset.pattern.permute.xlu0 0
      %455 = vperm.xlu0 %454, %v347
      %v456 = vpop.permute.xlu0 %455
      %459 = vset.pattern.permute.xlu0 0
      %460 = vperm.xlu0 %459, %v348
      %v461 = vpop.permute.xlu0 %460
      %464 = vset.pattern.permute.xlu0 0
      %465 = vperm.xlu0 %464, %v349
      %v466 = vpop.permute.xlu0 %465
      %469 = vset.pattern.permute.xlu0 0
      %470 = vperm.xlu0 %469, %v350
      %v471 = vpop.permute.xlu0 %470
      %474 = vset.pattern.permute.xlu0 0
      %475 = vperm.xlu0 %474, %v351
      %v476 = vpop.permute.xlu0 %475
      %479 = vset.pattern.permute.xlu0 0
      %480 = vperm.xlu0 %479, %v352
      %v481 = vpop.permute.xlu0 %480
      %484 = vset.pattern.permute.xlu0 0
      %485 = vperm.xlu0 %484, %v353
      %v486 = vpop.permute.xlu0 %485
      %489 = vset.pattern.permute.xlu0 0
      %490 = vperm.xlu0 %489, %v354
      %v491 = vpop.permute.xlu0 %490
      %494 = vset.pattern.permute.xlu0 0
      %495 = vperm.xlu0 %494, %v355
      %v496 = vpop.permute.xlu0 %495
      %499 = vset.pattern.permute.xlu0 0
      %500 = vperm.xlu0 %499, %v356
      %v501 = vpop.permute.xlu0 %500
      %504 = vset.pattern.permute.xlu0 0
      %505 = vperm.xlu0 %504, %v357
      %v506 = vpop.permute.xlu0 %505
      %509 = vset.pattern.permute.xlu0 0
      %510 = vperm.xlu0 %509, %v358
      %v511 = vpop.permute.xlu0 %510
      %514 = vset.pattern.permute.xlu0 0
      %515 = vperm.xlu0 %514, %v359
      %v516 = vpop.permute.xlu0 %515
      %519 = vset.pattern.permute.xlu0 0
      %520 = vperm.xlu0 %519, %v360
      %v521 = vpop.permute.xlu0 %520
      %524 = vset.pattern.permute.xlu0 0
      %525 = vperm.xlu0 %524, %v361
      %v526 = vpop.permute.xlu0 %525
      %529 = vset.pattern.permute.xlu0 0
      %530 = vperm.xlu0 %529, %v362
      %v531 = vpop.permute.xlu0 %530
      %534 = vset.pattern.permute.xlu0 0
      %535 = vperm.xlu0 %534, %v363
      %v536 = vpop.permute.xlu0 %535
      %539 = vset.pattern.permute.xlu0 0
      %540 = vperm.xlu0 %539, %v364
      %v541 = vpop.permute.xlu0 %540
      %544 = vset.pattern.permute.xlu0 0
      %545 = vperm.xlu0 %544, %v365
      %v546 = vpop.permute.xlu0 %545
      %549 = vset.pattern.permute.xlu0 0
      %550 = vperm.xlu0 %549, %v366
      %v551 = vpop.permute.xlu0 %550
      %554 = vset.pattern.permute.xlu0 0
      %555 = vperm.xlu0 %554, %v367
      %v556 = vpop.permute.xlu0 %555
      %559 = vset.pattern.permute.xlu0 0
      %560 = vperm.xlu0 %559, %v368
      %v561 = vpop.permute.xlu0 %560
      %564 = vset.pattern.permute.xlu0 0
      %565 = vperm.xlu0 %564, %v369
      %v566 = vpop.permute.xlu0 %565
      %569 = vset.pattern.permute.xlu0 0
      %570 = vperm.xlu0 %569, %v370
      %v571 = vpop.permute.xlu0 %570
      %574 = vset.pattern.permute.xlu0 0
      %575 = vperm.xlu0 %574, %v371
      %v576 = vpop.permute.xlu0 %575
      %579 = vset.pattern.permute.xlu0 0
      %580 = vperm.xlu0 %579, %v372
      %v581 = vpop.permute.xlu0 %580
      %584 = vset.pattern.permute.xlu0 0
      %585 = vperm.xlu0 %584, %v373
      %v586 = vpop.permute.xlu0 %585
      %589 = vset.pattern.permute.xlu0 0
      %590 = vperm.xlu0 %589, %v374
      %v591 = vpop.permute.xlu0 %590
      %594 = vset.pattern.permute.xlu0 0
      %595 = vperm.xlu0 %594, %v375
      %v596 = vpop.permute.xlu0 %595
      %599 = vset.pattern.permute.xlu0 0
      %600 = vperm.xlu0 %599, %v376
      %v601 = vpop.permute.xlu0 %600
      %604 = vset.pattern.permute.xlu0 0
      %605 = vperm.xlu0 %604, %v377
      %v606 = vpop.permute.xlu0 %605
      %609 = vset.pattern.permute.xlu0 0
      %610 = vperm.xlu0 %609, %v378
      %v611 = vpop.permute.xlu0 %610
      %614 = vset.pattern.permute.xlu0 0
      %615 = vperm.xlu0 %614, %v379
      %v616 = vpop.permute.xlu0 %615
      %619 = vset.pattern.permute.xlu0 0
      %620 = vperm.xlu0 %619, %v380
      %v621 = vpop.permute.xlu0 %620
      %624 = vset.pattern.permute.xlu0 0
      %625 = vperm.xlu0 %624, %v381
      %v626 = vpop.permute.xlu0 %625
      %629 = vset.pattern.permute.xlu0 0
      %630 = vperm.xlu0 %629, %v382
      %v631 = vpop.permute.xlu0 %630
      %634 = vset.pattern.permute.xlu0 0
      %635 = vperm.xlu0 %634, %v383
      %v636 = vpop.permute.xlu0 %635
      %639 = vset.pattern.permute.xlu0 0
      %640 = vperm.xlu0 %639, %v384
      %v641 = vpop.permute.xlu0 %640
      %644 = vset.pattern.permute.xlu0 0
      %645 = vperm.xlu0 %644, %v385
      %v646 = vpop.permute.xlu0 %645
      %649 = vset.pattern.permute.xlu0 0
      %650 = vperm.xlu0 %649, %v386
      %v651 = vpop.permute.xlu0 %650
      %654 = vset.pattern.permute.xlu0 0
      %655 = vperm.xlu0 %654, %v387
      %v656 = vpop.permute.xlu0 %655
      %659 = vset.pattern.permute.xlu0 0
      %660 = vperm.xlu0 %659, %v388
      %v661 = vpop.permute.xlu0 %660
      %664 = vset.pattern.permute.xlu0 0
      %665 = vperm.xlu0 %664, %v389
      %v666 = vpop.permute.xlu0 %665
      %669 = vset.pattern.permute.xlu0 0
      %670 = vperm.xlu0 %669, %v390
      %v671 = vpop.permute.xlu0 %670
      %674 = vset.pattern.permute.xlu0 0
      %675 = vperm.xlu0 %674, %v391
      %v676 = vpop.permute.xlu0 %675
      %679 = vset.pattern.permute.xlu0 0
      %680 = vperm.xlu0 %679, %v392
      %v681 = vpop.permute.xlu0 %680
      %684 = vset.pattern.permute.xlu0 0
      %685 = vperm.xlu0 %684, %v393
      %v686 = vpop.permute.xlu0 %685
      %689 = vset.pattern.permute.xlu0 0
      %690 = vperm.xlu0 %689, %v394
      %v691 = vpop.permute.xlu0 %690
      %694 = vset.pattern.permute.xlu0 0
      %695 = vperm.xlu0 %694, %v395
      %v696 = vpop.permute.xlu0 %695
      %699 = vset.pattern.permute.xlu0 0
      %700 = vperm.xlu0 %699, %v396
      %v701 = vpop.permute.xlu0 %700
      %704 = vset.pattern.permute.xlu0 0
      %705 = vperm.xlu0 %704, %v397
      %v706 = vpop.permute.xlu0 %705
      %709 = vset.pattern.permute.xlu0 0
      %710 = vperm.xlu0 %709, %v398
      %v711 = vpop.permute.xlu0 %710
      %714 = vset.pattern.permute.xlu0 0
      %715 = vperm.xlu0 %714, %v399
      %v716 = vpop.permute.xlu0 %715
      %719 = vset.pattern.permute.xlu0 0
      %720 = vperm.xlu0 %719, %v400
      %v721 = vpop.permute.xlu0 %720
      %v723 = vlaneseq
      %v724 = vshrl.u32 %v723, 7
      %v725 = vsub.s32 0, %v724
      %v726 = vrot.slane %v402, %v725
      %v727 = vmul.f32 %v406, %v726
      %v728 = vmul.f32 %v411, %v726
      %v729 = vmul.f32 %v416, %v726
      %v730 = vmul.f32 %v421, %v726
      %v731 = vmul.f32 %v426, %v726
      %v732 = vmul.f32 %v431, %v726
      %v733 = vmul.f32 %v436, %v726
      %v734 = vmul.f32 %v441, %v726
      %v735 = vmul.f32 %v446, %v726
      %v736 = vmul.f32 %v451, %v726
      %v737 = vmul.f32 %v456, %v726
      %v738 = vmul.f32 %v461, %v726
      %v739 = vmul.f32 %v466, %v726
      %v740 = vmul.f32 %v471, %v726
      %v741 = vmul.f32 %v476, %v726
      %v742 = vmul.f32 %v481, %v726
      %v743 = vmul.f32 %v486, %v726
      %v744 = vmul.f32 %v491, %v726
      %v745 = vmul.f32 %v496, %v726
      %v746 = vmul.f32 %v501, %v726
      %v747 = vmul.f32 %v506, %v726
      %v748 = vmul.f32 %v511, %v726
      %v749 = vmul.f32 %v516, %v726
      %v750 = vmul.f32 %v521, %v726
      %v751 = vmul.f32 %v526, %v726
      %v752 = vmul.f32 %v531, %v726
      %v753 = vmul.f32 %v536, %v726
      %v754 = vmul.f32 %v541, %v726
      %v755 = vmul.f32 %v546, %v726
      %v756 = vmul.f32 %v551, %v726
      %v757 = vmul.f32 %v556, %v726
      %v758 = vmul.f32 %v561, %v726
      %v759 = vmul.f32 %v566, %v726
      %v760 = vmul.f32 %v571, %v726
      %v761 = vmul.f32 %v576, %v726
      %v762 = vmul.f32 %v581, %v726
      %v763 = vmul.f32 %v586, %v726
      %v764 = vmul.f32 %v591, %v726
      %v765 = vmul.f32 %v596, %v726
      %v766 = vmul.f32 %v601, %v726
      %v767 = vmul.f32 %v606, %v726
      %v768 = vmul.f32 %v611, %v726
      %v769 = vmul.f32 %v616, %v726
      %v770 = vmul.f32 %v621, %v726
      %v771 = vmul.f32 %v626, %v726
      %v772 = vmul.f32 %v631, %v726
      %v773 = vmul.f32 %v636, %v726
      %v774 = vmul.f32 %v641, %v726
      %v775 = vmul.f32 %v646, %v726
      %v776 = vmul.f32 %v651, %v726
      %v777 = vmul.f32 %v656, %v726
      %v778 = vmul.f32 %v661, %v726
      %v779 = vmul.f32 %v666, %v726
      %v780 = vmul.f32 %v671, %v726
      %v781 = vmul.f32 %v676, %v726
      %v782 = vmul.f32 %v681, %v726
      %v783 = vmul.f32 %v686, %v726
      %v784 = vmul.f32 %v691, %v726
      %v785 = vmul.f32 %v696, %v726
      %v786 = vmul.f32 %v701, %v726
      %v787 = vmul.f32 %v706, %v726
      %v788 = vmul.f32 %v711, %v726
      %v789 = vmul.f32 %v716, %v726
      %v790 = vmul.f32 %v721, %v726
      %791 = vset.pattern.permute.xlu0 1
      %792 = vperm.xlu0 %791, %v337
      %v793 = vpop.permute.xlu0 %792
      %795 = vset.pattern.permute.xlu0 1
      %796 = vperm.xlu0 %795, %v338
      %v797 = vpop.permute.xlu0 %796
      %799 = vset.pattern.permute.xlu0 1
      %800 = vperm.xlu0 %799, %v339
      %v801 = vpop.permute.xlu0 %800
      %803 = vset.pattern.permute.xlu0 1
      %804 = vperm.xlu0 %803, %v340
      %v805 = vpop.permute.xlu0 %804
      %807 = vset.pattern.permute.xlu0 1
      %808 = vperm.xlu0 %807, %v341
      %v809 = vpop.permute.xlu0 %808
      %811 = vset.pattern.permute.xlu0 1
      %812 = vperm.xlu0 %811, %v342
      %v813 = vpop.permute.xlu0 %812
      %815 = vset.pattern.permute.xlu0 1
      %816 = vperm.xlu0 %815, %v343
      %v817 = vpop.permute.xlu0 %816
      %819 = vset.pattern.permute.xlu0 1
      %820 = vperm.xlu0 %819, %v344
      %v821 = vpop.permute.xlu0 %820
      %823 = vset.pattern.permute.xlu0 1
      %824 = vperm.xlu0 %823, %v345
      %v825 = vpop.permute.xlu0 %824
      %827 = vset.pattern.permute.xlu0 1
      %828 = vperm.xlu0 %827, %v346
      %v829 = vpop.permute.xlu0 %828
      %831 = vset.pattern.permute.xlu0 1
      %832 = vperm.xlu0 %831, %v347
      %v833 = vpop.permute.xlu0 %832
      %835 = vset.pattern.permute.xlu0 1
      %836 = vperm.xlu0 %835, %v348
      %v837 = vpop.permute.xlu0 %836
      %839 = vset.pattern.permute.xlu0 1
      %840 = vperm.xlu0 %839, %v349
      %v841 = vpop.permute.xlu0 %840
      %843 = vset.pattern.permute.xlu0 1
      %844 = vperm.xlu0 %843, %v350
      %v845 = vpop.permute.xlu0 %844
      %847 = vset.pattern.permute.xlu0 1
      %848 = vperm.xlu0 %847, %v351
      %v849 = vpop.permute.xlu0 %848
      %851 = vset.pattern.permute.xlu0 1
      %852 = vperm.xlu0 %851, %v352
      %v853 = vpop.permute.xlu0 %852
      %855 = vset.pattern.permute.xlu0 1
      %856 = vperm.xlu0 %855, %v353
      %v857 = vpop.permute.xlu0 %856
      %859 = vset.pattern.permute.xlu0 1
      %860 = vperm.xlu0 %859, %v354
      %v861 = vpop.permute.xlu0 %860
      %863 = vset.pattern.permute.xlu0 1
      %864 = vperm.xlu0 %863, %v355
      %v865 = vpop.permute.xlu0 %864
      %867 = vset.pattern.permute.xlu0 1
      %868 = vperm.xlu0 %867, %v356
      %v869 = vpop.permute.xlu0 %868
      %871 = vset.pattern.permute.xlu0 1
      %872 = vperm.xlu0 %871, %v357
      %v873 = vpop.permute.xlu0 %872
      %875 = vset.pattern.permute.xlu0 1
      %876 = vperm.xlu0 %875, %v358
      %v877 = vpop.permute.xlu0 %876
      %879 = vset.pattern.permute.xlu0 1
      %880 = vperm.xlu0 %879, %v359
      %v881 = vpop.permute.xlu0 %880
      %883 = vset.pattern.permute.xlu0 1
      %884 = vperm.xlu0 %883, %v360
      %v885 = vpop.permute.xlu0 %884
      %887 = vset.pattern.permute.xlu0 1
      %888 = vperm.xlu0 %887, %v361
      %v889 = vpop.permute.xlu0 %888
      %891 = vset.pattern.permute.xlu0 1
      %892 = vperm.xlu0 %891, %v362
      %v893 = vpop.permute.xlu0 %892
      %895 = vset.pattern.permute.xlu0 1
      %896 = vperm.xlu0 %895, %v363
      %v897 = vpop.permute.xlu0 %896
      %899 = vset.pattern.permute.xlu0 1
      %900 = vperm.xlu0 %899, %v364
      %v901 = vpop.permute.xlu0 %900
      %903 = vset.pattern.permute.xlu0 1
      %904 = vperm.xlu0 %903, %v365
      %v905 = vpop.permute.xlu0 %904
      %907 = vset.pattern.permute.xlu0 1
      %908 = vperm.xlu0 %907, %v366
      %v909 = vpop.permute.xlu0 %908
      %911 = vset.pattern.permute.xlu0 1
      %912 = vperm.xlu0 %911, %v367
      %v913 = vpop.permute.xlu0 %912
      %915 = vset.pattern.permute.xlu0 1
      %916 = vperm.xlu0 %915, %v368
      %v917 = vpop.permute.xlu0 %916
      %919 = vset.pattern.permute.xlu0 1
      %920 = vperm.xlu0 %919, %v369
      %v921 = vpop.permute.xlu0 %920
      %923 = vset.pattern.permute.xlu0 1
      %924 = vperm.xlu0 %923, %v370
      %v925 = vpop.permute.xlu0 %924
      %927 = vset.pattern.permute.xlu0 1
      %928 = vperm.xlu0 %927, %v371
      %v929 = vpop.permute.xlu0 %928
      %931 = vset.pattern.permute.xlu0 1
      %932 = vperm.xlu0 %931, %v372
      %v933 = vpop.permute.xlu0 %932
      %935 = vset.pattern.permute.xlu0 1
      %936 = vperm.xlu0 %935, %v373
      %v937 = vpop.permute.xlu0 %936
      %939 = vset.pattern.permute.xlu0 1
      %940 = vperm.xlu0 %939, %v374
      %v941 = vpop.permute.xlu0 %940
      %943 = vset.pattern.permute.xlu0 1
      %944 = vperm.xlu0 %943, %v375
      %v945 = vpop.permute.xlu0 %944
      %947 = vset.pattern.permute.xlu0 1
      %948 = vperm.xlu0 %947, %v376
      %v949 = vpop.permute.xlu0 %948
      %951 = vset.pattern.permute.xlu0 1
      %952 = vperm.xlu0 %951, %v377
      %v953 = vpop.permute.xlu0 %952
      %955 = vset.pattern.permute.xlu0 1
      %956 = vperm.xlu0 %955, %v378
      %v957 = vpop.permute.xlu0 %956
      %959 = vset.pattern.permute.xlu0 1
      %960 = vperm.xlu0 %959, %v379
      %v961 = vpop.permute.xlu0 %960
      %963 = vset.pattern.permute.xlu0 1
      %964 = vperm.xlu0 %963, %v380
      %v965 = vpop.permute.xlu0 %964
      %967 = vset.pattern.permute.xlu0 1
      %968 = vperm.xlu0 %967, %v381
      %v969 = vpop.permute.xlu0 %968
      %971 = vset.pattern.permute.xlu0 1
      %972 = vperm.xlu0 %971, %v382
      %v973 = vpop.permute.xlu0 %972
      %975 = vset.pattern.permute.xlu0 1
      %976 = vperm.xlu0 %975, %v383
      %v977 = vpop.permute.xlu0 %976
      %979 = vset.pattern.permute.xlu0 1
      %980 = vperm.xlu0 %979, %v384
      %v981 = vpop.permute.xlu0 %980
      %983 = vset.pattern.permute.xlu0 1
      %984 = vperm.xlu0 %983, %v385
      %v985 = vpop.permute.xlu0 %984
      %987 = vset.pattern.permute.xlu0 1
      %988 = vperm.xlu0 %987, %v386
      %v989 = vpop.permute.xlu0 %988
      %991 = vset.pattern.permute.xlu0 1
      %992 = vperm.xlu0 %991, %v387
      %v993 = vpop.permute.xlu0 %992
      %995 = vset.pattern.permute.xlu0 1
      %996 = vperm.xlu0 %995, %v388
      %v997 = vpop.permute.xlu0 %996
      %999 = vset.pattern.permute.xlu0 1
      %1000 = vperm.xlu0 %999, %v389
      %v1001 = vpop.permute.xlu0 %1000
      %1003 = vset.pattern.permute.xlu0 1
      %1004 = vperm.xlu0 %1003, %v390
      %v1005 = vpop.permute.xlu0 %1004
      %1007 = vset.pattern.permute.xlu0 1
      %1008 = vperm.xlu0 %1007, %v391
      %v1009 = vpop.permute.xlu0 %1008
      %1011 = vset.pattern.permute.xlu0 1
      %1012 = vperm.xlu0 %1011, %v392
      %v1013 = vpop.permute.xlu0 %1012
      %1015 = vset.pattern.permute.xlu0 1
      %1016 = vperm.xlu0 %1015, %v393
      %v1017 = vpop.permute.xlu0 %1016
      %1019 = vset.pattern.permute.xlu0 1
      %1020 = vperm.xlu0 %1019, %v394
      %v1021 = vpop.permute.xlu0 %1020
      %1023 = vset.pattern.permute.xlu0 1
      %1024 = vperm.xlu0 %1023, %v395
      %v1025 = vpop.permute.xlu0 %1024
      %1027 = vset.pattern.permute.xlu0 1
      %1028 = vperm.xlu0 %1027, %v396
      %v1029 = vpop.permute.xlu0 %1028
      %1031 = vset.pattern.permute.xlu0 1
      %1032 = vperm.xlu0 %1031, %v397
      %v1033 = vpop.permute.xlu0 %1032
      %1035 = vset.pattern.permute.xlu0 1
      %1036 = vperm.xlu0 %1035, %v398
      %v1037 = vpop.permute.xlu0 %1036
      %1039 = vset.pattern.permute.xlu0 1
      %1040 = vperm.xlu0 %1039, %v399
      %v1041 = vpop.permute.xlu0 %1040
      %1043 = vset.pattern.permute.xlu0 1
      %1044 = vperm.xlu0 %1043, %v400
      %v1045 = vpop.permute.xlu0 %1044
      %v1047 = vlaneseq
      %v1048 = vshrl.u32 %v1047, 7
      %v1049 = vsub.s32 1, %v1048
      %v1050 = vrot.slane %v402, %v1049
      %v1051 = vmul.f32 %v793, %v1050
      %v1052 = vmul.f32 %v797, %v1050
      %v1053 = vmul.f32 %v801, %v1050
      %v1054 = vmul.f32 %v805, %v1050
      %v1055 = vmul.f32 %v809, %v1050
      %v1056 = vmul.f32 %v813, %v1050
      %v1057 = vmul.f32 %v817, %v1050
      %v1058 = vmul.f32 %v821, %v1050
      %v1059 = vmul.f32 %v825, %v1050
      %v1060 = vmul.f32 %v829, %v1050
      %v1061 = vmul.f32 %v833, %v1050
      %v1062 = vmul.f32 %v837, %v1050
      %v1063 = vmul.f32 %v841, %v1050
      %v1064 = vmul.f32 %v845, %v1050
      %v1065 = vmul.f32 %v849, %v1050
      %v1066 = vmul.f32 %v853, %v1050
      %v1067 = vmul.f32 %v857, %v1050
      %v1068 = vmul.f32 %v861, %v1050
      %v1069 = vmul.f32 %v865, %v1050
      %v1070 = vmul.f32 %v869, %v1050
      %v1071 = vmul.f32 %v873, %v1050
      %v1072 = vmul.f32 %v877, %v1050
      %v1073 = vmul.f32 %v881, %v1050
      %v1074 = vmul.f32 %v885, %v1050
      %v1075 = vmul.f32 %v889, %v1050
      %v1076 = vmul.f32 %v893, %v1050
      %v1077 = vmul.f32 %v897, %v1050
      %v1078 = vmul.f32 %v901, %v1050
      %v1079 = vmul.f32 %v905, %v1050
      %v1080 = vmul.f32 %v909, %v1050
      %v1081 = vmul.f32 %v913, %v1050
      %v1082 = vmul.f32 %v917, %v1050
      %v1083 = vmul.f32 %v921, %v1050
      %v1084 = vmul.f32 %v925, %v1050
      %v1085 = vmul.f32 %v929, %v1050
      %v1086 = vmul.f32 %v933, %v1050
      %v1087 = vmul.f32 %v937, %v1050
      %v1088 = vmul.f32 %v941, %v1050
      %v1089 = vmul.f32 %v945, %v1050
      %v1090 = vmul.f32 %v949, %v1050
      %v1091 = vmul.f32 %v953, %v1050
      %v1092 = vmul.f32 %v957, %v1050
      %v1093 = vmul.f32 %v961, %v1050
      %v1094 = vmul.f32 %v965, %v1050
      %v1095 = vmul.f32 %v969, %v1050
      %v1096 = vmul.f32 %v973, %v1050
      %v1097 = vmul.f32 %v977, %v1050
      %v1098 = vmul.f32 %v981, %v1050
      %v1099 = vmul.f32 %v985, %v1050
      %v1100 = vmul.f32 %v989, %v1050
      %v1101 = vmul.f32 %v993, %v1050
      %v1102 = vmul.f32 %v997, %v1050
      %v1103 = vmul.f32 %v1001, %v1050
      %v1104 = vmul.f32 %v1005, %v1050
      %v1105 = vmul.f32 %v1009, %v1050
      %v1106 = vmul.f32 %v1013, %v1050
      %v1107 = vmul.f32 %v1017, %v1050
      %v1108 = vmul.f32 %v1021, %v1050
      %v1109 = vmul.f32 %v1025, %v1050
      %v1110 = vmul.f32 %v1029, %v1050
      %v1111 = vmul.f32 %v1033, %v1050
      %v1112 = vmul.f32 %v1037, %v1050
      %v1113 = vmul.f32 %v1041, %v1050
      %v1114 = vmul.f32 %v1045, %v1050
      %v1115 = vadd.f32 %v727, %v1051
      %v1116 = vadd.f32 %v728, %v1052
      %v1117 = vadd.f32 %v729, %v1053
      %v1118 = vadd.f32 %v730, %v1054
      %v1119 = vadd.f32 %v731, %v1055
      %v1120 = vadd.f32 %v732, %v1056
      %v1121 = vadd.f32 %v733, %v1057
      %v1122 = vadd.f32 %v734, %v1058
      %v1123 = vadd.f32 %v735, %v1059
      %v1124 = vadd.f32 %v736, %v1060
      %v1125 = vadd.f32 %v737, %v1061
      %v1126 = vadd.f32 %v738, %v1062
      %v1127 = vadd.f32 %v739, %v1063
      %v1128 = vadd.f32 %v740, %v1064
      %v1129 = vadd.f32 %v741, %v1065
      %v1130 = vadd.f32 %v742, %v1066
      %v1131 = vadd.f32 %v743, %v1067
      %v1132 = vadd.f32 %v744, %v1068
      %v1133 = vadd.f32 %v745, %v1069
      %v1134 = vadd.f32 %v746, %v1070
      %v1135 = vadd.f32 %v747, %v1071
      %v1136 = vadd.f32 %v748, %v1072
      %v1137 = vadd.f32 %v749, %v1073
      %v1138 = vadd.f32 %v750, %v1074
      %v1139 = vadd.f32 %v751, %v1075
      %v1140 = vadd.f32 %v752, %v1076
      %v1141 = vadd.f32 %v753, %v1077
      %v1142 = vadd.f32 %v754, %v1078
      %v1143 = vadd.f32 %v755, %v1079
      %v1144 = vadd.f32 %v756, %v1080
      %v1145 = vadd.f32 %v757, %v1081
      %v1146 = vadd.f32 %v758, %v1082
      %v1147 = vadd.f32 %v759, %v1083
      %v1148 = vadd.f32 %v760, %v1084
      %v1149 = vadd.f32 %v761, %v1085
      %v1150 = vadd.f32 %v762, %v1086
      %v1151 = vadd.f32 %v763, %v1087
      %v1152 = vadd.f32 %v764, %v1088
      %v1153 = vadd.f32 %v765, %v1089
      %v1154 = vadd.f32 %v766, %v1090
      %v1155 = vadd.f32 %v767, %v1091
      %v1156 = vadd.f32 %v768, %v1092
      %v1157 = vadd.f32 %v769, %v1093
      %v1158 = vadd.f32 %v770, %v1094
      %v1159 = vadd.f32 %v771, %v1095
      %v1160 = vadd.f32 %v772, %v1096
      %v1161 = vadd.f32 %v773, %v1097
      %v1162 = vadd.f32 %v774, %v1098
      %v1163 = vadd.f32 %v775, %v1099
      %v1164 = vadd.f32 %v776, %v1100
      %v1165 = vadd.f32 %v777, %v1101
      %v1166 = vadd.f32 %v778, %v1102
      %v1167 = vadd.f32 %v779, %v1103
      %v1168 = vadd.f32 %v780, %v1104
      %v1169 = vadd.f32 %v781, %v1105
      %v1170 = vadd.f32 %v782, %v1106
      %v1171 = vadd.f32 %v783, %v1107
      %v1172 = vadd.f32 %v784, %v1108
      %v1173 = vadd.f32 %v785, %v1109
      %v1174 = vadd.f32 %v786, %v1110
      %v1175 = vadd.f32 %v787, %v1111
      %v1176 = vadd.f32 %v788, %v1112
      %v1177 = vadd.f32 %v789, %v1113
      %v1178 = vadd.f32 %v790, %v1114
      %v1179 = vlaneseq
      %v1180 = vshrl.u32 %v1179, 7
      %v1181 = vsub.s32 2, %v1180
      %v1182 = vrot.slane %v402, %v1181
      %v1183 = vadd.f32 %v1115, %v1182
      %v1184 = vadd.f32 %v1116, %v1182
      %v1185 = vadd.f32 %v1117, %v1182
      %v1186 = vadd.f32 %v1118, %v1182
      %v1187 = vadd.f32 %v1119, %v1182
      %v1188 = vadd.f32 %v1120, %v1182
      %v1189 = vadd.f32 %v1121, %v1182
      %v1190 = vadd.f32 %v1122, %v1182
      %v1191 = vadd.f32 %v1123, %v1182
      %v1192 = vadd.f32 %v1124, %v1182
      %v1193 = vadd.f32 %v1125, %v1182
      %v1194 = vadd.f32 %v1126, %v1182
      %v1195 = vadd.f32 %v1127, %v1182
      %v1196 = vadd.f32 %v1128, %v1182
      %v1197 = vadd.f32 %v1129, %v1182
      %v1198 = vadd.f32 %v1130, %v1182
      %v1199 = vadd.f32 %v1131, %v1182
      %v1200 = vadd.f32 %v1132, %v1182
      %v1201 = vadd.f32 %v1133, %v1182
      %v1202 = vadd.f32 %v1134, %v1182
      %v1203 = vadd.f32 %v1135, %v1182
      %v1204 = vadd.f32 %v1136, %v1182
      %v1205 = vadd.f32 %v1137, %v1182
      %v1206 = vadd.f32 %v1138, %v1182
      %v1207 = vadd.f32 %v1139, %v1182
      %v1208 = vadd.f32 %v1140, %v1182
      %v1209 = vadd.f32 %v1141, %v1182
      %v1210 = vadd.f32 %v1142, %v1182
      %v1211 = vadd.f32 %v1143, %v1182
      %v1212 = vadd.f32 %v1144, %v1182
      %v1213 = vadd.f32 %v1145, %v1182
      %v1214 = vadd.f32 %v1146, %v1182
      %v1215 = vadd.f32 %v1147, %v1182
      %v1216 = vadd.f32 %v1148, %v1182
      %v1217 = vadd.f32 %v1149, %v1182
      %v1218 = vadd.f32 %v1150, %v1182
      %v1219 = vadd.f32 %v1151, %v1182
      %v1220 = vadd.f32 %v1152, %v1182
      %v1221 = vadd.f32 %v1153, %v1182
      %v1222 = vadd.f32 %v1154, %v1182
      %v1223 = vadd.f32 %v1155, %v1182
      %v1224 = vadd.f32 %v1156, %v1182
      %v1225 = vadd.f32 %v1157, %v1182
      %v1226 = vadd.f32 %v1158, %v1182
      %v1227 = vadd.f32 %v1159, %v1182
      %v1228 = vadd.f32 %v1160, %v1182
      %v1229 = vadd.f32 %v1161, %v1182
      %v1230 = vadd.f32 %v1162, %v1182
      %v1231 = vadd.f32 %v1163, %v1182
      %v1232 = vadd.f32 %v1164, %v1182
      %v1233 = vadd.f32 %v1165, %v1182
      %v1234 = vadd.f32 %v1166, %v1182
      %v1235 = vadd.f32 %v1167, %v1182
      %v1236 = vadd.f32 %v1168, %v1182
      %v1237 = vadd.f32 %v1169, %v1182
      %v1238 = vadd.f32 %v1170, %v1182
      %v1239 = vadd.f32 %v1171, %v1182
      %v1240 = vadd.f32 %v1172, %v1182
      %v1241 = vadd.f32 %v1173, %v1182
      %v1242 = vadd.f32 %v1174, %v1182
      %v1243 = vadd.f32 %v1175, %v1182
      %v1244 = vadd.f32 %v1176, %v1182
      %v1245 = vadd.f32 %v1177, %v1182
      %v1246 = vadd.f32 %v1178, %v1182
      %v1247 = vxor.u32 %v1183, 2147483648
      %v1248 = vxor.u32 %v1184, 2147483648
      %v1249 = vxor.u32 %v1185, 2147483648
      %v1250 = vxor.u32 %v1186, 2147483648
      %v1251 = vxor.u32 %v1187, 2147483648
      %v1252 = vxor.u32 %v1188, 2147483648
      %v1253 = vxor.u32 %v1189, 2147483648
      %v1254 = vxor.u32 %v1190, 2147483648
      %v1255 = vxor.u32 %v1191, 2147483648
      %v1256 = vxor.u32 %v1192, 2147483648
      %v1257 = vxor.u32 %v1193, 2147483648
      %v1258 = vxor.u32 %v1194, 2147483648
      %v1259 = vxor.u32 %v1195, 2147483648
      %v1260 = vxor.u32 %v1196, 2147483648
      %v1261 = vxor.u32 %v1197, 2147483648
      %v1262 = vxor.u32 %v1198, 2147483648
      %v1263 = vxor.u32 %v1199, 2147483648
      %v1264 = vxor.u32 %v1200, 2147483648
      %v1265 = vxor.u32 %v1201, 2147483648
      %v1266 = vxor.u32 %v1202, 2147483648
      %v1267 = vxor.u32 %v1203, 2147483648
      %v1268 = vxor.u32 %v1204, 2147483648
      %v1269 = vxor.u32 %v1205, 2147483648
      %v1270 = vxor.u32 %v1206, 2147483648
      %v1271 = vxor.u32 %v1207, 2147483648
      %v1272 = vxor.u32 %v1208, 2147483648
      %v1273 = vxor.u32 %v1209, 2147483648
      %v1274 = vxor.u32 %v1210, 2147483648
      %v1275 = vxor.u32 %v1211, 2147483648
      %v1276 = vxor.u32 %v1212, 2147483648
      %v1277 = vxor.u32 %v1213, 2147483648
      %v1278 = vxor.u32 %v1214, 2147483648
      %v1279 = vxor.u32 %v1215, 2147483648
      %v1280 = vxor.u32 %v1216, 2147483648
      %v1281 = vxor.u32 %v1217, 2147483648
      %v1282 = vxor.u32 %v1218, 2147483648
      %v1283 = vxor.u32 %v1219, 2147483648
      %v1284 = vxor.u32 %v1220, 2147483648
      %v1285 = vxor.u32 %v1221, 2147483648
      %v1286 = vxor.u32 %v1222, 2147483648
      %v1287 = vxor.u32 %v1223, 2147483648
      %v1288 = vxor.u32 %v1224, 2147483648
      %v1289 = vxor.u32 %v1225, 2147483648
      %v1290 = vxor.u32 %v1226, 2147483648
      %v1291 = vxor.u32 %v1227, 2147483648
      %v1292 = vxor.u32 %v1228, 2147483648
      %v1293 = vxor.u32 %v1229, 2147483648
      %v1294 = vxor.u32 %v1230, 2147483648
      %v1295 = vxor.u32 %v1231, 2147483648
      %v1296 = vxor.u32 %v1232, 2147483648
      %v1297 = vxor.u32 %v1233, 2147483648
      %v1298 = vxor.u32 %v1234, 2147483648
      %v1299 = vxor.u32 %v1235, 2147483648
      %v1300 = vxor.u32 %v1236, 2147483648
      %v1301 = vxor.u32 %v1237, 2147483648
      %v1302 = vxor.u32 %v1238, 2147483648
      %v1303 = vxor.u32 %v1239, 2147483648
      %v1304 = vxor.u32 %v1240, 2147483648
      %v1305 = vxor.u32 %v1241, 2147483648
      %v1306 = vxor.u32 %v1242, 2147483648
      %v1307 = vxor.u32 %v1243, 2147483648
      %v1308 = vxor.u32 %v1244, 2147483648
      %v1309 = vxor.u32 %v1245, 2147483648
      %v1310 = vxor.u32 %v1246, 2147483648
      %v1311 = vmul.f32 %v1247, 1.442695
      %v1312 = vpow.pop %v1311
      %v1313 = vmul.f32 %v1248, 1.442695
      %v1314 = vpow.pop %v1313
      %v1315 = vmul.f32 %v1249, 1.442695
      %v1316 = vpow.pop %v1315
      %v1317 = vmul.f32 %v1250, 1.442695
      %v1318 = vpow.pop %v1317
      %v1319 = vmul.f32 %v1251, 1.442695
      %v1320 = vpow.pop %v1319
      %v1321 = vmul.f32 %v1252, 1.442695
      %v1322 = vpow.pop %v1321
      %v1323 = vmul.f32 %v1253, 1.442695
      %v1324 = vpow.pop %v1323
      %v1325 = vmul.f32 %v1254, 1.442695
      %v1326 = vpow.pop %v1325
      %v1327 = vmul.f32 %v1255, 1.442695
      %v1328 = vpow.pop %v1327
      %v1329 = vmul.f32 %v1256, 1.442695
      %v1330 = vpow.pop %v1329
      %v1331 = vmul.f32 %v1257, 1.442695
      %v1332 = vpow.pop %v1331
      %v1333 = vmul.f32 %v1258, 1.442695
      %v1334 = vpow.pop %v1333
      %v1335 = vmul.f32 %v1259, 1.442695
      %v1336 = vpow.pop %v1335
      %v1337 = vmul.f32 %v1260, 1.442695
      %v1338 = vpow.pop %v1337
      %v1339 = vmul.f32 %v1261, 1.442695
      %v1340 = vpow.pop %v1339
      %v1341 = vmul.f32 %v1262, 1.442695
      %v1342 = vpow.pop %v1341
      %v1343 = vmul.f32 %v1263, 1.442695
      %v1344 = vpow.pop %v1343
      %v1345 = vmul.f32 %v1264, 1.442695
      %v1346 = vpow.pop %v1345
      %v1347 = vmul.f32 %v1265, 1.442695
      %v1348 = vpow.pop %v1347
      %v1349 = vmul.f32 %v1266, 1.442695
      %v1350 = vpow.pop %v1349
      %v1351 = vmul.f32 %v1267, 1.442695
      %v1352 = vpow.pop %v1351
      %v1353 = vmul.f32 %v1268, 1.442695
      %v1354 = vpow.pop %v1353
      %v1355 = vmul.f32 %v1269, 1.442695
      %v1356 = vpow.pop %v1355
      %v1357 = vmul.f32 %v1270, 1.442695
      %v1358 = vpow.pop %v1357
      %v1359 = vmul.f32 %v1271, 1.442695
      %v1360 = vpow.pop %v1359
      %v1361 = vmul.f32 %v1272, 1.442695
      %v1362 = vpow.pop %v1361
      %v1363 = vmul.f32 %v1273, 1.442695
      %v1364 = vpow.pop %v1363
      %v1365 = vmul.f32 %v1274, 1.442695
      %v1366 = vpow.pop %v1365
      %v1367 = vmul.f32 %v1275, 1.442695
      %v1368 = vpow.pop %v1367
      %v1369 = vmul.f32 %v1276, 1.442695
      %v1370 = vpow.pop %v1369
      %v1371 = vmul.f32 %v1277, 1.442695
      %v1372 = vpow.pop %v1371
      %v1373 = vmul.f32 %v1278, 1.442695
      %v1374 = vpow.pop %v1373
      %v1375 = vmul.f32 %v1279, 1.442695
      %v1376 = vpow.pop %v1375
      %v1377 = vmul.f32 %v1280, 1.442695
      %v1378 = vpow.pop %v1377
      %v1379 = vmul.f32 %v1281, 1.442695
      %v1380 = vpow.pop %v1379
      %v1381 = vmul.f32 %v1282, 1.442695
      %v1382 = vpow.pop %v1381
      %v1383 = vmul.f32 %v1283, 1.442695
      %v1384 = vpow.pop %v1383
      %v1385 = vmul.f32 %v1284, 1.442695
      %v1386 = vpow.pop %v1385
      %v1387 = vmul.f32 %v1285, 1.442695
      %v1388 = vpow.pop %v1387
      %v1389 = vmul.f32 %v1286, 1.442695
      %v1390 = vpow.pop %v1389
      %v1391 = vmul.f32 %v1287, 1.442695
      %v1392 = vpow.pop %v1391
      %v1393 = vmul.f32 %v1288, 1.442695
      %v1394 = vpow.pop %v1393
      %v1395 = vmul.f32 %v1289, 1.442695
      %v1396 = vpow.pop %v1395
      %v1397 = vmul.f32 %v1290, 1.442695
      %v1398 = vpow.pop %v1397
      %v1399 = vmul.f32 %v1291, 1.442695
      %v1400 = vpow.pop %v1399
      %v1401 = vmul.f32 %v1292, 1.442695
      %v1402 = vpow.pop %v1401
      %v1403 = vmul.f32 %v1293, 1.442695
      %v1404 = vpow.pop %v1403
      %v1405 = vmul.f32 %v1294, 1.442695
      %v1406 = vpow.pop %v1405
      %v1407 = vmul.f32 %v1295, 1.442695
      %v1408 = vpow.pop %v1407
      %v1409 = vmul.f32 %v1296, 1.442695
      %v1410 = vpow.pop %v1409
      %v1411 = vmul.f32 %v1297, 1.442695
      %v1412 = vpow.pop %v1411
      %v1413 = vmul.f32 %v1298, 1.442695
      %v1414 = vpow.pop %v1413
      %v1415 = vmul.f32 %v1299, 1.442695
      %v1416 = vpow.pop %v1415
      %v1417 = vmul.f32 %v1300, 1.442695
      %v1418 = vpow.pop %v1417
      %v1419 = vmul.f32 %v1301, 1.442695
      %v1420 = vpow.pop %v1419
      %v1421 = vmul.f32 %v1302, 1.442695
      %v1422 = vpow.pop %v1421
      %v1423 = vmul.f32 %v1303, 1.442695
      %v1424 = vpow.pop %v1423
      %v1425 = vmul.f32 %v1304, 1.442695
      %v1426 = vpow.pop %v1425
      %v1427 = vmul.f32 %v1305, 1.442695
      %v1428 = vpow.pop %v1427
      %v1429 = vmul.f32 %v1306, 1.442695
      %v1430 = vpow.pop %v1429
      %v1431 = vmul.f32 %v1307, 1.442695
      %v1432 = vpow.pop %v1431
      %v1433 = vmul.f32 %v1308, 1.442695
      %v1434 = vpow.pop %v1433
      %v1435 = vmul.f32 %v1309, 1.442695
      %v1436 = vpow.pop %v1435
      %v1437 = vmul.f32 %v1310, 1.442695
      %v1438 = vpow.pop %v1437
      %v1439 = vadd.f32 %v1312, 1.0
      %v1440 = vadd.f32 %v1314, 1.0
      %v1441 = vadd.f32 %v1316, 1.0
      %v1442 = vadd.f32 %v1318, 1.0
      %v1443 = vadd.f32 %v1320, 1.0
      %v1444 = vadd.f32 %v1322, 1.0
      %v1445 = vadd.f32 %v1324, 1.0
      %v1446 = vadd.f32 %v1326, 1.0
      %v1447 = vadd.f32 %v1328, 1.0
      %v1448 = vadd.f32 %v1330, 1.0
      %v1449 = vadd.f32 %v1332, 1.0
      %v1450 = vadd.f32 %v1334, 1.0
      %v1451 = vadd.f32 %v1336, 1.0
      %v1452 = vadd.f32 %v1338, 1.0
      %v1453 = vadd.f32 %v1340, 1.0
      %v1454 = vadd.f32 %v1342, 1.0
      %v1455 = vadd.f32 %v1344, 1.0
      %v1456 = vadd.f32 %v1346, 1.0
      %v1457 = vadd.f32 %v1348, 1.0
      %v1458 = vadd.f32 %v1350, 1.0
      %v1459 = vadd.f32 %v1352, 1.0
      %v1460 = vadd.f32 %v1354, 1.0
      %v1461 = vadd.f32 %v1356, 1.0
      %v1462 = vadd.f32 %v1358, 1.0
      %v1463 = vadd.f32 %v1360, 1.0
      %v1464 = vadd.f32 %v1362, 1.0
      %v1465 = vadd.f32 %v1364, 1.0
      %v1466 = vadd.f32 %v1366, 1.0
      %v1467 = vadd.f32 %v1368, 1.0
      %v1468 = vadd.f32 %v1370, 1.0
      %v1469 = vadd.f32 %v1372, 1.0
      %v1470 = vadd.f32 %v1374, 1.0
      %v1471 = vadd.f32 %v1376, 1.0
      %v1472 = vadd.f32 %v1378, 1.0
      %v1473 = vadd.f32 %v1380, 1.0
      %v1474 = vadd.f32 %v1382, 1.0
      %v1475 = vadd.f32 %v1384, 1.0
      %v1476 = vadd.f32 %v1386, 1.0
      %v1477 = vadd.f32 %v1388, 1.0
      %v1478 = vadd.f32 %v1390, 1.0
      %v1479 = vadd.f32 %v1392, 1.0
      %v1480 = vadd.f32 %v1394, 1.0
      %v1481 = vadd.f32 %v1396, 1.0
      %v1482 = vadd.f32 %v1398, 1.0
      %v1483 = vadd.f32 %v1400, 1.0
      %v1484 = vadd.f32 %v1402, 1.0
      %v1485 = vadd.f32 %v1404, 1.0
      %v1486 = vadd.f32 %v1406, 1.0
      %v1487 = vadd.f32 %v1408, 1.0
      %v1488 = vadd.f32 %v1410, 1.0
      %v1489 = vadd.f32 %v1412, 1.0
      %v1490 = vadd.f32 %v1414, 1.0
      %v1491 = vadd.f32 %v1416, 1.0
      %v1492 = vadd.f32 %v1418, 1.0
      %v1493 = vadd.f32 %v1420, 1.0
      %v1494 = vadd.f32 %v1422, 1.0
      %v1495 = vadd.f32 %v1424, 1.0
      %v1496 = vadd.f32 %v1426, 1.0
      %v1497 = vadd.f32 %v1428, 1.0
      %v1498 = vadd.f32 %v1430, 1.0
      %v1499 = vadd.f32 %v1432, 1.0
      %v1500 = vadd.f32 %v1434, 1.0
      %v1501 = vadd.f32 %v1436, 1.0
      %v1502 = vadd.f32 %v1438, 1.0
      %v1503 = vrcp.pop %v1439
      %v1504 = vmul.f32 1.0, %v1503
      %v1505 = vrcp.pop %v1440
      %v1506 = vmul.f32 1.0, %v1505
      %v1507 = vrcp.pop %v1441
      %v1508 = vmul.f32 1.0, %v1507
      %v1509 = vrcp.pop %v1442
      %v1510 = vmul.f32 1.0, %v1509
      %v1511 = vrcp.pop %v1443
      %v1512 = vmul.f32 1.0, %v1511
      %v1513 = vrcp.pop %v1444
      %v1514 = vmul.f32 1.0, %v1513
      %v1515 = vrcp.pop %v1445
      %v1516 = vmul.f32 1.0, %v1515
      %v1517 = vrcp.pop %v1446
      %v1518 = vmul.f32 1.0, %v1517
      %v1519 = vrcp.pop %v1447
      %v1520 = vmul.f32 1.0, %v1519
      %v1521 = vrcp.pop %v1448
      %v1522 = vmul.f32 1.0, %v1521
      %v1523 = vrcp.pop %v1449
      %v1524 = vmul.f32 1.0, %v1523
      %v1525 = vrcp.pop %v1450
      %v1526 = vmul.f32 1.0, %v1525
      %v1527 = vrcp.pop %v1451
      %v1528 = vmul.f32 1.0, %v1527
      %v1529 = vrcp.pop %v1452
      %v1530 = vmul.f32 1.0, %v1529
      %v1531 = vrcp.pop %v1453
      %v1532 = vmul.f32 1.0, %v1531
      %v1533 = vrcp.pop %v1454
      %v1534 = vmul.f32 1.0, %v1533
      %v1535 = vrcp.pop %v1455
      %v1536 = vmul.f32 1.0, %v1535
      %v1537 = vrcp.pop %v1456
      %v1538 = vmul.f32 1.0, %v1537
      %v1539 = vrcp.pop %v1457
      %v1540 = vmul.f32 1.0, %v1539
      %v1541 = vrcp.pop %v1458
      %v1542 = vmul.f32 1.0, %v1541
      %v1543 = vrcp.pop %v1459
      %v1544 = vmul.f32 1.0, %v1543
      %v1545 = vrcp.pop %v1460
      %v1546 = vmul.f32 1.0, %v1545
      %v1547 = vrcp.pop %v1461
      %v1548 = vmul.f32 1.0, %v1547
      %v1549 = vrcp.pop %v1462
      %v1550 = vmul.f32 1.0, %v1549
      %v1551 = vrcp.pop %v1463
      %v1552 = vmul.f32 1.0, %v1551
      %v1553 = vrcp.pop %v1464
      %v1554 = vmul.f32 1.0, %v1553
      %v1555 = vrcp.pop %v1465
      %v1556 = vmul.f32 1.0, %v1555
      %v1557 = vrcp.pop %v1466
      %v1558 = vmul.f32 1.0, %v1557
      %v1559 = vrcp.pop %v1467
      %v1560 = vmul.f32 1.0, %v1559
      %v1561 = vrcp.pop %v1468
      %v1562 = vmul.f32 1.0, %v1561
      %v1563 = vrcp.pop %v1469
      %v1564 = vmul.f32 1.0, %v1563
      %v1565 = vrcp.pop %v1470
      %v1566 = vmul.f32 1.0, %v1565
      %v1567 = vrcp.pop %v1471
      %v1568 = vmul.f32 1.0, %v1567
      %v1569 = vrcp.pop %v1472
      %v1570 = vmul.f32 1.0, %v1569
      %v1571 = vrcp.pop %v1473
      %v1572 = vmul.f32 1.0, %v1571
      %v1573 = vrcp.pop %v1474
      %v1574 = vmul.f32 1.0, %v1573
      %v1575 = vrcp.pop %v1475
      %v1576 = vmul.f32 1.0, %v1575
      %v1577 = vrcp.pop %v1476
      %v1578 = vmul.f32 1.0, %v1577
      %v1579 = vrcp.pop %v1477
      %v1580 = vmul.f32 1.0, %v1579
      %v1581 = vrcp.pop %v1478
      %v1582 = vmul.f32 1.0, %v1581
      %v1583 = vrcp.pop %v1479
      %v1584 = vmul.f32 1.0, %v1583
      %v1585 = vrcp.pop %v1480
      %v1586 = vmul.f32 1.0, %v1585
      %v1587 = vrcp.pop %v1481
      %v1588 = vmul.f32 1.0, %v1587
      %v1589 = vrcp.pop %v1482
      %v1590 = vmul.f32 1.0, %v1589
      %v1591 = vrcp.pop %v1483
      %v1592 = vmul.f32 1.0, %v1591
      %v1593 = vrcp.pop %v1484
      %v1594 = vmul.f32 1.0, %v1593
      %v1595 = vrcp.pop %v1485
      %v1596 = vmul.f32 1.0, %v1595
      %v1597 = vrcp.pop %v1486
      %v1598 = vmul.f32 1.0, %v1597
      %v1599 = vrcp.pop %v1487
      %v1600 = vmul.f32 1.0, %v1599
      %v1601 = vrcp.pop %v1488
      %v1602 = vmul.f32 1.0, %v1601
      %v1603 = vrcp.pop %v1489
      %v1604 = vmul.f32 1.0, %v1603
      %v1605 = vrcp.pop %v1490
      %v1606 = vmul.f32 1.0, %v1605
      %v1607 = vrcp.pop %v1491
      %v1608 = vmul.f32 1.0, %v1607
      %v1609 = vrcp.pop %v1492
      %v1610 = vmul.f32 1.0, %v1609
      %v1611 = vrcp.pop %v1493
      %v1612 = vmul.f32 1.0, %v1611
      %v1613 = vrcp.pop %v1494
      %v1614 = vmul.f32 1.0, %v1613
      %v1615 = vrcp.pop %v1495
      %v1616 = vmul.f32 1.0, %v1615
      %v1617 = vrcp.pop %v1496
      %v1618 = vmul.f32 1.0, %v1617
      %v1619 = vrcp.pop %v1497
      %v1620 = vmul.f32 1.0, %v1619
      %v1621 = vrcp.pop %v1498
      %v1622 = vmul.f32 1.0, %v1621
      %v1623 = vrcp.pop %v1499
      %v1624 = vmul.f32 1.0, %v1623
      %v1625 = vrcp.pop %v1500
      %v1626 = vmul.f32 1.0, %v1625
      %v1627 = vrcp.pop %v1501
      %v1628 = vmul.f32 1.0, %v1627
      %v1629 = vrcp.pop %v1502
      %v1630 = vmul.f32 1.0, %v1629
      %1695 = vrot.lane.b32.xlu0 %v1504, 124
      %v1696 = vpop.permute.xlu0 %1695
      %1697 = vrot.lane.b32.xlu0 %v1506, 124
      %v1698 = vpop.permute.xlu0 %1697
      %1699 = vrot.lane.b32.xlu0 %v1508, 124
      %v1700 = vpop.permute.xlu0 %1699
      %1701 = vrot.lane.b32.xlu0 %v1510, 124
      %v1702 = vpop.permute.xlu0 %1701
      %1703 = vrot.lane.b32.xlu0 %v1512, 124
      %v1704 = vpop.permute.xlu0 %1703
      %1705 = vrot.lane.b32.xlu0 %v1514, 124
      %v1706 = vpop.permute.xlu0 %1705
      %1707 = vrot.lane.b32.xlu0 %v1516, 124
      %v1708 = vpop.permute.xlu0 %1707
      %1709 = vrot.lane.b32.xlu0 %v1518, 124
      %v1710 = vpop.permute.xlu0 %1709
      %1711 = vrot.lane.b32.xlu0 %v1520, 124
      %v1712 = vpop.permute.xlu0 %1711
      %1713 = vrot.lane.b32.xlu0 %v1522, 124
      %v1714 = vpop.permute.xlu0 %1713
      %1715 = vrot.lane.b32.xlu0 %v1524, 124
      %v1716 = vpop.permute.xlu0 %1715
      %1717 = vrot.lane.b32.xlu0 %v1526, 124
      %v1718 = vpop.permute.xlu0 %1717
      %1719 = vrot.lane.b32.xlu0 %v1528, 124
      %v1720 = vpop.permute.xlu0 %1719
      %1721 = vrot.lane.b32.xlu0 %v1530, 124
      %v1722 = vpop.permute.xlu0 %1721
      %1723 = vrot.lane.b32.xlu0 %v1532, 124
      %v1724 = vpop.permute.xlu0 %1723
      %1725 = vrot.lane.b32.xlu0 %v1534, 124
      %v1726 = vpop.permute.xlu0 %1725
      %1727 = vrot.lane.b32.xlu0 %v1536, 124
      %v1728 = vpop.permute.xlu0 %1727
      %1729 = vrot.lane.b32.xlu0 %v1538, 124
      %v1730 = vpop.permute.xlu0 %1729
      %1731 = vrot.lane.b32.xlu0 %v1540, 124
      %v1732 = vpop.permute.xlu0 %1731
      %1733 = vrot.lane.b32.xlu0 %v1542, 124
      %v1734 = vpop.permute.xlu0 %1733
      %1735 = vrot.lane.b32.xlu0 %v1544, 124
      %v1736 = vpop.permute.xlu0 %1735
      %1737 = vrot.lane.b32.xlu0 %v1546, 124
      %v1738 = vpop.permute.xlu0 %1737
      %1739 = vrot.lane.b32.xlu0 %v1548, 124
      %v1740 = vpop.permute.xlu0 %1739
      %1741 = vrot.lane.b32.xlu0 %v1550, 124
      %v1742 = vpop.permute.xlu0 %1741
      %1743 = vrot.lane.b32.xlu0 %v1552, 124
      %v1744 = vpop.permute.xlu0 %1743
      %1745 = vrot.lane.b32.xlu0 %v1554, 124
      %v1746 = vpop.permute.xlu0 %1745
      %1747 = vrot.lane.b32.xlu0 %v1556, 124
      %v1748 = vpop.permute.xlu0 %1747
      %1749 = vrot.lane.b32.xlu0 %v1558, 124
      %v1750 = vpop.permute.xlu0 %1749
      %1751 = vrot.lane.b32.xlu0 %v1560, 124
      %v1752 = vpop.permute.xlu0 %1751
      %1753 = vrot.lane.b32.xlu0 %v1562, 124
      %v1754 = vpop.permute.xlu0 %1753
      %1755 = vrot.lane.b32.xlu0 %v1564, 124
      %v1756 = vpop.permute.xlu0 %1755
      %1757 = vrot.lane.b32.xlu0 %v1566, 124
      %v1758 = vpop.permute.xlu0 %1757
      %1759 = vrot.lane.b32.xlu0 %v1568, 124
      %v1760 = vpop.permute.xlu0 %1759
      %1761 = vrot.lane.b32.xlu0 %v1570, 124
      %v1762 = vpop.permute.xlu0 %1761
      %1763 = vrot.lane.b32.xlu0 %v1572, 124
      %v1764 = vpop.permute.xlu0 %1763
      %1765 = vrot.lane.b32.xlu0 %v1574, 124
      %v1766 = vpop.permute.xlu0 %1765
      %1767 = vrot.lane.b32.xlu0 %v1576, 124
      %v1768 = vpop.permute.xlu0 %1767
      %1769 = vrot.lane.b32.xlu0 %v1578, 124
      %v1770 = vpop.permute.xlu0 %1769
      %1771 = vrot.lane.b32.xlu0 %v1580, 124
      %v1772 = vpop.permute.xlu0 %1771
      %1773 = vrot.lane.b32.xlu0 %v1582, 124
      %v1774 = vpop.permute.xlu0 %1773
      %1775 = vrot.lane.b32.xlu0 %v1584, 124
      %v1776 = vpop.permute.xlu0 %1775
      %1777 = vrot.lane.b32.xlu0 %v1586, 124
      %v1778 = vpop.permute.xlu0 %1777
      %1779 = vrot.lane.b32.xlu0 %v1588, 124
      %v1780 = vpop.permute.xlu0 %1779
      %1781 = vrot.lane.b32.xlu0 %v1590, 124
      %v1782 = vpop.permute.xlu0 %1781
      %1783 = vrot.lane.b32.xlu0 %v1592, 124
      %v1784 = vpop.permute.xlu0 %1783
      %1785 = vrot.lane.b32.xlu0 %v1594, 124
      %v1786 = vpop.permute.xlu0 %1785
      %1787 = vrot.lane.b32.xlu0 %v1596, 124
      %v1788 = vpop.permute.xlu0 %1787
      %1789 = vrot.lane.b32.xlu0 %v1598, 124
      %v1790 = vpop.permute.xlu0 %1789
      %1791 = vrot.lane.b32.xlu0 %v1600, 124
      %v1792 = vpop.permute.xlu0 %1791
      %1793 = vrot.lane.b32.xlu0 %v1602, 124
      %v1794 = vpop.permute.xlu0 %1793
      %1795 = vrot.lane.b32.xlu0 %v1604, 124
      %v1796 = vpop.permute.xlu0 %1795
      %1797 = vrot.lane.b32.xlu0 %v1606, 124
      %v1798 = vpop.permute.xlu0 %1797
      %1799 = vrot.lane.b32.xlu0 %v1608, 124
      %v1800 = vpop.permute.xlu0 %1799
      %1801 = vrot.lane.b32.xlu0 %v1610, 124
      %v1802 = vpop.permute.xlu0 %1801
      %1803 = vrot.lane.b32.xlu0 %v1612, 124
      %v1804 = vpop.permute.xlu0 %1803
      %1805 = vrot.lane.b32.xlu0 %v1614, 124
      %v1806 = vpop.permute.xlu0 %1805
      %1807 = vrot.lane.b32.xlu0 %v1616, 124
      %v1808 = vpop.permute.xlu0 %1807
      %1809 = vrot.lane.b32.xlu0 %v1618, 124
      %v1810 = vpop.permute.xlu0 %1809
      %1811 = vrot.lane.b32.xlu0 %v1620, 124
      %v1812 = vpop.permute.xlu0 %1811
      %1813 = vrot.lane.b32.xlu0 %v1622, 124
      %v1814 = vpop.permute.xlu0 %1813
      %1815 = vrot.lane.b32.xlu0 %v1624, 124
      %v1816 = vpop.permute.xlu0 %1815
      %1817 = vrot.lane.b32.xlu0 %v1626, 124
      %v1818 = vpop.permute.xlu0 %1817
      %1819 = vrot.lane.b32.xlu0 %v1628, 124
      %v1820 = vpop.permute.xlu0 %1819
      %1821 = vrot.lane.b32.xlu0 %v1630, 124
      %v1822 = vpop.permute.xlu0 %1821
      %v1887 = vmul.f32 %v1504, %v1696
      %v1888 = vmul.f32 %v1506, %v1698
      %v1889 = vmul.f32 %v1508, %v1700
      %v1890 = vmul.f32 %v1510, %v1702
      %v1891 = vmul.f32 %v1512, %v1704
      %v1892 = vmul.f32 %v1514, %v1706
      %v1893 = vmul.f32 %v1516, %v1708
      %v1894 = vmul.f32 %v1518, %v1710
      %v1895 = vmul.f32 %v1520, %v1712
      %v1896 = vmul.f32 %v1522, %v1714
      %v1897 = vmul.f32 %v1524, %v1716
      %v1898 = vmul.f32 %v1526, %v1718
      %v1899 = vmul.f32 %v1528, %v1720
      %v1900 = vmul.f32 %v1530, %v1722
      %v1901 = vmul.f32 %v1532, %v1724
      %v1902 = vmul.f32 %v1534, %v1726
      %v1903 = vmul.f32 %v1536, %v1728
      %v1904 = vmul.f32 %v1538, %v1730
      %v1905 = vmul.f32 %v1540, %v1732
      %v1906 = vmul.f32 %v1542, %v1734
      %v1907 = vmul.f32 %v1544, %v1736
      %v1908 = vmul.f32 %v1546, %v1738
      %v1909 = vmul.f32 %v1548, %v1740
      %v1910 = vmul.f32 %v1550, %v1742
      %v1911 = vmul.f32 %v1552, %v1744
      %v1912 = vmul.f32 %v1554, %v1746
      %v1913 = vmul.f32 %v1556, %v1748
      %v1914 = vmul.f32 %v1558, %v1750
      %v1915 = vmul.f32 %v1560, %v1752
      %v1916 = vmul.f32 %v1562, %v1754
      %v1917 = vmul.f32 %v1564, %v1756
      %v1918 = vmul.f32 %v1566, %v1758
      %v1919 = vmul.f32 %v1568, %v1760
      %v1920 = vmul.f32 %v1570, %v1762
      %v1921 = vmul.f32 %v1572, %v1764
      %v1922 = vmul.f32 %v1574, %v1766
      %v1923 = vmul.f32 %v1576, %v1768
      %v1924 = vmul.f32 %v1578, %v1770
      %v1925 = vmul.f32 %v1580, %v1772
      %v1926 = vmul.f32 %v1582, %v1774
      %v1927 = vmul.f32 %v1584, %v1776
      %v1928 = vmul.f32 %v1586, %v1778
      %v1929 = vmul.f32 %v1588, %v1780
      %v1930 = vmul.f32 %v1590, %v1782
      %v1931 = vmul.f32 %v1592, %v1784
      %v1932 = vmul.f32 %v1594, %v1786
      %v1933 = vmul.f32 %v1596, %v1788
      %v1934 = vmul.f32 %v1598, %v1790
      %v1935 = vmul.f32 %v1600, %v1792
      %v1936 = vmul.f32 %v1602, %v1794
      %v1937 = vmul.f32 %v1604, %v1796
      %v1938 = vmul.f32 %v1606, %v1798
      %v1939 = vmul.f32 %v1608, %v1800
      %v1940 = vmul.f32 %v1610, %v1802
      %v1941 = vmul.f32 %v1612, %v1804
      %v1942 = vmul.f32 %v1614, %v1806
      %v1943 = vmul.f32 %v1616, %v1808
      %v1944 = vmul.f32 %v1618, %v1810
      %v1945 = vmul.f32 %v1620, %v1812
      %v1946 = vmul.f32 %v1622, %v1814
      %v1947 = vmul.f32 %v1624, %v1816
      %v1948 = vmul.f32 %v1626, %v1818
      %v1949 = vmul.f32 %v1628, %v1820
      %v1950 = vmul.f32 %v1630, %v1822
      %1951 = vrot.lane.b32.xlu0 %v1504, 120
      %v1952 = vpop.permute.xlu0 %1951
      %1953 = vrot.lane.b32.xlu0 %v1506, 120
      %v1954 = vpop.permute.xlu0 %1953
      %1955 = vrot.lane.b32.xlu0 %v1508, 120
      %v1956 = vpop.permute.xlu0 %1955
      %1957 = vrot.lane.b32.xlu0 %v1510, 120
      %v1958 = vpop.permute.xlu0 %1957
      %1959 = vrot.lane.b32.xlu0 %v1512, 120
      %v1960 = vpop.permute.xlu0 %1959
      %1961 = vrot.lane.b32.xlu0 %v1514, 120
      %v1962 = vpop.permute.xlu0 %1961
      %1963 = vrot.lane.b32.xlu0 %v1516, 120
      %v1964 = vpop.permute.xlu0 %1963
      %1965 = vrot.lane.b32.xlu0 %v1518, 120
      %v1966 = vpop.permute.xlu0 %1965
      %1967 = vrot.lane.b32.xlu0 %v1520, 120
      %v1968 = vpop.permute.xlu0 %1967
      %1969 = vrot.lane.b32.xlu0 %v1522, 120
      %v1970 = vpop.permute.xlu0 %1969
      %1971 = vrot.lane.b32.xlu0 %v1524, 120
      %v1972 = vpop.permute.xlu0 %1971
      %1973 = vrot.lane.b32.xlu0 %v1526, 120
      %v1974 = vpop.permute.xlu0 %1973
      %1975 = vrot.lane.b32.xlu0 %v1528, 120
      %v1976 = vpop.permute.xlu0 %1975
      %1977 = vrot.lane.b32.xlu0 %v1530, 120
      %v1978 = vpop.permute.xlu0 %1977
      %1979 = vrot.lane.b32.xlu0 %v1532, 120
      %v1980 = vpop.permute.xlu0 %1979
      %1981 = vrot.lane.b32.xlu0 %v1534, 120
      %v1982 = vpop.permute.xlu0 %1981
      %1983 = vrot.lane.b32.xlu0 %v1536, 120
      %v1984 = vpop.permute.xlu0 %1983
      %1985 = vrot.lane.b32.xlu0 %v1538, 120
      %v1986 = vpop.permute.xlu0 %1985
      %1987 = vrot.lane.b32.xlu0 %v1540, 120
      %v1988 = vpop.permute.xlu0 %1987
      %1989 = vrot.lane.b32.xlu0 %v1542, 120
      %v1990 = vpop.permute.xlu0 %1989
      %1991 = vrot.lane.b32.xlu0 %v1544, 120
      %v1992 = vpop.permute.xlu0 %1991
      %1993 = vrot.lane.b32.xlu0 %v1546, 120
      %v1994 = vpop.permute.xlu0 %1993
      %1995 = vrot.lane.b32.xlu0 %v1548, 120
      %v1996 = vpop.permute.xlu0 %1995
      %1997 = vrot.lane.b32.xlu0 %v1550, 120
      %v1998 = vpop.permute.xlu0 %1997
      %1999 = vrot.lane.b32.xlu0 %v1552, 120
      %v2000 = vpop.permute.xlu0 %1999
      %2001 = vrot.lane.b32.xlu0 %v1554, 120
      %v2002 = vpop.permute.xlu0 %2001
      %2003 = vrot.lane.b32.xlu0 %v1556, 120
      %v2004 = vpop.permute.xlu0 %2003
      %2005 = vrot.lane.b32.xlu0 %v1558, 120
      %v2006 = vpop.permute.xlu0 %2005
      %2007 = vrot.lane.b32.xlu0 %v1560, 120
      %v2008 = vpop.permute.xlu0 %2007
      %2009 = vrot.lane.b32.xlu0 %v1562, 120
      %v2010 = vpop.permute.xlu0 %2009
      %2011 = vrot.lane.b32.xlu0 %v1564, 120
      %v2012 = vpop.permute.xlu0 %2011
      %2013 = vrot.lane.b32.xlu0 %v1566, 120
      %v2014 = vpop.permute.xlu0 %2013
      %2015 = vrot.lane.b32.xlu0 %v1568, 120
      %v2016 = vpop.permute.xlu0 %2015
      %2017 = vrot.lane.b32.xlu0 %v1570, 120
      %v2018 = vpop.permute.xlu0 %2017
      %2019 = vrot.lane.b32.xlu0 %v1572, 120
      %v2020 = vpop.permute.xlu0 %2019
      %2021 = vrot.lane.b32.xlu0 %v1574, 120
      %v2022 = vpop.permute.xlu0 %2021
      %2023 = vrot.lane.b32.xlu0 %v1576, 120
      %v2024 = vpop.permute.xlu0 %2023
      %2025 = vrot.lane.b32.xlu0 %v1578, 120
      %v2026 = vpop.permute.xlu0 %2025
      %2027 = vrot.lane.b32.xlu0 %v1580, 120
      %v2028 = vpop.permute.xlu0 %2027
      %2029 = vrot.lane.b32.xlu0 %v1582, 120
      %v2030 = vpop.permute.xlu0 %2029
      %2031 = vrot.lane.b32.xlu0 %v1584, 120
      %v2032 = vpop.permute.xlu0 %2031
      %2033 = vrot.lane.b32.xlu0 %v1586, 120
      %v2034 = vpop.permute.xlu0 %2033
      %2035 = vrot.lane.b32.xlu0 %v1588, 120
      %v2036 = vpop.permute.xlu0 %2035
      %2037 = vrot.lane.b32.xlu0 %v1590, 120
      %v2038 = vpop.permute.xlu0 %2037
      %2039 = vrot.lane.b32.xlu0 %v1592, 120
      %v2040 = vpop.permute.xlu0 %2039
      %2041 = vrot.lane.b32.xlu0 %v1594, 120
      %v2042 = vpop.permute.xlu0 %2041
      %2043 = vrot.lane.b32.xlu0 %v1596, 120
      %v2044 = vpop.permute.xlu0 %2043
      %2045 = vrot.lane.b32.xlu0 %v1598, 120
      %v2046 = vpop.permute.xlu0 %2045
      %2047 = vrot.lane.b32.xlu0 %v1600, 120
      %v2048 = vpop.permute.xlu0 %2047
      %2049 = vrot.lane.b32.xlu0 %v1602, 120
      %v2050 = vpop.permute.xlu0 %2049
      %2051 = vrot.lane.b32.xlu0 %v1604, 120
      %v2052 = vpop.permute.xlu0 %2051
      %2053 = vrot.lane.b32.xlu0 %v1606, 120
      %v2054 = vpop.permute.xlu0 %2053
      %2055 = vrot.lane.b32.xlu0 %v1608, 120
      %v2056 = vpop.permute.xlu0 %2055
      %2057 = vrot.lane.b32.xlu0 %v1610, 120
      %v2058 = vpop.permute.xlu0 %2057
      %2059 = vrot.lane.b32.xlu0 %v1612, 120
      %v2060 = vpop.permute.xlu0 %2059
      %2061 = vrot.lane.b32.xlu0 %v1614, 120
      %v2062 = vpop.permute.xlu0 %2061
      %2063 = vrot.lane.b32.xlu0 %v1616, 120
      %v2064 = vpop.permute.xlu0 %2063
      %2065 = vrot.lane.b32.xlu0 %v1618, 120
      %v2066 = vpop.permute.xlu0 %2065
      %2067 = vrot.lane.b32.xlu0 %v1620, 120
      %v2068 = vpop.permute.xlu0 %2067
      %2069 = vrot.lane.b32.xlu0 %v1622, 120
      %v2070 = vpop.permute.xlu0 %2069
      %2071 = vrot.lane.b32.xlu0 %v1624, 120
      %v2072 = vpop.permute.xlu0 %2071
      %2073 = vrot.lane.b32.xlu0 %v1626, 120
      %v2074 = vpop.permute.xlu0 %2073
      %2075 = vrot.lane.b32.xlu0 %v1628, 120
      %v2076 = vpop.permute.xlu0 %2075
      %2077 = vrot.lane.b32.xlu0 %v1630, 120
      %v2078 = vpop.permute.xlu0 %2077
      %v2143 = vmul.f32 %v1887, %v1952
      %v2144 = vmul.f32 %v1888, %v1954
      %v2145 = vmul.f32 %v1889, %v1956
      %v2146 = vmul.f32 %v1890, %v1958
      %v2147 = vmul.f32 %v1891, %v1960
      %v2148 = vmul.f32 %v1892, %v1962
      %v2149 = vmul.f32 %v1893, %v1964
      %v2150 = vmul.f32 %v1894, %v1966
      %v2151 = vmul.f32 %v1895, %v1968
      %v2152 = vmul.f32 %v1896, %v1970
      %v2153 = vmul.f32 %v1897, %v1972
      %v2154 = vmul.f32 %v1898, %v1974
      %v2155 = vmul.f32 %v1899, %v1976
      %v2156 = vmul.f32 %v1900, %v1978
      %v2157 = vmul.f32 %v1901, %v1980
      %v2158 = vmul.f32 %v1902, %v1982
      %v2159 = vmul.f32 %v1903, %v1984
      %v2160 = vmul.f32 %v1904, %v1986
      %v2161 = vmul.f32 %v1905, %v1988
      %v2162 = vmul.f32 %v1906, %v1990
      %v2163 = vmul.f32 %v1907, %v1992
      %v2164 = vmul.f32 %v1908, %v1994
      %v2165 = vmul.f32 %v1909, %v1996
      %v2166 = vmul.f32 %v1910, %v1998
      %v2167 = vmul.f32 %v1911, %v2000
      %v2168 = vmul.f32 %v1912, %v2002
      %v2169 = vmul.f32 %v1913, %v2004
      %v2170 = vmul.f32 %v1914, %v2006
      %v2171 = vmul.f32 %v1915, %v2008
      %v2172 = vmul.f32 %v1916, %v2010
      %v2173 = vmul.f32 %v1917, %v2012
      %v2174 = vmul.f32 %v1918, %v2014
      %v2175 = vmul.f32 %v1919, %v2016
      %v2176 = vmul.f32 %v1920, %v2018
      %v2177 = vmul.f32 %v1921, %v2020
      %v2178 = vmul.f32 %v1922, %v2022
      %v2179 = vmul.f32 %v1923, %v2024
      %v2180 = vmul.f32 %v1924, %v2026
      %v2181 = vmul.f32 %v1925, %v2028
      %v2182 = vmul.f32 %v1926, %v2030
      %v2183 = vmul.f32 %v1927, %v2032
      %v2184 = vmul.f32 %v1928, %v2034
      %v2185 = vmul.f32 %v1929, %v2036
      %v2186 = vmul.f32 %v1930, %v2038
      %v2187 = vmul.f32 %v1931, %v2040
      %v2188 = vmul.f32 %v1932, %v2042
      %v2189 = vmul.f32 %v1933, %v2044
      %v2190 = vmul.f32 %v1934, %v2046
      %v2191 = vmul.f32 %v1935, %v2048
      %v2192 = vmul.f32 %v1936, %v2050
      %v2193 = vmul.f32 %v1937, %v2052
      %v2194 = vmul.f32 %v1938, %v2054
      %v2195 = vmul.f32 %v1939, %v2056
      %v2196 = vmul.f32 %v1940, %v2058
      %v2197 = vmul.f32 %v1941, %v2060
      %v2198 = vmul.f32 %v1942, %v2062
      %v2199 = vmul.f32 %v1943, %v2064
      %v2200 = vmul.f32 %v1944, %v2066
      %v2201 = vmul.f32 %v1945, %v2068
      %v2202 = vmul.f32 %v1946, %v2070
      %v2203 = vmul.f32 %v1947, %v2072
      %v2204 = vmul.f32 %v1948, %v2074
      %v2205 = vmul.f32 %v1949, %v2076
      %v2206 = vmul.f32 %v1950, %v2078
      %2207 = vrot.lane.b32.xlu0 %v1504, 116
      %v2208 = vpop.permute.xlu0 %2207
      %2209 = vrot.lane.b32.xlu0 %v1506, 116
      %v2210 = vpop.permute.xlu0 %2209
      %2211 = vrot.lane.b32.xlu0 %v1508, 116
      %v2212 = vpop.permute.xlu0 %2211
      %2213 = vrot.lane.b32.xlu0 %v1510, 116
      %v2214 = vpop.permute.xlu0 %2213
      %2215 = vrot.lane.b32.xlu0 %v1512, 116
      %v2216 = vpop.permute.xlu0 %2215
      %2217 = vrot.lane.b32.xlu0 %v1514, 116
      %v2218 = vpop.permute.xlu0 %2217
      %2219 = vrot.lane.b32.xlu0 %v1516, 116
      %v2220 = vpop.permute.xlu0 %2219
      %2221 = vrot.lane.b32.xlu0 %v1518, 116
      %v2222 = vpop.permute.xlu0 %2221
      %2223 = vrot.lane.b32.xlu0 %v1520, 116
      %v2224 = vpop.permute.xlu0 %2223
      %2225 = vrot.lane.b32.xlu0 %v1522, 116
      %v2226 = vpop.permute.xlu0 %2225
      %2227 = vrot.lane.b32.xlu0 %v1524, 116
      %v2228 = vpop.permute.xlu0 %2227
      %2229 = vrot.lane.b32.xlu0 %v1526, 116
      %v2230 = vpop.permute.xlu0 %2229
      %2231 = vrot.lane.b32.xlu0 %v1528, 116
      %v2232 = vpop.permute.xlu0 %2231
      %2233 = vrot.lane.b32.xlu0 %v1530, 116
      %v2234 = vpop.permute.xlu0 %2233
      %2235 = vrot.lane.b32.xlu0 %v1532, 116
      %v2236 = vpop.permute.xlu0 %2235
      %2237 = vrot.lane.b32.xlu0 %v1534, 116
      %v2238 = vpop.permute.xlu0 %2237
      %2239 = vrot.lane.b32.xlu0 %v1536, 116
      %v2240 = vpop.permute.xlu0 %2239
      %2241 = vrot.lane.b32.xlu0 %v1538, 116
      %v2242 = vpop.permute.xlu0 %2241
      %2243 = vrot.lane.b32.xlu0 %v1540, 116
      %v2244 = vpop.permute.xlu0 %2243
      %2245 = vrot.lane.b32.xlu0 %v1542, 116
      %v2246 = vpop.permute.xlu0 %2245
      %2247 = vrot.lane.b32.xlu0 %v1544, 116
      %v2248 = vpop.permute.xlu0 %2247
      %2249 = vrot.lane.b32.xlu0 %v1546, 116
      %v2250 = vpop.permute.xlu0 %2249
      %2251 = vrot.lane.b32.xlu0 %v1548, 116
      %v2252 = vpop.permute.xlu0 %2251
      %2253 = vrot.lane.b32.xlu0 %v1550, 116
      %v2254 = vpop.permute.xlu0 %2253
      %2255 = vrot.lane.b32.xlu0 %v1552, 116
      %v2256 = vpop.permute.xlu0 %2255
      %2257 = vrot.lane.b32.xlu0 %v1554, 116
      %v2258 = vpop.permute.xlu0 %2257
      %2259 = vrot.lane.b32.xlu0 %v1556, 116
      %v2260 = vpop.permute.xlu0 %2259
      %2261 = vrot.lane.b32.xlu0 %v1558, 116
      %v2262 = vpop.permute.xlu0 %2261
      %2263 = vrot.lane.b32.xlu0 %v1560, 116
      %v2264 = vpop.permute.xlu0 %2263
      %2265 = vrot.lane.b32.xlu0 %v1562, 116
      %v2266 = vpop.permute.xlu0 %2265
      %2267 = vrot.lane.b32.xlu0 %v1564, 116
      %v2268 = vpop.permute.xlu0 %2267
      %2269 = vrot.lane.b32.xlu0 %v1566, 116
      %v2270 = vpop.permute.xlu0 %2269
      %2271 = vrot.lane.b32.xlu0 %v1568, 116
      %v2272 = vpop.permute.xlu0 %2271
      %2273 = vrot.lane.b32.xlu0 %v1570, 116
      %v2274 = vpop.permute.xlu0 %2273
      %2275 = vrot.lane.b32.xlu0 %v1572, 116
      %v2276 = vpop.permute.xlu0 %2275
      %2277 = vrot.lane.b32.xlu0 %v1574, 116
      %v2278 = vpop.permute.xlu0 %2277
      %2279 = vrot.lane.b32.xlu0 %v1576, 116
      %v2280 = vpop.permute.xlu0 %2279
      %2281 = vrot.lane.b32.xlu0 %v1578, 116
      %v2282 = vpop.permute.xlu0 %2281
      %2283 = vrot.lane.b32.xlu0 %v1580, 116
      %v2284 = vpop.permute.xlu0 %2283
      %2285 = vrot.lane.b32.xlu0 %v1582, 116
      %v2286 = vpop.permute.xlu0 %2285
      %2287 = vrot.lane.b32.xlu0 %v1584, 116
      %v2288 = vpop.permute.xlu0 %2287
      %2289 = vrot.lane.b32.xlu0 %v1586, 116
      %v2290 = vpop.permute.xlu0 %2289
      %2291 = vrot.lane.b32.xlu0 %v1588, 116
      %v2292 = vpop.permute.xlu0 %2291
      %2293 = vrot.lane.b32.xlu0 %v1590, 116
      %v2294 = vpop.permute.xlu0 %2293
      %2295 = vrot.lane.b32.xlu0 %v1592, 116
      %v2296 = vpop.permute.xlu0 %2295
      %2297 = vrot.lane.b32.xlu0 %v1594, 116
      %v2298 = vpop.permute.xlu0 %2297
      %2299 = vrot.lane.b32.xlu0 %v1596, 116
      %v2300 = vpop.permute.xlu0 %2299
      %2301 = vrot.lane.b32.xlu0 %v1598, 116
      %v2302 = vpop.permute.xlu0 %2301
      %2303 = vrot.lane.b32.xlu0 %v1600, 116
      %v2304 = vpop.permute.xlu0 %2303
      %2305 = vrot.lane.b32.xlu0 %v1602, 116
      %v2306 = vpop.permute.xlu0 %2305
      %2307 = vrot.lane.b32.xlu0 %v1604, 116
      %v2308 = vpop.permute.xlu0 %2307
      %2309 = vrot.lane.b32.xlu0 %v1606, 116
      %v2310 = vpop.permute.xlu0 %2309
      %2311 = vrot.lane.b32.xlu0 %v1608, 116
      %v2312 = vpop.permute.xlu0 %2311
      %2313 = vrot.lane.b32.xlu0 %v1610, 116
      %v2314 = vpop.permute.xlu0 %2313
      %2315 = vrot.lane.b32.xlu0 %v1612, 116
      %v2316 = vpop.permute.xlu0 %2315
      %2317 = vrot.lane.b32.xlu0 %v1614, 116
      %v2318 = vpop.permute.xlu0 %2317
      %2319 = vrot.lane.b32.xlu0 %v1616, 116
      %v2320 = vpop.permute.xlu0 %2319
      %2321 = vrot.lane.b32.xlu0 %v1618, 116
      %v2322 = vpop.permute.xlu0 %2321
      %2323 = vrot.lane.b32.xlu0 %v1620, 116
      %v2324 = vpop.permute.xlu0 %2323
      %2325 = vrot.lane.b32.xlu0 %v1622, 116
      %v2326 = vpop.permute.xlu0 %2325
      %2327 = vrot.lane.b32.xlu0 %v1624, 116
      %v2328 = vpop.permute.xlu0 %2327
      %2329 = vrot.lane.b32.xlu0 %v1626, 116
      %v2330 = vpop.permute.xlu0 %2329
      %2331 = vrot.lane.b32.xlu0 %v1628, 116
      %v2332 = vpop.permute.xlu0 %2331
      %2333 = vrot.lane.b32.xlu0 %v1630, 116
      %v2334 = vpop.permute.xlu0 %2333
      %v2399 = vmul.f32 %v2143, %v2208
      %v2400 = vmul.f32 %v2144, %v2210
      %v2401 = vmul.f32 %v2145, %v2212
      %v2402 = vmul.f32 %v2146, %v2214
      %v2403 = vmul.f32 %v2147, %v2216
      %v2404 = vmul.f32 %v2148, %v2218
      %v2405 = vmul.f32 %v2149, %v2220
      %v2406 = vmul.f32 %v2150, %v2222
      %v2407 = vmul.f32 %v2151, %v2224
      %v2408 = vmul.f32 %v2152, %v2226
      %v2409 = vmul.f32 %v2153, %v2228
      %v2410 = vmul.f32 %v2154, %v2230
      %v2411 = vmul.f32 %v2155, %v2232
      %v2412 = vmul.f32 %v2156, %v2234
      %v2413 = vmul.f32 %v2157, %v2236
      %v2414 = vmul.f32 %v2158, %v2238
      %v2415 = vmul.f32 %v2159, %v2240
      %v2416 = vmul.f32 %v2160, %v2242
      %v2417 = vmul.f32 %v2161, %v2244
      %v2418 = vmul.f32 %v2162, %v2246
      %v2419 = vmul.f32 %v2163, %v2248
      %v2420 = vmul.f32 %v2164, %v2250
      %v2421 = vmul.f32 %v2165, %v2252
      %v2422 = vmul.f32 %v2166, %v2254
      %v2423 = vmul.f32 %v2167, %v2256
      %v2424 = vmul.f32 %v2168, %v2258
      %v2425 = vmul.f32 %v2169, %v2260
      %v2426 = vmul.f32 %v2170, %v2262
      %v2427 = vmul.f32 %v2171, %v2264
      %v2428 = vmul.f32 %v2172, %v2266
      %v2429 = vmul.f32 %v2173, %v2268
      %v2430 = vmul.f32 %v2174, %v2270
      %v2431 = vmul.f32 %v2175, %v2272
      %v2432 = vmul.f32 %v2176, %v2274
      %v2433 = vmul.f32 %v2177, %v2276
      %v2434 = vmul.f32 %v2178, %v2278
      %v2435 = vmul.f32 %v2179, %v2280
      %v2436 = vmul.f32 %v2180, %v2282
      %v2437 = vmul.f32 %v2181, %v2284
      %v2438 = vmul.f32 %v2182, %v2286
      %v2439 = vmul.f32 %v2183, %v2288
      %v2440 = vmul.f32 %v2184, %v2290
      %v2441 = vmul.f32 %v2185, %v2292
      %v2442 = vmul.f32 %v2186, %v2294
      %v2443 = vmul.f32 %v2187, %v2296
      %v2444 = vmul.f32 %v2188, %v2298
      %v2445 = vmul.f32 %v2189, %v2300
      %v2446 = vmul.f32 %v2190, %v2302
      %v2447 = vmul.f32 %v2191, %v2304
      %v2448 = vmul.f32 %v2192, %v2306
      %v2449 = vmul.f32 %v2193, %v2308
      %v2450 = vmul.f32 %v2194, %v2310
      %v2451 = vmul.f32 %v2195, %v2312
      %v2452 = vmul.f32 %v2196, %v2314
      %v2453 = vmul.f32 %v2197, %v2316
      %v2454 = vmul.f32 %v2198, %v2318
      %v2455 = vmul.f32 %v2199, %v2320
      %v2456 = vmul.f32 %v2200, %v2322
      %v2457 = vmul.f32 %v2201, %v2324
      %v2458 = vmul.f32 %v2202, %v2326
      %v2459 = vmul.f32 %v2203, %v2328
      %v2460 = vmul.f32 %v2204, %v2330
      %v2461 = vmul.f32 %v2205, %v2332
      %v2462 = vmul.f32 %v2206, %v2334
      %vm2463 = vcmask 31744
      %v2465 = vsel %vm2463, %v2399, 0
      %v2468 = vsel %vm2463, %v2400, 0
      %v2471 = vsel %vm2463, %v2401, 0
      %v2474 = vsel %vm2463, %v2402, 0
      %v2477 = vsel %vm2463, %v2403, 0
      %v2480 = vsel %vm2463, %v2404, 0
      %v2483 = vsel %vm2463, %v2405, 0
      %v2486 = vsel %vm2463, %v2406, 0
      %v2489 = vsel %vm2463, %v2407, 0
      %v2492 = vsel %vm2463, %v2408, 0
      %v2495 = vsel %vm2463, %v2409, 0
      %v2498 = vsel %vm2463, %v2410, 0
      %v2501 = vsel %vm2463, %v2411, 0
      %v2504 = vsel %vm2463, %v2412, 0
      %v2507 = vsel %vm2463, %v2413, 0
      %v2510 = vsel %vm2463, %v2414, 0
      %v2513 = vsel %vm2463, %v2415, 0
      %v2516 = vsel %vm2463, %v2416, 0
      %v2519 = vsel %vm2463, %v2417, 0
      %v2522 = vsel %vm2463, %v2418, 0
      %v2525 = vsel %vm2463, %v2419, 0
      %v2528 = vsel %vm2463, %v2420, 0
      %v2531 = vsel %vm2463, %v2421, 0
      %v2534 = vsel %vm2463, %v2422, 0
      %v2537 = vsel %vm2463, %v2423, 0
      %v2540 = vsel %vm2463, %v2424, 0
      %v2543 = vsel %vm2463, %v2425, 0
      %v2546 = vsel %vm2463, %v2426, 0
      %v2549 = vsel %vm2463, %v2427, 0
      %v2552 = vsel %vm2463, %v2428, 0
      %v2555 = vsel %vm2463, %v2429, 0
      %v2558 = vsel %vm2463, %v2430, 0
      %v2561 = vsel %vm2463, %v2431, 0
      %v2564 = vsel %vm2463, %v2432, 0
      %v2567 = vsel %vm2463, %v2433, 0
      %v2570 = vsel %vm2463, %v2434, 0
      %v2573 = vsel %vm2463, %v2435, 0
      %v2576 = vsel %vm2463, %v2436, 0
      %v2579 = vsel %vm2463, %v2437, 0
      %v2582 = vsel %vm2463, %v2438, 0
      %v2585 = vsel %vm2463, %v2439, 0
      %v2588 = vsel %vm2463, %v2440, 0
      %v2591 = vsel %vm2463, %v2441, 0
      %v2594 = vsel %vm2463, %v2442, 0
      %v2597 = vsel %vm2463, %v2443, 0
      %v2600 = vsel %vm2463, %v2444, 0
      %v2603 = vsel %vm2463, %v2445, 0
      %v2606 = vsel %vm2463, %v2446, 0
      %v2609 = vsel %vm2463, %v2447, 0
      %v2612 = vsel %vm2463, %v2448, 0
      %v2615 = vsel %vm2463, %v2449, 0
      %v2618 = vsel %vm2463, %v2450, 0
      %v2621 = vsel %vm2463, %v2451, 0
      %v2624 = vsel %vm2463, %v2452, 0
      %v2627 = vsel %vm2463, %v2453, 0
      %v2630 = vsel %vm2463, %v2454, 0
      %v2633 = vsel %vm2463, %v2455, 0
      %v2636 = vsel %vm2463, %v2456, 0
      %v2639 = vsel %vm2463, %v2457, 0
      %v2642 = vsel %vm2463, %v2458, 0
      %v2645 = vsel %vm2463, %v2459, 0
      %v2648 = vsel %vm2463, %v2460, 0
      %v2651 = vsel %vm2463, %v2461, 0
      %v2654 = vsel %vm2463, %v2462, 0
      %vm2656 = vcmask 1043456
      %v2658 = vsel %vm2656, %v401, 0
      %2660 = vmatprep.subr.mxu0 0.0
      %2661 = vmatpush1.msra.mxu0 0.0
      %2662 = vmatprep.subr.mxu0 0.0
      %2663 = vmatpush1.msra.mxu0 0.0
      %2664 = vmatprep.subr.mxu0 0.0
      %2665 = vmatpush1.msra.mxu0 0.0
      %2666 = vmatprep.subr.mxu0 0.0
      %2667 = vmatpush1.msra.mxu0 0.0
      %2668 = vmatprep.subr.mxu0 0.0
      %2669 = vmatpush1.msra.mxu0 0.0
      %2670 = vmatprep.subr.mxu0 0.0
      %2671 = vmatpush1.msra.mxu0 0.0
      %2672 = vmatprep.subr.mxu0 0.0
      %2673 = vmatpush1.msra.mxu0 0.0
      %2674 = vmatprep.subr.mxu0 0.0
      %2675 = vmatpush1.msra.mxu0 0.0
      %2676 = vmatprep.subr.mxu0 0.0
      %2677 = vmatpush1.msra.mxu0 0.0
      %2678 = vmatprep.subr.mxu0 0.0
      %2679 = vmatpush1.msra.mxu0 0.0
      %2680 = vmatprep.subr.mxu0 0.0
      %2681 = vmatpush1.msra.mxu0 0.0
      %2682 = vmatprep.subr.mxu0 0.0
      %2683 = vmatpush1.msra.mxu0 0.0
      %2684 = vmatprep.subr.mxu0 0.0
      %2685 = vmatpush1.msra.mxu0 0.0
      %2686 = vmatprep.subr.mxu0 0.0
      %2687 = vmatpush1.msra.mxu0 0.0
      %2688 = vmatprep.subr.mxu0 0.0
      %2689 = vmatpush1.msra.mxu0 0.0
      %2690 = vmatprep.subr.mxu0 0.0
      %2691 = vmatpush1.msra.mxu0 %v2658
      %2692 = vmatprep.subr.mxu0 0.0
      %2693 = vmatpush2.msra.mxu0 0.0
      %2694 = vmatprep.subr.mxu0 0.0
      %2695 = vmatpush2.msra.mxu0 0.0
      %2696 = vmatprep.subr.mxu0 0.0
      %2697 = vmatpush2.msra.mxu0 0.0
      %2698 = vmatprep.subr.mxu0 0.0
      %2699 = vmatpush2.msra.mxu0 0.0
      %2700 = vmatprep.subr.mxu0 0.0
      %2701 = vmatpush2.msra.mxu0 0.0
      %2702 = vmatprep.subr.mxu0 0.0
      %2703 = vmatpush2.msra.mxu0 0.0
      %2704 = vmatprep.subr.mxu0 0.0
      %2705 = vmatpush2.msra.mxu0 0.0
      %2706 = vmatprep.subr.mxu0 0.0
      %2707 = vmatpush2.msra.mxu0 0.0
      %2708 = vmatprep.subr.mxu0 0.0
      %2709 = vmatpush2.msra.mxu0 0.0
      %2710 = vmatprep.subr.mxu0 0.0
      %2711 = vmatpush2.msra.mxu0 0.0
      %2712 = vmatprep.subr.mxu0 0.0
      %2713 = vmatpush2.msra.mxu0 0.0
      %2714 = vmatprep.subr.mxu0 0.0
      %2715 = vmatpush2.msra.mxu0 0.0
      %2716 = vmatprep.subr.mxu0 0.0
      %2717 = vmatpush2.msra.mxu0 0.0
      %2718 = vmatprep.subr.mxu0 0.0
      %2719 = vmatpush2.msra.mxu0 0.0
      %2720 = vmatprep.subr.mxu0 0.0
      %2721 = vmatpush2.msra.mxu0 0.0
      %2722 = vmatprep.subr.mxu0 0.0
      %2723 = vmatpush2.msra.mxu0 0.0
      %2724 = vmatprep.mubr.f32.mxu0 0.0
      %2725 = vmatmul.mubr.f32.gmra.mxu0 %v2465
      %v2726 = vpop.f32.mrf.mxu0
      %v2727 = vadd.f32 0.0, %v2726
      %v2728 = vpop.f32.mrf.mxu0
      %2729 = vmatprep.mubr.f32.mxu0 0.0
      %2730 = vmatmul.mubr.f32.gmra.mxu0 %v2468
      %v2731 = vpop.f32.mrf.mxu0
      %v2732 = vadd.f32 0.0, %v2731
      %v2733 = vpop.f32.mrf.mxu0
      %2734 = vmatprep.mubr.f32.mxu0 0.0
      %2735 = vmatmul.mubr.f32.gmra.mxu0 %v2471
      %v2736 = vpop.f32.mrf.mxu0
      %v2737 = vadd.f32 0.0, %v2736
      %v2738 = vpop.f32.mrf.mxu0
      %2739 = vmatprep.mubr.f32.mxu0 0.0
      %2740 = vmatmul.mubr.f32.gmra.mxu0 %v2474
      %v2741 = vpop.f32.mrf.mxu0
      %v2742 = vadd.f32 0.0, %v2741
      %v2743 = vpop.f32.mrf.mxu0
      %2744 = vmatprep.mubr.f32.mxu0 0.0
      %2745 = vmatmul.mubr.f32.gmra.mxu0 %v2477
      %v2746 = vpop.f32.mrf.mxu0
      %v2747 = vadd.f32 0.0, %v2746
      %v2748 = vpop.f32.mrf.mxu0
      %2749 = vmatprep.mubr.f32.mxu0 0.0
      %2750 = vmatmul.mubr.f32.gmra.mxu0 %v2480
      %v2751 = vpop.f32.mrf.mxu0
      %v2752 = vadd.f32 0.0, %v2751
      %v2753 = vpop.f32.mrf.mxu0
      %2754 = vmatprep.mubr.f32.mxu0 0.0
      %2755 = vmatmul.mubr.f32.gmra.mxu0 %v2483
      %v2756 = vpop.f32.mrf.mxu0
      %v2757 = vadd.f32 0.0, %v2756
      %v2758 = vpop.f32.mrf.mxu0
      %2759 = vmatprep.mubr.f32.mxu0 0.0
      %2760 = vmatmul.mubr.f32.gmra.mxu0 %v2486
      %v2761 = vpop.f32.mrf.mxu0
      %v2762 = vadd.f32 0.0, %v2761
      %v2763 = vpop.f32.mrf.mxu0
      %2764 = vmatprep.mubr.f32.mxu0 0.0
      %2765 = vmatmul.mubr.f32.gmra.mxu0 %v2489
      %v2766 = vpop.f32.mrf.mxu0
      %v2767 = vadd.f32 0.0, %v2766
      %v2768 = vpop.f32.mrf.mxu0
      %2769 = vmatprep.mubr.f32.mxu0 0.0
      %2770 = vmatmul.mubr.f32.gmra.mxu0 %v2492
      %v2771 = vpop.f32.mrf.mxu0
      %v2772 = vadd.f32 0.0, %v2771
      %v2773 = vpop.f32.mrf.mxu0
      %2774 = vmatprep.mubr.f32.mxu0 0.0
      %2775 = vmatmul.mubr.f32.gmra.mxu0 %v2495
      %v2776 = vpop.f32.mrf.mxu0
      %v2777 = vadd.f32 0.0, %v2776
      %v2778 = vpop.f32.mrf.mxu0
      %2779 = vmatprep.mubr.f32.mxu0 0.0
      %2780 = vmatmul.mubr.f32.gmra.mxu0 %v2498
      %v2781 = vpop.f32.mrf.mxu0
      %v2782 = vadd.f32 0.0, %v2781
      %v2783 = vpop.f32.mrf.mxu0
      %2784 = vmatprep.mubr.f32.mxu0 0.0
      %2785 = vmatmul.mubr.f32.gmra.mxu0 %v2501
      %v2786 = vpop.f32.mrf.mxu0
      %v2787 = vadd.f32 0.0, %v2786
      %v2788 = vpop.f32.mrf.mxu0
      %2789 = vmatprep.mubr.f32.mxu0 0.0
      %2790 = vmatmul.mubr.f32.gmra.mxu0 %v2504
      %v2791 = vpop.f32.mrf.mxu0
      %v2792 = vadd.f32 0.0, %v2791
      %v2793 = vpop.f32.mrf.mxu0
      %2794 = vmatprep.mubr.f32.mxu0 0.0
      %2795 = vmatmul.mubr.f32.gmra.mxu0 %v2507
      %v2796 = vpop.f32.mrf.mxu0
      %v2797 = vadd.f32 0.0, %v2796
      %v2798 = vpop.f32.mrf.mxu0
      %2799 = vmatprep.mubr.f32.mxu0 0.0
      %2800 = vmatmul.mubr.f32.gmra.mxu0 %v2510
      %v2801 = vpop.f32.mrf.mxu0
      %v2802 = vadd.f32 0.0, %v2801
      %v2803 = vpop.f32.mrf.mxu0
      %2804 = vmatprep.mubr.f32.mxu0 0.0
      %2805 = vmatmul.mubr.f32.gmra.mxu0 %v2513
      %v2806 = vpop.f32.mrf.mxu0
      %v2807 = vadd.f32 0.0, %v2806
      %v2808 = vpop.f32.mrf.mxu0
      %2809 = vmatprep.mubr.f32.mxu0 0.0
      %2810 = vmatmul.mubr.f32.gmra.mxu0 %v2516
      %v2811 = vpop.f32.mrf.mxu0
      %v2812 = vadd.f32 0.0, %v2811
      %v2813 = vpop.f32.mrf.mxu0
      %2814 = vmatprep.mubr.f32.mxu0 0.0
      %2815 = vmatmul.mubr.f32.gmra.mxu0 %v2519
      %v2816 = vpop.f32.mrf.mxu0
      %v2817 = vadd.f32 0.0, %v2816
      %v2818 = vpop.f32.mrf.mxu0
      %2819 = vmatprep.mubr.f32.mxu0 0.0
      %2820 = vmatmul.mubr.f32.gmra.mxu0 %v2522
      %v2821 = vpop.f32.mrf.mxu0
      %v2822 = vadd.f32 0.0, %v2821
      %v2823 = vpop.f32.mrf.mxu0
      %2824 = vmatprep.mubr.f32.mxu0 0.0
      %2825 = vmatmul.mubr.f32.gmra.mxu0 %v2525
      %v2826 = vpop.f32.mrf.mxu0
      %v2827 = vadd.f32 0.0, %v2826
      %v2828 = vpop.f32.mrf.mxu0
      %2829 = vmatprep.mubr.f32.mxu0 0.0
      %2830 = vmatmul.mubr.f32.gmra.mxu0 %v2528
      %v2831 = vpop.f32.mrf.mxu0
      %v2832 = vadd.f32 0.0, %v2831
      %v2833 = vpop.f32.mrf.mxu0
      %2834 = vmatprep.mubr.f32.mxu0 0.0
      %2835 = vmatmul.mubr.f32.gmra.mxu0 %v2531
      %v2836 = vpop.f32.mrf.mxu0
      %v2837 = vadd.f32 0.0, %v2836
      %v2838 = vpop.f32.mrf.mxu0
      %2839 = vmatprep.mubr.f32.mxu0 0.0
      %2840 = vmatmul.mubr.f32.gmra.mxu0 %v2534
      %v2841 = vpop.f32.mrf.mxu0
      %v2842 = vadd.f32 0.0, %v2841
      %v2843 = vpop.f32.mrf.mxu0
      %2844 = vmatprep.mubr.f32.mxu0 0.0
      %2845 = vmatmul.mubr.f32.gmra.mxu0 %v2537
      %v2846 = vpop.f32.mrf.mxu0
      %v2847 = vadd.f32 0.0, %v2846
      %v2848 = vpop.f32.mrf.mxu0
      %2849 = vmatprep.mubr.f32.mxu0 0.0
      %2850 = vmatmul.mubr.f32.gmra.mxu0 %v2540
      %v2851 = vpop.f32.mrf.mxu0
      %v2852 = vadd.f32 0.0, %v2851
      %v2853 = vpop.f32.mrf.mxu0
      %2854 = vmatprep.mubr.f32.mxu0 0.0
      %2855 = vmatmul.mubr.f32.gmra.mxu0 %v2543
      %v2856 = vpop.f32.mrf.mxu0
      %v2857 = vadd.f32 0.0, %v2856
      %v2858 = vpop.f32.mrf.mxu0
      %2859 = vmatprep.mubr.f32.mxu0 0.0
      %2860 = vmatmul.mubr.f32.gmra.mxu0 %v2546
      %v2861 = vpop.f32.mrf.mxu0
      %v2862 = vadd.f32 0.0, %v2861
      %v2863 = vpop.f32.mrf.mxu0
      %2864 = vmatprep.mubr.f32.mxu0 0.0
      %2865 = vmatmul.mubr.f32.gmra.mxu0 %v2549
      %v2866 = vpop.f32.mrf.mxu0
      %v2867 = vadd.f32 0.0, %v2866
      %v2868 = vpop.f32.mrf.mxu0
      %2869 = vmatprep.mubr.f32.mxu0 0.0
      %2870 = vmatmul.mubr.f32.gmra.mxu0 %v2552
      %v2871 = vpop.f32.mrf.mxu0
      %v2872 = vadd.f32 0.0, %v2871
      %v2873 = vpop.f32.mrf.mxu0
      %2874 = vmatprep.mubr.f32.mxu0 0.0
      %2875 = vmatmul.mubr.f32.gmra.mxu0 %v2555
      %v2876 = vpop.f32.mrf.mxu0
      %v2877 = vadd.f32 0.0, %v2876
      %v2878 = vpop.f32.mrf.mxu0
      %2879 = vmatprep.mubr.f32.mxu0 0.0
      %2880 = vmatmul.mubr.f32.gmra.mxu0 %v2558
      %v2881 = vpop.f32.mrf.mxu0
      %v2882 = vadd.f32 0.0, %v2881
      %v2883 = vpop.f32.mrf.mxu0
      %2884 = vmatprep.mubr.f32.mxu0 0.0
      %2885 = vmatmul.mubr.f32.gmra.mxu0 %v2561
      %v2886 = vpop.f32.mrf.mxu0
      %v2887 = vadd.f32 0.0, %v2886
      %v2888 = vpop.f32.mrf.mxu0
      %2889 = vmatprep.mubr.f32.mxu0 0.0
      %2890 = vmatmul.mubr.f32.gmra.mxu0 %v2564
      %v2891 = vpop.f32.mrf.mxu0
      %v2892 = vadd.f32 0.0, %v2891
      %v2893 = vpop.f32.mrf.mxu0
      %2894 = vmatprep.mubr.f32.mxu0 0.0
      %2895 = vmatmul.mubr.f32.gmra.mxu0 %v2567
      %v2896 = vpop.f32.mrf.mxu0
      %v2897 = vadd.f32 0.0, %v2896
      %v2898 = vpop.f32.mrf.mxu0
      %2899 = vmatprep.mubr.f32.mxu0 0.0
      %2900 = vmatmul.mubr.f32.gmra.mxu0 %v2570
      %v2901 = vpop.f32.mrf.mxu0
      %v2902 = vadd.f32 0.0, %v2901
      %v2903 = vpop.f32.mrf.mxu0
      %2904 = vmatprep.mubr.f32.mxu0 0.0
      %2905 = vmatmul.mubr.f32.gmra.mxu0 %v2573
      %v2906 = vpop.f32.mrf.mxu0
      %v2907 = vadd.f32 0.0, %v2906
      %v2908 = vpop.f32.mrf.mxu0
      %2909 = vmatprep.mubr.f32.mxu0 0.0
      %2910 = vmatmul.mubr.f32.gmra.mxu0 %v2576
      %v2911 = vpop.f32.mrf.mxu0
      %v2912 = vadd.f32 0.0, %v2911
      %v2913 = vpop.f32.mrf.mxu0
      %2914 = vmatprep.mubr.f32.mxu0 0.0
      %2915 = vmatmul.mubr.f32.gmra.mxu0 %v2579
      %v2916 = vpop.f32.mrf.mxu0
      %v2917 = vadd.f32 0.0, %v2916
      %v2918 = vpop.f32.mrf.mxu0
      %2919 = vmatprep.mubr.f32.mxu0 0.0
      %2920 = vmatmul.mubr.f32.gmra.mxu0 %v2582
      %v2921 = vpop.f32.mrf.mxu0
      %v2922 = vadd.f32 0.0, %v2921
      %v2923 = vpop.f32.mrf.mxu0
      %2924 = vmatprep.mubr.f32.mxu0 0.0
      %2925 = vmatmul.mubr.f32.gmra.mxu0 %v2585
      %v2926 = vpop.f32.mrf.mxu0
      %v2927 = vadd.f32 0.0, %v2926
      %v2928 = vpop.f32.mrf.mxu0
      %2929 = vmatprep.mubr.f32.mxu0 0.0
      %2930 = vmatmul.mubr.f32.gmra.mxu0 %v2588
      %v2931 = vpop.f32.mrf.mxu0
      %v2932 = vadd.f32 0.0, %v2931
      %v2933 = vpop.f32.mrf.mxu0
      %2934 = vmatprep.mubr.f32.mxu0 0.0
      %2935 = vmatmul.mubr.f32.gmra.mxu0 %v2591
      %v2936 = vpop.f32.mrf.mxu0
      %v2937 = vadd.f32 0.0, %v2936
      %v2938 = vpop.f32.mrf.mxu0
      %2939 = vmatprep.mubr.f32.mxu0 0.0
      %2940 = vmatmul.mubr.f32.gmra.mxu0 %v2594
      %v2941 = vpop.f32.mrf.mxu0
      %v2942 = vadd.f32 0.0, %v2941
      %v2943 = vpop.f32.mrf.mxu0
      %2944 = vmatprep.mubr.f32.mxu0 0.0
      %2945 = vmatmul.mubr.f32.gmra.mxu0 %v2597
      %v2946 = vpop.f32.mrf.mxu0
      %v2947 = vadd.f32 0.0, %v2946
      %v2948 = vpop.f32.mrf.mxu0
      %2949 = vmatprep.mubr.f32.mxu0 0.0
      %2950 = vmatmul.mubr.f32.gmra.mxu0 %v2600
      %v2951 = vpop.f32.mrf.mxu0
      %v2952 = vadd.f32 0.0, %v2951
      %v2953 = vpop.f32.mrf.mxu0
      %2954 = vmatprep.mubr.f32.mxu0 0.0
      %2955 = vmatmul.mubr.f32.gmra.mxu0 %v2603
      %v2956 = vpop.f32.mrf.mxu0
      %v2957 = vadd.f32 0.0, %v2956
      %v2958 = vpop.f32.mrf.mxu0
      %2959 = vmatprep.mubr.f32.mxu0 0.0
      %2960 = vmatmul.mubr.f32.gmra.mxu0 %v2606
      %v2961 = vpop.f32.mrf.mxu0
      %v2962 = vadd.f32 0.0, %v2961
      %v2963 = vpop.f32.mrf.mxu0
      %2964 = vmatprep.mubr.f32.mxu0 0.0
      %2965 = vmatmul.mubr.f32.gmra.mxu0 %v2609
      %v2966 = vpop.f32.mrf.mxu0
      %v2967 = vadd.f32 0.0, %v2966
      %v2968 = vpop.f32.mrf.mxu0
      %2969 = vmatprep.mubr.f32.mxu0 0.0
      %2970 = vmatmul.mubr.f32.gmra.mxu0 %v2612
      %v2971 = vpop.f32.mrf.mxu0
      %v2972 = vadd.f32 0.0, %v2971
      %v2973 = vpop.f32.mrf.mxu0
      %2974 = vmatprep.mubr.f32.mxu0 0.0
      %2975 = vmatmul.mubr.f32.gmra.mxu0 %v2615
      %v2976 = vpop.f32.mrf.mxu0
      %v2977 = vadd.f32 0.0, %v2976
      %v2978 = vpop.f32.mrf.mxu0
      %2979 = vmatprep.mubr.f32.mxu0 0.0
      %2980 = vmatmul.mubr.f32.gmra.mxu0 %v2618
      %v2981 = vpop.f32.mrf.mxu0
      %v2982 = vadd.f32 0.0, %v2981
      %v2983 = vpop.f32.mrf.mxu0
      %2984 = vmatprep.mubr.f32.mxu0 0.0
      %2985 = vmatmul.mubr.f32.gmra.mxu0 %v2621
      %v2986 = vpop.f32.mrf.mxu0
      %v2987 = vadd.f32 0.0, %v2986
      %v2988 = vpop.f32.mrf.mxu0
      %2989 = vmatprep.mubr.f32.mxu0 0.0
      %2990 = vmatmul.mubr.f32.gmra.mxu0 %v2624
      %v2991 = vpop.f32.mrf.mxu0
      %v2992 = vadd.f32 0.0, %v2991
      %v2993 = vpop.f32.mrf.mxu0
      %2994 = vmatprep.mubr.f32.mxu0 0.0
      %2995 = vmatmul.mubr.f32.gmra.mxu0 %v2627
      %v2996 = vpop.f32.mrf.mxu0
      %v2997 = vadd.f32 0.0, %v2996
      %v2998 = vpop.f32.mrf.mxu0
      %2999 = vmatprep.mubr.f32.mxu0 0.0
      %3000 = vmatmul.mubr.f32.gmra.mxu0 %v2630
      %v3001 = vpop.f32.mrf.mxu0
      %v3002 = vadd.f32 0.0, %v3001
      %v3003 = vpop.f32.mrf.mxu0
      %3004 = vmatprep.mubr.f32.mxu0 0.0
      %3005 = vmatmul.mubr.f32.gmra.mxu0 %v2633
      %v3006 = vpop.f32.mrf.mxu0
      %v3007 = vadd.f32 0.0, %v3006
      %v3008 = vpop.f32.mrf.mxu0
      %3009 = vmatprep.mubr.f32.mxu0 0.0
      %3010 = vmatmul.mubr.f32.gmra.mxu0 %v2636
      %v3011 = vpop.f32.mrf.mxu0
      %v3012 = vadd.f32 0.0, %v3011
      %v3013 = vpop.f32.mrf.mxu0
      %3014 = vmatprep.mubr.f32.mxu0 0.0
      %3015 = vmatmul.mubr.f32.gmra.mxu0 %v2639
      %v3016 = vpop.f32.mrf.mxu0
      %v3017 = vadd.f32 0.0, %v3016
      %v3018 = vpop.f32.mrf.mxu0
      %3019 = vmatprep.mubr.f32.mxu0 0.0
      %3020 = vmatmul.mubr.f32.gmra.mxu0 %v2642
      %v3021 = vpop.f32.mrf.mxu0
      %v3022 = vadd.f32 0.0, %v3021
      %v3023 = vpop.f32.mrf.mxu0
      %3024 = vmatprep.mubr.f32.mxu0 0.0
      %3025 = vmatmul.mubr.f32.gmra.mxu0 %v2645
      %v3026 = vpop.f32.mrf.mxu0
      %v3027 = vadd.f32 0.0, %v3026
      %v3028 = vpop.f32.mrf.mxu0
      %3029 = vmatprep.mubr.f32.mxu0 0.0
      %3030 = vmatmul.mubr.f32.gmra.mxu0 %v2648
      %v3031 = vpop.f32.mrf.mxu0
      %v3032 = vadd.f32 0.0, %v3031
      %v3033 = vpop.f32.mrf.mxu0
      %3034 = vmatprep.mubr.f32.mxu0 0.0
      %3035 = vmatmul.mubr.f32.gmra.mxu0 %v2651
      %v3036 = vpop.f32.mrf.mxu0
      %v3037 = vadd.f32 0.0, %v3036
      %v3038 = vpop.f32.mrf.mxu0
      %3039 = vmatprep.mubr.f32.mxu0 0.0
      %3040 = vmatmul.mubr.f32.gmra.mxu0 %v2654
      %v3041 = vpop.f32.mrf.mxu0
      %v3042 = vadd.f32 0.0, %v3041
      %v3043 = vpop.f32.mrf.mxu0
      %3044 = vdwg.mxu0
      %v3045 = vld [vmem:[%s3] sm:$0x7]
      %v3046 = vld [vmem:[%s4] sm:$0x1]
      %v3048 = vlaneseq
      %v3049 = vshrl.u32 %v3048, 7
      %v3050 = vsub.s32 0, %v3049
      %v3051 = vrot.slane %v3046, %v3050
      %vm3053 = vcmask 23552
      %v3054 = vsel %vm3053, %v337, 0
      %v3056 = vsel %vm3053, %v338, 0
      %v3058 = vsel %vm3053, %v339, 0
      %v3060 = vsel %vm3053, %v340, 0
      %v3062 = vsel %vm3053, %v341, 0
      %v3064 = vsel %vm3053, %v342, 0
      %v3066 = vsel %vm3053, %v343, 0
      %v3068 = vsel %vm3053, %v344, 0
      %v3070 = vsel %vm3053, %v345, 0
      %v3072 = vsel %vm3053, %v346, 0
      %v3074 = vsel %vm3053, %v347, 0
      %v3076 = vsel %vm3053, %v348, 0
      %v3078 = vsel %vm3053, %v349, 0
      %v3080 = vsel %vm3053, %v350, 0
      %v3082 = vsel %vm3053, %v351, 0
      %v3084 = vsel %vm3053, %v352, 0
      %v3086 = vsel %vm3053, %v353, 0
      %v3088 = vsel %vm3053, %v354, 0
      %v3090 = vsel %vm3053, %v355, 0
      %v3092 = vsel %vm3053, %v356, 0
      %v3094 = vsel %vm3053, %v357, 0
      %v3096 = vsel %vm3053, %v358, 0
      %v3098 = vsel %vm3053, %v359, 0
      %v3100 = vsel %vm3053, %v360, 0
      %v3102 = vsel %vm3053, %v361, 0
      %v3104 = vsel %vm3053, %v362, 0
      %v3106 = vsel %vm3053, %v363, 0
      %v3108 = vsel %vm3053, %v364, 0
      %v3110 = vsel %vm3053, %v365, 0
      %v3112 = vsel %vm3053, %v366, 0
      %v3114 = vsel %vm3053, %v367, 0
      %v3116 = vsel %vm3053, %v368, 0
      %v3118 = vsel %vm3053, %v369, 0
      %v3120 = vsel %vm3053, %v370, 0
      %v3122 = vsel %vm3053, %v371, 0
      %v3124 = vsel %vm3053, %v372, 0
      %v3126 = vsel %vm3053, %v373, 0
      %v3128 = vsel %vm3053, %v374, 0
      %v3130 = vsel %vm3053, %v375, 0
      %v3132 = vsel %vm3053, %v376, 0
      %v3134 = vsel %vm3053, %v377, 0
      %v3136 = vsel %vm3053, %v378, 0
      %v3138 = vsel %vm3053, %v379, 0
      %v3140 = vsel %vm3053, %v380, 0
      %v3142 = vsel %vm3053, %v381, 0
      %v3144 = vsel %vm3053, %v382, 0
      %v3146 = vsel %vm3053, %v383, 0
      %v3148 = vsel %vm3053, %v384, 0
      %v3150 = vsel %vm3053, %v385, 0
      %v3152 = vsel %vm3053, %v386, 0
      %v3154 = vsel %vm3053, %v387, 0
      %v3156 = vsel %vm3053, %v388, 0
      %v3158 = vsel %vm3053, %v389, 0
      %v3160 = vsel %vm3053, %v390, 0
      %v3162 = vsel %vm3053, %v391, 0
      %v3164 = vsel %vm3053, %v392, 0
      %v3166 = vsel %vm3053, %v393, 0
      %v3168 = vsel %vm3053, %v394, 0
      %v3170 = vsel %vm3053, %v395, 0
      %v3172 = vsel %vm3053, %v396, 0
      %v3174 = vsel %vm3053, %v397, 0
      %v3176 = vsel %vm3053, %v398, 0
      %v3178 = vsel %vm3053, %v399, 0
      %v3180 = vsel %vm3053, %v400, 0
      %vm3182 = vcmask 1042432
      %v3184 = vsel %vm3182, %v3045, 0
      %3186 = vmatprep.subr.mxu0 0.0
      %3187 = vmatpush1.msra.mxu0 0.0
      %3188 = vmatprep.subr.mxu0 0.0
      %3189 = vmatpush1.msra.mxu0 0.0
      %3190 = vmatprep.subr.mxu0 0.0
      %3191 = vmatpush1.msra.mxu0 0.0
      %3192 = vmatprep.subr.mxu0 0.0
      %3193 = vmatpush1.msra.mxu0 0.0
      %3194 = vmatprep.subr.mxu0 0.0
      %3195 = vmatpush1.msra.mxu0 0.0
      %3196 = vmatprep.subr.mxu0 0.0
      %3197 = vmatpush1.msra.mxu0 0.0
      %3198 = vmatprep.subr.mxu0 0.0
      %3199 = vmatpush1.msra.mxu0 0.0
      %3200 = vmatprep.subr.mxu0 0.0
      %3201 = vmatpush1.msra.mxu0 0.0
      %3202 = vmatprep.subr.mxu0 0.0
      %3203 = vmatpush1.msra.mxu0 0.0
      %3204 = vmatprep.subr.mxu0 0.0
      %3205 = vmatpush1.msra.mxu0 0.0
      %3206 = vmatprep.subr.mxu0 0.0
      %3207 = vmatpush1.msra.mxu0 0.0
      %3208 = vmatprep.subr.mxu0 0.0
      %3209 = vmatpush1.msra.mxu0 0.0
      %3210 = vmatprep.subr.mxu0 0.0
      %3211 = vmatpush1.msra.mxu0 0.0
      %3212 = vmatprep.subr.mxu0 0.0
      %3213 = vmatpush1.msra.mxu0 0.0
      %3214 = vmatprep.subr.mxu0 0.0
      %3215 = vmatpush1.msra.mxu0 0.0
      %3216 = vmatprep.subr.mxu0 0.0
      %3217 = vmatpush1.msra.mxu0 %v3184
      %3218 = vmatprep.subr.mxu0 0.0
      %3219 = vmatpush2.msra.mxu0 0.0
      %3220 = vmatprep.subr.mxu0 0.0
      %3221 = vmatpush2.msra.mxu0 0.0
      %3222 = vmatprep.subr.mxu0 0.0
      %3223 = vmatpush2.msra.mxu0 0.0
      %3224 = vmatprep.subr.mxu0 0.0
      %3225 = vmatpush2.msra.mxu0 0.0
      %3226 = vmatprep.subr.mxu0 0.0
      %3227 = vmatpush2.msra.mxu0 0.0
      %3228 = vmatprep.subr.mxu0 0.0
      %3229 = vmatpush2.msra.mxu0 0.0
      %3230 = vmatprep.subr.mxu0 0.0
      %3231 = vmatpush2.msra.mxu0 0.0
      %3232 = vmatprep.subr.mxu0 0.0
      %3233 = vmatpush2.msra.mxu0 0.0
      %3234 = vmatprep.subr.mxu0 0.0
      %3235 = vmatpush2.msra.mxu0 0.0
      %3236 = vmatprep.subr.mxu0 0.0
      %3237 = vmatpush2.msra.mxu0 0.0
      %3238 = vmatprep.subr.mxu0 0.0
      %3239 = vmatpush2.msra.mxu0 0.0
      %3240 = vmatprep.subr.mxu0 0.0
      %3241 = vmatpush2.msra.mxu0 0.0
      %3242 = vmatprep.subr.mxu0 0.0
      %3243 = vmatpush2.msra.mxu0 0.0
      %3244 = vmatprep.subr.mxu0 0.0
      %3245 = vmatpush2.msra.mxu0 0.0
      %3246 = vmatprep.subr.mxu0 0.0
      %3247 = vmatpush2.msra.mxu0 0.0
      %3248 = vmatprep.subr.mxu0 0.0
      %3249 = vmatpush2.msra.mxu0 0.0
      %3250 = vmatprep.mubr.f32.mxu0 0.0
      %3251 = vmatmul.mubr.f32.gmra.mxu0 %v3054
      %v3252 = vpop.f32.mrf.mxu0
      %v3253 = vadd.f32 %v3051, %v3252
      %v3254 = vpop.f32.mrf.mxu0
      %3255 = vmatprep.mubr.f32.mxu0 0.0
      %3256 = vmatmul.mubr.f32.gmra.mxu0 %v3056
      %v3257 = vpop.f32.mrf.mxu0
      %v3258 = vadd.f32 %v3051, %v3257
      %v3259 = vpop.f32.mrf.mxu0
      %3260 = vmatprep.mubr.f32.mxu0 0.0
      %3261 = vmatmul.mubr.f32.gmra.mxu0 %v3058
      %v3262 = vpop.f32.mrf.mxu0
      %v3263 = vadd.f32 %v3051, %v3262
      %v3264 = vpop.f32.mrf.mxu0
      %3265 = vmatprep.mubr.f32.mxu0 0.0
      %3266 = vmatmul.mubr.f32.gmra.mxu0 %v3060
      %v3267 = vpop.f32.mrf.mxu0
      %v3268 = vadd.f32 %v3051, %v3267
      %v3269 = vpop.f32.mrf.mxu0
      %3270 = vmatprep.mubr.f32.mxu0 0.0
      %3271 = vmatmul.mubr.f32.gmra.mxu0 %v3062
      %v3272 = vpop.f32.mrf.mxu0
      %v3273 = vadd.f32 %v3051, %v3272
      %v3274 = vpop.f32.mrf.mxu0
      %3275 = vmatprep.mubr.f32.mxu0 0.0
      %3276 = vmatmul.mubr.f32.gmra.mxu0 %v3064
      %v3277 = vpop.f32.mrf.mxu0
      %v3278 = vadd.f32 %v3051, %v3277
      %v3279 = vpop.f32.mrf.mxu0
      %3280 = vmatprep.mubr.f32.mxu0 0.0
      %3281 = vmatmul.mubr.f32.gmra.mxu0 %v3066
      %v3282 = vpop.f32.mrf.mxu0
      %v3283 = vadd.f32 %v3051, %v3282
      %v3284 = vpop.f32.mrf.mxu0
      %3285 = vmatprep.mubr.f32.mxu0 0.0
      %3286 = vmatmul.mubr.f32.gmra.mxu0 %v3068
      %v3287 = vpop.f32.mrf.mxu0
      %v3288 = vadd.f32 %v3051, %v3287
      %v3289 = vpop.f32.mrf.mxu0
      %3290 = vmatprep.mubr.f32.mxu0 0.0
      %3291 = vmatmul.mubr.f32.gmra.mxu0 %v3070
      %v3292 = vpop.f32.mrf.mxu0
      %v3293 = vadd.f32 %v3051, %v3292
      %v3294 = vpop.f32.mrf.mxu0
      %3295 = vmatprep.mubr.f32.mxu0 0.0
      %3296 = vmatmul.mubr.f32.gmra.mxu0 %v3072
      %v3297 = vpop.f32.mrf.mxu0
      %v3298 = vadd.f32 %v3051, %v3297
      %v3299 = vpop.f32.mrf.mxu0
      %3300 = vmatprep.mubr.f32.mxu0 0.0
      %3301 = vmatmul.mubr.f32.gmra.mxu0 %v3074
      %v3302 = vpop.f32.mrf.mxu0
      %v3303 = vadd.f32 %v3051, %v3302
      %v3304 = vpop.f32.mrf.mxu0
      %3305 = vmatprep.mubr.f32.mxu0 0.0
      %3306 = vmatmul.mubr.f32.gmra.mxu0 %v3076
      %v3307 = vpop.f32.mrf.mxu0
      %v3308 = vadd.f32 %v3051, %v3307
      %v3309 = vpop.f32.mrf.mxu0
      %3310 = vmatprep.mubr.f32.mxu0 0.0
      %3311 = vmatmul.mubr.f32.gmra.mxu0 %v3078
      %v3312 = vpop.f32.mrf.mxu0
      %v3313 = vadd.f32 %v3051, %v3312
      %v3314 = vpop.f32.mrf.mxu0
      %3315 = vmatprep.mubr.f32.mxu0 0.0
      %3316 = vmatmul.mubr.f32.gmra.mxu0 %v3080
      %v3317 = vpop.f32.mrf.mxu0
      %v3318 = vadd.f32 %v3051, %v3317
      %v3319 = vpop.f32.mrf.mxu0
      %3320 = vmatprep.mubr.f32.mxu0 0.0
      %3321 = vmatmul.mubr.f32.gmra.mxu0 %v3082
      %v3322 = vpop.f32.mrf.mxu0
      %v3323 = vadd.f32 %v3051, %v3322
      %v3324 = vpop.f32.mrf.mxu0
      %3325 = vmatprep.mubr.f32.mxu0 0.0
      %3326 = vmatmul.mubr.f32.gmra.mxu0 %v3084
      %v3327 = vpop.f32.mrf.mxu0
      %v3328 = vadd.f32 %v3051, %v3327
      %v3329 = vpop.f32.mrf.mxu0
      %3330 = vmatprep.mubr.f32.mxu0 0.0
      %3331 = vmatmul.mubr.f32.gmra.mxu0 %v3086
      %v3332 = vpop.f32.mrf.mxu0
      %v3333 = vadd.f32 %v3051, %v3332
      %v3334 = vpop.f32.mrf.mxu0
      %3335 = vmatprep.mubr.f32.mxu0 0.0
      %3336 = vmatmul.mubr.f32.gmra.mxu0 %v3088
      %v3337 = vpop.f32.mrf.mxu0
      %v3338 = vadd.f32 %v3051, %v3337
      %v3339 = vpop.f32.mrf.mxu0
      %3340 = vmatprep.mubr.f32.mxu0 0.0
      %3341 = vmatmul.mubr.f32.gmra.mxu0 %v3090
      %v3342 = vpop.f32.mrf.mxu0
      %v3343 = vadd.f32 %v3051, %v3342
      %v3344 = vpop.f32.mrf.mxu0
      %3345 = vmatprep.mubr.f32.mxu0 0.0
      %3346 = vmatmul.mubr.f32.gmra.mxu0 %v3092
      %v3347 = vpop.f32.mrf.mxu0
      %v3348 = vadd.f32 %v3051, %v3347
      %v3349 = vpop.f32.mrf.mxu0
      %3350 = vmatprep.mubr.f32.mxu0 0.0
      %3351 = vmatmul.mubr.f32.gmra.mxu0 %v3094
      %v3352 = vpop.f32.mrf.mxu0
      %v3353 = vadd.f32 %v3051, %v3352
      %v3354 = vpop.f32.mrf.mxu0
      %3355 = vmatprep.mubr.f32.mxu0 0.0
      %3356 = vmatmul.mubr.f32.gmra.mxu0 %v3096
      %v3357 = vpop.f32.mrf.mxu0
      %v3358 = vadd.f32 %v3051, %v3357
      %v3359 = vpop.f32.mrf.mxu0
      %3360 = vmatprep.mubr.f32.mxu0 0.0
      %3361 = vmatmul.mubr.f32.gmra.mxu0 %v3098
      %v3362 = vpop.f32.mrf.mxu0
      %v3363 = vadd.f32 %v3051, %v3362
      %v3364 = vpop.f32.mrf.mxu0
      %3365 = vmatprep.mubr.f32.mxu0 0.0
      %3366 = vmatmul.mubr.f32.gmra.mxu0 %v3100
      %v3367 = vpop.f32.mrf.mxu0
      %v3368 = vadd.f32 %v3051, %v3367
      %v3369 = vpop.f32.mrf.mxu0
      %3370 = vmatprep.mubr.f32.mxu0 0.0
      %3371 = vmatmul.mubr.f32.gmra.mxu0 %v3102
      %v3372 = vpop.f32.mrf.mxu0
      %v3373 = vadd.f32 %v3051, %v3372
      %v3374 = vpop.f32.mrf.mxu0
      %3375 = vmatprep.mubr.f32.mxu0 0.0
      %3376 = vmatmul.mubr.f32.gmra.mxu0 %v3104
      %v3377 = vpop.f32.mrf.mxu0
      %v3378 = vadd.f32 %v3051, %v3377
      %v3379 = vpop.f32.mrf.mxu0
      %3380 = vmatprep.mubr.f32.mxu0 0.0
      %3381 = vmatmul.mubr.f32.gmra.mxu0 %v3106
      %v3382 = vpop.f32.mrf.mxu0
      %v3383 = vadd.f32 %v3051, %v3382
      %v3384 = vpop.f32.mrf.mxu0
      %3385 = vmatprep.mubr.f32.mxu0 0.0
      %3386 = vmatmul.mubr.f32.gmra.mxu0 %v3108
      %v3387 = vpop.f32.mrf.mxu0
      %v3388 = vadd.f32 %v3051, %v3387
      %v3389 = vpop.f32.mrf.mxu0
      %3390 = vmatprep.mubr.f32.mxu0 0.0
      %3391 = vmatmul.mubr.f32.gmra.mxu0 %v3110
      %v3392 = vpop.f32.mrf.mxu0
      %v3393 = vadd.f32 %v3051, %v3392
      %v3394 = vpop.f32.mrf.mxu0
      %3395 = vmatprep.mubr.f32.mxu0 0.0
      %3396 = vmatmul.mubr.f32.gmra.mxu0 %v3112
      %v3397 = vpop.f32.mrf.mxu0
      %v3398 = vadd.f32 %v3051, %v3397
      %v3399 = vpop.f32.mrf.mxu0
      %3400 = vmatprep.mubr.f32.mxu0 0.0
      %3401 = vmatmul.mubr.f32.gmra.mxu0 %v3114
      %v3402 = vpop.f32.mrf.mxu0
      %v3403 = vadd.f32 %v3051, %v3402
      %v3404 = vpop.f32.mrf.mxu0
      %3405 = vmatprep.mubr.f32.mxu0 0.0
      %3406 = vmatmul.mubr.f32.gmra.mxu0 %v3116
      %v3407 = vpop.f32.mrf.mxu0
      %v3408 = vadd.f32 %v3051, %v3407
      %v3409 = vpop.f32.mrf.mxu0
      %3410 = vmatprep.mubr.f32.mxu0 0.0
      %3411 = vmatmul.mubr.f32.gmra.mxu0 %v3118
      %v3412 = vpop.f32.mrf.mxu0
      %v3413 = vadd.f32 %v3051, %v3412
      %v3414 = vpop.f32.mrf.mxu0
      %3415 = vmatprep.mubr.f32.mxu0 0.0
      %3416 = vmatmul.mubr.f32.gmra.mxu0 %v3120
      %v3417 = vpop.f32.mrf.mxu0
      %v3418 = vadd.f32 %v3051, %v3417
      %v3419 = vpop.f32.mrf.mxu0
      %3420 = vmatprep.mubr.f32.mxu0 0.0
      %3421 = vmatmul.mubr.f32.gmra.mxu0 %v3122
      %v3422 = vpop.f32.mrf.mxu0
      %v3423 = vadd.f32 %v3051, %v3422
      %v3424 = vpop.f32.mrf.mxu0
      %3425 = vmatprep.mubr.f32.mxu0 0.0
      %3426 = vmatmul.mubr.f32.gmra.mxu0 %v3124
      %v3427 = vpop.f32.mrf.mxu0
      %v3428 = vadd.f32 %v3051, %v3427
      %v3429 = vpop.f32.mrf.mxu0
      %3430 = vmatprep.mubr.f32.mxu0 0.0
      %3431 = vmatmul.mubr.f32.gmra.mxu0 %v3126
      %v3432 = vpop.f32.mrf.mxu0
      %v3433 = vadd.f32 %v3051, %v3432
      %v3434 = vpop.f32.mrf.mxu0
      %3435 = vmatprep.mubr.f32.mxu0 0.0
      %3436 = vmatmul.mubr.f32.gmra.mxu0 %v3128
      %v3437 = vpop.f32.mrf.mxu0
      %v3438 = vadd.f32 %v3051, %v3437
      %v3439 = vpop.f32.mrf.mxu0
      %3440 = vmatprep.mubr.f32.mxu0 0.0
      %3441 = vmatmul.mubr.f32.gmra.mxu0 %v3130
      %v3442 = vpop.f32.mrf.mxu0
      %v3443 = vadd.f32 %v3051, %v3442
      %v3444 = vpop.f32.mrf.mxu0
      %3445 = vmatprep.mubr.f32.mxu0 0.0
      %3446 = vmatmul.mubr.f32.gmra.mxu0 %v3132
      %v3447 = vpop.f32.mrf.mxu0
      %v3448 = vadd.f32 %v3051, %v3447
      %v3449 = vpop.f32.mrf.mxu0
      %3450 = vmatprep.mubr.f32.mxu0 0.0
      %3451 = vmatmul.mubr.f32.gmra.mxu0 %v3134
      %v3452 = vpop.f32.mrf.mxu0
      %v3453 = vadd.f32 %v3051, %v3452
      %v3454 = vpop.f32.mrf.mxu0
      %3455 = vmatprep.mubr.f32.mxu0 0.0
      %3456 = vmatmul.mubr.f32.gmra.mxu0 %v3136
      %v3457 = vpop.f32.mrf.mxu0
      %v3458 = vadd.f32 %v3051, %v3457
      %v3459 = vpop.f32.mrf.mxu0
      %3460 = vmatprep.mubr.f32.mxu0 0.0
      %3461 = vmatmul.mubr.f32.gmra.mxu0 %v3138
      %v3462 = vpop.f32.mrf.mxu0
      %v3463 = vadd.f32 %v3051, %v3462
      %v3464 = vpop.f32.mrf.mxu0
      %3465 = vmatprep.mubr.f32.mxu0 0.0
      %3466 = vmatmul.mubr.f32.gmra.mxu0 %v3140
      %v3467 = vpop.f32.mrf.mxu0
      %v3468 = vadd.f32 %v3051, %v3467
      %v3469 = vpop.f32.mrf.mxu0
      %3470 = vmatprep.mubr.f32.mxu0 0.0
      %3471 = vmatmul.mubr.f32.gmra.mxu0 %v3142
      %v3472 = vpop.f32.mrf.mxu0
      %v3473 = vadd.f32 %v3051, %v3472
      %v3474 = vpop.f32.mrf.mxu0
      %3475 = vmatprep.mubr.f32.mxu0 0.0
      %3476 = vmatmul.mubr.f32.gmra.mxu0 %v3144
      %v3477 = vpop.f32.mrf.mxu0
      %v3478 = vadd.f32 %v3051, %v3477
      %v3479 = vpop.f32.mrf.mxu0
      %3480 = vmatprep.mubr.f32.mxu0 0.0
      %3481 = vmatmul.mubr.f32.gmra.mxu0 %v3146
      %v3482 = vpop.f32.mrf.mxu0
      %v3483 = vadd.f32 %v3051, %v3482
      %v3484 = vpop.f32.mrf.mxu0
      %3485 = vmatprep.mubr.f32.mxu0 0.0
      %3486 = vmatmul.mubr.f32.gmra.mxu0 %v3148
      %v3487 = vpop.f32.mrf.mxu0
      %v3488 = vadd.f32 %v3051, %v3487
      %v3489 = vpop.f32.mrf.mxu0
      %3490 = vmatprep.mubr.f32.mxu0 0.0
      %3491 = vmatmul.mubr.f32.gmra.mxu0 %v3150
      %v3492 = vpop.f32.mrf.mxu0
      %v3493 = vadd.f32 %v3051, %v3492
      %v3494 = vpop.f32.mrf.mxu0
      %3495 = vmatprep.mubr.f32.mxu0 0.0
      %3496 = vmatmul.mubr.f32.gmra.mxu0 %v3152
      %v3497 = vpop.f32.mrf.mxu0
      %v3498 = vadd.f32 %v3051, %v3497
      %v3499 = vpop.f32.mrf.mxu0
      %3500 = vmatprep.mubr.f32.mxu0 0.0
      %3501 = vmatmul.mubr.f32.gmra.mxu0 %v3154
      %v3502 = vpop.f32.mrf.mxu0
      %v3503 = vadd.f32 %v3051, %v3502
      %v3504 = vpop.f32.mrf.mxu0
      %3505 = vmatprep.mubr.f32.mxu0 0.0
      %3506 = vmatmul.mubr.f32.gmra.mxu0 %v3156
      %v3507 = vpop.f32.mrf.mxu0
      %v3508 = vadd.f32 %v3051, %v3507
      %v3509 = vpop.f32.mrf.mxu0
      %3510 = vmatprep.mubr.f32.mxu0 0.0
      %3511 = vmatmul.mubr.f32.gmra.mxu0 %v3158
      %v3512 = vpop.f32.mrf.mxu0
      %v3513 = vadd.f32 %v3051, %v3512
      %v3514 = vpop.f32.mrf.mxu0
      %3515 = vmatprep.mubr.f32.mxu0 0.0
      %3516 = vmatmul.mubr.f32.gmra.mxu0 %v3160
      %v3517 = vpop.f32.mrf.mxu0
      %v3518 = vadd.f32 %v3051, %v3517
      %v3519 = vpop.f32.mrf.mxu0
      %3520 = vmatprep.mubr.f32.mxu0 0.0
      %3521 = vmatmul.mubr.f32.gmra.mxu0 %v3162
      %v3522 = vpop.f32.mrf.mxu0
      %v3523 = vadd.f32 %v3051, %v3522
      %v3524 = vpop.f32.mrf.mxu0
      %3525 = vmatprep.mubr.f32.mxu0 0.0
      %3526 = vmatmul.mubr.f32.gmra.mxu0 %v3164
      %v3527 = vpop.f32.mrf.mxu0
      %v3528 = vadd.f32 %v3051, %v3527
      %v3529 = vpop.f32.mrf.mxu0
      %3530 = vmatprep.mubr.f32.mxu0 0.0
      %3531 = vmatmul.mubr.f32.gmra.mxu0 %v3166
      %v3532 = vpop.f32.mrf.mxu0
      %v3533 = vadd.f32 %v3051, %v3532
      %v3534 = vpop.f32.mrf.mxu0
      %3535 = vmatprep.mubr.f32.mxu0 0.0
      %3536 = vmatmul.mubr.f32.gmra.mxu0 %v3168
      %v3537 = vpop.f32.mrf.mxu0
      %v3538 = vadd.f32 %v3051, %v3537
      %v3539 = vpop.f32.mrf.mxu0
      %3540 = vmatprep.mubr.f32.mxu0 0.0
      %3541 = vmatmul.mubr.f32.gmra.mxu0 %v3170
      %v3542 = vpop.f32.mrf.mxu0
      %v3543 = vadd.f32 %v3051, %v3542
      %v3544 = vpop.f32.mrf.mxu0
      %3545 = vmatprep.mubr.f32.mxu0 0.0
      %3546 = vmatmul.mubr.f32.gmra.mxu0 %v3172
      %v3547 = vpop.f32.mrf.mxu0
      %v3548 = vadd.f32 %v3051, %v3547
      %v3549 = vpop.f32.mrf.mxu0
      %3550 = vmatprep.mubr.f32.mxu0 0.0
      %3551 = vmatmul.mubr.f32.gmra.mxu0 %v3174
      %v3552 = vpop.f32.mrf.mxu0
      %v3553 = vadd.f32 %v3051, %v3552
      %v3554 = vpop.f32.mrf.mxu0
      %3555 = vmatprep.mubr.f32.mxu0 0.0
      %3556 = vmatmul.mubr.f32.gmra.mxu0 %v3176
      %v3557 = vpop.f32.mrf.mxu0
      %v3558 = vadd.f32 %v3051, %v3557
      %v3559 = vpop.f32.mrf.mxu0
      %3560 = vmatprep.mubr.f32.mxu0 0.0
      %3561 = vmatmul.mubr.f32.gmra.mxu0 %v3178
      %v3562 = vpop.f32.mrf.mxu0
      %v3563 = vadd.f32 %v3051, %v3562
      %v3564 = vpop.f32.mrf.mxu0
      %3565 = vmatprep.mubr.f32.mxu0 0.0
      %3566 = vmatmul.mubr.f32.gmra.mxu0 %v3180
      %v3567 = vpop.f32.mrf.mxu0
      %v3568 = vadd.f32 %v3051, %v3567
      %v3569 = vpop.f32.mrf.mxu0
      %3570 = vdwg.mxu0
      %v3571 = vtanh.pop %v3253
      %v3572 = vtanh.pop %v3258
      %v3573 = vtanh.pop %v3263
      %v3574 = vtanh.pop %v3268
      %v3575 = vtanh.pop %v3273
      %v3576 = vtanh.pop %v3278
      %v3577 = vtanh.pop %v3283
      %v3578 = vtanh.pop %v3288
      %v3579 = vtanh.pop %v3293
      %v3580 = vtanh.pop %v3298
      %v3581 = vtanh.pop %v3303
      %v3582 = vtanh.pop %v3308
      %v3583 = vtanh.pop %v3313
      %v3584 = vtanh.pop %v3318
      %v3585 = vtanh.pop %v3323
      %v3586 = vtanh.pop %v3328
      %v3587 = vtanh.pop %v3333
      %v3588 = vtanh.pop %v3338
      %v3589 = vtanh.pop %v3343
      %v3590 = vtanh.pop %v3348
      %v3591 = vtanh.pop %v3353
      %v3592 = vtanh.pop %v3358
      %v3593 = vtanh.pop %v3363
      %v3594 = vtanh.pop %v3368
      %v3595 = vtanh.pop %v3373
      %v3596 = vtanh.pop %v3378
      %v3597 = vtanh.pop %v3383
      %v3598 = vtanh.pop %v3388
      %v3599 = vtanh.pop %v3393
      %v3600 = vtanh.pop %v3398
      %v3601 = vtanh.pop %v3403
      %v3602 = vtanh.pop %v3408
      %v3603 = vtanh.pop %v3413
      %v3604 = vtanh.pop %v3418
      %v3605 = vtanh.pop %v3423
      %v3606 = vtanh.pop %v3428
      %v3607 = vtanh.pop %v3433
      %v3608 = vtanh.pop %v3438
      %v3609 = vtanh.pop %v3443
      %v3610 = vtanh.pop %v3448
      %v3611 = vtanh.pop %v3453
      %v3612 = vtanh.pop %v3458
      %v3613 = vtanh.pop %v3463
      %v3614 = vtanh.pop %v3468
      %v3615 = vtanh.pop %v3473
      %v3616 = vtanh.pop %v3478
      %v3617 = vtanh.pop %v3483
      %v3618 = vtanh.pop %v3488
      %v3619 = vtanh.pop %v3493
      %v3620 = vtanh.pop %v3498
      %v3621 = vtanh.pop %v3503
      %v3622 = vtanh.pop %v3508
      %v3623 = vtanh.pop %v3513
      %v3624 = vtanh.pop %v3518
      %v3625 = vtanh.pop %v3523
      %v3626 = vtanh.pop %v3528
      %v3627 = vtanh.pop %v3533
      %v3628 = vtanh.pop %v3538
      %v3629 = vtanh.pop %v3543
      %v3630 = vtanh.pop %v3548
      %v3631 = vtanh.pop %v3553
      %v3632 = vtanh.pop %v3558
      %v3633 = vtanh.pop %v3563
      %v3634 = vtanh.pop %v3568
      %v3635 = vpack.c.bf16 %v3572, %v3571
      %v3636 = vpack.c.bf16 %v3574, %v3573
      %v3637 = vpack.c.bf16 %v3576, %v3575
      %v3638 = vpack.c.bf16 %v3578, %v3577
      %v3639 = vpack.c.bf16 %v3580, %v3579
      %v3640 = vpack.c.bf16 %v3582, %v3581
      %v3641 = vpack.c.bf16 %v3584, %v3583
      %v3642 = vpack.c.bf16 %v3586, %v3585
      %v3643 = vpack.c.bf16 %v3588, %v3587
      %v3644 = vpack.c.bf16 %v3590, %v3589
      %v3645 = vpack.c.bf16 %v3592, %v3591
      %v3646 = vpack.c.bf16 %v3594, %v3593
      %v3647 = vpack.c.bf16 %v3596, %v3595
      %v3648 = vpack.c.bf16 %v3598, %v3597
      %v3649 = vpack.c.bf16 %v3600, %v3599
      %v3650 = vpack.c.bf16 %v3602, %v3601
      %v3651 = vpack.c.bf16 %v3604, %v3603
      %v3652 = vpack.c.bf16 %v3606, %v3605
      %v3653 = vpack.c.bf16 %v3608, %v3607
      %v3654 = vpack.c.bf16 %v3610, %v3609
      %v3655 = vpack.c.bf16 %v3612, %v3611
      %v3656 = vpack.c.bf16 %v3614, %v3613
      %v3657 = vpack.c.bf16 %v3616, %v3615
      %v3658 = vpack.c.bf16 %v3618, %v3617
      %v3659 = vpack.c.bf16 %v3620, %v3619
      %v3660 = vpack.c.bf16 %v3622, %v3621
      %v3661 = vpack.c.bf16 %v3624, %v3623
      %v3662 = vpack.c.bf16 %v3626, %v3625
      %v3663 = vpack.c.bf16 %v3628, %v3627
      %v3664 = vpack.c.bf16 %v3630, %v3629
      %v3665 = vpack.c.bf16 %v3632, %v3631
      %v3666 = vpack.c.bf16 %v3634, %v3633
      %v3667 = vld [vmem:[%s5] sm:$0xf]
      %v3668 = vld [vmem:[%s5 + $0x4] sm:$0xf]
      %v3669 = vld [vmem:[%s5 + $0x8] sm:$0xf]
      %v3670 = vld [vmem:[%s5 + $0xc] sm:$0xf]
      %v3671 = vld [vmem:[%s5 + $0x10] sm:$0xf]
      %v3672 = vld [vmem:[%s5 + $0x14] sm:$0xf]
      %v3673 = vld [vmem:[%s5 + $0x18] sm:$0xf]
      %v3674 = vld [vmem:[%s5 + $0x1c] sm:$0xf]
      %v3675 = vld [vmem:[%s5 + $0x20] sm:$0xf]
      %v3676 = vld [vmem:[%s5 + $0x24] sm:$0xf]
      %v3677 = vld [vmem:[%s5 + $0x28] sm:$0xf]
      %v3678 = vld [vmem:[%s5 + $0x2c] sm:$0xf]
      %v3679 = vld [vmem:[%s5 + $0x30] sm:$0xf]
      %v3680 = vld [vmem:[%s5 + $0x34] sm:$0xf]
      %v3681 = vld [vmem:[%s5 + $0x38] sm:$0xf]
      %v3682 = vld [vmem:[%s5 + $0x3c] sm:$0xf]
      %v3683 = vld [vmem:[%s6] sm:$0x1]
      %v3685 = vlaneseq
      %v3686 = vshrl.u32 %v3685, 7
      %v3687 = vsub.s32 0, %v3686
      %v3688 = vrot.slane %v3683, %v3687
      %v3706 = vunpack.c.l.b16 %v3667
      %v3707 = vunpack.c.l.b16 %v3668
      %v3708 = vunpack.c.l.b16 %v3669
      %v3709 = vunpack.c.l.b16 %v3670
      %v3710 = vunpack.c.l.b16 %v3671
      %v3711 = vunpack.c.l.b16 %v3672
      %v3712 = vunpack.c.l.b16 %v3673
      %v3713 = vunpack.c.l.b16 %v3674
      %v3714 = vunpack.c.l.b16 %v3675
      %v3715 = vunpack.c.l.b16 %v3676
      %v3716 = vunpack.c.l.b16 %v3677
      %v3717 = vunpack.c.l.b16 %v3678
      %v3718 = vunpack.c.l.b16 %v3679
      %v3719 = vunpack.c.l.b16 %v3680
      %v3720 = vunpack.c.l.b16 %v3681
      %v3721 = vunpack.c.l.b16 %v3682
      %v3722 = vpack.c.b16 %v3707, %v3706
      %v3723 = vpack.c.b16 %v3709, %v3708
      %v3724 = vpack.c.b16 %v3711, %v3710
      %v3725 = vpack.c.b16 %v3713, %v3712
      %v3726 = vpack.c.b16 %v3715, %v3714
      %v3727 = vpack.c.b16 %v3717, %v3716
      %v3728 = vpack.c.b16 %v3719, %v3718
      %v3729 = vpack.c.b16 %v3721, %v3720
      %3738 = vmatprep.subr.bf16.mxu0 0
      %3739 = vmatpush1.bf16.msra.mxu0 %v3729
      %3740 = vmatprep.subr.bf16.mxu0 0
      %3741 = vmatpush1.bf16.msra.mxu0 %v3728
      %3742 = vmatprep.subr.bf16.mxu0 0
      %3743 = vmatpush1.bf16.msra.mxu0 %v3727
      %3744 = vmatprep.subr.bf16.mxu0 0
      %3745 = vmatpush1.bf16.msra.mxu0 %v3726
      %3746 = vmatprep.subr.bf16.mxu0 0
      %3747 = vmatpush1.bf16.msra.mxu0 %v3725
      %3748 = vmatprep.subr.bf16.mxu0 0
      %3749 = vmatpush1.bf16.msra.mxu0 %v3724
      %3750 = vmatprep.subr.bf16.mxu0 0
      %3751 = vmatpush1.bf16.msra.mxu0 %v3723
      %3752 = vmatprep.subr.bf16.mxu0 0
      %3753 = vmatpush1.bf16.msra.mxu0 %v3722
      %3754 = vmatprep.subr.bf16.mxu0 0
      %3755 = vmatpush2.bf16.msra.mxu0 0
      %3756 = vmatprep.subr.bf16.mxu0 0
      %3757 = vmatpush2.bf16.msra.mxu0 0
      %3758 = vmatprep.subr.bf16.mxu0 0
      %3759 = vmatpush2.bf16.msra.mxu0 0
      %3760 = vmatprep.subr.bf16.mxu0 0
      %3761 = vmatpush2.bf16.msra.mxu0 0
      %3762 = vmatprep.subr.bf16.mxu0 0
      %3763 = vmatpush2.bf16.msra.mxu0 0
      %3764 = vmatprep.subr.bf16.mxu0 0
      %3765 = vmatpush2.bf16.msra.mxu0 0
      %3766 = vmatprep.subr.bf16.mxu0 0
      %3767 = vmatpush2.bf16.msra.mxu0 0
      %3768 = vmatprep.subr.bf16.mxu0 0
      %3769 = vmatpush2.bf16.msra.mxu0 0
      %3770 = vmatprep.mubr.bf16.mxu0 0
      %3771 = vmatmul.mubr.bf16.gmra.mxu0 %v3635
      %v3772 = vpop.f32.mrf.mxu0
      %v3773 = vadd.f32 %v3688, %v3772
      %v3774 = vpop.f32.mrf.mxu0
      %v3775 = vpop.f32.mrf.mxu0
      %v3776 = vadd.f32 %v3688, %v3775
      %v3777 = vpop.f32.mrf.mxu0
      %3778 = vmatprep.mubr.bf16.mxu0 0
      %3779 = vmatmul.mubr.bf16.gmra.mxu0 %v3636
      %v3780 = vpop.f32.mrf.mxu0
      %v3781 = vadd.f32 %v3688, %v3780
      %v3782 = vpop.f32.mrf.mxu0
      %v3783 = vpop.f32.mrf.mxu0
      %v3784 = vadd.f32 %v3688, %v3783
      %v3785 = vpop.f32.mrf.mxu0
      %3786 = vmatprep.mubr.bf16.mxu0 0
      %3787 = vmatmul.mubr.bf16.gmra.mxu0 %v3637
      %v3788 = vpop.f32.mrf.mxu0
      %v3789 = vadd.f32 %v3688, %v3788
      %v3790 = vpop.f32.mrf.mxu0
      %v3791 = vpop.f32.mrf.mxu0
      %v3792 = vadd.f32 %v3688, %v3791
      %v3793 = vpop.f32.mrf.mxu0
      %3794 = vmatprep.mubr.bf16.mxu0 0
      %3795 = vmatmul.mubr.bf16.gmra.mxu0 %v3638
      %v3796 = vpop.f32.mrf.mxu0
      %v3797 = vadd.f32 %v3688, %v3796
      %v3798 = vpop.f32.mrf.mxu0
      %v3799 = vpop.f32.mrf.mxu0
      %v3800 = vadd.f32 %v3688, %v3799
      %v3801 = vpop.f32.mrf.mxu0
      %3802 = vmatprep.mubr.bf16.mxu0 0
      %3803 = vmatmul.mubr.bf16.gmra.mxu0 %v3639
      %v3804 = vpop.f32.mrf.mxu0
      %v3805 = vadd.f32 %v3688, %v3804
      %v3806 = vpop.f32.mrf.mxu0
      %v3807 = vpop.f32.mrf.mxu0
      %v3808 = vadd.f32 %v3688, %v3807
      %v3809 = vpop.f32.mrf.mxu0
      %3810 = vmatprep.mubr.bf16.mxu0 0
      %3811 = vmatmul.mubr.bf16.gmra.mxu0 %v3640
      %v3812 = vpop.f32.mrf.mxu0
      %v3813 = vadd.f32 %v3688, %v3812
      %v3814 = vpop.f32.mrf.mxu0
      %v3815 = vpop.f32.mrf.mxu0
      %v3816 = vadd.f32 %v3688, %v3815
      %v3817 = vpop.f32.mrf.mxu0
      %3818 = vmatprep.mubr.bf16.mxu0 0
      %3819 = vmatmul.mubr.bf16.gmra.mxu0 %v3641
      %v3820 = vpop.f32.mrf.mxu0
      %v3821 = vadd.f32 %v3688, %v3820
      %v3822 = vpop.f32.mrf.mxu0
      %v3823 = vpop.f32.mrf.mxu0
      %v3824 = vadd.f32 %v3688, %v3823
      %v3825 = vpop.f32.mrf.mxu0
      %3826 = vmatprep.mubr.bf16.mxu0 0
      %3827 = vmatmul.mubr.bf16.gmra.mxu0 %v3642
      %v3828 = vpop.f32.mrf.mxu0
      %v3829 = vadd.f32 %v3688, %v3828
      %v3830 = vpop.f32.mrf.mxu0
      %v3831 = vpop.f32.mrf.mxu0
      %v3832 = vadd.f32 %v3688, %v3831
      %v3833 = vpop.f32.mrf.mxu0
      %3834 = vmatprep.mubr.bf16.mxu0 0
      %3835 = vmatmul.mubr.bf16.gmra.mxu0 %v3643
      %v3836 = vpop.f32.mrf.mxu0
      %v3837 = vadd.f32 %v3688, %v3836
      %v3838 = vpop.f32.mrf.mxu0
      %v3839 = vpop.f32.mrf.mxu0
      %v3840 = vadd.f32 %v3688, %v3839
      %v3841 = vpop.f32.mrf.mxu0
      %3842 = vmatprep.mubr.bf16.mxu0 0
      %3843 = vmatmul.mubr.bf16.gmra.mxu0 %v3644
      %v3844 = vpop.f32.mrf.mxu0
      %v3845 = vadd.f32 %v3688, %v3844
      %v3846 = vpop.f32.mrf.mxu0
      %v3847 = vpop.f32.mrf.mxu0
      %v3848 = vadd.f32 %v3688, %v3847
      %v3849 = vpop.f32.mrf.mxu0
      %3850 = vmatprep.mubr.bf16.mxu0 0
      %3851 = vmatmul.mubr.bf16.gmra.mxu0 %v3645
      %v3852 = vpop.f32.mrf.mxu0
      %v3853 = vadd.f32 %v3688, %v3852
      %v3854 = vpop.f32.mrf.mxu0
      %v3855 = vpop.f32.mrf.mxu0
      %v3856 = vadd.f32 %v3688, %v3855
      %v3857 = vpop.f32.mrf.mxu0
      %3858 = vmatprep.mubr.bf16.mxu0 0
      %3859 = vmatmul.mubr.bf16.gmra.mxu0 %v3646
      %v3860 = vpop.f32.mrf.mxu0
      %v3861 = vadd.f32 %v3688, %v3860
      %v3862 = vpop.f32.mrf.mxu0
      %v3863 = vpop.f32.mrf.mxu0
      %v3864 = vadd.f32 %v3688, %v3863
      %v3865 = vpop.f32.mrf.mxu0
      %3866 = vmatprep.mubr.bf16.mxu0 0
      %3867 = vmatmul.mubr.bf16.gmra.mxu0 %v3647
      %v3868 = vpop.f32.mrf.mxu0
      %v3869 = vadd.f32 %v3688, %v3868
      %v3870 = vpop.f32.mrf.mxu0
      %v3871 = vpop.f32.mrf.mxu0
      %v3872 = vadd.f32 %v3688, %v3871
      %v3873 = vpop.f32.mrf.mxu0
      %3874 = vmatprep.mubr.bf16.mxu0 0
      %3875 = vmatmul.mubr.bf16.gmra.mxu0 %v3648
      %v3876 = vpop.f32.mrf.mxu0
      %v3877 = vadd.f32 %v3688, %v3876
      %v3878 = vpop.f32.mrf.mxu0
      %v3879 = vpop.f32.mrf.mxu0
      %v3880 = vadd.f32 %v3688, %v3879
      %v3881 = vpop.f32.mrf.mxu0
      %3882 = vmatprep.mubr.bf16.mxu0 0
      %3883 = vmatmul.mubr.bf16.gmra.mxu0 %v3649
      %v3884 = vpop.f32.mrf.mxu0
      %v3885 = vadd.f32 %v3688, %v3884
      %v3886 = vpop.f32.mrf.mxu0
      %v3887 = vpop.f32.mrf.mxu0
      %v3888 = vadd.f32 %v3688, %v3887
      %v3889 = vpop.f32.mrf.mxu0
      %3890 = vmatprep.mubr.bf16.mxu0 0
      %3891 = vmatmul.mubr.bf16.gmra.mxu0 %v3650
      %v3892 = vpop.f32.mrf.mxu0
      %v3893 = vadd.f32 %v3688, %v3892
      %v3894 = vpop.f32.mrf.mxu0
      %v3895 = vpop.f32.mrf.mxu0
      %v3896 = vadd.f32 %v3688, %v3895
      %v3897 = vpop.f32.mrf.mxu0
      %3898 = vmatprep.mubr.bf16.mxu0 0
      %3899 = vmatmul.mubr.bf16.gmra.mxu0 %v3651
      %v3900 = vpop.f32.mrf.mxu0
      %v3901 = vadd.f32 %v3688, %v3900
      %v3902 = vpop.f32.mrf.mxu0
      %v3903 = vpop.f32.mrf.mxu0
      %v3904 = vadd.f32 %v3688, %v3903
      %v3905 = vpop.f32.mrf.mxu0
      %3906 = vmatprep.mubr.bf16.mxu0 0
      %3907 = vmatmul.mubr.bf16.gmra.mxu0 %v3652
      %v3908 = vpop.f32.mrf.mxu0
      %v3909 = vadd.f32 %v3688, %v3908
      %v3910 = vpop.f32.mrf.mxu0
      %v3911 = vpop.f32.mrf.mxu0
      %v3912 = vadd.f32 %v3688, %v3911
      %v3913 = vpop.f32.mrf.mxu0
      %3914 = vmatprep.mubr.bf16.mxu0 0
      %3915 = vmatmul.mubr.bf16.gmra.mxu0 %v3653
      %v3916 = vpop.f32.mrf.mxu0
      %v3917 = vadd.f32 %v3688, %v3916
      %v3918 = vpop.f32.mrf.mxu0
      %v3919 = vpop.f32.mrf.mxu0
      %v3920 = vadd.f32 %v3688, %v3919
      %v3921 = vpop.f32.mrf.mxu0
      %3922 = vmatprep.mubr.bf16.mxu0 0
      %3923 = vmatmul.mubr.bf16.gmra.mxu0 %v3654
      %v3924 = vpop.f32.mrf.mxu0
      %v3925 = vadd.f32 %v3688, %v3924
      %v3926 = vpop.f32.mrf.mxu0
      %v3927 = vpop.f32.mrf.mxu0
      %v3928 = vadd.f32 %v3688, %v3927
      %v3929 = vpop.f32.mrf.mxu0
      %3930 = vmatprep.mubr.bf16.mxu0 0
      %3931 = vmatmul.mubr.bf16.gmra.mxu0 %v3655
      %v3932 = vpop.f32.mrf.mxu0
      %v3933 = vadd.f32 %v3688, %v3932
      %v3934 = vpop.f32.mrf.mxu0
      %v3935 = vpop.f32.mrf.mxu0
      %v3936 = vadd.f32 %v3688, %v3935
      %v3937 = vpop.f32.mrf.mxu0
      %3938 = vmatprep.mubr.bf16.mxu0 0
      %3939 = vmatmul.mubr.bf16.gmra.mxu0 %v3656
      %v3940 = vpop.f32.mrf.mxu0
      %v3941 = vadd.f32 %v3688, %v3940
      %v3942 = vpop.f32.mrf.mxu0
      %v3943 = vpop.f32.mrf.mxu0
      %v3944 = vadd.f32 %v3688, %v3943
      %v3945 = vpop.f32.mrf.mxu0
      %3946 = vmatprep.mubr.bf16.mxu0 0
      %3947 = vmatmul.mubr.bf16.gmra.mxu0 %v3657
      %v3948 = vpop.f32.mrf.mxu0
      %v3949 = vadd.f32 %v3688, %v3948
      %v3950 = vpop.f32.mrf.mxu0
      %v3951 = vpop.f32.mrf.mxu0
      %v3952 = vadd.f32 %v3688, %v3951
      %v3953 = vpop.f32.mrf.mxu0
      %3954 = vmatprep.mubr.bf16.mxu0 0
      %3955 = vmatmul.mubr.bf16.gmra.mxu0 %v3658
      %v3956 = vpop.f32.mrf.mxu0
      %v3957 = vadd.f32 %v3688, %v3956
      %v3958 = vpop.f32.mrf.mxu0
      %v3959 = vpop.f32.mrf.mxu0
      %v3960 = vadd.f32 %v3688, %v3959
      %v3961 = vpop.f32.mrf.mxu0
      %3962 = vmatprep.mubr.bf16.mxu0 0
      %3963 = vmatmul.mubr.bf16.gmra.mxu0 %v3659
      %v3964 = vpop.f32.mrf.mxu0
      %v3965 = vadd.f32 %v3688, %v3964
      %v3966 = vpop.f32.mrf.mxu0
      %v3967 = vpop.f32.mrf.mxu0
      %v3968 = vadd.f32 %v3688, %v3967
      %v3969 = vpop.f32.mrf.mxu0
      %3970 = vmatprep.mubr.bf16.mxu0 0
      %3971 = vmatmul.mubr.bf16.gmra.mxu0 %v3660
      %v3972 = vpop.f32.mrf.mxu0
      %v3973 = vadd.f32 %v3688, %v3972
      %v3974 = vpop.f32.mrf.mxu0
      %v3975 = vpop.f32.mrf.mxu0
      %v3976 = vadd.f32 %v3688, %v3975
      %v3977 = vpop.f32.mrf.mxu0
      %3978 = vmatprep.mubr.bf16.mxu0 0
      %3979 = vmatmul.mubr.bf16.gmra.mxu0 %v3661
      %v3980 = vpop.f32.mrf.mxu0
      %v3981 = vadd.f32 %v3688, %v3980
      %v3982 = vpop.f32.mrf.mxu0
      %v3983 = vpop.f32.mrf.mxu0
      %v3984 = vadd.f32 %v3688, %v3983
      %v3985 = vpop.f32.mrf.mxu0
      %3986 = vmatprep.mubr.bf16.mxu0 0
      %3987 = vmatmul.mubr.bf16.gmra.mxu0 %v3662
      %v3988 = vpop.f32.mrf.mxu0
      %v3989 = vadd.f32 %v3688, %v3988
      %v3990 = vpop.f32.mrf.mxu0
      %v3991 = vpop.f32.mrf.mxu0
      %v3992 = vadd.f32 %v3688, %v3991
      %v3993 = vpop.f32.mrf.mxu0
      %3994 = vmatprep.mubr.bf16.mxu0 0
      %3995 = vmatmul.mubr.bf16.gmra.mxu0 %v3663
      %v3996 = vpop.f32.mrf.mxu0
      %v3997 = vadd.f32 %v3688, %v3996
      %v3998 = vpop.f32.mrf.mxu0
      %v3999 = vpop.f32.mrf.mxu0
      %v4000 = vadd.f32 %v3688, %v3999
      %v4001 = vpop.f32.mrf.mxu0
      %4002 = vmatprep.mubr.bf16.mxu0 0
      %4003 = vmatmul.mubr.bf16.gmra.mxu0 %v3664
      %v4004 = vpop.f32.mrf.mxu0
      %v4005 = vadd.f32 %v3688, %v4004
      %v4006 = vpop.f32.mrf.mxu0
      %v4007 = vpop.f32.mrf.mxu0
      %v4008 = vadd.f32 %v3688, %v4007
      %v4009 = vpop.f32.mrf.mxu0
      %4010 = vmatprep.mubr.bf16.mxu0 0
      %4011 = vmatmul.mubr.bf16.gmra.mxu0 %v3665
      %v4012 = vpop.f32.mrf.mxu0
      %v4013 = vadd.f32 %v3688, %v4012
      %v4014 = vpop.f32.mrf.mxu0
      %v4015 = vpop.f32.mrf.mxu0
      %v4016 = vadd.f32 %v3688, %v4015
      %v4017 = vpop.f32.mrf.mxu0
      %4018 = vmatprep.mubr.bf16.mxu0 0
      %4019 = vmatmul.mubr.bf16.gmra.mxu0 %v3666
      %v4020 = vpop.f32.mrf.mxu0
      %v4021 = vadd.f32 %v3688, %v4020
      %v4022 = vpop.f32.mrf.mxu0
      %v4023 = vpop.f32.mrf.mxu0
      %v4024 = vadd.f32 %v3688, %v4023
      %v4025 = vpop.f32.mrf.mxu0
      %4026 = vdwg.mxu0
      %v4027 = vtanh.pop %v3773
      %v4028 = vtanh.pop %v3776
      %v4029 = vtanh.pop %v3781
      %v4030 = vtanh.pop %v3784
      %v4031 = vtanh.pop %v3789
      %v4032 = vtanh.pop %v3792
      %v4033 = vtanh.pop %v3797
      %v4034 = vtanh.pop %v3800
      %v4035 = vtanh.pop %v3805
      %v4036 = vtanh.pop %v3808
      %v4037 = vtanh.pop %v3813
      %v4038 = vtanh.pop %v3816
      %v4039 = vtanh.pop %v3821
      %v4040 = vtanh.pop %v3824
      %v4041 = vtanh.pop %v3829
      %v4042 = vtanh.pop %v3832
      %v4043 = vtanh.pop %v3837
      %v4044 = vtanh.pop %v3840
      %v4045 = vtanh.pop %v3845
      %v4046 = vtanh.pop %v3848
      %v4047 = vtanh.pop %v3853
      %v4048 = vtanh.pop %v3856
      %v4049 = vtanh.pop %v3861
      %v4050 = vtanh.pop %v3864
      %v4051 = vtanh.pop %v3869
      %v4052 = vtanh.pop %v3872
      %v4053 = vtanh.pop %v3877
      %v4054 = vtanh.pop %v3880
      %v4055 = vtanh.pop %v3885
      %v4056 = vtanh.pop %v3888
      %v4057 = vtanh.pop %v3893
      %v4058 = vtanh.pop %v3896
      %v4059 = vtanh.pop %v3901
      %v4060 = vtanh.pop %v3904
      %v4061 = vtanh.pop %v3909
      %v4062 = vtanh.pop %v3912
      %v4063 = vtanh.pop %v3917
      %v4064 = vtanh.pop %v3920
      %v4065 = vtanh.pop %v3925
      %v4066 = vtanh.pop %v3928
      %v4067 = vtanh.pop %v3933
      %v4068 = vtanh.pop %v3936
      %v4069 = vtanh.pop %v3941
      %v4070 = vtanh.pop %v3944
      %v4071 = vtanh.pop %v3949
      %v4072 = vtanh.pop %v3952
      %v4073 = vtanh.pop %v3957
      %v4074 = vtanh.pop %v3960
      %v4075 = vtanh.pop %v3965
      %v4076 = vtanh.pop %v3968
      %v4077 = vtanh.pop %v3973
      %v4078 = vtanh.pop %v3976
      %v4079 = vtanh.pop %v3981
      %v4080 = vtanh.pop %v3984
      %v4081 = vtanh.pop %v3989
      %v4082 = vtanh.pop %v3992
      %v4083 = vtanh.pop %v3997
      %v4084 = vtanh.pop %v4000
      %v4085 = vtanh.pop %v4005
      %v4086 = vtanh.pop %v4008
      %v4087 = vtanh.pop %v4013
      %v4088 = vtanh.pop %v4016
      %v4089 = vtanh.pop %v4021
      %v4090 = vtanh.pop %v4024
      %v4091 = vmul.f32 %v4027, %v2727
      %v4092 = vmul.f32 %v4028, %v2732
      %v4093 = vmul.f32 %v4029, %v2737
      %v4094 = vmul.f32 %v4030, %v2742
      %v4095 = vmul.f32 %v4031, %v2747
      %v4096 = vmul.f32 %v4032, %v2752
      %v4097 = vmul.f32 %v4033, %v2757
      %v4098 = vmul.f32 %v4034, %v2762
      %v4099 = vmul.f32 %v4035, %v2767
      %v4100 = vmul.f32 %v4036, %v2772
      %v4101 = vmul.f32 %v4037, %v2777
      %v4102 = vmul.f32 %v4038, %v2782
      %v4103 = vmul.f32 %v4039, %v2787
      %v4104 = vmul.f32 %v4040, %v2792
      %v4105 = vmul.f32 %v4041, %v2797
      %v4106 = vmul.f32 %v4042, %v2802
      %v4107 = vmul.f32 %v4043, %v2807
      %v4108 = vmul.f32 %v4044, %v2812
      %v4109 = vmul.f32 %v4045, %v2817
      %v4110 = vmul.f32 %v4046, %v2822
      %v4111 = vmul.f32 %v4047, %v2827
      %v4112 = vmul.f32 %v4048, %v2832
      %v4113 = vmul.f32 %v4049, %v2837
      %v4114 = vmul.f32 %v4050, %v2842
      %v4115 = vmul.f32 %v4051, %v2847
      %v4116 = vmul.f32 %v4052, %v2852
      %v4117 = vmul.f32 %v4053, %v2857
      %v4118 = vmul.f32 %v4054, %v2862
      %v4119 = vmul.f32 %v4055, %v2867
      %v4120 = vmul.f32 %v4056, %v2872
      %v4121 = vmul.f32 %v4057, %v2877
      %v4122 = vmul.f32 %v4058, %v2882
      %v4123 = vmul.f32 %v4059, %v2887
      %v4124 = vmul.f32 %v4060, %v2892
      %v4125 = vmul.f32 %v4061, %v2897
      %v4126 = vmul.f32 %v4062, %v2902
      %v4127 = vmul.f32 %v4063, %v2907
      %v4128 = vmul.f32 %v4064, %v2912
      %v4129 = vmul.f32 %v4065, %v2917
      %v4130 = vmul.f32 %v4066, %v2922
      %v4131 = vmul.f32 %v4067, %v2927
      %v4132 = vmul.f32 %v4068, %v2932
      %v4133 = vmul.f32 %v4069, %v2937
      %v4134 = vmul.f32 %v4070, %v2942
      %v4135 = vmul.f32 %v4071, %v2947
      %v4136 = vmul.f32 %v4072, %v2952
      %v4137 = vmul.f32 %v4073, %v2957
      %v4138 = vmul.f32 %v4074, %v2962
      %v4139 = vmul.f32 %v4075, %v2967
      %v4140 = vmul.f32 %v4076, %v2972
      %v4141 = vmul.f32 %v4077, %v2977
      %v4142 = vmul.f32 %v4078, %v2982
      %v4143 = vmul.f32 %v4079, %v2987
      %v4144 = vmul.f32 %v4080, %v2992
      %v4145 = vmul.f32 %v4081, %v2997
      %v4146 = vmul.f32 %v4082, %v3002
      %v4147 = vmul.f32 %v4083, %v3007
      %v4148 = vmul.f32 %v4084, %v3012
      %v4149 = vmul.f32 %v4085, %v3017
      %v4150 = vmul.f32 %v4086, %v3022
      %v4151 = vmul.f32 %v4087, %v3027
      %v4152 = vmul.f32 %v4088, %v3032
      %v4153 = vmul.f32 %v4089, %v3037
      %v4154 = vmul.f32 %v4090, %v3042
      %v4155 = vpack.c.bf16 %v4092, %v4091
      %v4156 = vpack.c.bf16 %v4094, %v4093
      %v4157 = vpack.c.bf16 %v4096, %v4095
      %v4158 = vpack.c.bf16 %v4098, %v4097
      %v4159 = vpack.c.bf16 %v4100, %v4099
      %v4160 = vpack.c.bf16 %v4102, %v4101
      %v4161 = vpack.c.bf16 %v4104, %v4103
      %v4162 = vpack.c.bf16 %v4106, %v4105
      %v4163 = vpack.c.bf16 %v4108, %v4107
      %v4164 = vpack.c.bf16 %v4110, %v4109
      %v4165 = vpack.c.bf16 %v4112, %v4111
      %v4166 = vpack.c.bf16 %v4114, %v4113
      %v4167 = vpack.c.bf16 %v4116, %v4115
      %v4168 = vpack.c.bf16 %v4118, %v4117
      %v4169 = vpack.c.bf16 %v4120, %v4119
      %v4170 = vpack.c.bf16 %v4122, %v4121
      %v4171 = vpack.c.bf16 %v4124, %v4123
      %v4172 = vpack.c.bf16 %v4126, %v4125
      %v4173 = vpack.c.bf16 %v4128, %v4127
      %v4174 = vpack.c.bf16 %v4130, %v4129
      %v4175 = vpack.c.bf16 %v4132, %v4131
      %v4176 = vpack.c.bf16 %v4134, %v4133
      %v4177 = vpack.c.bf16 %v4136, %v4135
      %v4178 = vpack.c.bf16 %v4138, %v4137
      %v4179 = vpack.c.bf16 %v4140, %v4139
      %v4180 = vpack.c.bf16 %v4142, %v4141
      %v4181 = vpack.c.bf16 %v4144, %v4143
      %v4182 = vpack.c.bf16 %v4146, %v4145
      %v4183 = vpack.c.bf16 %v4148, %v4147
      %v4184 = vpack.c.bf16 %v4150, %v4149
      %v4185 = vpack.c.bf16 %v4152, %v4151
      %v4186 = vpack.c.bf16 %v4154, %v4153
      %v4187 = vld [vmem:[%s7] sm:$0xf]
      %v4188 = vld [vmem:[%s7 + $0x4] sm:$0xf]
      %v4189 = vld [vmem:[%s7 + $0x8] sm:$0xf]
      %v4190 = vld [vmem:[%s7 + $0xc] sm:$0xf]
      %v4191 = vld [vmem:[%s7 + $0x10] sm:$0xf]
      %v4192 = vld [vmem:[%s7 + $0x14] sm:$0xf]
      %v4193 = vld [vmem:[%s7 + $0x18] sm:$0xf]
      %v4194 = vld [vmem:[%s7 + $0x1c] sm:$0xf]
      %v4195 = vld [vmem:[%s7 + $0x20] sm:$0xf]
      %v4196 = vld [vmem:[%s7 + $0x24] sm:$0xf]
      %v4197 = vld [vmem:[%s7 + $0x28] sm:$0xf]
      %v4198 = vld [vmem:[%s7 + $0x2c] sm:$0xf]
      %v4199 = vld [vmem:[%s7 + $0x30] sm:$0xf]
      %v4200 = vld [vmem:[%s7 + $0x34] sm:$0xf]
      %v4201 = vld [vmem:[%s7 + $0x38] sm:$0xf]
      %v4202 = vld [vmem:[%s7 + $0x3c] sm:$0xf]
      %v4203 = vld [vmem:[%s8] sm:$0xf]
      %v4205 = vsel %vm2656, %v4203, 0
      %4207 = vmatprep.subr.mxu0 0.0
      %4208 = vmatpush1.msra.mxu0 0.0
      %4209 = vmatprep.subr.mxu0 0.0
      %4210 = vmatpush1.msra.mxu0 0.0
      %4211 = vmatprep.subr.mxu0 0.0
      %4212 = vmatpush1.msra.mxu0 0.0
      %4213 = vmatprep.subr.mxu0 0.0
      %4214 = vmatpush1.msra.mxu0 0.0
      %4215 = vmatprep.subr.mxu0 0.0
      %4216 = vmatpush1.msra.mxu0 0.0
      %4217 = vmatprep.subr.mxu0 0.0
      %4218 = vmatpush1.msra.mxu0 0.0
      %4219 = vmatprep.subr.mxu0 0.0
      %4220 = vmatpush1.msra.mxu0 0.0
      %4221 = vmatprep.subr.mxu0 0.0
      %4222 = vmatpush1.msra.mxu0 0.0
      %4223 = vmatprep.subr.mxu0 0.0
      %4224 = vmatpush1.msra.mxu0 0.0
      %4225 = vmatprep.subr.mxu0 0.0
      %4226 = vmatpush1.msra.mxu0 0.0
      %4227 = vmatprep.subr.mxu0 0.0
      %4228 = vmatpush1.msra.mxu0 0.0
      %4229 = vmatprep.subr.mxu0 0.0
      %4230 = vmatpush1.msra.mxu0 0.0
      %4231 = vmatprep.subr.mxu0 0.0
      %4232 = vmatpush1.msra.mxu0 0.0
      %4233 = vmatprep.subr.mxu0 0.0
      %4234 = vmatpush1.msra.mxu0 0.0
      %4235 = vmatprep.subr.mxu0 0.0
      %4236 = vmatpush1.msra.mxu0 0.0
      %4237 = vmatprep.subr.mxu0 0.0
      %4238 = vmatpush1.msra.mxu0 %v4205
      %4239 = vmatprep.subr.mxu0 0.0
      %4240 = vmatpush2.msra.mxu0 0.0
      %4241 = vmatprep.subr.mxu0 0.0
      %4242 = vmatpush2.msra.mxu0 0.0
      %4243 = vmatprep.subr.mxu0 0.0
      %4244 = vmatpush2.msra.mxu0 0.0
      %4245 = vmatprep.subr.mxu0 0.0
      %4246 = vmatpush2.msra.mxu0 0.0
      %4247 = vmatprep.subr.mxu0 0.0
      %4248 = vmatpush2.msra.mxu0 0.0
      %4249 = vmatprep.subr.mxu0 0.0
      %4250 = vmatpush2.msra.mxu0 0.0
      %4251 = vmatprep.subr.mxu0 0.0
      %4252 = vmatpush2.msra.mxu0 0.0
      %4253 = vmatprep.subr.mxu0 0.0
      %4254 = vmatpush2.msra.mxu0 0.0
      %4255 = vmatprep.subr.mxu0 0.0
      %4256 = vmatpush2.msra.mxu0 0.0
      %4257 = vmatprep.subr.mxu0 0.0
      %4258 = vmatpush2.msra.mxu0 0.0
      %4259 = vmatprep.subr.mxu0 0.0
      %4260 = vmatpush2.msra.mxu0 0.0
      %4261 = vmatprep.subr.mxu0 0.0
      %4262 = vmatpush2.msra.mxu0 0.0
      %4263 = vmatprep.subr.mxu0 0.0
      %4264 = vmatpush2.msra.mxu0 0.0
      %4265 = vmatprep.subr.mxu0 0.0
      %4266 = vmatpush2.msra.mxu0 0.0
      %4267 = vmatprep.subr.mxu0 0.0
      %4268 = vmatpush2.msra.mxu0 0.0
      %4269 = vmatprep.subr.mxu0 0.0
      %4270 = vmatpush2.msra.mxu0 0.0
      %4271 = vmatprep.mubr.f32.mxu0 0.0
      %4272 = vmatmul.mubr.f32.gmra.mxu0 %v2465
      %v4273 = vpop.f32.mrf.mxu0
      %v4274 = vadd.f32 0.0, %v4273
      %v4275 = vpop.f32.mrf.mxu0
      %4276 = vmatprep.mubr.f32.mxu0 0.0
      %4277 = vmatmul.mubr.f32.gmra.mxu0 %v2468
      %v4278 = vpop.f32.mrf.mxu0
      %v4279 = vadd.f32 0.0, %v4278
      %v4280 = vpop.f32.mrf.mxu0
      %4281 = vmatprep.mubr.f32.mxu0 0.0
      %4282 = vmatmul.mubr.f32.gmra.mxu0 %v2471
      %v4283 = vpop.f32.mrf.mxu0
      %v4284 = vadd.f32 0.0, %v4283
      %v4285 = vpop.f32.mrf.mxu0
      %4286 = vmatprep.mubr.f32.mxu0 0.0
      %4287 = vmatmul.mubr.f32.gmra.mxu0 %v2474
      %v4288 = vpop.f32.mrf.mxu0
      %v4289 = vadd.f32 0.0, %v4288
      %v4290 = vpop.f32.mrf.mxu0
      %4291 = vmatprep.mubr.f32.mxu0 0.0
      %4292 = vmatmul.mubr.f32.gmra.mxu0 %v2477
      %v4293 = vpop.f32.mrf.mxu0
      %v4294 = vadd.f32 0.0, %v4293
      %v4295 = vpop.f32.mrf.mxu0
      %4296 = vmatprep.mubr.f32.mxu0 0.0
      %4297 = vmatmul.mubr.f32.gmra.mxu0 %v2480
      %v4298 = vpop.f32.mrf.mxu0
      %v4299 = vadd.f32 0.0, %v4298
      %v4300 = vpop.f32.mrf.mxu0
      %4301 = vmatprep.mubr.f32.mxu0 0.0
      %4302 = vmatmul.mubr.f32.gmra.mxu0 %v2483
      %v4303 = vpop.f32.mrf.mxu0
      %v4304 = vadd.f32 0.0, %v4303
      %v4305 = vpop.f32.mrf.mxu0
      %4306 = vmatprep.mubr.f32.mxu0 0.0
      %4307 = vmatmul.mubr.f32.gmra.mxu0 %v2486
      %v4308 = vpop.f32.mrf.mxu0
      %v4309 = vadd.f32 0.0, %v4308
      %v4310 = vpop.f32.mrf.mxu0
      %4311 = vmatprep.mubr.f32.mxu0 0.0
      %4312 = vmatmul.mubr.f32.gmra.mxu0 %v2489
      %v4313 = vpop.f32.mrf.mxu0
      %v4314 = vadd.f32 0.0, %v4313
      %v4315 = vpop.f32.mrf.mxu0
      %4316 = vmatprep.mubr.f32.mxu0 0.0
      %4317 = vmatmul.mubr.f32.gmra.mxu0 %v2492
      %v4318 = vpop.f32.mrf.mxu0
      %v4319 = vadd.f32 0.0, %v4318
      %v4320 = vpop.f32.mrf.mxu0
      %4321 = vmatprep.mubr.f32.mxu0 0.0
      %4322 = vmatmul.mubr.f32.gmra.mxu0 %v2495
      %v4323 = vpop.f32.mrf.mxu0
      %v4324 = vadd.f32 0.0, %v4323
      %v4325 = vpop.f32.mrf.mxu0
      %4326 = vmatprep.mubr.f32.mxu0 0.0
      %4327 = vmatmul.mubr.f32.gmra.mxu0 %v2498
      %v4328 = vpop.f32.mrf.mxu0
      %v4329 = vadd.f32 0.0, %v4328
      %v4330 = vpop.f32.mrf.mxu0
      %4331 = vmatprep.mubr.f32.mxu0 0.0
      %4332 = vmatmul.mubr.f32.gmra.mxu0 %v2501
      %v4333 = vpop.f32.mrf.mxu0
      %v4334 = vadd.f32 0.0, %v4333
      %v4335 = vpop.f32.mrf.mxu0
      %4336 = vmatprep.mubr.f32.mxu0 0.0
      %4337 = vmatmul.mubr.f32.gmra.mxu0 %v2504
      %v4338 = vpop.f32.mrf.mxu0
      %v4339 = vadd.f32 0.0, %v4338
      %v4340 = vpop.f32.mrf.mxu0
      %4341 = vmatprep.mubr.f32.mxu0 0.0
      %4342 = vmatmul.mubr.f32.gmra.mxu0 %v2507
      %v4343 = vpop.f32.mrf.mxu0
      %v4344 = vadd.f32 0.0, %v4343
      %v4345 = vpop.f32.mrf.mxu0
      %4346 = vmatprep.mubr.f32.mxu0 0.0
      %4347 = vmatmul.mubr.f32.gmra.mxu0 %v2510
      %v4348 = vpop.f32.mrf.mxu0
      %v4349 = vadd.f32 0.0, %v4348
      %v4350 = vpop.f32.mrf.mxu0
      %4351 = vmatprep.mubr.f32.mxu0 0.0
      %4352 = vmatmul.mubr.f32.gmra.mxu0 %v2513
      %v4353 = vpop.f32.mrf.mxu0
      %v4354 = vadd.f32 0.0, %v4353
      %v4355 = vpop.f32.mrf.mxu0
      %4356 = vmatprep.mubr.f32.mxu0 0.0
      %4357 = vmatmul.mubr.f32.gmra.mxu0 %v2516
      %v4358 = vpop.f32.mrf.mxu0
      %v4359 = vadd.f32 0.0, %v4358
      %v4360 = vpop.f32.mrf.mxu0
      %4361 = vmatprep.mubr.f32.mxu0 0.0
      %4362 = vmatmul.mubr.f32.gmra.mxu0 %v2519
      %v4363 = vpop.f32.mrf.mxu0
      %v4364 = vadd.f32 0.0, %v4363
      %v4365 = vpop.f32.mrf.mxu0
      %4366 = vmatprep.mubr.f32.mxu0 0.0
      %4367 = vmatmul.mubr.f32.gmra.mxu0 %v2522
      %v4368 = vpop.f32.mrf.mxu0
      %v4369 = vadd.f32 0.0, %v4368
      %v4370 = vpop.f32.mrf.mxu0
      %4371 = vmatprep.mubr.f32.mxu0 0.0
      %4372 = vmatmul.mubr.f32.gmra.mxu0 %v2525
      %v4373 = vpop.f32.mrf.mxu0
      %v4374 = vadd.f32 0.0, %v4373
      %v4375 = vpop.f32.mrf.mxu0
      %4376 = vmatprep.mubr.f32.mxu0 0.0
      %4377 = vmatmul.mubr.f32.gmra.mxu0 %v2528
      %v4378 = vpop.f32.mrf.mxu0
      %v4379 = vadd.f32 0.0, %v4378
      %v4380 = vpop.f32.mrf.mxu0
      %4381 = vmatprep.mubr.f32.mxu0 0.0
      %4382 = vmatmul.mubr.f32.gmra.mxu0 %v2531
      %v4383 = vpop.f32.mrf.mxu0
      %v4384 = vadd.f32 0.0, %v4383
      %v4385 = vpop.f32.mrf.mxu0
      %4386 = vmatprep.mubr.f32.mxu0 0.0
      %4387 = vmatmul.mubr.f32.gmra.mxu0 %v2534
      %v4388 = vpop.f32.mrf.mxu0
      %v4389 = vadd.f32 0.0, %v4388
      %v4390 = vpop.f32.mrf.mxu0
      %4391 = vmatprep.mubr.f32.mxu0 0.0
      %4392 = vmatmul.mubr.f32.gmra.mxu0 %v2537
      %v4393 = vpop.f32.mrf.mxu0
      %v4394 = vadd.f32 0.0, %v4393
      %v4395 = vpop.f32.mrf.mxu0
      %4396 = vmatprep.mubr.f32.mxu0 0.0
      %4397 = vmatmul.mubr.f32.gmra.mxu0 %v2540
      %v4398 = vpop.f32.mrf.mxu0
      %v4399 = vadd.f32 0.0, %v4398
      %v4400 = vpop.f32.mrf.mxu0
      %4401 = vmatprep.mubr.f32.mxu0 0.0
      %4402 = vmatmul.mubr.f32.gmra.mxu0 %v2543
      %v4403 = vpop.f32.mrf.mxu0
      %v4404 = vadd.f32 0.0, %v4403
      %v4405 = vpop.f32.mrf.mxu0
      %4406 = vmatprep.mubr.f32.mxu0 0.0
      %4407 = vmatmul.mubr.f32.gmra.mxu0 %v2546
      %v4408 = vpop.f32.mrf.mxu0
      %v4409 = vadd.f32 0.0, %v4408
      %v4410 = vpop.f32.mrf.mxu0
      %4411 = vmatprep.mubr.f32.mxu0 0.0
      %4412 = vmatmul.mubr.f32.gmra.mxu0 %v2549
      %v4413 = vpop.f32.mrf.mxu0
      %v4414 = vadd.f32 0.0, %v4413
      %v4415 = vpop.f32.mrf.mxu0
      %4416 = vmatprep.mubr.f32.mxu0 0.0
      %4417 = vmatmul.mubr.f32.gmra.mxu0 %v2552
      %v4418 = vpop.f32.mrf.mxu0
      %v4419 = vadd.f32 0.0, %v4418
      %v4420 = vpop.f32.mrf.mxu0
      %4421 = vmatprep.mubr.f32.mxu0 0.0
      %4422 = vmatmul.mubr.f32.gmra.mxu0 %v2555
      %v4423 = vpop.f32.mrf.mxu0
      %v4424 = vadd.f32 0.0, %v4423
      %v4425 = vpop.f32.mrf.mxu0
      %4426 = vmatprep.mubr.f32.mxu0 0.0
      %4427 = vmatmul.mubr.f32.gmra.mxu0 %v2558
      %v4428 = vpop.f32.mrf.mxu0
      %v4429 = vadd.f32 0.0, %v4428
      %v4430 = vpop.f32.mrf.mxu0
      %4431 = vmatprep.mubr.f32.mxu0 0.0
      %4432 = vmatmul.mubr.f32.gmra.mxu0 %v2561
      %v4433 = vpop.f32.mrf.mxu0
      %v4434 = vadd.f32 0.0, %v4433
      %v4435 = vpop.f32.mrf.mxu0
      %4436 = vmatprep.mubr.f32.mxu0 0.0
      %4437 = vmatmul.mubr.f32.gmra.mxu0 %v2564
      %v4438 = vpop.f32.mrf.mxu0
      %v4439 = vadd.f32 0.0, %v4438
      %v4440 = vpop.f32.mrf.mxu0
      %4441 = vmatprep.mubr.f32.mxu0 0.0
      %4442 = vmatmul.mubr.f32.gmra.mxu0 %v2567
      %v4443 = vpop.f32.mrf.mxu0
      %v4444 = vadd.f32 0.0, %v4443
      %v4445 = vpop.f32.mrf.mxu0
      %4446 = vmatprep.mubr.f32.mxu0 0.0
      %4447 = vmatmul.mubr.f32.gmra.mxu0 %v2570
      %v4448 = vpop.f32.mrf.mxu0
      %v4449 = vadd.f32 0.0, %v4448
      %v4450 = vpop.f32.mrf.mxu0
      %4451 = vmatprep.mubr.f32.mxu0 0.0
      %4452 = vmatmul.mubr.f32.gmra.mxu0 %v2573
      %v4453 = vpop.f32.mrf.mxu0
      %v4454 = vadd.f32 0.0, %v4453
      %v4455 = vpop.f32.mrf.mxu0
      %4456 = vmatprep.mubr.f32.mxu0 0.0
      %4457 = vmatmul.mubr.f32.gmra.mxu0 %v2576
      %v4458 = vpop.f32.mrf.mxu0
      %v4459 = vadd.f32 0.0, %v4458
      %v4460 = vpop.f32.mrf.mxu0
      %4461 = vmatprep.mubr.f32.mxu0 0.0
      %4462 = vmatmul.mubr.f32.gmra.mxu0 %v2579
      %v4463 = vpop.f32.mrf.mxu0
      %v4464 = vadd.f32 0.0, %v4463
      %v4465 = vpop.f32.mrf.mxu0
      %4466 = vmatprep.mubr.f32.mxu0 0.0
      %4467 = vmatmul.mubr.f32.gmra.mxu0 %v2582
      %v4468 = vpop.f32.mrf.mxu0
      %v4469 = vadd.f32 0.0, %v4468
      %v4470 = vpop.f32.mrf.mxu0
      %4471 = vmatprep.mubr.f32.mxu0 0.0
      %4472 = vmatmul.mubr.f32.gmra.mxu0 %v2585
      %v4473 = vpop.f32.mrf.mxu0
      %v4474 = vadd.f32 0.0, %v4473
      %v4475 = vpop.f32.mrf.mxu0
      %4476 = vmatprep.mubr.f32.mxu0 0.0
      %4477 = vmatmul.mubr.f32.gmra.mxu0 %v2588
      %v4478 = vpop.f32.mrf.mxu0
      %v4479 = vadd.f32 0.0, %v4478
      %v4480 = vpop.f32.mrf.mxu0
      %4481 = vmatprep.mubr.f32.mxu0 0.0
      %4482 = vmatmul.mubr.f32.gmra.mxu0 %v2591
      %v4483 = vpop.f32.mrf.mxu0
      %v4484 = vadd.f32 0.0, %v4483
      %v4485 = vpop.f32.mrf.mxu0
      %4486 = vmatprep.mubr.f32.mxu0 0.0
      %4487 = vmatmul.mubr.f32.gmra.mxu0 %v2594
      %v4488 = vpop.f32.mrf.mxu0
      %v4489 = vadd.f32 0.0, %v4488
      %v4490 = vpop.f32.mrf.mxu0
      %4491 = vmatprep.mubr.f32.mxu0 0.0
      %4492 = vmatmul.mubr.f32.gmra.mxu0 %v2597
      %v4493 = vpop.f32.mrf.mxu0
      %v4494 = vadd.f32 0.0, %v4493
      %v4495 = vpop.f32.mrf.mxu0
      %4496 = vmatprep.mubr.f32.mxu0 0.0
      %4497 = vmatmul.mubr.f32.gmra.mxu0 %v2600
      %v4498 = vpop.f32.mrf.mxu0
      %v4499 = vadd.f32 0.0, %v4498
      %v4500 = vpop.f32.mrf.mxu0
      %4501 = vmatprep.mubr.f32.mxu0 0.0
      %4502 = vmatmul.mubr.f32.gmra.mxu0 %v2603
      %v4503 = vpop.f32.mrf.mxu0
      %v4504 = vadd.f32 0.0, %v4503
      %v4505 = vpop.f32.mrf.mxu0
      %4506 = vmatprep.mubr.f32.mxu0 0.0
      %4507 = vmatmul.mubr.f32.gmra.mxu0 %v2606
      %v4508 = vpop.f32.mrf.mxu0
      %v4509 = vadd.f32 0.0, %v4508
      %v4510 = vpop.f32.mrf.mxu0
      %4511 = vmatprep.mubr.f32.mxu0 0.0
      %4512 = vmatmul.mubr.f32.gmra.mxu0 %v2609
      %v4513 = vpop.f32.mrf.mxu0
      %v4514 = vadd.f32 0.0, %v4513
      %v4515 = vpop.f32.mrf.mxu0
      %4516 = vmatprep.mubr.f32.mxu0 0.0
      %4517 = vmatmul.mubr.f32.gmra.mxu0 %v2612
      %v4518 = vpop.f32.mrf.mxu0
      %v4519 = vadd.f32 0.0, %v4518
      %v4520 = vpop.f32.mrf.mxu0
      %4521 = vmatprep.mubr.f32.mxu0 0.0
      %4522 = vmatmul.mubr.f32.gmra.mxu0 %v2615
      %v4523 = vpop.f32.mrf.mxu0
      %v4524 = vadd.f32 0.0, %v4523
      %v4525 = vpop.f32.mrf.mxu0
      %4526 = vmatprep.mubr.f32.mxu0 0.0
      %4527 = vmatmul.mubr.f32.gmra.mxu0 %v2618
      %v4528 = vpop.f32.mrf.mxu0
      %v4529 = vadd.f32 0.0, %v4528
      %v4530 = vpop.f32.mrf.mxu0
      %4531 = vmatprep.mubr.f32.mxu0 0.0
      %4532 = vmatmul.mubr.f32.gmra.mxu0 %v2621
      %v4533 = vpop.f32.mrf.mxu0
      %v4534 = vadd.f32 0.0, %v4533
      %v4535 = vpop.f32.mrf.mxu0
      %4536 = vmatprep.mubr.f32.mxu0 0.0
      %4537 = vmatmul.mubr.f32.gmra.mxu0 %v2624
      %v4538 = vpop.f32.mrf.mxu0
      %v4539 = vadd.f32 0.0, %v4538
      %v4540 = vpop.f32.mrf.mxu0
      %4541 = vmatprep.mubr.f32.mxu0 0.0
      %4542 = vmatmul.mubr.f32.gmra.mxu0 %v2627
      %v4543 = vpop.f32.mrf.mxu0
      %v4544 = vadd.f32 0.0, %v4543
      %v4545 = vpop.f32.mrf.mxu0
      %4546 = vmatprep.mubr.f32.mxu0 0.0
      %4547 = vmatmul.mubr.f32.gmra.mxu0 %v2630
      %v4548 = vpop.f32.mrf.mxu0
      %v4549 = vadd.f32 0.0, %v4548
      %v4550 = vpop.f32.mrf.mxu0
      %4551 = vmatprep.mubr.f32.mxu0 0.0
      %4552 = vmatmul.mubr.f32.gmra.mxu0 %v2633
      %v4553 = vpop.f32.mrf.mxu0
      %v4554 = vadd.f32 0.0, %v4553
      %v4555 = vpop.f32.mrf.mxu0
      %4556 = vmatprep.mubr.f32.mxu0 0.0
      %4557 = vmatmul.mubr.f32.gmra.mxu0 %v2636
      %v4558 = vpop.f32.mrf.mxu0
      %v4559 = vadd.f32 0.0, %v4558
      %v4560 = vpop.f32.mrf.mxu0
      %4561 = vmatprep.mubr.f32.mxu0 0.0
      %4562 = vmatmul.mubr.f32.gmra.mxu0 %v2639
      %v4563 = vpop.f32.mrf.mxu0
      %v4564 = vadd.f32 0.0, %v4563
      %v4565 = vpop.f32.mrf.mxu0
      %4566 = vmatprep.mubr.f32.mxu0 0.0
      %4567 = vmatmul.mubr.f32.gmra.mxu0 %v2642
      %v4568 = vpop.f32.mrf.mxu0
      %v4569 = vadd.f32 0.0, %v4568
      %v4570 = vpop.f32.mrf.mxu0
      %4571 = vmatprep.mubr.f32.mxu0 0.0
      %4572 = vmatmul.mubr.f32.gmra.mxu0 %v2645
      %v4573 = vpop.f32.mrf.mxu0
      %v4574 = vadd.f32 0.0, %v4573
      %v4575 = vpop.f32.mrf.mxu0
      %4576 = vmatprep.mubr.f32.mxu0 0.0
      %4577 = vmatmul.mubr.f32.gmra.mxu0 %v2648
      %v4578 = vpop.f32.mrf.mxu0
      %v4579 = vadd.f32 0.0, %v4578
      %v4580 = vpop.f32.mrf.mxu0
      %4581 = vmatprep.mubr.f32.mxu0 0.0
      %4582 = vmatmul.mubr.f32.gmra.mxu0 %v2651
      %v4583 = vpop.f32.mrf.mxu0
      %v4584 = vadd.f32 0.0, %v4583
      %v4585 = vpop.f32.mrf.mxu0
      %4586 = vmatprep.mubr.f32.mxu0 0.0
      %4587 = vmatmul.mubr.f32.gmra.mxu0 %v2654
      %v4588 = vpop.f32.mrf.mxu0
      %v4589 = vadd.f32 0.0, %v4588
      %v4590 = vpop.f32.mrf.mxu0
      %4591 = vdwg.mxu0
      %v4608 = vunpack.c.l.b16 %v4187
      %v4609 = vunpack.c.l.b16 %v4188
      %v4610 = vunpack.c.l.b16 %v4189
      %v4611 = vunpack.c.l.b16 %v4190
      %v4612 = vunpack.c.l.b16 %v4191
      %v4613 = vunpack.c.l.b16 %v4192
      %v4614 = vunpack.c.l.b16 %v4193
      %v4615 = vunpack.c.l.b16 %v4194
      %v4616 = vunpack.c.l.b16 %v4195
      %v4617 = vunpack.c.l.b16 %v4196
      %v4618 = vunpack.c.l.b16 %v4197
      %v4619 = vunpack.c.l.b16 %v4198
      %v4620 = vunpack.c.l.b16 %v4199
      %v4621 = vunpack.c.l.b16 %v4200
      %v4622 = vunpack.c.l.b16 %v4201
      %v4623 = vunpack.c.l.b16 %v4202
      %v4624 = vpack.c.b16 %v4609, %v4608
      %v4625 = vpack.c.b16 %v4611, %v4610
      %v4626 = vpack.c.b16 %v4613, %v4612
      %v4627 = vpack.c.b16 %v4615, %v4614
      %v4628 = vpack.c.b16 %v4617, %v4616
      %v4629 = vpack.c.b16 %v4619, %v4618
      %v4630 = vpack.c.b16 %v4621, %v4620
      %v4631 = vpack.c.b16 %v4623, %v4622
      %4640 = vmatprep.subr.bf16.mxu0 0
      %4641 = vmatpush1.bf16.msra.mxu0 %v4631
      %4642 = vmatprep.subr.bf16.mxu0 0
      %4643 = vmatpush1.bf16.msra.mxu0 %v4630
      %4644 = vmatprep.subr.bf16.mxu0 0
      %4645 = vmatpush1.bf16.msra.mxu0 %v4629
      %4646 = vmatprep.subr.bf16.mxu0 0
      %4647 = vmatpush1.bf16.msra.mxu0 %v4628
      %4648 = vmatprep.subr.bf16.mxu0 0
      %4649 = vmatpush1.bf16.msra.mxu0 %v4627
      %4650 = vmatprep.subr.bf16.mxu0 0
      %4651 = vmatpush1.bf16.msra.mxu0 %v4626
      %4652 = vmatprep.subr.bf16.mxu0 0
      %4653 = vmatpush1.bf16.msra.mxu0 %v4625
      %4654 = vmatprep.subr.bf16.mxu0 0
      %4655 = vmatpush1.bf16.msra.mxu0 %v4624
      %4656 = vmatprep.subr.bf16.mxu0 0
      %4657 = vmatpush2.bf16.msra.mxu0 0
      %4658 = vmatprep.subr.bf16.mxu0 0
      %4659 = vmatpush2.bf16.msra.mxu0 0
      %4660 = vmatprep.subr.bf16.mxu0 0
      %4661 = vmatpush2.bf16.msra.mxu0 0
      %4662 = vmatprep.subr.bf16.mxu0 0
      %4663 = vmatpush2.bf16.msra.mxu0 0
      %4664 = vmatprep.subr.bf16.mxu0 0
      %4665 = vmatpush2.bf16.msra.mxu0 0
      %4666 = vmatprep.subr.bf16.mxu0 0
      %4667 = vmatpush2.bf16.msra.mxu0 0
      %4668 = vmatprep.subr.bf16.mxu0 0
      %4669 = vmatpush2.bf16.msra.mxu0 0
      %4670 = vmatprep.subr.bf16.mxu0 0
      %4671 = vmatpush2.bf16.msra.mxu0 0
      %4672 = vmatprep.mubr.bf16.mxu0 0
      %4673 = vmatmul.mubr.bf16.gmra.mxu0 %v4155
      %v4674 = vpop.f32.mrf.mxu0
      %v4675 = vadd.f32 %v4274, %v4674
      %v4676 = vpop.f32.mrf.mxu0
      %v4677 = vpop.f32.mrf.mxu0
      %v4678 = vadd.f32 %v4279, %v4677
      %v4679 = vpop.f32.mrf.mxu0
      %4680 = vmatprep.mubr.bf16.mxu0 0
      %4681 = vmatmul.mubr.bf16.gmra.mxu0 %v4156
      %v4682 = vpop.f32.mrf.mxu0
      %v4683 = vadd.f32 %v4284, %v4682
      %v4684 = vpop.f32.mrf.mxu0
      %v4685 = vpop.f32.mrf.mxu0
      %v4686 = vadd.f32 %v4289, %v4685
      %v4687 = vpop.f32.mrf.mxu0
      %4688 = vmatprep.mubr.bf16.mxu0 0
      %4689 = vmatmul.mubr.bf16.gmra.mxu0 %v4157
      %v4690 = vpop.f32.mrf.mxu0
      %v4691 = vadd.f32 %v4294, %v4690
      %v4692 = vpop.f32.mrf.mxu0
      %v4693 = vpop.f32.mrf.mxu0
      %v4694 = vadd.f32 %v4299, %v4693
      %v4695 = vpop.f32.mrf.mxu0
      %4696 = vmatprep.mubr.bf16.mxu0 0
      %4697 = vmatmul.mubr.bf16.gmra.mxu0 %v4158
      %v4698 = vpop.f32.mrf.mxu0
      %v4699 = vadd.f32 %v4304, %v4698
      %v4700 = vpop.f32.mrf.mxu0
      %v4701 = vpop.f32.mrf.mxu0
      %v4702 = vadd.f32 %v4309, %v4701
      %v4703 = vpop.f32.mrf.mxu0
      %4704 = vmatprep.mubr.bf16.mxu0 0
      %4705 = vmatmul.mubr.bf16.gmra.mxu0 %v4159
      %v4706 = vpop.f32.mrf.mxu0
      %v4707 = vadd.f32 %v4314, %v4706
      %v4708 = vpop.f32.mrf.mxu0
      %v4709 = vpop.f32.mrf.mxu0
      %v4710 = vadd.f32 %v4319, %v4709
      %v4711 = vpop.f32.mrf.mxu0
      %4712 = vmatprep.mubr.bf16.mxu0 0
      %4713 = vmatmul.mubr.bf16.gmra.mxu0 %v4160
      %v4714 = vpop.f32.mrf.mxu0
      %v4715 = vadd.f32 %v4324, %v4714
      %v4716 = vpop.f32.mrf.mxu0
      %v4717 = vpop.f32.mrf.mxu0
      %v4718 = vadd.f32 %v4329, %v4717
      %v4719 = vpop.f32.mrf.mxu0
      %4720 = vmatprep.mubr.bf16.mxu0 0
      %4721 = vmatmul.mubr.bf16.gmra.mxu0 %v4161
      %v4722 = vpop.f32.mrf.mxu0
      %v4723 = vadd.f32 %v4334, %v4722
      %v4724 = vpop.f32.mrf.mxu0
      %v4725 = vpop.f32.mrf.mxu0
      %v4726 = vadd.f32 %v4339, %v4725
      %v4727 = vpop.f32.mrf.mxu0
      %4728 = vmatprep.mubr.bf16.mxu0 0
      %4729 = vmatmul.mubr.bf16.gmra.mxu0 %v4162
      %v4730 = vpop.f32.mrf.mxu0
      %v4731 = vadd.f32 %v4344, %v4730
      %v4732 = vpop.f32.mrf.mxu0
      %v4733 = vpop.f32.mrf.mxu0
      %v4734 = vadd.f32 %v4349, %v4733
      %v4735 = vpop.f32.mrf.mxu0
      %4736 = vmatprep.mubr.bf16.mxu0 0
      %4737 = vmatmul.mubr.bf16.gmra.mxu0 %v4163
      %v4738 = vpop.f32.mrf.mxu0
      %v4739 = vadd.f32 %v4354, %v4738
      %v4740 = vpop.f32.mrf.mxu0
      %v4741 = vpop.f32.mrf.mxu0
      %v4742 = vadd.f32 %v4359, %v4741
      %v4743 = vpop.f32.mrf.mxu0
      %4744 = vmatprep.mubr.bf16.mxu0 0
      %4745 = vmatmul.mubr.bf16.gmra.mxu0 %v4164
      %v4746 = vpop.f32.mrf.mxu0
      %v4747 = vadd.f32 %v4364, %v4746
      %v4748 = vpop.f32.mrf.mxu0
      %v4749 = vpop.f32.mrf.mxu0
      %v4750 = vadd.f32 %v4369, %v4749
      %v4751 = vpop.f32.mrf.mxu0
      %4752 = vmatprep.mubr.bf16.mxu0 0
      %4753 = vmatmul.mubr.bf16.gmra.mxu0 %v4165
      %v4754 = vpop.f32.mrf.mxu0
      %v4755 = vadd.f32 %v4374, %v4754
      %v4756 = vpop.f32.mrf.mxu0
      %v4757 = vpop.f32.mrf.mxu0
      %v4758 = vadd.f32 %v4379, %v4757
      %v4759 = vpop.f32.mrf.mxu0
      %4760 = vmatprep.mubr.bf16.mxu0 0
      %4761 = vmatmul.mubr.bf16.gmra.mxu0 %v4166
      %v4762 = vpop.f32.mrf.mxu0
      %v4763 = vadd.f32 %v4384, %v4762
      %v4764 = vpop.f32.mrf.mxu0
      %v4765 = vpop.f32.mrf.mxu0
      %v4766 = vadd.f32 %v4389, %v4765
      %v4767 = vpop.f32.mrf.mxu0
      %4768 = vmatprep.mubr.bf16.mxu0 0
      %4769 = vmatmul.mubr.bf16.gmra.mxu0 %v4167
      %v4770 = vpop.f32.mrf.mxu0
      %v4771 = vadd.f32 %v4394, %v4770
      %v4772 = vpop.f32.mrf.mxu0
      %v4773 = vpop.f32.mrf.mxu0
      %v4774 = vadd.f32 %v4399, %v4773
      %v4775 = vpop.f32.mrf.mxu0
      %4776 = vmatprep.mubr.bf16.mxu0 0
      %4777 = vmatmul.mubr.bf16.gmra.mxu0 %v4168
      %v4778 = vpop.f32.mrf.mxu0
      %v4779 = vadd.f32 %v4404, %v4778
      %v4780 = vpop.f32.mrf.mxu0
      %v4781 = vpop.f32.mrf.mxu0
      %v4782 = vadd.f32 %v4409, %v4781
      %v4783 = vpop.f32.mrf.mxu0
      %4784 = vmatprep.mubr.bf16.mxu0 0
      %4785 = vmatmul.mubr.bf16.gmra.mxu0 %v4169
      %v4786 = vpop.f32.mrf.mxu0
      %v4787 = vadd.f32 %v4414, %v4786
      %v4788 = vpop.f32.mrf.mxu0
      %v4789 = vpop.f32.mrf.mxu0
      %v4790 = vadd.f32 %v4419, %v4789
      %v4791 = vpop.f32.mrf.mxu0
      %4792 = vmatprep.mubr.bf16.mxu0 0
      %4793 = vmatmul.mubr.bf16.gmra.mxu0 %v4170
      %v4794 = vpop.f32.mrf.mxu0
      %v4795 = vadd.f32 %v4424, %v4794
      %v4796 = vpop.f32.mrf.mxu0
      %v4797 = vpop.f32.mrf.mxu0
      %v4798 = vadd.f32 %v4429, %v4797
      %v4799 = vpop.f32.mrf.mxu0
      %4800 = vmatprep.mubr.bf16.mxu0 0
      %4801 = vmatmul.mubr.bf16.gmra.mxu0 %v4171
      %v4802 = vpop.f32.mrf.mxu0
      %v4803 = vadd.f32 %v4434, %v4802
      %v4804 = vpop.f32.mrf.mxu0
      %v4805 = vpop.f32.mrf.mxu0
      %v4806 = vadd.f32 %v4439, %v4805
      %v4807 = vpop.f32.mrf.mxu0
      %4808 = vmatprep.mubr.bf16.mxu0 0
      %4809 = vmatmul.mubr.bf16.gmra.mxu0 %v4172
      %v4810 = vpop.f32.mrf.mxu0
      %v4811 = vadd.f32 %v4444, %v4810
      %v4812 = vpop.f32.mrf.mxu0
      %v4813 = vpop.f32.mrf.mxu0
      %v4814 = vadd.f32 %v4449, %v4813
      %v4815 = vpop.f32.mrf.mxu0
      %4816 = vmatprep.mubr.bf16.mxu0 0
      %4817 = vmatmul.mubr.bf16.gmra.mxu0 %v4173
      %v4818 = vpop.f32.mrf.mxu0
      %v4819 = vadd.f32 %v4454, %v4818
      %v4820 = vpop.f32.mrf.mxu0
      %v4821 = vpop.f32.mrf.mxu0
      %v4822 = vadd.f32 %v4459, %v4821
      %v4823 = vpop.f32.mrf.mxu0
      %4824 = vmatprep.mubr.bf16.mxu0 0
      %4825 = vmatmul.mubr.bf16.gmra.mxu0 %v4174
      %v4826 = vpop.f32.mrf.mxu0
      %v4827 = vadd.f32 %v4464, %v4826
      %v4828 = vpop.f32.mrf.mxu0
      %v4829 = vpop.f32.mrf.mxu0
      %v4830 = vadd.f32 %v4469, %v4829
      %v4831 = vpop.f32.mrf.mxu0
      %4832 = vmatprep.mubr.bf16.mxu0 0
      %4833 = vmatmul.mubr.bf16.gmra.mxu0 %v4175
      %v4834 = vpop.f32.mrf.mxu0
      %v4835 = vadd.f32 %v4474, %v4834
      %v4836 = vpop.f32.mrf.mxu0
      %v4837 = vpop.f32.mrf.mxu0
      %v4838 = vadd.f32 %v4479, %v4837
      %v4839 = vpop.f32.mrf.mxu0
      %4840 = vmatprep.mubr.bf16.mxu0 0
      %4841 = vmatmul.mubr.bf16.gmra.mxu0 %v4176
      %v4842 = vpop.f32.mrf.mxu0
      %v4843 = vadd.f32 %v4484, %v4842
      %v4844 = vpop.f32.mrf.mxu0
      %v4845 = vpop.f32.mrf.mxu0
      %v4846 = vadd.f32 %v4489, %v4845
      %v4847 = vpop.f32.mrf.mxu0
      %4848 = vmatprep.mubr.bf16.mxu0 0
      %4849 = vmatmul.mubr.bf16.gmra.mxu0 %v4177
      %v4850 = vpop.f32.mrf.mxu0
      %v4851 = vadd.f32 %v4494, %v4850
      %v4852 = vpop.f32.mrf.mxu0
      %v4853 = vpop.f32.mrf.mxu0
      %v4854 = vadd.f32 %v4499, %v4853
      %v4855 = vpop.f32.mrf.mxu0
      %4856 = vmatprep.mubr.bf16.mxu0 0
      %4857 = vmatmul.mubr.bf16.gmra.mxu0 %v4178
      %v4858 = vpop.f32.mrf.mxu0
      %v4859 = vadd.f32 %v4504, %v4858
      %v4860 = vpop.f32.mrf.mxu0
      %v4861 = vpop.f32.mrf.mxu0
      %v4862 = vadd.f32 %v4509, %v4861
      %v4863 = vpop.f32.mrf.mxu0
      %4864 = vmatprep.mubr.bf16.mxu0 0
      %4865 = vmatmul.mubr.bf16.gmra.mxu0 %v4179
      %v4866 = vpop.f32.mrf.mxu0
      %v4867 = vadd.f32 %v4514, %v4866
      %v4868 = vpop.f32.mrf.mxu0
      %v4869 = vpop.f32.mrf.mxu0
      %v4870 = vadd.f32 %v4519, %v4869
      %v4871 = vpop.f32.mrf.mxu0
      %4872 = vmatprep.mubr.bf16.mxu0 0
      %4873 = vmatmul.mubr.bf16.gmra.mxu0 %v4180
      %v4874 = vpop.f32.mrf.mxu0
      %v4875 = vadd.f32 %v4524, %v4874
      %v4876 = vpop.f32.mrf.mxu0
      %v4877 = vpop.f32.mrf.mxu0
      %v4878 = vadd.f32 %v4529, %v4877
      %v4879 = vpop.f32.mrf.mxu0
      %4880 = vmatprep.mubr.bf16.mxu0 0
      %4881 = vmatmul.mubr.bf16.gmra.mxu0 %v4181
      %v4882 = vpop.f32.mrf.mxu0
      %v4883 = vadd.f32 %v4534, %v4882
      %v4884 = vpop.f32.mrf.mxu0
      %v4885 = vpop.f32.mrf.mxu0
      %v4886 = vadd.f32 %v4539, %v4885
      %v4887 = vpop.f32.mrf.mxu0
      %4888 = vmatprep.mubr.bf16.mxu0 0
      %4889 = vmatmul.mubr.bf16.gmra.mxu0 %v4182
      %v4890 = vpop.f32.mrf.mxu0
      %v4891 = vadd.f32 %v4544, %v4890
      %v4892 = vpop.f32.mrf.mxu0
      %v4893 = vpop.f32.mrf.mxu0
      %v4894 = vadd.f32 %v4549, %v4893
      %v4895 = vpop.f32.mrf.mxu0
      %4896 = vmatprep.mubr.bf16.mxu0 0
      %4897 = vmatmul.mubr.bf16.gmra.mxu0 %v4183
      %v4898 = vpop.f32.mrf.mxu0
      %v4899 = vadd.f32 %v4554, %v4898
      %v4900 = vpop.f32.mrf.mxu0
      %v4901 = vpop.f32.mrf.mxu0
      %v4902 = vadd.f32 %v4559, %v4901
      %v4903 = vpop.f32.mrf.mxu0
      %4904 = vmatprep.mubr.bf16.mxu0 0
      %4905 = vmatmul.mubr.bf16.gmra.mxu0 %v4184
      %v4906 = vpop.f32.mrf.mxu0
      %v4907 = vadd.f32 %v4564, %v4906
      %v4908 = vpop.f32.mrf.mxu0
      %v4909 = vpop.f32.mrf.mxu0
      %v4910 = vadd.f32 %v4569, %v4909
      %v4911 = vpop.f32.mrf.mxu0
      %4912 = vmatprep.mubr.bf16.mxu0 0
      %4913 = vmatmul.mubr.bf16.gmra.mxu0 %v4185
      %v4914 = vpop.f32.mrf.mxu0
      %v4915 = vadd.f32 %v4574, %v4914
      %v4916 = vpop.f32.mrf.mxu0
      %v4917 = vpop.f32.mrf.mxu0
      %v4918 = vadd.f32 %v4579, %v4917
      %v4919 = vpop.f32.mrf.mxu0
      %4920 = vmatprep.mubr.bf16.mxu0 0
      %4921 = vmatmul.mubr.bf16.gmra.mxu0 %v4186
      %v4922 = vpop.f32.mrf.mxu0
      %v4923 = vadd.f32 %v4584, %v4922
      %v4924 = vpop.f32.mrf.mxu0
      %v4925 = vpop.f32.mrf.mxu0
      %v4926 = vadd.f32 %v4589, %v4925
      %v4927 = vpop.f32.mrf.mxu0
      %4928 = vdwg.mxu0
      %v4929 = vadd.f32 %v4675, 0.0
      %v4930 = vadd.f32 %v4678, 0.0
      %v4931 = vadd.f32 %v4683, 0.0
      %v4932 = vadd.f32 %v4686, 0.0
      %v4933 = vadd.f32 %v4691, 0.0
      %v4934 = vadd.f32 %v4694, 0.0
      %v4935 = vadd.f32 %v4699, 0.0
      %v4936 = vadd.f32 %v4702, 0.0
      %v4937 = vadd.f32 %v4707, 0.0
      %v4938 = vadd.f32 %v4710, 0.0
      %v4939 = vadd.f32 %v4715, 0.0
      %v4940 = vadd.f32 %v4718, 0.0
      %v4941 = vadd.f32 %v4723, 0.0
      %v4942 = vadd.f32 %v4726, 0.0
      %v4943 = vadd.f32 %v4731, 0.0
      %v4944 = vadd.f32 %v4734, 0.0
      %v4945 = vadd.f32 %v4739, 0.0
      %v4946 = vadd.f32 %v4742, 0.0
      %v4947 = vadd.f32 %v4747, 0.0
      %v4948 = vadd.f32 %v4750, 0.0
      %v4949 = vadd.f32 %v4755, 0.0
      %v4950 = vadd.f32 %v4758, 0.0
      %v4951 = vadd.f32 %v4763, 0.0
      %v4952 = vadd.f32 %v4766, 0.0
      %v4953 = vadd.f32 %v4771, 0.0
      %v4954 = vadd.f32 %v4774, 0.0
      %v4955 = vadd.f32 %v4779, 0.0
      %v4956 = vadd.f32 %v4782, 0.0
      %v4957 = vadd.f32 %v4787, 0.0
      %v4958 = vadd.f32 %v4790, 0.0
      %v4959 = vadd.f32 %v4795, 0.0
      %v4960 = vadd.f32 %v4798, 0.0
      %v4961 = vadd.f32 %v4803, 0.0
      %v4962 = vadd.f32 %v4806, 0.0
      %v4963 = vadd.f32 %v4811, 0.0
      %v4964 = vadd.f32 %v4814, 0.0
      %v4965 = vadd.f32 %v4819, 0.0
      %v4966 = vadd.f32 %v4822, 0.0
      %v4967 = vadd.f32 %v4827, 0.0
      %v4968 = vadd.f32 %v4830, 0.0
      %v4969 = vadd.f32 %v4835, 0.0
      %v4970 = vadd.f32 %v4838, 0.0
      %v4971 = vadd.f32 %v4843, 0.0
      %v4972 = vadd.f32 %v4846, 0.0
      %v4973 = vadd.f32 %v4851, 0.0
      %v4974 = vadd.f32 %v4854, 0.0
      %v4975 = vadd.f32 %v4859, 0.0
      %v4976 = vadd.f32 %v4862, 0.0
      %v4977 = vadd.f32 %v4867, 0.0
      %v4978 = vadd.f32 %v4870, 0.0
      %v4979 = vadd.f32 %v4875, 0.0
      %v4980 = vadd.f32 %v4878, 0.0
      %v4981 = vadd.f32 %v4883, 0.0
      %v4982 = vadd.f32 %v4886, 0.0
      %v4983 = vadd.f32 %v4891, 0.0
      %v4984 = vadd.f32 %v4894, 0.0
      %v4985 = vadd.f32 %v4899, 0.0
      %v4986 = vadd.f32 %v4902, 0.0
      %v4987 = vadd.f32 %v4907, 0.0
      %v4988 = vadd.f32 %v4910, 0.0
      %v4989 = vadd.f32 %v4915, 0.0
      %v4990 = vadd.f32 %v4918, 0.0
      %v4991 = vadd.f32 %v4923, 0.0
      %v4992 = vadd.f32 %v4926, 0.0
      %s4993 = scalar_lea.vmem %s1, 4
      %v4994 = vld [vmem:[%s4993] sm:$0x7]
      %v4995 = vlaneseq
      %v4996 = vshrl.u32 %v4995, 7
      %v4997 = vsub.s32 0, %v4996
      %v4998 = vrot.slane %v4994, %v4997
      %v4999 = vmul.f32 %v406, %v4998
      %v5000 = vmul.f32 %v411, %v4998
      %v5001 = vmul.f32 %v416, %v4998
      %v5002 = vmul.f32 %v421, %v4998
      %v5003 = vmul.f32 %v426, %v4998
      %v5004 = vmul.f32 %v431, %v4998
      %v5005 = vmul.f32 %v436, %v4998
      %v5006 = vmul.f32 %v441, %v4998
      %v5007 = vmul.f32 %v446, %v4998
      %v5008 = vmul.f32 %v451, %v4998
      %v5009 = vmul.f32 %v456, %v4998
      %v5010 = vmul.f32 %v461, %v4998
      %v5011 = vmul.f32 %v466, %v4998
      %v5012 = vmul.f32 %v471, %v4998
      %v5013 = vmul.f32 %v476, %v4998
      %v5014 = vmul.f32 %v481, %v4998
      %v5015 = vmul.f32 %v486, %v4998
      %v5016 = vmul.f32 %v491, %v4998
      %v5017 = vmul.f32 %v496, %v4998
      %v5018 = vmul.f32 %v501, %v4998
      %v5019 = vmul.f32 %v506, %v4998
      %v5020 = vmul.f32 %v511, %v4998
      %v5021 = vmul.f32 %v516, %v4998
      %v5022 = vmul.f32 %v521, %v4998
      %v5023 = vmul.f32 %v526, %v4998
      %v5024 = vmul.f32 %v531, %v4998
      %v5025 = vmul.f32 %v536, %v4998
      %v5026 = vmul.f32 %v541, %v4998
      %v5027 = vmul.f32 %v546, %v4998
      %v5028 = vmul.f32 %v551, %v4998
      %v5029 = vmul.f32 %v556, %v4998
      %v5030 = vmul.f32 %v561, %v4998
      %v5031 = vmul.f32 %v566, %v4998
      %v5032 = vmul.f32 %v571, %v4998
      %v5033 = vmul.f32 %v576, %v4998
      %v5034 = vmul.f32 %v581, %v4998
      %v5035 = vmul.f32 %v586, %v4998
      %v5036 = vmul.f32 %v591, %v4998
      %v5037 = vmul.f32 %v596, %v4998
      %v5038 = vmul.f32 %v601, %v4998
      %v5039 = vmul.f32 %v606, %v4998
      %v5040 = vmul.f32 %v611, %v4998
      %v5041 = vmul.f32 %v616, %v4998
      %v5042 = vmul.f32 %v621, %v4998
      %v5043 = vmul.f32 %v626, %v4998
      %v5044 = vmul.f32 %v631, %v4998
      %v5045 = vmul.f32 %v636, %v4998
      %v5046 = vmul.f32 %v641, %v4998
      %v5047 = vmul.f32 %v646, %v4998
      %v5048 = vmul.f32 %v651, %v4998
      %v5049 = vmul.f32 %v656, %v4998
      %v5050 = vmul.f32 %v661, %v4998
      %v5051 = vmul.f32 %v666, %v4998
      %v5052 = vmul.f32 %v671, %v4998
      %v5053 = vmul.f32 %v676, %v4998
      %v5054 = vmul.f32 %v681, %v4998
      %v5055 = vmul.f32 %v686, %v4998
      %v5056 = vmul.f32 %v691, %v4998
      %v5057 = vmul.f32 %v696, %v4998
      %v5058 = vmul.f32 %v701, %v4998
      %v5059 = vmul.f32 %v706, %v4998
      %v5060 = vmul.f32 %v711, %v4998
      %v5061 = vmul.f32 %v716, %v4998
      %v5062 = vmul.f32 %v721, %v4998
      %v5063 = vlaneseq
      %v5064 = vshrl.u32 %v5063, 7
      %v5065 = vsub.s32 1, %v5064
      %v5066 = vrot.slane %v4994, %v5065
      %v5067 = vmul.f32 %v793, %v5066
      %v5068 = vmul.f32 %v797, %v5066
      %v5069 = vmul.f32 %v801, %v5066
      %v5070 = vmul.f32 %v805, %v5066
      %v5071 = vmul.f32 %v809, %v5066
      %v5072 = vmul.f32 %v813, %v5066
      %v5073 = vmul.f32 %v817, %v5066
      %v5074 = vmul.f32 %v821, %v5066
      %v5075 = vmul.f32 %v825, %v5066
      %v5076 = vmul.f32 %v829, %v5066
      %v5077 = vmul.f32 %v833, %v5066
      %v5078 = vmul.f32 %v837, %v5066
      %v5079 = vmul.f32 %v841, %v5066
      %v5080 = vmul.f32 %v845, %v5066
      %v5081 = vmul.f32 %v849, %v5066
      %v5082 = vmul.f32 %v853, %v5066
      %v5083 = vmul.f32 %v857, %v5066
      %v5084 = vmul.f32 %v861, %v5066
      %v5085 = vmul.f32 %v865, %v5066
      %v5086 = vmul.f32 %v869, %v5066
      %v5087 = vmul.f32 %v873, %v5066
      %v5088 = vmul.f32 %v877, %v5066
      %v5089 = vmul.f32 %v881, %v5066
      %v5090 = vmul.f32 %v885, %v5066
      %v5091 = vmul.f32 %v889, %v5066
      %v5092 = vmul.f32 %v893, %v5066
      %v5093 = vmul.f32 %v897, %v5066
      %v5094 = vmul.f32 %v901, %v5066
      %v5095 = vmul.f32 %v905, %v5066
      %v5096 = vmul.f32 %v909, %v5066
      %v5097 = vmul.f32 %v913, %v5066
      %v5098 = vmul.f32 %v917, %v5066
      %v5099 = vmul.f32 %v921, %v5066
      %v5100 = vmul.f32 %v925, %v5066
      %v5101 = vmul.f32 %v929, %v5066
      %v5102 = vmul.f32 %v933, %v5066
      %v5103 = vmul.f32 %v937, %v5066
      %v5104 = vmul.f32 %v941, %v5066
      %v5105 = vmul.f32 %v945, %v5066
      %v5106 = vmul.f32 %v949, %v5066
      %v5107 = vmul.f32 %v953, %v5066
      %v5108 = vmul.f32 %v957, %v5066
      %v5109 = vmul.f32 %v961, %v5066
      %v5110 = vmul.f32 %v965, %v5066
      %v5111 = vmul.f32 %v969, %v5066
      %v5112 = vmul.f32 %v973, %v5066
      %v5113 = vmul.f32 %v977, %v5066
      %v5114 = vmul.f32 %v981, %v5066
      %v5115 = vmul.f32 %v985, %v5066
      %v5116 = vmul.f32 %v989, %v5066
      %v5117 = vmul.f32 %v993, %v5066
      %v5118 = vmul.f32 %v997, %v5066
      %v5119 = vmul.f32 %v1001, %v5066
      %v5120 = vmul.f32 %v1005, %v5066
      %v5121 = vmul.f32 %v1009, %v5066
      %v5122 = vmul.f32 %v1013, %v5066
      %v5123 = vmul.f32 %v1017, %v5066
      %v5124 = vmul.f32 %v1021, %v5066
      %v5125 = vmul.f32 %v1025, %v5066
      %v5126 = vmul.f32 %v1029, %v5066
      %v5127 = vmul.f32 %v1033, %v5066
      %v5128 = vmul.f32 %v1037, %v5066
      %v5129 = vmul.f32 %v1041, %v5066
      %v5130 = vmul.f32 %v1045, %v5066
      %v5131 = vadd.f32 %v4999, %v5067
      %v5132 = vadd.f32 %v5000, %v5068
      %v5133 = vadd.f32 %v5001, %v5069
      %v5134 = vadd.f32 %v5002, %v5070
      %v5135 = vadd.f32 %v5003, %v5071
      %v5136 = vadd.f32 %v5004, %v5072
      %v5137 = vadd.f32 %v5005, %v5073
      %v5138 = vadd.f32 %v5006, %v5074
      %v5139 = vadd.f32 %v5007, %v5075
      %v5140 = vadd.f32 %v5008, %v5076
      %v5141 = vadd.f32 %v5009, %v5077
      %v5142 = vadd.f32 %v5010, %v5078
      %v5143 = vadd.f32 %v5011, %v5079
      %v5144 = vadd.f32 %v5012, %v5080
      %v5145 = vadd.f32 %v5013, %v5081
      %v5146 = vadd.f32 %v5014, %v5082
      %v5147 = vadd.f32 %v5015, %v5083
      %v5148 = vadd.f32 %v5016, %v5084
      %v5149 = vadd.f32 %v5017, %v5085
      %v5150 = vadd.f32 %v5018, %v5086
      %v5151 = vadd.f32 %v5019, %v5087
      %v5152 = vadd.f32 %v5020, %v5088
      %v5153 = vadd.f32 %v5021, %v5089
      %v5154 = vadd.f32 %v5022, %v5090
      %v5155 = vadd.f32 %v5023, %v5091
      %v5156 = vadd.f32 %v5024, %v5092
      %v5157 = vadd.f32 %v5025, %v5093
      %v5158 = vadd.f32 %v5026, %v5094
      %v5159 = vadd.f32 %v5027, %v5095
      %v5160 = vadd.f32 %v5028, %v5096
      %v5161 = vadd.f32 %v5029, %v5097
      %v5162 = vadd.f32 %v5030, %v5098
      %v5163 = vadd.f32 %v5031, %v5099
      %v5164 = vadd.f32 %v5032, %v5100
      %v5165 = vadd.f32 %v5033, %v5101
      %v5166 = vadd.f32 %v5034, %v5102
      %v5167 = vadd.f32 %v5035, %v5103
      %v5168 = vadd.f32 %v5036, %v5104
      %v5169 = vadd.f32 %v5037, %v5105
      %v5170 = vadd.f32 %v5038, %v5106
      %v5171 = vadd.f32 %v5039, %v5107
      %v5172 = vadd.f32 %v5040, %v5108
      %v5173 = vadd.f32 %v5041, %v5109
      %v5174 = vadd.f32 %v5042, %v5110
      %v5175 = vadd.f32 %v5043, %v5111
      %v5176 = vadd.f32 %v5044, %v5112
      %v5177 = vadd.f32 %v5045, %v5113
      %v5178 = vadd.f32 %v5046, %v5114
      %v5179 = vadd.f32 %v5047, %v5115
      %v5180 = vadd.f32 %v5048, %v5116
      %v5181 = vadd.f32 %v5049, %v5117
      %v5182 = vadd.f32 %v5050, %v5118
      %v5183 = vadd.f32 %v5051, %v5119
      %v5184 = vadd.f32 %v5052, %v5120
      %v5185 = vadd.f32 %v5053, %v5121
      %v5186 = vadd.f32 %v5054, %v5122
      %v5187 = vadd.f32 %v5055, %v5123
      %v5188 = vadd.f32 %v5056, %v5124
      %v5189 = vadd.f32 %v5057, %v5125
      %v5190 = vadd.f32 %v5058, %v5126
      %v5191 = vadd.f32 %v5059, %v5127
      %v5192 = vadd.f32 %v5060, %v5128
      %v5193 = vadd.f32 %v5061, %v5129
      %v5194 = vadd.f32 %v5062, %v5130
      %v5195 = vlaneseq
      %v5196 = vshrl.u32 %v5195, 7
      %v5197 = vsub.s32 2, %v5196
      %v5198 = vrot.slane %v4994, %v5197
      %v5199 = vadd.f32 %v5131, %v5198
      %v5200 = vadd.f32 %v5132, %v5198
      %v5201 = vadd.f32 %v5133, %v5198
      %v5202 = vadd.f32 %v5134, %v5198
      %v5203 = vadd.f32 %v5135, %v5198
      %v5204 = vadd.f32 %v5136, %v5198
      %v5205 = vadd.f32 %v5137, %v5198
      %v5206 = vadd.f32 %v5138, %v5198
      %v5207 = vadd.f32 %v5139, %v5198
      %v5208 = vadd.f32 %v5140, %v5198
      %v5209 = vadd.f32 %v5141, %v5198
      %v5210 = vadd.f32 %v5142, %v5198
      %v5211 = vadd.f32 %v5143, %v5198
      %v5212 = vadd.f32 %v5144, %v5198
      %v5213 = vadd.f32 %v5145, %v5198
      %v5214 = vadd.f32 %v5146, %v5198
      %v5215 = vadd.f32 %v5147, %v5198
      %v5216 = vadd.f32 %v5148, %v5198
      %v5217 = vadd.f32 %v5149, %v5198
      %v5218 = vadd.f32 %v5150, %v5198
      %v5219 = vadd.f32 %v5151, %v5198
      %v5220 = vadd.f32 %v5152, %v5198
      %v5221 = vadd.f32 %v5153, %v5198
      %v5222 = vadd.f32 %v5154, %v5198
      %v5223 = vadd.f32 %v5155, %v5198
      %v5224 = vadd.f32 %v5156, %v5198
      %v5225 = vadd.f32 %v5157, %v5198
      %v5226 = vadd.f32 %v5158, %v5198
      %v5227 = vadd.f32 %v5159, %v5198
      %v5228 = vadd.f32 %v5160, %v5198
      %v5229 = vadd.f32 %v5161, %v5198
      %v5230 = vadd.f32 %v5162, %v5198
      %v5231 = vadd.f32 %v5163, %v5198
      %v5232 = vadd.f32 %v5164, %v5198
      %v5233 = vadd.f32 %v5165, %v5198
      %v5234 = vadd.f32 %v5166, %v5198
      %v5235 = vadd.f32 %v5167, %v5198
      %v5236 = vadd.f32 %v5168, %v5198
      %v5237 = vadd.f32 %v5169, %v5198
      %v5238 = vadd.f32 %v5170, %v5198
      %v5239 = vadd.f32 %v5171, %v5198
      %v5240 = vadd.f32 %v5172, %v5198
      %v5241 = vadd.f32 %v5173, %v5198
      %v5242 = vadd.f32 %v5174, %v5198
      %v5243 = vadd.f32 %v5175, %v5198
      %v5244 = vadd.f32 %v5176, %v5198
      %v5245 = vadd.f32 %v5177, %v5198
      %v5246 = vadd.f32 %v5178, %v5198
      %v5247 = vadd.f32 %v5179, %v5198
      %v5248 = vadd.f32 %v5180, %v5198
      %v5249 = vadd.f32 %v5181, %v5198
      %v5250 = vadd.f32 %v5182, %v5198
      %v5251 = vadd.f32 %v5183, %v5198
      %v5252 = vadd.f32 %v5184, %v5198
      %v5253 = vadd.f32 %v5185, %v5198
      %v5254 = vadd.f32 %v5186, %v5198
      %v5255 = vadd.f32 %v5187, %v5198
      %v5256 = vadd.f32 %v5188, %v5198
      %v5257 = vadd.f32 %v5189, %v5198
      %v5258 = vadd.f32 %v5190, %v5198
      %v5259 = vadd.f32 %v5191, %v5198
      %v5260 = vadd.f32 %v5192, %v5198
      %v5261 = vadd.f32 %v5193, %v5198
      %v5262 = vadd.f32 %v5194, %v5198
      %v5263 = vxor.u32 %v5199, 2147483648
      %v5264 = vxor.u32 %v5200, 2147483648
      %v5265 = vxor.u32 %v5201, 2147483648
      %v5266 = vxor.u32 %v5202, 2147483648
      %v5267 = vxor.u32 %v5203, 2147483648
      %v5268 = vxor.u32 %v5204, 2147483648
      %v5269 = vxor.u32 %v5205, 2147483648
      %v5270 = vxor.u32 %v5206, 2147483648
      %v5271 = vxor.u32 %v5207, 2147483648
      %v5272 = vxor.u32 %v5208, 2147483648
      %v5273 = vxor.u32 %v5209, 2147483648
      %v5274 = vxor.u32 %v5210, 2147483648
      %v5275 = vxor.u32 %v5211, 2147483648
      %v5276 = vxor.u32 %v5212, 2147483648
      %v5277 = vxor.u32 %v5213, 2147483648
      %v5278 = vxor.u32 %v5214, 2147483648
      %v5279 = vxor.u32 %v5215, 2147483648
      %v5280 = vxor.u32 %v5216, 2147483648
      %v5281 = vxor.u32 %v5217, 2147483648
      %v5282 = vxor.u32 %v5218, 2147483648
      %v5283 = vxor.u32 %v5219, 2147483648
      %v5284 = vxor.u32 %v5220, 2147483648
      %v5285 = vxor.u32 %v5221, 2147483648
      %v5286 = vxor.u32 %v5222, 2147483648
      %v5287 = vxor.u32 %v5223, 2147483648
      %v5288 = vxor.u32 %v5224, 2147483648
      %v5289 = vxor.u32 %v5225, 2147483648
      %v5290 = vxor.u32 %v5226, 2147483648
      %v5291 = vxor.u32 %v5227, 2147483648
      %v5292 = vxor.u32 %v5228, 2147483648
      %v5293 = vxor.u32 %v5229, 2147483648
      %v5294 = vxor.u32 %v5230, 2147483648
      %v5295 = vxor.u32 %v5231, 2147483648
      %v5296 = vxor.u32 %v5232, 2147483648
      %v5297 = vxor.u32 %v5233, 2147483648
      %v5298 = vxor.u32 %v5234, 2147483648
      %v5299 = vxor.u32 %v5235, 2147483648
      %v5300 = vxor.u32 %v5236, 2147483648
      %v5301 = vxor.u32 %v5237, 2147483648
      %v5302 = vxor.u32 %v5238, 2147483648
      %v5303 = vxor.u32 %v5239, 2147483648
      %v5304 = vxor.u32 %v5240, 2147483648
      %v5305 = vxor.u32 %v5241, 2147483648
      %v5306 = vxor.u32 %v5242, 2147483648
      %v5307 = vxor.u32 %v5243, 2147483648
      %v5308 = vxor.u32 %v5244, 2147483648
      %v5309 = vxor.u32 %v5245, 2147483648
      %v5310 = vxor.u32 %v5246, 2147483648
      %v5311 = vxor.u32 %v5247, 2147483648
      %v5312 = vxor.u32 %v5248, 2147483648
      %v5313 = vxor.u32 %v5249, 2147483648
      %v5314 = vxor.u32 %v5250, 2147483648
      %v5315 = vxor.u32 %v5251, 2147483648
      %v5316 = vxor.u32 %v5252, 2147483648
      %v5317 = vxor.u32 %v5253, 2147483648
      %v5318 = vxor.u32 %v5254, 2147483648
      %v5319 = vxor.u32 %v5255, 2147483648
      %v5320 = vxor.u32 %v5256, 2147483648
      %v5321 = vxor.u32 %v5257, 2147483648
      %v5322 = vxor.u32 %v5258, 2147483648
      %v5323 = vxor.u32 %v5259, 2147483648
      %v5324 = vxor.u32 %v5260, 2147483648
      %v5325 = vxor.u32 %v5261, 2147483648
      %v5326 = vxor.u32 %v5262, 2147483648
      %v5327 = vmul.f32 %v5263, 1.442695
      %v5328 = vpow.pop %v5327
      %v5329 = vmul.f32 %v5264, 1.442695
      %v5330 = vpow.pop %v5329
      %v5331 = vmul.f32 %v5265, 1.442695
      %v5332 = vpow.pop %v5331
      %v5333 = vmul.f32 %v5266, 1.442695
      %v5334 = vpow.pop %v5333
      %v5335 = vmul.f32 %v5267, 1.442695
      %v5336 = vpow.pop %v5335
      %v5337 = vmul.f32 %v5268, 1.442695
      %v5338 = vpow.pop %v5337
      %v5339 = vmul.f32 %v5269, 1.442695
      %v5340 = vpow.pop %v5339
      %v5341 = vmul.f32 %v5270, 1.442695
      %v5342 = vpow.pop %v5341
      %v5343 = vmul.f32 %v5271, 1.442695
      %v5344 = vpow.pop %v5343
      %v5345 = vmul.f32 %v5272, 1.442695
      %v5346 = vpow.pop %v5345
      %v5347 = vmul.f32 %v5273, 1.442695
      %v5348 = vpow.pop %v5347
      %v5349 = vmul.f32 %v5274, 1.442695
      %v5350 = vpow.pop %v5349
      %v5351 = vmul.f32 %v5275, 1.442695
      %v5352 = vpow.pop %v5351
      %v5353 = vmul.f32 %v5276, 1.442695
      %v5354 = vpow.pop %v5353
      %v5355 = vmul.f32 %v5277, 1.442695
      %v5356 = vpow.pop %v5355
      %v5357 = vmul.f32 %v5278, 1.442695
      %v5358 = vpow.pop %v5357
      %v5359 = vmul.f32 %v5279, 1.442695
      %v5360 = vpow.pop %v5359
      %v5361 = vmul.f32 %v5280, 1.442695
      %v5362 = vpow.pop %v5361
      %v5363 = vmul.f32 %v5281, 1.442695
      %v5364 = vpow.pop %v5363
      %v5365 = vmul.f32 %v5282, 1.442695
      %v5366 = vpow.pop %v5365
      %v5367 = vmul.f32 %v5283, 1.442695
      %v5368 = vpow.pop %v5367
      %v5369 = vmul.f32 %v5284, 1.442695
      %v5370 = vpow.pop %v5369
      %v5371 = vmul.f32 %v5285, 1.442695
      %v5372 = vpow.pop %v5371
      %v5373 = vmul.f32 %v5286, 1.442695
      %v5374 = vpow.pop %v5373
      %v5375 = vmul.f32 %v5287, 1.442695
      %v5376 = vpow.pop %v5375
      %v5377 = vmul.f32 %v5288, 1.442695
      %v5378 = vpow.pop %v5377
      %v5379 = vmul.f32 %v5289, 1.442695
      %v5380 = vpow.pop %v5379
      %v5381 = vmul.f32 %v5290, 1.442695
      %v5382 = vpow.pop %v5381
      %v5383 = vmul.f32 %v5291, 1.442695
      %v5384 = vpow.pop %v5383
      %v5385 = vmul.f32 %v5292, 1.442695
      %v5386 = vpow.pop %v5385
      %v5387 = vmul.f32 %v5293, 1.442695
      %v5388 = vpow.pop %v5387
      %v5389 = vmul.f32 %v5294, 1.442695
      %v5390 = vpow.pop %v5389
      %v5391 = vmul.f32 %v5295, 1.442695
      %v5392 = vpow.pop %v5391
      %v5393 = vmul.f32 %v5296, 1.442695
      %v5394 = vpow.pop %v5393
      %v5395 = vmul.f32 %v5297, 1.442695
      %v5396 = vpow.pop %v5395
      %v5397 = vmul.f32 %v5298, 1.442695
      %v5398 = vpow.pop %v5397
      %v5399 = vmul.f32 %v5299, 1.442695
      %v5400 = vpow.pop %v5399
      %v5401 = vmul.f32 %v5300, 1.442695
      %v5402 = vpow.pop %v5401
      %v5403 = vmul.f32 %v5301, 1.442695
      %v5404 = vpow.pop %v5403
      %v5405 = vmul.f32 %v5302, 1.442695
      %v5406 = vpow.pop %v5405
      %v5407 = vmul.f32 %v5303, 1.442695
      %v5408 = vpow.pop %v5407
      %v5409 = vmul.f32 %v5304, 1.442695
      %v5410 = vpow.pop %v5409
      %v5411 = vmul.f32 %v5305, 1.442695
      %v5412 = vpow.pop %v5411
      %v5413 = vmul.f32 %v5306, 1.442695
      %v5414 = vpow.pop %v5413
      %v5415 = vmul.f32 %v5307, 1.442695
      %v5416 = vpow.pop %v5415
      %v5417 = vmul.f32 %v5308, 1.442695
      %v5418 = vpow.pop %v5417
      %v5419 = vmul.f32 %v5309, 1.442695
      %v5420 = vpow.pop %v5419
      %v5421 = vmul.f32 %v5310, 1.442695
      %v5422 = vpow.pop %v5421
      %v5423 = vmul.f32 %v5311, 1.442695
      %v5424 = vpow.pop %v5423
      %v5425 = vmul.f32 %v5312, 1.442695
      %v5426 = vpow.pop %v5425
      %v5427 = vmul.f32 %v5313, 1.442695
      %v5428 = vpow.pop %v5427
      %v5429 = vmul.f32 %v5314, 1.442695
      %v5430 = vpow.pop %v5429
      %v5431 = vmul.f32 %v5315, 1.442695
      %v5432 = vpow.pop %v5431
      %v5433 = vmul.f32 %v5316, 1.442695
      %v5434 = vpow.pop %v5433
      %v5435 = vmul.f32 %v5317, 1.442695
      %v5436 = vpow.pop %v5435
      %v5437 = vmul.f32 %v5318, 1.442695
      %v5438 = vpow.pop %v5437
      %v5439 = vmul.f32 %v5319, 1.442695
      %v5440 = vpow.pop %v5439
      %v5441 = vmul.f32 %v5320, 1.442695
      %v5442 = vpow.pop %v5441
      %v5443 = vmul.f32 %v5321, 1.442695
      %v5444 = vpow.pop %v5443
      %v5445 = vmul.f32 %v5322, 1.442695
      %v5446 = vpow.pop %v5445
      %v5447 = vmul.f32 %v5323, 1.442695
      %v5448 = vpow.pop %v5447
      %v5449 = vmul.f32 %v5324, 1.442695
      %v5450 = vpow.pop %v5449
      %v5451 = vmul.f32 %v5325, 1.442695
      %v5452 = vpow.pop %v5451
      %v5453 = vmul.f32 %v5326, 1.442695
      %v5454 = vpow.pop %v5453
      %v5455 = vadd.f32 %v5328, 1.0
      %v5456 = vadd.f32 %v5330, 1.0
      %v5457 = vadd.f32 %v5332, 1.0
      %v5458 = vadd.f32 %v5334, 1.0
      %v5459 = vadd.f32 %v5336, 1.0
      %v5460 = vadd.f32 %v5338, 1.0
      %v5461 = vadd.f32 %v5340, 1.0
      %v5462 = vadd.f32 %v5342, 1.0
      %v5463 = vadd.f32 %v5344, 1.0
      %v5464 = vadd.f32 %v5346, 1.0
      %v5465 = vadd.f32 %v5348, 1.0
      %v5466 = vadd.f32 %v5350, 1.0
      %v5467 = vadd.f32 %v5352, 1.0
      %v5468 = vadd.f32 %v5354, 1.0
      %v5469 = vadd.f32 %v5356, 1.0
      %v5470 = vadd.f32 %v5358, 1.0
      %v5471 = vadd.f32 %v5360, 1.0
      %v5472 = vadd.f32 %v5362, 1.0
      %v5473 = vadd.f32 %v5364, 1.0
      %v5474 = vadd.f32 %v5366, 1.0
      %v5475 = vadd.f32 %v5368, 1.0
      %v5476 = vadd.f32 %v5370, 1.0
      %v5477 = vadd.f32 %v5372, 1.0
      %v5478 = vadd.f32 %v5374, 1.0
      %v5479 = vadd.f32 %v5376, 1.0
      %v5480 = vadd.f32 %v5378, 1.0
      %v5481 = vadd.f32 %v5380, 1.0
      %v5482 = vadd.f32 %v5382, 1.0
      %v5483 = vadd.f32 %v5384, 1.0
      %v5484 = vadd.f32 %v5386, 1.0
      %v5485 = vadd.f32 %v5388, 1.0
      %v5486 = vadd.f32 %v5390, 1.0
      %v5487 = vadd.f32 %v5392, 1.0
      %v5488 = vadd.f32 %v5394, 1.0
      %v5489 = vadd.f32 %v5396, 1.0
      %v5490 = vadd.f32 %v5398, 1.0
      %v5491 = vadd.f32 %v5400, 1.0
      %v5492 = vadd.f32 %v5402, 1.0
      %v5493 = vadd.f32 %v5404, 1.0
      %v5494 = vadd.f32 %v5406, 1.0
      %v5495 = vadd.f32 %v5408, 1.0
      %v5496 = vadd.f32 %v5410, 1.0
      %v5497 = vadd.f32 %v5412, 1.0
      %v5498 = vadd.f32 %v5414, 1.0
      %v5499 = vadd.f32 %v5416, 1.0
      %v5500 = vadd.f32 %v5418, 1.0
      %v5501 = vadd.f32 %v5420, 1.0
      %v5502 = vadd.f32 %v5422, 1.0
      %v5503 = vadd.f32 %v5424, 1.0
      %v5504 = vadd.f32 %v5426, 1.0
      %v5505 = vadd.f32 %v5428, 1.0
      %v5506 = vadd.f32 %v5430, 1.0
      %v5507 = vadd.f32 %v5432, 1.0
      %v5508 = vadd.f32 %v5434, 1.0
      %v5509 = vadd.f32 %v5436, 1.0
      %v5510 = vadd.f32 %v5438, 1.0
      %v5511 = vadd.f32 %v5440, 1.0
      %v5512 = vadd.f32 %v5442, 1.0
      %v5513 = vadd.f32 %v5444, 1.0
      %v5514 = vadd.f32 %v5446, 1.0
      %v5515 = vadd.f32 %v5448, 1.0
      %v5516 = vadd.f32 %v5450, 1.0
      %v5517 = vadd.f32 %v5452, 1.0
      %v5518 = vadd.f32 %v5454, 1.0
      %v5519 = vrcp.pop %v5455
      %v5520 = vmul.f32 1.0, %v5519
      %v5521 = vrcp.pop %v5456
      %v5522 = vmul.f32 1.0, %v5521
      %v5523 = vrcp.pop %v5457
      %v5524 = vmul.f32 1.0, %v5523
      %v5525 = vrcp.pop %v5458
      %v5526 = vmul.f32 1.0, %v5525
      %v5527 = vrcp.pop %v5459
      %v5528 = vmul.f32 1.0, %v5527
      %v5529 = vrcp.pop %v5460
      %v5530 = vmul.f32 1.0, %v5529
      %v5531 = vrcp.pop %v5461
      %v5532 = vmul.f32 1.0, %v5531
      %v5533 = vrcp.pop %v5462
      %v5534 = vmul.f32 1.0, %v5533
      %v5535 = vrcp.pop %v5463
      %v5536 = vmul.f32 1.0, %v5535
      %v5537 = vrcp.pop %v5464
      %v5538 = vmul.f32 1.0, %v5537
      %v5539 = vrcp.pop %v5465
      %v5540 = vmul.f32 1.0, %v5539
      %v5541 = vrcp.pop %v5466
      %v5542 = vmul.f32 1.0, %v5541
      %v5543 = vrcp.pop %v5467
      %v5544 = vmul.f32 1.0, %v5543
      %v5545 = vrcp.pop %v5468
      %v5546 = vmul.f32 1.0, %v5545
      %v5547 = vrcp.pop %v5469
      %v5548 = vmul.f32 1.0, %v5547
      %v5549 = vrcp.pop %v5470
      %v5550 = vmul.f32 1.0, %v5549
      %v5551 = vrcp.pop %v5471
      %v5552 = vmul.f32 1.0, %v5551
      %v5553 = vrcp.pop %v5472
      %v5554 = vmul.f32 1.0, %v5553
      %v5555 = vrcp.pop %v5473
      %v5556 = vmul.f32 1.0, %v5555
      %v5557 = vrcp.pop %v5474
      %v5558 = vmul.f32 1.0, %v5557
      %v5559 = vrcp.pop %v5475
      %v5560 = vmul.f32 1.0, %v5559
      %v5561 = vrcp.pop %v5476
      %v5562 = vmul.f32 1.0, %v5561
      %v5563 = vrcp.pop %v5477
      %v5564 = vmul.f32 1.0, %v5563
      %v5565 = vrcp.pop %v5478
      %v5566 = vmul.f32 1.0, %v5565
      %v5567 = vrcp.pop %v5479
      %v5568 = vmul.f32 1.0, %v5567
      %v5569 = vrcp.pop %v5480
      %v5570 = vmul.f32 1.0, %v5569
      %v5571 = vrcp.pop %v5481
      %v5572 = vmul.f32 1.0, %v5571
      %v5573 = vrcp.pop %v5482
      %v5574 = vmul.f32 1.0, %v5573
      %v5575 = vrcp.pop %v5483
      %v5576 = vmul.f32 1.0, %v5575
      %v5577 = vrcp.pop %v5484
      %v5578 = vmul.f32 1.0, %v5577
      %v5579 = vrcp.pop %v5485
      %v5580 = vmul.f32 1.0, %v5579
      %v5581 = vrcp.pop %v5486
      %v5582 = vmul.f32 1.0, %v5581
      %v5583 = vrcp.pop %v5487
      %v5584 = vmul.f32 1.0, %v5583
      %v5585 = vrcp.pop %v5488
      %v5586 = vmul.f32 1.0, %v5585
      %v5587 = vrcp.pop %v5489
      %v5588 = vmul.f32 1.0, %v5587
      %v5589 = vrcp.pop %v5490
      %v5590 = vmul.f32 1.0, %v5589
      %v5591 = vrcp.pop %v5491
      %v5592 = vmul.f32 1.0, %v5591
      %v5593 = vrcp.pop %v5492
      %v5594 = vmul.f32 1.0, %v5593
      %v5595 = vrcp.pop %v5493
      %v5596 = vmul.f32 1.0, %v5595
      %v5597 = vrcp.pop %v5494
      %v5598 = vmul.f32 1.0, %v5597
      %v5599 = vrcp.pop %v5495
      %v5600 = vmul.f32 1.0, %v5599
      %v5601 = vrcp.pop %v5496
      %v5602 = vmul.f32 1.0, %v5601
      %v5603 = vrcp.pop %v5497
      %v5604 = vmul.f32 1.0, %v5603
      %v5605 = vrcp.pop %v5498
      %v5606 = vmul.f32 1.0, %v5605
      %v5607 = vrcp.pop %v5499
      %v5608 = vmul.f32 1.0, %v5607
      %v5609 = vrcp.pop %v5500
      %v5610 = vmul.f32 1.0, %v5609
      %v5611 = vrcp.pop %v5501
      %v5612 = vmul.f32 1.0, %v5611
      %v5613 = vrcp.pop %v5502
      %v5614 = vmul.f32 1.0, %v5613
      %v5615 = vrcp.pop %v5503
      %v5616 = vmul.f32 1.0, %v5615
      %v5617 = vrcp.pop %v5504
      %v5618 = vmul.f32 1.0, %v5617
      %v5619 = vrcp.pop %v5505
      %v5620 = vmul.f32 1.0, %v5619
      %v5621 = vrcp.pop %v5506
      %v5622 = vmul.f32 1.0, %v5621
      %v5623 = vrcp.pop %v5507
      %v5624 = vmul.f32 1.0, %v5623
      %v5625 = vrcp.pop %v5508
      %v5626 = vmul.f32 1.0, %v5625
      %v5627 = vrcp.pop %v5509
      %v5628 = vmul.f32 1.0, %v5627
      %v5629 = vrcp.pop %v5510
      %v5630 = vmul.f32 1.0, %v5629
      %v5631 = vrcp.pop %v5511
      %v5632 = vmul.f32 1.0, %v5631
      %v5633 = vrcp.pop %v5512
      %v5634 = vmul.f32 1.0, %v5633
      %v5635 = vrcp.pop %v5513
      %v5636 = vmul.f32 1.0, %v5635
      %v5637 = vrcp.pop %v5514
      %v5638 = vmul.f32 1.0, %v5637
      %v5639 = vrcp.pop %v5515
      %v5640 = vmul.f32 1.0, %v5639
      %v5641 = vrcp.pop %v5516
      %v5642 = vmul.f32 1.0, %v5641
      %v5643 = vrcp.pop %v5517
      %v5644 = vmul.f32 1.0, %v5643
      %v5645 = vrcp.pop %v5518
      %v5646 = vmul.f32 1.0, %v5645
      %5711 = vrot.lane.b32.xlu0 %v5520, 124
      %v5712 = vpop.permute.xlu0 %5711
      %5713 = vrot.lane.b32.xlu0 %v5522, 124
      %v5714 = vpop.permute.xlu0 %5713
      %5715 = vrot.lane.b32.xlu0 %v5524, 124
      %v5716 = vpop.permute.xlu0 %5715
      %5717 = vrot.lane.b32.xlu0 %v5526, 124
      %v5718 = vpop.permute.xlu0 %5717
      %5719 = vrot.lane.b32.xlu0 %v5528, 124
      %v5720 = vpop.permute.xlu0 %5719
      %5721 = vrot.lane.b32.xlu0 %v5530, 124
      %v5722 = vpop.permute.xlu0 %5721
      %5723 = vrot.lane.b32.xlu0 %v5532, 124
      %v5724 = vpop.permute.xlu0 %5723
      %5725 = vrot.lane.b32.xlu0 %v5534, 124
      %v5726 = vpop.permute.xlu0 %5725
      %5727 = vrot.lane.b32.xlu0 %v5536, 124
      %v5728 = vpop.permute.xlu0 %5727
      %5729 = vrot.lane.b32.xlu0 %v5538, 124
      %v5730 = vpop.permute.xlu0 %5729
      %5731 = vrot.lane.b32.xlu0 %v5540, 124
      %v5732 = vpop.permute.xlu0 %5731
      %5733 = vrot.lane.b32.xlu0 %v5542, 124
      %v5734 = vpop.permute.xlu0 %5733
      %5735 = vrot.lane.b32.xlu0 %v5544, 124
      %v5736 = vpop.permute.xlu0 %5735
      %5737 = vrot.lane.b32.xlu0 %v5546, 124
      %v5738 = vpop.permute.xlu0 %5737
      %5739 = vrot.lane.b32.xlu0 %v5548, 124
      %v5740 = vpop.permute.xlu0 %5739
      %5741 = vrot.lane.b32.xlu0 %v5550, 124
      %v5742 = vpop.permute.xlu0 %5741
      %5743 = vrot.lane.b32.xlu0 %v5552, 124
      %v5744 = vpop.permute.xlu0 %5743
      %5745 = vrot.lane.b32.xlu0 %v5554, 124
      %v5746 = vpop.permute.xlu0 %5745
      %5747 = vrot.lane.b32.xlu0 %v5556, 124
      %v5748 = vpop.permute.xlu0 %5747
      %5749 = vrot.lane.b32.xlu0 %v5558, 124
      %v5750 = vpop.permute.xlu0 %5749
      %5751 = vrot.lane.b32.xlu0 %v5560, 124
      %v5752 = vpop.permute.xlu0 %5751
      %5753 = vrot.lane.b32.xlu0 %v5562, 124
      %v5754 = vpop.permute.xlu0 %5753
      %5755 = vrot.lane.b32.xlu0 %v5564, 124
      %v5756 = vpop.permute.xlu0 %5755
      %5757 = vrot.lane.b32.xlu0 %v5566, 124
      %v5758 = vpop.permute.xlu0 %5757
      %5759 = vrot.lane.b32.xlu0 %v5568, 124
      %v5760 = vpop.permute.xlu0 %5759
      %5761 = vrot.lane.b32.xlu0 %v5570, 124
      %v5762 = vpop.permute.xlu0 %5761
      %5763 = vrot.lane.b32.xlu0 %v5572, 124
      %v5764 = vpop.permute.xlu0 %5763
      %5765 = vrot.lane.b32.xlu0 %v5574, 124
      %v5766 = vpop.permute.xlu0 %5765
      %5767 = vrot.lane.b32.xlu0 %v5576, 124
      %v5768 = vpop.permute.xlu0 %5767
      %5769 = vrot.lane.b32.xlu0 %v5578, 124
      %v5770 = vpop.permute.xlu0 %5769
      %5771 = vrot.lane.b32.xlu0 %v5580, 124
      %v5772 = vpop.permute.xlu0 %5771
      %5773 = vrot.lane.b32.xlu0 %v5582, 124
      %v5774 = vpop.permute.xlu0 %5773
      %5775 = vrot.lane.b32.xlu0 %v5584, 124
      %v5776 = vpop.permute.xlu0 %5775
      %5777 = vrot.lane.b32.xlu0 %v5586, 124
      %v5778 = vpop.permute.xlu0 %5777
      %5779 = vrot.lane.b32.xlu0 %v5588, 124
      %v5780 = vpop.permute.xlu0 %5779
      %5781 = vrot.lane.b32.xlu0 %v5590, 124
      %v5782 = vpop.permute.xlu0 %5781
      %5783 = vrot.lane.b32.xlu0 %v5592, 124
      %v5784 = vpop.permute.xlu0 %5783
      %5785 = vrot.lane.b32.xlu0 %v5594, 124
      %v5786 = vpop.permute.xlu0 %5785
      %5787 = vrot.lane.b32.xlu0 %v5596, 124
      %v5788 = vpop.permute.xlu0 %5787
      %5789 = vrot.lane.b32.xlu0 %v5598, 124
      %v5790 = vpop.permute.xlu0 %5789
      %5791 = vrot.lane.b32.xlu0 %v5600, 124
      %v5792 = vpop.permute.xlu0 %5791
      %5793 = vrot.lane.b32.xlu0 %v5602, 124
      %v5794 = vpop.permute.xlu0 %5793
      %5795 = vrot.lane.b32.xlu0 %v5604, 124
      %v5796 = vpop.permute.xlu0 %5795
      %5797 = vrot.lane.b32.xlu0 %v5606, 124
      %v5798 = vpop.permute.xlu0 %5797
      %5799 = vrot.lane.b32.xlu0 %v5608, 124
      %v5800 = vpop.permute.xlu0 %5799
      %5801 = vrot.lane.b32.xlu0 %v5610, 124
      %v5802 = vpop.permute.xlu0 %5801
      %5803 = vrot.lane.b32.xlu0 %v5612, 124
      %v5804 = vpop.permute.xlu0 %5803
      %5805 = vrot.lane.b32.xlu0 %v5614, 124
      %v5806 = vpop.permute.xlu0 %5805
      %5807 = vrot.lane.b32.xlu0 %v5616, 124
      %v5808 = vpop.permute.xlu0 %5807
      %5809 = vrot.lane.b32.xlu0 %v5618, 124
      %v5810 = vpop.permute.xlu0 %5809
      %5811 = vrot.lane.b32.xlu0 %v5620, 124
      %v5812 = vpop.permute.xlu0 %5811
      %5813 = vrot.lane.b32.xlu0 %v5622, 124
      %v5814 = vpop.permute.xlu0 %5813
      %5815 = vrot.lane.b32.xlu0 %v5624, 124
      %v5816 = vpop.permute.xlu0 %5815
      %5817 = vrot.lane.b32.xlu0 %v5626, 124
      %v5818 = vpop.permute.xlu0 %5817
      %5819 = vrot.lane.b32.xlu0 %v5628, 124
      %v5820 = vpop.permute.xlu0 %5819
      %5821 = vrot.lane.b32.xlu0 %v5630, 124
      %v5822 = vpop.permute.xlu0 %5821
      %5823 = vrot.lane.b32.xlu0 %v5632, 124
      %v5824 = vpop.permute.xlu0 %5823
      %5825 = vrot.lane.b32.xlu0 %v5634, 124
      %v5826 = vpop.permute.xlu0 %5825
      %5827 = vrot.lane.b32.xlu0 %v5636, 124
      %v5828 = vpop.permute.xlu0 %5827
      %5829 = vrot.lane.b32.xlu0 %v5638, 124
      %v5830 = vpop.permute.xlu0 %5829
      %5831 = vrot.lane.b32.xlu0 %v5640, 124
      %v5832 = vpop.permute.xlu0 %5831
      %5833 = vrot.lane.b32.xlu0 %v5642, 124
      %v5834 = vpop.permute.xlu0 %5833
      %5835 = vrot.lane.b32.xlu0 %v5644, 124
      %v5836 = vpop.permute.xlu0 %5835
      %5837 = vrot.lane.b32.xlu0 %v5646, 124
      %v5838 = vpop.permute.xlu0 %5837
      %v5903 = vmul.f32 %v5520, %v5712
      %v5904 = vmul.f32 %v5522, %v5714
      %v5905 = vmul.f32 %v5524, %v5716
      %v5906 = vmul.f32 %v5526, %v5718
      %v5907 = vmul.f32 %v5528, %v5720
      %v5908 = vmul.f32 %v5530, %v5722
      %v5909 = vmul.f32 %v5532, %v5724
      %v5910 = vmul.f32 %v5534, %v5726
      %v5911 = vmul.f32 %v5536, %v5728
      %v5912 = vmul.f32 %v5538, %v5730
      %v5913 = vmul.f32 %v5540, %v5732
      %v5914 = vmul.f32 %v5542, %v5734
      %v5915 = vmul.f32 %v5544, %v5736
      %v5916 = vmul.f32 %v5546, %v5738
      %v5917 = vmul.f32 %v5548, %v5740
      %v5918 = vmul.f32 %v5550, %v5742
      %v5919 = vmul.f32 %v5552, %v5744
      %v5920 = vmul.f32 %v5554, %v5746
      %v5921 = vmul.f32 %v5556, %v5748
      %v5922 = vmul.f32 %v5558, %v5750
      %v5923 = vmul.f32 %v5560, %v5752
      %v5924 = vmul.f32 %v5562, %v5754
      %v5925 = vmul.f32 %v5564, %v5756
      %v5926 = vmul.f32 %v5566, %v5758
      %v5927 = vmul.f32 %v5568, %v5760
      %v5928 = vmul.f32 %v5570, %v5762
      %v5929 = vmul.f32 %v5572, %v5764
      %v5930 = vmul.f32 %v5574, %v5766
      %v5931 = vmul.f32 %v5576, %v5768
      %v5932 = vmul.f32 %v5578, %v5770
      %v5933 = vmul.f32 %v5580, %v5772
      %v5934 = vmul.f32 %v5582, %v5774
      %v5935 = vmul.f32 %v5584, %v5776
      %v5936 = vmul.f32 %v5586, %v5778
      %v5937 = vmul.f32 %v5588, %v5780
      %v5938 = vmul.f32 %v5590, %v5782
      %v5939 = vmul.f32 %v5592, %v5784
      %v5940 = vmul.f32 %v5594, %v5786
      %v5941 = vmul.f32 %v5596, %v5788
      %v5942 = vmul.f32 %v5598, %v5790
      %v5943 = vmul.f32 %v5600, %v5792
      %v5944 = vmul.f32 %v5602, %v5794
      %v5945 = vmul.f32 %v5604, %v5796
      %v5946 = vmul.f32 %v5606, %v5798
      %v5947 = vmul.f32 %v5608, %v5800
      %v5948 = vmul.f32 %v5610, %v5802
      %v5949 = vmul.f32 %v5612, %v5804
      %v5950 = vmul.f32 %v5614, %v5806
      %v5951 = vmul.f32 %v5616, %v5808
      %v5952 = vmul.f32 %v5618, %v5810
      %v5953 = vmul.f32 %v5620, %v5812
      %v5954 = vmul.f32 %v5622, %v5814
      %v5955 = vmul.f32 %v5624, %v5816
      %v5956 = vmul.f32 %v5626, %v5818
      %v5957 = vmul.f32 %v5628, %v5820
      %v5958 = vmul.f32 %v5630, %v5822
      %v5959 = vmul.f32 %v5632, %v5824
      %v5960 = vmul.f32 %v5634, %v5826
      %v5961 = vmul.f32 %v5636, %v5828
      %v5962 = vmul.f32 %v5638, %v5830
      %v5963 = vmul.f32 %v5640, %v5832
      %v5964 = vmul.f32 %v5642, %v5834
      %v5965 = vmul.f32 %v5644, %v5836
      %v5966 = vmul.f32 %v5646, %v5838
      %5967 = vrot.lane.b32.xlu0 %v5520, 120
      %v5968 = vpop.permute.xlu0 %5967
      %5969 = vrot.lane.b32.xlu0 %v5522, 120
      %v5970 = vpop.permute.xlu0 %5969
      %5971 = vrot.lane.b32.xlu0 %v5524, 120
      %v5972 = vpop.permute.xlu0 %5971
      %5973 = vrot.lane.b32.xlu0 %v5526, 120
      %v5974 = vpop.permute.xlu0 %5973
      %5975 = vrot.lane.b32.xlu0 %v5528, 120
      %v5976 = vpop.permute.xlu0 %5975
      %5977 = vrot.lane.b32.xlu0 %v5530, 120
      %v5978 = vpop.permute.xlu0 %5977
      %5979 = vrot.lane.b32.xlu0 %v5532, 120
      %v5980 = vpop.permute.xlu0 %5979
      %5981 = vrot.lane.b32.xlu0 %v5534, 120
      %v5982 = vpop.permute.xlu0 %5981
      %5983 = vrot.lane.b32.xlu0 %v5536, 120
      %v5984 = vpop.permute.xlu0 %5983
      %5985 = vrot.lane.b32.xlu0 %v5538, 120
      %v5986 = vpop.permute.xlu0 %5985
      %5987 = vrot.lane.b32.xlu0 %v5540, 120
      %v5988 = vpop.permute.xlu0 %5987
      %5989 = vrot.lane.b32.xlu0 %v5542, 120
      %v5990 = vpop.permute.xlu0 %5989
      %5991 = vrot.lane.b32.xlu0 %v5544, 120
      %v5992 = vpop.permute.xlu0 %5991
      %5993 = vrot.lane.b32.xlu0 %v5546, 120
      %v5994 = vpop.permute.xlu0 %5993
      %5995 = vrot.lane.b32.xlu0 %v5548, 120
      %v5996 = vpop.permute.xlu0 %5995
      %5997 = vrot.lane.b32.xlu0 %v5550, 120
      %v5998 = vpop.permute.xlu0 %5997
      %5999 = vrot.lane.b32.xlu0 %v5552, 120
      %v6000 = vpop.permute.xlu0 %5999
      %6001 = vrot.lane.b32.xlu0 %v5554, 120
      %v6002 = vpop.permute.xlu0 %6001
      %6003 = vrot.lane.b32.xlu0 %v5556, 120
      %v6004 = vpop.permute.xlu0 %6003
      %6005 = vrot.lane.b32.xlu0 %v5558, 120
      %v6006 = vpop.permute.xlu0 %6005
      %6007 = vrot.lane.b32.xlu0 %v5560, 120
      %v6008 = vpop.permute.xlu0 %6007
      %6009 = vrot.lane.b32.xlu0 %v5562, 120
      %v6010 = vpop.permute.xlu0 %6009
      %6011 = vrot.lane.b32.xlu0 %v5564, 120
      %v6012 = vpop.permute.xlu0 %6011
      %6013 = vrot.lane.b32.xlu0 %v5566, 120
      %v6014 = vpop.permute.xlu0 %6013
      %6015 = vrot.lane.b32.xlu0 %v5568, 120
      %v6016 = vpop.permute.xlu0 %6015
      %6017 = vrot.lane.b32.xlu0 %v5570, 120
      %v6018 = vpop.permute.xlu0 %6017
      %6019 = vrot.lane.b32.xlu0 %v5572, 120
      %v6020 = vpop.permute.xlu0 %6019
      %6021 = vrot.lane.b32.xlu0 %v5574, 120
      %v6022 = vpop.permute.xlu0 %6021
      %6023 = vrot.lane.b32.xlu0 %v5576, 120
      %v6024 = vpop.permute.xlu0 %6023
      %6025 = vrot.lane.b32.xlu0 %v5578, 120
      %v6026 = vpop.permute.xlu0 %6025
      %6027 = vrot.lane.b32.xlu0 %v5580, 120
      %v6028 = vpop.permute.xlu0 %6027
      %6029 = vrot.lane.b32.xlu0 %v5582, 120
      %v6030 = vpop.permute.xlu0 %6029
      %6031 = vrot.lane.b32.xlu0 %v5584, 120
      %v6032 = vpop.permute.xlu0 %6031
      %6033 = vrot.lane.b32.xlu0 %v5586, 120
      %v6034 = vpop.permute.xlu0 %6033
      %6035 = vrot.lane.b32.xlu0 %v5588, 120
      %v6036 = vpop.permute.xlu0 %6035
      %6037 = vrot.lane.b32.xlu0 %v5590, 120
      %v6038 = vpop.permute.xlu0 %6037
      %6039 = vrot.lane.b32.xlu0 %v5592, 120
      %v6040 = vpop.permute.xlu0 %6039
      %6041 = vrot.lane.b32.xlu0 %v5594, 120
      %v6042 = vpop.permute.xlu0 %6041
      %6043 = vrot.lane.b32.xlu0 %v5596, 120
      %v6044 = vpop.permute.xlu0 %6043
      %6045 = vrot.lane.b32.xlu0 %v5598, 120
      %v6046 = vpop.permute.xlu0 %6045
      %6047 = vrot.lane.b32.xlu0 %v5600, 120
      %v6048 = vpop.permute.xlu0 %6047
      %6049 = vrot.lane.b32.xlu0 %v5602, 120
      %v6050 = vpop.permute.xlu0 %6049
      %6051 = vrot.lane.b32.xlu0 %v5604, 120
      %v6052 = vpop.permute.xlu0 %6051
      %6053 = vrot.lane.b32.xlu0 %v5606, 120
      %v6054 = vpop.permute.xlu0 %6053
      %6055 = vrot.lane.b32.xlu0 %v5608, 120
      %v6056 = vpop.permute.xlu0 %6055
      %6057 = vrot.lane.b32.xlu0 %v5610, 120
      %v6058 = vpop.permute.xlu0 %6057
      %6059 = vrot.lane.b32.xlu0 %v5612, 120
      %v6060 = vpop.permute.xlu0 %6059
      %6061 = vrot.lane.b32.xlu0 %v5614, 120
      %v6062 = vpop.permute.xlu0 %6061
      %6063 = vrot.lane.b32.xlu0 %v5616, 120
      %v6064 = vpop.permute.xlu0 %6063
      %6065 = vrot.lane.b32.xlu0 %v5618, 120
      %v6066 = vpop.permute.xlu0 %6065
      %6067 = vrot.lane.b32.xlu0 %v5620, 120
      %v6068 = vpop.permute.xlu0 %6067
      %6069 = vrot.lane.b32.xlu0 %v5622, 120
      %v6070 = vpop.permute.xlu0 %6069
      %6071 = vrot.lane.b32.xlu0 %v5624, 120
      %v6072 = vpop.permute.xlu0 %6071
      %6073 = vrot.lane.b32.xlu0 %v5626, 120
      %v6074 = vpop.permute.xlu0 %6073
      %6075 = vrot.lane.b32.xlu0 %v5628, 120
      %v6076 = vpop.permute.xlu0 %6075
      %6077 = vrot.lane.b32.xlu0 %v5630, 120
      %v6078 = vpop.permute.xlu0 %6077
      %6079 = vrot.lane.b32.xlu0 %v5632, 120
      %v6080 = vpop.permute.xlu0 %6079
      %6081 = vrot.lane.b32.xlu0 %v5634, 120
      %v6082 = vpop.permute.xlu0 %6081
      %6083 = vrot.lane.b32.xlu0 %v5636, 120
      %v6084 = vpop.permute.xlu0 %6083
      %6085 = vrot.lane.b32.xlu0 %v5638, 120
      %v6086 = vpop.permute.xlu0 %6085
      %6087 = vrot.lane.b32.xlu0 %v5640, 120
      %v6088 = vpop.permute.xlu0 %6087
      %6089 = vrot.lane.b32.xlu0 %v5642, 120
      %v6090 = vpop.permute.xlu0 %6089
      %6091 = vrot.lane.b32.xlu0 %v5644, 120
      %v6092 = vpop.permute.xlu0 %6091
      %6093 = vrot.lane.b32.xlu0 %v5646, 120
      %v6094 = vpop.permute.xlu0 %6093
      %v6159 = vmul.f32 %v5903, %v5968
      %v6160 = vmul.f32 %v5904, %v5970
      %v6161 = vmul.f32 %v5905, %v5972
      %v6162 = vmul.f32 %v5906, %v5974
      %v6163 = vmul.f32 %v5907, %v5976
      %v6164 = vmul.f32 %v5908, %v5978
      %v6165 = vmul.f32 %v5909, %v5980
      %v6166 = vmul.f32 %v5910, %v5982
      %v6167 = vmul.f32 %v5911, %v5984
      %v6168 = vmul.f32 %v5912, %v5986
      %v6169 = vmul.f32 %v5913, %v5988
      %v6170 = vmul.f32 %v5914, %v5990
      %v6171 = vmul.f32 %v5915, %v5992
      %v6172 = vmul.f32 %v5916, %v5994
      %v6173 = vmul.f32 %v5917, %v5996
      %v6174 = vmul.f32 %v5918, %v5998
      %v6175 = vmul.f32 %v5919, %v6000
      %v6176 = vmul.f32 %v5920, %v6002
      %v6177 = vmul.f32 %v5921, %v6004
      %v6178 = vmul.f32 %v5922, %v6006
      %v6179 = vmul.f32 %v5923, %v6008
      %v6180 = vmul.f32 %v5924, %v6010
      %v6181 = vmul.f32 %v5925, %v6012
      %v6182 = vmul.f32 %v5926, %v6014
      %v6183 = vmul.f32 %v5927, %v6016
      %v6184 = vmul.f32 %v5928, %v6018
      %v6185 = vmul.f32 %v5929, %v6020
      %v6186 = vmul.f32 %v5930, %v6022
      %v6187 = vmul.f32 %v5931, %v6024
      %v6188 = vmul.f32 %v5932, %v6026
      %v6189 = vmul.f32 %v5933, %v6028
      %v6190 = vmul.f32 %v5934, %v6030
      %v6191 = vmul.f32 %v5935, %v6032
      %v6192 = vmul.f32 %v5936, %v6034
      %v6193 = vmul.f32 %v5937, %v6036
      %v6194 = vmul.f32 %v5938, %v6038
      %v6195 = vmul.f32 %v5939, %v6040
      %v6196 = vmul.f32 %v5940, %v6042
      %v6197 = vmul.f32 %v5941, %v6044
      %v6198 = vmul.f32 %v5942, %v6046
      %v6199 = vmul.f32 %v5943, %v6048
      %v6200 = vmul.f32 %v5944, %v6050
      %v6201 = vmul.f32 %v5945, %v6052
      %v6202 = vmul.f32 %v5946, %v6054
      %v6203 = vmul.f32 %v5947, %v6056
      %v6204 = vmul.f32 %v5948, %v6058
      %v6205 = vmul.f32 %v5949, %v6060
      %v6206 = vmul.f32 %v5950, %v6062
      %v6207 = vmul.f32 %v5951, %v6064
      %v6208 = vmul.f32 %v5952, %v6066
      %v6209 = vmul.f32 %v5953, %v6068
      %v6210 = vmul.f32 %v5954, %v6070
      %v6211 = vmul.f32 %v5955, %v6072
      %v6212 = vmul.f32 %v5956, %v6074
      %v6213 = vmul.f32 %v5957, %v6076
      %v6214 = vmul.f32 %v5958, %v6078
      %v6215 = vmul.f32 %v5959, %v6080
      %v6216 = vmul.f32 %v5960, %v6082
      %v6217 = vmul.f32 %v5961, %v6084
      %v6218 = vmul.f32 %v5962, %v6086
      %v6219 = vmul.f32 %v5963, %v6088
      %v6220 = vmul.f32 %v5964, %v6090
      %v6221 = vmul.f32 %v5965, %v6092
      %v6222 = vmul.f32 %v5966, %v6094
      %6223 = vrot.lane.b32.xlu0 %v5520, 116
      %v6224 = vpop.permute.xlu0 %6223
      %6225 = vrot.lane.b32.xlu0 %v5522, 116
      %v6226 = vpop.permute.xlu0 %6225
      %6227 = vrot.lane.b32.xlu0 %v5524, 116
      %v6228 = vpop.permute.xlu0 %6227
      %6229 = vrot.lane.b32.xlu0 %v5526, 116
      %v6230 = vpop.permute.xlu0 %6229
      %6231 = vrot.lane.b32.xlu0 %v5528, 116
      %v6232 = vpop.permute.xlu0 %6231
      %6233 = vrot.lane.b32.xlu0 %v5530, 116
      %v6234 = vpop.permute.xlu0 %6233
      %6235 = vrot.lane.b32.xlu0 %v5532, 116
      %v6236 = vpop.permute.xlu0 %6235
      %6237 = vrot.lane.b32.xlu0 %v5534, 116
      %v6238 = vpop.permute.xlu0 %6237
      %6239 = vrot.lane.b32.xlu0 %v5536, 116
      %v6240 = vpop.permute.xlu0 %6239
      %6241 = vrot.lane.b32.xlu0 %v5538, 116
      %v6242 = vpop.permute.xlu0 %6241
      %6243 = vrot.lane.b32.xlu0 %v5540, 116
      %v6244 = vpop.permute.xlu0 %6243
      %6245 = vrot.lane.b32.xlu0 %v5542, 116
      %v6246 = vpop.permute.xlu0 %6245
      %6247 = vrot.lane.b32.xlu0 %v5544, 116
      %v6248 = vpop.permute.xlu0 %6247
      %6249 = vrot.lane.b32.xlu0 %v5546, 116
      %v6250 = vpop.permute.xlu0 %6249
      %6251 = vrot.lane.b32.xlu0 %v5548, 116
      %v6252 = vpop.permute.xlu0 %6251
      %6253 = vrot.lane.b32.xlu0 %v5550, 116
      %v6254 = vpop.permute.xlu0 %6253
      %6255 = vrot.lane.b32.xlu0 %v5552, 116
      %v6256 = vpop.permute.xlu0 %6255
      %6257 = vrot.lane.b32.xlu0 %v5554, 116
      %v6258 = vpop.permute.xlu0 %6257
      %6259 = vrot.lane.b32.xlu0 %v5556, 116
      %v6260 = vpop.permute.xlu0 %6259
      %6261 = vrot.lane.b32.xlu0 %v5558, 116
      %v6262 = vpop.permute.xlu0 %6261
      %6263 = vrot.lane.b32.xlu0 %v5560, 116
      %v6264 = vpop.permute.xlu0 %6263
      %6265 = vrot.lane.b32.xlu0 %v5562, 116
      %v6266 = vpop.permute.xlu0 %6265
      %6267 = vrot.lane.b32.xlu0 %v5564, 116
      %v6268 = vpop.permute.xlu0 %6267
      %6269 = vrot.lane.b32.xlu0 %v5566, 116
      %v6270 = vpop.permute.xlu0 %6269
      %6271 = vrot.lane.b32.xlu0 %v5568, 116
      %v6272 = vpop.permute.xlu0 %6271
      %6273 = vrot.lane.b32.xlu0 %v5570, 116
      %v6274 = vpop.permute.xlu0 %6273
      %6275 = vrot.lane.b32.xlu0 %v5572, 116
      %v6276 = vpop.permute.xlu0 %6275
      %6277 = vrot.lane.b32.xlu0 %v5574, 116
      %v6278 = vpop.permute.xlu0 %6277
      %6279 = vrot.lane.b32.xlu0 %v5576, 116
      %v6280 = vpop.permute.xlu0 %6279
      %6281 = vrot.lane.b32.xlu0 %v5578, 116
      %v6282 = vpop.permute.xlu0 %6281
      %6283 = vrot.lane.b32.xlu0 %v5580, 116
      %v6284 = vpop.permute.xlu0 %6283
      %6285 = vrot.lane.b32.xlu0 %v5582, 116
      %v6286 = vpop.permute.xlu0 %6285
      %6287 = vrot.lane.b32.xlu0 %v5584, 116
      %v6288 = vpop.permute.xlu0 %6287
      %6289 = vrot.lane.b32.xlu0 %v5586, 116
      %v6290 = vpop.permute.xlu0 %6289
      %6291 = vrot.lane.b32.xlu0 %v5588, 116
      %v6292 = vpop.permute.xlu0 %6291
      %6293 = vrot.lane.b32.xlu0 %v5590, 116
      %v6294 = vpop.permute.xlu0 %6293
      %6295 = vrot.lane.b32.xlu0 %v5592, 116
      %v6296 = vpop.permute.xlu0 %6295
      %6297 = vrot.lane.b32.xlu0 %v5594, 116
      %v6298 = vpop.permute.xlu0 %6297
      %6299 = vrot.lane.b32.xlu0 %v5596, 116
      %v6300 = vpop.permute.xlu0 %6299
      %6301 = vrot.lane.b32.xlu0 %v5598, 116
      %v6302 = vpop.permute.xlu0 %6301
      %6303 = vrot.lane.b32.xlu0 %v5600, 116
      %v6304 = vpop.permute.xlu0 %6303
      %6305 = vrot.lane.b32.xlu0 %v5602, 116
      %v6306 = vpop.permute.xlu0 %6305
      %6307 = vrot.lane.b32.xlu0 %v5604, 116
      %v6308 = vpop.permute.xlu0 %6307
      %6309 = vrot.lane.b32.xlu0 %v5606, 116
      %v6310 = vpop.permute.xlu0 %6309
      %6311 = vrot.lane.b32.xlu0 %v5608, 116
      %v6312 = vpop.permute.xlu0 %6311
      %6313 = vrot.lane.b32.xlu0 %v5610, 116
      %v6314 = vpop.permute.xlu0 %6313
      %6315 = vrot.lane.b32.xlu0 %v5612, 116
      %v6316 = vpop.permute.xlu0 %6315
      %6317 = vrot.lane.b32.xlu0 %v5614, 116
      %v6318 = vpop.permute.xlu0 %6317
      %6319 = vrot.lane.b32.xlu0 %v5616, 116
      %v6320 = vpop.permute.xlu0 %6319
      %6321 = vrot.lane.b32.xlu0 %v5618, 116
      %v6322 = vpop.permute.xlu0 %6321
      %6323 = vrot.lane.b32.xlu0 %v5620, 116
      %v6324 = vpop.permute.xlu0 %6323
      %6325 = vrot.lane.b32.xlu0 %v5622, 116
      %v6326 = vpop.permute.xlu0 %6325
      %6327 = vrot.lane.b32.xlu0 %v5624, 116
      %v6328 = vpop.permute.xlu0 %6327
      %6329 = vrot.lane.b32.xlu0 %v5626, 116
      %v6330 = vpop.permute.xlu0 %6329
      %6331 = vrot.lane.b32.xlu0 %v5628, 116
      %v6332 = vpop.permute.xlu0 %6331
      %6333 = vrot.lane.b32.xlu0 %v5630, 116
      %v6334 = vpop.permute.xlu0 %6333
      %6335 = vrot.lane.b32.xlu0 %v5632, 116
      %v6336 = vpop.permute.xlu0 %6335
      %6337 = vrot.lane.b32.xlu0 %v5634, 116
      %v6338 = vpop.permute.xlu0 %6337
      %6339 = vrot.lane.b32.xlu0 %v5636, 116
      %v6340 = vpop.permute.xlu0 %6339
      %6341 = vrot.lane.b32.xlu0 %v5638, 116
      %v6342 = vpop.permute.xlu0 %6341
      %6343 = vrot.lane.b32.xlu0 %v5640, 116
      %v6344 = vpop.permute.xlu0 %6343
      %6345 = vrot.lane.b32.xlu0 %v5642, 116
      %v6346 = vpop.permute.xlu0 %6345
      %6347 = vrot.lane.b32.xlu0 %v5644, 116
      %v6348 = vpop.permute.xlu0 %6347
      %6349 = vrot.lane.b32.xlu0 %v5646, 116
      %v6350 = vpop.permute.xlu0 %6349
      %v6415 = vmul.f32 %v6159, %v6224
      %v6416 = vmul.f32 %v6160, %v6226
      %v6417 = vmul.f32 %v6161, %v6228
      %v6418 = vmul.f32 %v6162, %v6230
      %v6419 = vmul.f32 %v6163, %v6232
      %v6420 = vmul.f32 %v6164, %v6234
      %v6421 = vmul.f32 %v6165, %v6236
      %v6422 = vmul.f32 %v6166, %v6238
      %v6423 = vmul.f32 %v6167, %v6240
      %v6424 = vmul.f32 %v6168, %v6242
      %v6425 = vmul.f32 %v6169, %v6244
      %v6426 = vmul.f32 %v6170, %v6246
      %v6427 = vmul.f32 %v6171, %v6248
      %v6428 = vmul.f32 %v6172, %v6250
      %v6429 = vmul.f32 %v6173, %v6252
      %v6430 = vmul.f32 %v6174, %v6254
      %v6431 = vmul.f32 %v6175, %v6256
      %v6432 = vmul.f32 %v6176, %v6258
      %v6433 = vmul.f32 %v6177, %v6260
      %v6434 = vmul.f32 %v6178, %v6262
      %v6435 = vmul.f32 %v6179, %v6264
      %v6436 = vmul.f32 %v6180, %v6266
      %v6437 = vmul.f32 %v6181, %v6268
      %v6438 = vmul.f32 %v6182, %v6270
      %v6439 = vmul.f32 %v6183, %v6272
      %v6440 = vmul.f32 %v6184, %v6274
      %v6441 = vmul.f32 %v6185, %v6276
      %v6442 = vmul.f32 %v6186, %v6278
      %v6443 = vmul.f32 %v6187, %v6280
      %v6444 = vmul.f32 %v6188, %v6282
      %v6445 = vmul.f32 %v6189, %v6284
      %v6446 = vmul.f32 %v6190, %v6286
      %v6447 = vmul.f32 %v6191, %v6288
      %v6448 = vmul.f32 %v6192, %v6290
      %v6449 = vmul.f32 %v6193, %v6292
      %v6450 = vmul.f32 %v6194, %v6294
      %v6451 = vmul.f32 %v6195, %v6296
      %v6452 = vmul.f32 %v6196, %v6298
      %v6453 = vmul.f32 %v6197, %v6300
      %v6454 = vmul.f32 %v6198, %v6302
      %v6455 = vmul.f32 %v6199, %v6304
      %v6456 = vmul.f32 %v6200, %v6306
      %v6457 = vmul.f32 %v6201, %v6308
      %v6458 = vmul.f32 %v6202, %v6310
      %v6459 = vmul.f32 %v6203, %v6312
      %v6460 = vmul.f32 %v6204, %v6314
      %v6461 = vmul.f32 %v6205, %v6316
      %v6462 = vmul.f32 %v6206, %v6318
      %v6463 = vmul.f32 %v6207, %v6320
      %v6464 = vmul.f32 %v6208, %v6322
      %v6465 = vmul.f32 %v6209, %v6324
      %v6466 = vmul.f32 %v6210, %v6326
      %v6467 = vmul.f32 %v6211, %v6328
      %v6468 = vmul.f32 %v6212, %v6330
      %v6469 = vmul.f32 %v6213, %v6332
      %v6470 = vmul.f32 %v6214, %v6334
      %v6471 = vmul.f32 %v6215, %v6336
      %v6472 = vmul.f32 %v6216, %v6338
      %v6473 = vmul.f32 %v6217, %v6340
      %v6474 = vmul.f32 %v6218, %v6342
      %v6475 = vmul.f32 %v6219, %v6344
      %v6476 = vmul.f32 %v6220, %v6346
      %v6477 = vmul.f32 %v6221, %v6348
      %v6478 = vmul.f32 %v6222, %v6350
      %v6480 = vsel %vm2463, %v6415, 0
      %v6483 = vsel %vm2463, %v6416, 0
      %v6486 = vsel %vm2463, %v6417, 0
      %v6489 = vsel %vm2463, %v6418, 0
      %v6492 = vsel %vm2463, %v6419, 0
      %v6495 = vsel %vm2463, %v6420, 0
      %v6498 = vsel %vm2463, %v6421, 0
      %v6501 = vsel %vm2463, %v6422, 0
      %v6504 = vsel %vm2463, %v6423, 0
      %v6507 = vsel %vm2463, %v6424, 0
      %v6510 = vsel %vm2463, %v6425, 0
      %v6513 = vsel %vm2463, %v6426, 0
      %v6516 = vsel %vm2463, %v6427, 0
      %v6519 = vsel %vm2463, %v6428, 0
      %v6522 = vsel %vm2463, %v6429, 0
      %v6525 = vsel %vm2463, %v6430, 0
      %v6528 = vsel %vm2463, %v6431, 0
      %v6531 = vsel %vm2463, %v6432, 0
      %v6534 = vsel %vm2463, %v6433, 0
      %v6537 = vsel %vm2463, %v6434, 0
      %v6540 = vsel %vm2463, %v6435, 0
      %v6543 = vsel %vm2463, %v6436, 0
      %v6546 = vsel %vm2463, %v6437, 0
      %v6549 = vsel %vm2463, %v6438, 0
      %v6552 = vsel %vm2463, %v6439, 0
      %v6555 = vsel %vm2463, %v6440, 0
      %v6558 = vsel %vm2463, %v6441, 0
      %v6561 = vsel %vm2463, %v6442, 0
      %v6564 = vsel %vm2463, %v6443, 0
      %v6567 = vsel %vm2463, %v6444, 0
      %v6570 = vsel %vm2463, %v6445, 0
      %v6573 = vsel %vm2463, %v6446, 0
      %v6576 = vsel %vm2463, %v6447, 0
      %v6579 = vsel %vm2463, %v6448, 0
      %v6582 = vsel %vm2463, %v6449, 0
      %v6585 = vsel %vm2463, %v6450, 0
      %v6588 = vsel %vm2463, %v6451, 0
      %v6591 = vsel %vm2463, %v6452, 0
      %v6594 = vsel %vm2463, %v6453, 0
      %v6597 = vsel %vm2463, %v6454, 0
      %v6600 = vsel %vm2463, %v6455, 0
      %v6603 = vsel %vm2463, %v6456, 0
      %v6606 = vsel %vm2463, %v6457, 0
      %v6609 = vsel %vm2463, %v6458, 0
      %v6612 = vsel %vm2463, %v6459, 0
      %v6615 = vsel %vm2463, %v6460, 0
      %v6618 = vsel %vm2463, %v6461, 0
      %v6621 = vsel %vm2463, %v6462, 0
      %v6624 = vsel %vm2463, %v6463, 0
      %v6627 = vsel %vm2463, %v6464, 0
      %v6630 = vsel %vm2463, %v6465, 0
      %v6633 = vsel %vm2463, %v6466, 0
      %v6636 = vsel %vm2463, %v6467, 0
      %v6639 = vsel %vm2463, %v6468, 0
      %v6642 = vsel %vm2463, %v6469, 0
      %v6645 = vsel %vm2463, %v6470, 0
      %v6648 = vsel %vm2463, %v6471, 0
      %v6651 = vsel %vm2463, %v6472, 0
      %v6654 = vsel %vm2463, %v6473, 0
      %v6657 = vsel %vm2463, %v6474, 0
      %v6660 = vsel %vm2463, %v6475, 0
      %v6663 = vsel %vm2463, %v6476, 0
      %v6666 = vsel %vm2463, %v6477, 0
      %v6669 = vsel %vm2463, %v6478, 0
      %6671 = vmatprep.subr.mxu0 0.0
      %6672 = vmatpush1.msra.mxu0 0.0
      %6673 = vmatprep.subr.mxu0 0.0
      %6674 = vmatpush1.msra.mxu0 0.0
      %6675 = vmatprep.subr.mxu0 0.0
      %6676 = vmatpush1.msra.mxu0 0.0
      %6677 = vmatprep.subr.mxu0 0.0
      %6678 = vmatpush1.msra.mxu0 0.0
      %6679 = vmatprep.subr.mxu0 0.0
      %6680 = vmatpush1.msra.mxu0 0.0
      %6681 = vmatprep.subr.mxu0 0.0
      %6682 = vmatpush1.msra.mxu0 0.0
      %6683 = vmatprep.subr.mxu0 0.0
      %6684 = vmatpush1.msra.mxu0 0.0
      %6685 = vmatprep.subr.mxu0 0.0
      %6686 = vmatpush1.msra.mxu0 0.0
      %6687 = vmatprep.subr.mxu0 0.0
      %6688 = vmatpush1.msra.mxu0 0.0
      %6689 = vmatprep.subr.mxu0 0.0
      %6690 = vmatpush1.msra.mxu0 0.0
      %6691 = vmatprep.subr.mxu0 0.0
      %6692 = vmatpush1.msra.mxu0 0.0
      %6693 = vmatprep.subr.mxu0 0.0
      %6694 = vmatpush1.msra.mxu0 0.0
      %6695 = vmatprep.subr.mxu0 0.0
      %6696 = vmatpush1.msra.mxu0 0.0
      %6697 = vmatprep.subr.mxu0 0.0
      %6698 = vmatpush1.msra.mxu0 0.0
      %6699 = vmatprep.subr.mxu0 0.0
      %6700 = vmatpush1.msra.mxu0 0.0
      %6701 = vmatprep.subr.mxu0 0.0
      %6702 = vmatpush1.msra.mxu0 %v2658
      %6703 = vmatprep.subr.mxu0 0.0
      %6704 = vmatpush2.msra.mxu0 0.0
      %6705 = vmatprep.subr.mxu0 0.0
      %6706 = vmatpush2.msra.mxu0 0.0
      %6707 = vmatprep.subr.mxu0 0.0
      %6708 = vmatpush2.msra.mxu0 0.0
      %6709 = vmatprep.subr.mxu0 0.0
      %6710 = vmatpush2.msra.mxu0 0.0
      %6711 = vmatprep.subr.mxu0 0.0
      %6712 = vmatpush2.msra.mxu0 0.0
      %6713 = vmatprep.subr.mxu0 0.0
      %6714 = vmatpush2.msra.mxu0 0.0
      %6715 = vmatprep.subr.mxu0 0.0
      %6716 = vmatpush2.msra.mxu0 0.0
      %6717 = vmatprep.subr.mxu0 0.0
      %6718 = vmatpush2.msra.mxu0 0.0
      %6719 = vmatprep.subr.mxu0 0.0
      %6720 = vmatpush2.msra.mxu0 0.0
      %6721 = vmatprep.subr.mxu0 0.0
      %6722 = vmatpush2.msra.mxu0 0.0
      %6723 = vmatprep.subr.mxu0 0.0
      %6724 = vmatpush2.msra.mxu0 0.0
      %6725 = vmatprep.subr.mxu0 0.0
      %6726 = vmatpush2.msra.mxu0 0.0
      %6727 = vmatprep.subr.mxu0 0.0
      %6728 = vmatpush2.msra.mxu0 0.0
      %6729 = vmatprep.subr.mxu0 0.0
      %6730 = vmatpush2.msra.mxu0 0.0
      %6731 = vmatprep.subr.mxu0 0.0
      %6732 = vmatpush2.msra.mxu0 0.0
      %6733 = vmatprep.subr.mxu0 0.0
      %6734 = vmatpush2.msra.mxu0 0.0
      %6735 = vmatprep.mubr.f32.mxu0 0.0
      %6736 = vmatmul.mubr.f32.gmra.mxu0 %v6480
      %v6737 = vpop.f32.mrf.mxu0
      %v6738 = vadd.f32 0.0, %v6737
      %v6739 = vpop.f32.mrf.mxu0
      %6740 = vmatprep.mubr.f32.mxu0 0.0
      %6741 = vmatmul.mubr.f32.gmra.mxu0 %v6483
      %v6742 = vpop.f32.mrf.mxu0
      %v6743 = vadd.f32 0.0, %v6742
      %v6744 = vpop.f32.mrf.mxu0
      %6745 = vmatprep.mubr.f32.mxu0 0.0
      %6746 = vmatmul.mubr.f32.gmra.mxu0 %v6486
      %v6747 = vpop.f32.mrf.mxu0
      %v6748 = vadd.f32 0.0, %v6747
      %v6749 = vpop.f32.mrf.mxu0
      %6750 = vmatprep.mubr.f32.mxu0 0.0
      %6751 = vmatmul.mubr.f32.gmra.mxu0 %v6489
      %v6752 = vpop.f32.mrf.mxu0
      %v6753 = vadd.f32 0.0, %v6752
      %v6754 = vpop.f32.mrf.mxu0
      %6755 = vmatprep.mubr.f32.mxu0 0.0
      %6756 = vmatmul.mubr.f32.gmra.mxu0 %v6492
      %v6757 = vpop.f32.mrf.mxu0
      %v6758 = vadd.f32 0.0, %v6757
      %v6759 = vpop.f32.mrf.mxu0
      %6760 = vmatprep.mubr.f32.mxu0 0.0
      %6761 = vmatmul.mubr.f32.gmra.mxu0 %v6495
      %v6762 = vpop.f32.mrf.mxu0
      %v6763 = vadd.f32 0.0, %v6762
      %v6764 = vpop.f32.mrf.mxu0
      %6765 = vmatprep.mubr.f32.mxu0 0.0
      %6766 = vmatmul.mubr.f32.gmra.mxu0 %v6498
      %v6767 = vpop.f32.mrf.mxu0
      %v6768 = vadd.f32 0.0, %v6767
      %v6769 = vpop.f32.mrf.mxu0
      %6770 = vmatprep.mubr.f32.mxu0 0.0
      %6771 = vmatmul.mubr.f32.gmra.mxu0 %v6501
      %v6772 = vpop.f32.mrf.mxu0
      %v6773 = vadd.f32 0.0, %v6772
      %v6774 = vpop.f32.mrf.mxu0
      %6775 = vmatprep.mubr.f32.mxu0 0.0
      %6776 = vmatmul.mubr.f32.gmra.mxu0 %v6504
      %v6777 = vpop.f32.mrf.mxu0
      %v6778 = vadd.f32 0.0, %v6777
      %v6779 = vpop.f32.mrf.mxu0
      %6780 = vmatprep.mubr.f32.mxu0 0.0
      %6781 = vmatmul.mubr.f32.gmra.mxu0 %v6507
      %v6782 = vpop.f32.mrf.mxu0
      %v6783 = vadd.f32 0.0, %v6782
      %v6784 = vpop.f32.mrf.mxu0
      %6785 = vmatprep.mubr.f32.mxu0 0.0
      %6786 = vmatmul.mubr.f32.gmra.mxu0 %v6510
      %v6787 = vpop.f32.mrf.mxu0
      %v6788 = vadd.f32 0.0, %v6787
      %v6789 = vpop.f32.mrf.mxu0
      %6790 = vmatprep.mubr.f32.mxu0 0.0
      %6791 = vmatmul.mubr.f32.gmra.mxu0 %v6513
      %v6792 = vpop.f32.mrf.mxu0
      %v6793 = vadd.f32 0.0, %v6792
      %v6794 = vpop.f32.mrf.mxu0
      %6795 = vmatprep.mubr.f32.mxu0 0.0
      %6796 = vmatmul.mubr.f32.gmra.mxu0 %v6516
      %v6797 = vpop.f32.mrf.mxu0
      %v6798 = vadd.f32 0.0, %v6797
      %v6799 = vpop.f32.mrf.mxu0
      %6800 = vmatprep.mubr.f32.mxu0 0.0
      %6801 = vmatmul.mubr.f32.gmra.mxu0 %v6519
      %v6802 = vpop.f32.mrf.mxu0
      %v6803 = vadd.f32 0.0, %v6802
      %v6804 = vpop.f32.mrf.mxu0
      %6805 = vmatprep.mubr.f32.mxu0 0.0
      %6806 = vmatmul.mubr.f32.gmra.mxu0 %v6522
      %v6807 = vpop.f32.mrf.mxu0
      %v6808 = vadd.f32 0.0, %v6807
      %v6809 = vpop.f32.mrf.mxu0
      %6810 = vmatprep.mubr.f32.mxu0 0.0
      %6811 = vmatmul.mubr.f32.gmra.mxu0 %v6525
      %v6812 = vpop.f32.mrf.mxu0
      %v6813 = vadd.f32 0.0, %v6812
      %v6814 = vpop.f32.mrf.mxu0
      %6815 = vmatprep.mubr.f32.mxu0 0.0
      %6816 = vmatmul.mubr.f32.gmra.mxu0 %v6528
      %v6817 = vpop.f32.mrf.mxu0
      %v6818 = vadd.f32 0.0, %v6817
      %v6819 = vpop.f32.mrf.mxu0
      %6820 = vmatprep.mubr.f32.mxu0 0.0
      %6821 = vmatmul.mubr.f32.gmra.mxu0 %v6531
      %v6822 = vpop.f32.mrf.mxu0
      %v6823 = vadd.f32 0.0, %v6822
      %v6824 = vpop.f32.mrf.mxu0
      %6825 = vmatprep.mubr.f32.mxu0 0.0
      %6826 = vmatmul.mubr.f32.gmra.mxu0 %v6534
      %v6827 = vpop.f32.mrf.mxu0
      %v6828 = vadd.f32 0.0, %v6827
      %v6829 = vpop.f32.mrf.mxu0
      %6830 = vmatprep.mubr.f32.mxu0 0.0
      %6831 = vmatmul.mubr.f32.gmra.mxu0 %v6537
      %v6832 = vpop.f32.mrf.mxu0
      %v6833 = vadd.f32 0.0, %v6832
      %v6834 = vpop.f32.mrf.mxu0
      %6835 = vmatprep.mubr.f32.mxu0 0.0
      %6836 = vmatmul.mubr.f32.gmra.mxu0 %v6540
      %v6837 = vpop.f32.mrf.mxu0
      %v6838 = vadd.f32 0.0, %v6837
      %v6839 = vpop.f32.mrf.mxu0
      %6840 = vmatprep.mubr.f32.mxu0 0.0
      %6841 = vmatmul.mubr.f32.gmra.mxu0 %v6543
      %v6842 = vpop.f32.mrf.mxu0
      %v6843 = vadd.f32 0.0, %v6842
      %v6844 = vpop.f32.mrf.mxu0
      %6845 = vmatprep.mubr.f32.mxu0 0.0
      %6846 = vmatmul.mubr.f32.gmra.mxu0 %v6546
      %v6847 = vpop.f32.mrf.mxu0
      %v6848 = vadd.f32 0.0, %v6847
      %v6849 = vpop.f32.mrf.mxu0
      %6850 = vmatprep.mubr.f32.mxu0 0.0
      %6851 = vmatmul.mubr.f32.gmra.mxu0 %v6549
      %v6852 = vpop.f32.mrf.mxu0
      %v6853 = vadd.f32 0.0, %v6852
      %v6854 = vpop.f32.mrf.mxu0
      %6855 = vmatprep.mubr.f32.mxu0 0.0
      %6856 = vmatmul.mubr.f32.gmra.mxu0 %v6552
      %v6857 = vpop.f32.mrf.mxu0
      %v6858 = vadd.f32 0.0, %v6857
      %v6859 = vpop.f32.mrf.mxu0
      %6860 = vmatprep.mubr.f32.mxu0 0.0
      %6861 = vmatmul.mubr.f32.gmra.mxu0 %v6555
      %v6862 = vpop.f32.mrf.mxu0
      %v6863 = vadd.f32 0.0, %v6862
      %v6864 = vpop.f32.mrf.mxu0
      %6865 = vmatprep.mubr.f32.mxu0 0.0
      %6866 = vmatmul.mubr.f32.gmra.mxu0 %v6558
      %v6867 = vpop.f32.mrf.mxu0
      %v6868 = vadd.f32 0.0, %v6867
      %v6869 = vpop.f32.mrf.mxu0
      %6870 = vmatprep.mubr.f32.mxu0 0.0
      %6871 = vmatmul.mubr.f32.gmra.mxu0 %v6561
      %v6872 = vpop.f32.mrf.mxu0
      %v6873 = vadd.f32 0.0, %v6872
      %v6874 = vpop.f32.mrf.mxu0
      %6875 = vmatprep.mubr.f32.mxu0 0.0
      %6876 = vmatmul.mubr.f32.gmra.mxu0 %v6564
      %v6877 = vpop.f32.mrf.mxu0
      %v6878 = vadd.f32 0.0, %v6877
      %v6879 = vpop.f32.mrf.mxu0
      %6880 = vmatprep.mubr.f32.mxu0 0.0
      %6881 = vmatmul.mubr.f32.gmra.mxu0 %v6567
      %v6882 = vpop.f32.mrf.mxu0
      %v6883 = vadd.f32 0.0, %v6882
      %v6884 = vpop.f32.mrf.mxu0
      %6885 = vmatprep.mubr.f32.mxu0 0.0
      %6886 = vmatmul.mubr.f32.gmra.mxu0 %v6570
      %v6887 = vpop.f32.mrf.mxu0
      %v6888 = vadd.f32 0.0, %v6887
      %v6889 = vpop.f32.mrf.mxu0
      %6890 = vmatprep.mubr.f32.mxu0 0.0
      %6891 = vmatmul.mubr.f32.gmra.mxu0 %v6573
      %v6892 = vpop.f32.mrf.mxu0
      %v6893 = vadd.f32 0.0, %v6892
      %v6894 = vpop.f32.mrf.mxu0
      %6895 = vmatprep.mubr.f32.mxu0 0.0
      %6896 = vmatmul.mubr.f32.gmra.mxu0 %v6576
      %v6897 = vpop.f32.mrf.mxu0
      %v6898 = vadd.f32 0.0, %v6897
      %v6899 = vpop.f32.mrf.mxu0
      %6900 = vmatprep.mubr.f32.mxu0 0.0
      %6901 = vmatmul.mubr.f32.gmra.mxu0 %v6579
      %v6902 = vpop.f32.mrf.mxu0
      %v6903 = vadd.f32 0.0, %v6902
      %v6904 = vpop.f32.mrf.mxu0
      %6905 = vmatprep.mubr.f32.mxu0 0.0
      %6906 = vmatmul.mubr.f32.gmra.mxu0 %v6582
      %v6907 = vpop.f32.mrf.mxu0
      %v6908 = vadd.f32 0.0, %v6907
      %v6909 = vpop.f32.mrf.mxu0
      %6910 = vmatprep.mubr.f32.mxu0 0.0
      %6911 = vmatmul.mubr.f32.gmra.mxu0 %v6585
      %v6912 = vpop.f32.mrf.mxu0
      %v6913 = vadd.f32 0.0, %v6912
      %v6914 = vpop.f32.mrf.mxu0
      %6915 = vmatprep.mubr.f32.mxu0 0.0
      %6916 = vmatmul.mubr.f32.gmra.mxu0 %v6588
      %v6917 = vpop.f32.mrf.mxu0
      %v6918 = vadd.f32 0.0, %v6917
      %v6919 = vpop.f32.mrf.mxu0
      %6920 = vmatprep.mubr.f32.mxu0 0.0
      %6921 = vmatmul.mubr.f32.gmra.mxu0 %v6591
      %v6922 = vpop.f32.mrf.mxu0
      %v6923 = vadd.f32 0.0, %v6922
      %v6924 = vpop.f32.mrf.mxu0
      %6925 = vmatprep.mubr.f32.mxu0 0.0
      %6926 = vmatmul.mubr.f32.gmra.mxu0 %v6594
      %v6927 = vpop.f32.mrf.mxu0
      %v6928 = vadd.f32 0.0, %v6927
      %v6929 = vpop.f32.mrf.mxu0
      %6930 = vmatprep.mubr.f32.mxu0 0.0
      %6931 = vmatmul.mubr.f32.gmra.mxu0 %v6597
      %v6932 = vpop.f32.mrf.mxu0
      %v6933 = vadd.f32 0.0, %v6932
      %v6934 = vpop.f32.mrf.mxu0
      %6935 = vmatprep.mubr.f32.mxu0 0.0
      %6936 = vmatmul.mubr.f32.gmra.mxu0 %v6600
      %v6937 = vpop.f32.mrf.mxu0
      %v6938 = vadd.f32 0.0, %v6937
      %v6939 = vpop.f32.mrf.mxu0
      %6940 = vmatprep.mubr.f32.mxu0 0.0
      %6941 = vmatmul.mubr.f32.gmra.mxu0 %v6603
      %v6942 = vpop.f32.mrf.mxu0
      %v6943 = vadd.f32 0.0, %v6942
      %v6944 = vpop.f32.mrf.mxu0
      %6945 = vmatprep.mubr.f32.mxu0 0.0
      %6946 = vmatmul.mubr.f32.gmra.mxu0 %v6606
      %v6947 = vpop.f32.mrf.mxu0
      %v6948 = vadd.f32 0.0, %v6947
      %v6949 = vpop.f32.mrf.mxu0
      %6950 = vmatprep.mubr.f32.mxu0 0.0
      %6951 = vmatmul.mubr.f32.gmra.mxu0 %v6609
      %v6952 = vpop.f32.mrf.mxu0
      %v6953 = vadd.f32 0.0, %v6952
      %v6954 = vpop.f32.mrf.mxu0
      %6955 = vmatprep.mubr.f32.mxu0 0.0
      %6956 = vmatmul.mubr.f32.gmra.mxu0 %v6612
      %v6957 = vpop.f32.mrf.mxu0
      %v6958 = vadd.f32 0.0, %v6957
      %v6959 = vpop.f32.mrf.mxu0
      %6960 = vmatprep.mubr.f32.mxu0 0.0
      %6961 = vmatmul.mubr.f32.gmra.mxu0 %v6615
      %v6962 = vpop.f32.mrf.mxu0
      %v6963 = vadd.f32 0.0, %v6962
      %v6964 = vpop.f32.mrf.mxu0
      %6965 = vmatprep.mubr.f32.mxu0 0.0
      %6966 = vmatmul.mubr.f32.gmra.mxu0 %v6618
      %v6967 = vpop.f32.mrf.mxu0
      %v6968 = vadd.f32 0.0, %v6967
      %v6969 = vpop.f32.mrf.mxu0
      %6970 = vmatprep.mubr.f32.mxu0 0.0
      %6971 = vmatmul.mubr.f32.gmra.mxu0 %v6621
      %v6972 = vpop.f32.mrf.mxu0
      %v6973 = vadd.f32 0.0, %v6972
      %v6974 = vpop.f32.mrf.mxu0
      %6975 = vmatprep.mubr.f32.mxu0 0.0
      %6976 = vmatmul.mubr.f32.gmra.mxu0 %v6624
      %v6977 = vpop.f32.mrf.mxu0
      %v6978 = vadd.f32 0.0, %v6977
      %v6979 = vpop.f32.mrf.mxu0
      %6980 = vmatprep.mubr.f32.mxu0 0.0
      %6981 = vmatmul.mubr.f32.gmra.mxu0 %v6627
      %v6982 = vpop.f32.mrf.mxu0
      %v6983 = vadd.f32 0.0, %v6982
      %v6984 = vpop.f32.mrf.mxu0
      %6985 = vmatprep.mubr.f32.mxu0 0.0
      %6986 = vmatmul.mubr.f32.gmra.mxu0 %v6630
      %v6987 = vpop.f32.mrf.mxu0
      %v6988 = vadd.f32 0.0, %v6987
      %v6989 = vpop.f32.mrf.mxu0
      %6990 = vmatprep.mubr.f32.mxu0 0.0
      %6991 = vmatmul.mubr.f32.gmra.mxu0 %v6633
      %v6992 = vpop.f32.mrf.mxu0
      %v6993 = vadd.f32 0.0, %v6992
      %v6994 = vpop.f32.mrf.mxu0
      %6995 = vmatprep.mubr.f32.mxu0 0.0
      %6996 = vmatmul.mubr.f32.gmra.mxu0 %v6636
      %v6997 = vpop.f32.mrf.mxu0
      %v6998 = vadd.f32 0.0, %v6997
      %v6999 = vpop.f32.mrf.mxu0
      %7000 = vmatprep.mubr.f32.mxu0 0.0
      %7001 = vmatmul.mubr.f32.gmra.mxu0 %v6639
      %v7002 = vpop.f32.mrf.mxu0
      %v7003 = vadd.f32 0.0, %v7002
      %v7004 = vpop.f32.mrf.mxu0
      %7005 = vmatprep.mubr.f32.mxu0 0.0
      %7006 = vmatmul.mubr.f32.gmra.mxu0 %v6642
      %v7007 = vpop.f32.mrf.mxu0
      %v7008 = vadd.f32 0.0, %v7007
      %v7009 = vpop.f32.mrf.mxu0
      %7010 = vmatprep.mubr.f32.mxu0 0.0
      %7011 = vmatmul.mubr.f32.gmra.mxu0 %v6645
      %v7012 = vpop.f32.mrf.mxu0
      %v7013 = vadd.f32 0.0, %v7012
      %v7014 = vpop.f32.mrf.mxu0
      %7015 = vmatprep.mubr.f32.mxu0 0.0
      %7016 = vmatmul.mubr.f32.gmra.mxu0 %v6648
      %v7017 = vpop.f32.mrf.mxu0
      %v7018 = vadd.f32 0.0, %v7017
      %v7019 = vpop.f32.mrf.mxu0
      %7020 = vmatprep.mubr.f32.mxu0 0.0
      %7021 = vmatmul.mubr.f32.gmra.mxu0 %v6651
      %v7022 = vpop.f32.mrf.mxu0
      %v7023 = vadd.f32 0.0, %v7022
      %v7024 = vpop.f32.mrf.mxu0
      %7025 = vmatprep.mubr.f32.mxu0 0.0
      %7026 = vmatmul.mubr.f32.gmra.mxu0 %v6654
      %v7027 = vpop.f32.mrf.mxu0
      %v7028 = vadd.f32 0.0, %v7027
      %v7029 = vpop.f32.mrf.mxu0
      %7030 = vmatprep.mubr.f32.mxu0 0.0
      %7031 = vmatmul.mubr.f32.gmra.mxu0 %v6657
      %v7032 = vpop.f32.mrf.mxu0
      %v7033 = vadd.f32 0.0, %v7032
      %v7034 = vpop.f32.mrf.mxu0
      %7035 = vmatprep.mubr.f32.mxu0 0.0
      %7036 = vmatmul.mubr.f32.gmra.mxu0 %v6660
      %v7037 = vpop.f32.mrf.mxu0
      %v7038 = vadd.f32 0.0, %v7037
      %v7039 = vpop.f32.mrf.mxu0
      %7040 = vmatprep.mubr.f32.mxu0 0.0
      %7041 = vmatmul.mubr.f32.gmra.mxu0 %v6663
      %v7042 = vpop.f32.mrf.mxu0
      %v7043 = vadd.f32 0.0, %v7042
      %v7044 = vpop.f32.mrf.mxu0
      %7045 = vmatprep.mubr.f32.mxu0 0.0
      %7046 = vmatmul.mubr.f32.gmra.mxu0 %v6666
      %v7047 = vpop.f32.mrf.mxu0
      %v7048 = vadd.f32 0.0, %v7047
      %v7049 = vpop.f32.mrf.mxu0
      %7050 = vmatprep.mubr.f32.mxu0 0.0
      %7051 = vmatmul.mubr.f32.gmra.mxu0 %v6669
      %v7052 = vpop.f32.mrf.mxu0
      %v7053 = vadd.f32 0.0, %v7052
      %v7054 = vpop.f32.mrf.mxu0
      %7055 = vdwg.mxu0
      %s7056 = scalar_lea.vmem %s3, 4
      %v7057 = vld [vmem:[%s7056] sm:$0x7]
      %s7058 = scalar_lea.vmem %s4, 1
      %v7059 = vld [vmem:[%s7058] sm:$0x1]
      %v7061 = vlaneseq
      %v7062 = vshrl.u32 %v7061, 7
      %v7063 = vsub.s32 0, %v7062
      %v7064 = vrot.slane %v7059, %v7063
      %v7067 = vsel %vm3182, %v7057, 0
      %7069 = vmatprep.subr.mxu0 0.0
      %7070 = vmatpush1.msra.mxu0 0.0
      %7071 = vmatprep.subr.mxu0 0.0
      %7072 = vmatpush1.msra.mxu0 0.0
      %7073 = vmatprep.subr.mxu0 0.0
      %7074 = vmatpush1.msra.mxu0 0.0
      %7075 = vmatprep.subr.mxu0 0.0
      %7076 = vmatpush1.msra.mxu0 0.0
      %7077 = vmatprep.subr.mxu0 0.0
      %7078 = vmatpush1.msra.mxu0 0.0
      %7079 = vmatprep.subr.mxu0 0.0
      %7080 = vmatpush1.msra.mxu0 0.0
      %7081 = vmatprep.subr.mxu0 0.0
      %7082 = vmatpush1.msra.mxu0 0.0
      %7083 = vmatprep.subr.mxu0 0.0
      %7084 = vmatpush1.msra.mxu0 0.0
      %7085 = vmatprep.subr.mxu0 0.0
      %7086 = vmatpush1.msra.mxu0 0.0
      %7087 = vmatprep.subr.mxu0 0.0
      %7088 = vmatpush1.msra.mxu0 0.0
      %7089 = vmatprep.subr.mxu0 0.0
      %7090 = vmatpush1.msra.mxu0 0.0
      %7091 = vmatprep.subr.mxu0 0.0
      %7092 = vmatpush1.msra.mxu0 0.0
      %7093 = vmatprep.subr.mxu0 0.0
      %7094 = vmatpush1.msra.mxu0 0.0
      %7095 = vmatprep.subr.mxu0 0.0
      %7096 = vmatpush1.msra.mxu0 0.0
      %7097 = vmatprep.subr.mxu0 0.0
      %7098 = vmatpush1.msra.mxu0 0.0
      %7099 = vmatprep.subr.mxu0 0.0
      %7100 = vmatpush1.msra.mxu0 %v7067
      %7101 = vmatprep.subr.mxu0 0.0
      %7102 = vmatpush2.msra.mxu0 0.0
      %7103 = vmatprep.subr.mxu0 0.0
      %7104 = vmatpush2.msra.mxu0 0.0
      %7105 = vmatprep.subr.mxu0 0.0
      %7106 = vmatpush2.msra.mxu0 0.0
      %7107 = vmatprep.subr.mxu0 0.0
      %7108 = vmatpush2.msra.mxu0 0.0
      %7109 = vmatprep.subr.mxu0 0.0
      %7110 = vmatpush2.msra.mxu0 0.0
      %7111 = vmatprep.subr.mxu0 0.0
      %7112 = vmatpush2.msra.mxu0 0.0
      %7113 = vmatprep.subr.mxu0 0.0
      %7114 = vmatpush2.msra.mxu0 0.0
      %7115 = vmatprep.subr.mxu0 0.0
      %7116 = vmatpush2.msra.mxu0 0.0
      %7117 = vmatprep.subr.mxu0 0.0
      %7118 = vmatpush2.msra.mxu0 0.0
      %7119 = vmatprep.subr.mxu0 0.0
      %7120 = vmatpush2.msra.mxu0 0.0
      %7121 = vmatprep.subr.mxu0 0.0
      %7122 = vmatpush2.msra.mxu0 0.0
      %7123 = vmatprep.subr.mxu0 0.0
      %7124 = vmatpush2.msra.mxu0 0.0
      %7125 = vmatprep.subr.mxu0 0.0
      %7126 = vmatpush2.msra.mxu0 0.0
      %7127 = vmatprep.subr.mxu0 0.0
      %7128 = vmatpush2.msra.mxu0 0.0
      %7129 = vmatprep.subr.mxu0 0.0
      %7130 = vmatpush2.msra.mxu0 0.0
      %7131 = vmatprep.subr.mxu0 0.0
      %7132 = vmatpush2.msra.mxu0 0.0
      %7133 = vmatprep.mubr.f32.mxu0 0.0
      %7134 = vmatmul.mubr.f32.gmra.mxu0 %v3054
      %v7135 = vpop.f32.mrf.mxu0
      %v7136 = vadd.f32 %v7064, %v7135
      %v7137 = vpop.f32.mrf.mxu0
      %7138 = vmatprep.mubr.f32.mxu0 0.0
      %7139 = vmatmul.mubr.f32.gmra.mxu0 %v3056
      %v7140 = vpop.f32.mrf.mxu0
      %v7141 = vadd.f32 %v7064, %v7140
      %v7142 = vpop.f32.mrf.mxu0
      %7143 = vmatprep.mubr.f32.mxu0 0.0
      %7144 = vmatmul.mubr.f32.gmra.mxu0 %v3058
      %v7145 = vpop.f32.mrf.mxu0
      %v7146 = vadd.f32 %v7064, %v7145
      %v7147 = vpop.f32.mrf.mxu0
      %7148 = vmatprep.mubr.f32.mxu0 0.0
      %7149 = vmatmul.mubr.f32.gmra.mxu0 %v3060
      %v7150 = vpop.f32.mrf.mxu0
      %v7151 = vadd.f32 %v7064, %v7150
      %v7152 = vpop.f32.mrf.mxu0
      %7153 = vmatprep.mubr.f32.mxu0 0.0
      %7154 = vmatmul.mubr.f32.gmra.mxu0 %v3062
      %v7155 = vpop.f32.mrf.mxu0
      %v7156 = vadd.f32 %v7064, %v7155
      %v7157 = vpop.f32.mrf.mxu0
      %7158 = vmatprep.mubr.f32.mxu0 0.0
      %7159 = vmatmul.mubr.f32.gmra.mxu0 %v3064
      %v7160 = vpop.f32.mrf.mxu0
      %v7161 = vadd.f32 %v7064, %v7160
      %v7162 = vpop.f32.mrf.mxu0
      %7163 = vmatprep.mubr.f32.mxu0 0.0
      %7164 = vmatmul.mubr.f32.gmra.mxu0 %v3066
      %v7165 = vpop.f32.mrf.mxu0
      %v7166 = vadd.f32 %v7064, %v7165
      %v7167 = vpop.f32.mrf.mxu0
      %7168 = vmatprep.mubr.f32.mxu0 0.0
      %7169 = vmatmul.mubr.f32.gmra.mxu0 %v3068
      %v7170 = vpop.f32.mrf.mxu0
      %v7171 = vadd.f32 %v7064, %v7170
      %v7172 = vpop.f32.mrf.mxu0
      %7173 = vmatprep.mubr.f32.mxu0 0.0
      %7174 = vmatmul.mubr.f32.gmra.mxu0 %v3070
      %v7175 = vpop.f32.mrf.mxu0
      %v7176 = vadd.f32 %v7064, %v7175
      %v7177 = vpop.f32.mrf.mxu0
      %7178 = vmatprep.mubr.f32.mxu0 0.0
      %7179 = vmatmul.mubr.f32.gmra.mxu0 %v3072
      %v7180 = vpop.f32.mrf.mxu0
      %v7181 = vadd.f32 %v7064, %v7180
      %v7182 = vpop.f32.mrf.mxu0
      %7183 = vmatprep.mubr.f32.mxu0 0.0
      %7184 = vmatmul.mubr.f32.gmra.mxu0 %v3074
      %v7185 = vpop.f32.mrf.mxu0
      %v7186 = vadd.f32 %v7064, %v7185
      %v7187 = vpop.f32.mrf.mxu0
      %7188 = vmatprep.mubr.f32.mxu0 0.0
      %7189 = vmatmul.mubr.f32.gmra.mxu0 %v3076
      %v7190 = vpop.f32.mrf.mxu0
      %v7191 = vadd.f32 %v7064, %v7190
      %v7192 = vpop.f32.mrf.mxu0
      %7193 = vmatprep.mubr.f32.mxu0 0.0
      %7194 = vmatmul.mubr.f32.gmra.mxu0 %v3078
      %v7195 = vpop.f32.mrf.mxu0
      %v7196 = vadd.f32 %v7064, %v7195
      %v7197 = vpop.f32.mrf.mxu0
      %7198 = vmatprep.mubr.f32.mxu0 0.0
      %7199 = vmatmul.mubr.f32.gmra.mxu0 %v3080
      %v7200 = vpop.f32.mrf.mxu0
      %v7201 = vadd.f32 %v7064, %v7200
      %v7202 = vpop.f32.mrf.mxu0
      %7203 = vmatprep.mubr.f32.mxu0 0.0
      %7204 = vmatmul.mubr.f32.gmra.mxu0 %v3082
      %v7205 = vpop.f32.mrf.mxu0
      %v7206 = vadd.f32 %v7064, %v7205
      %v7207 = vpop.f32.mrf.mxu0
      %7208 = vmatprep.mubr.f32.mxu0 0.0
      %7209 = vmatmul.mubr.f32.gmra.mxu0 %v3084
      %v7210 = vpop.f32.mrf.mxu0
      %v7211 = vadd.f32 %v7064, %v7210
      %v7212 = vpop.f32.mrf.mxu0
      %7213 = vmatprep.mubr.f32.mxu0 0.0
      %7214 = vmatmul.mubr.f32.gmra.mxu0 %v3086
      %v7215 = vpop.f32.mrf.mxu0
      %v7216 = vadd.f32 %v7064, %v7215
      %v7217 = vpop.f32.mrf.mxu0
      %7218 = vmatprep.mubr.f32.mxu0 0.0
      %7219 = vmatmul.mubr.f32.gmra.mxu0 %v3088
      %v7220 = vpop.f32.mrf.mxu0
      %v7221 = vadd.f32 %v7064, %v7220
      %v7222 = vpop.f32.mrf.mxu0
      %7223 = vmatprep.mubr.f32.mxu0 0.0
      %7224 = vmatmul.mubr.f32.gmra.mxu0 %v3090
      %v7225 = vpop.f32.mrf.mxu0
      %v7226 = vadd.f32 %v7064, %v7225
      %v7227 = vpop.f32.mrf.mxu0
      %7228 = vmatprep.mubr.f32.mxu0 0.0
      %7229 = vmatmul.mubr.f32.gmra.mxu0 %v3092
      %v7230 = vpop.f32.mrf.mxu0
      %v7231 = vadd.f32 %v7064, %v7230
      %v7232 = vpop.f32.mrf.mxu0
      %7233 = vmatprep.mubr.f32.mxu0 0.0
      %7234 = vmatmul.mubr.f32.gmra.mxu0 %v3094
      %v7235 = vpop.f32.mrf.mxu0
      %v7236 = vadd.f32 %v7064, %v7235
      %v7237 = vpop.f32.mrf.mxu0
      %7238 = vmatprep.mubr.f32.mxu0 0.0
      %7239 = vmatmul.mubr.f32.gmra.mxu0 %v3096
      %v7240 = vpop.f32.mrf.mxu0
      %v7241 = vadd.f32 %v7064, %v7240
      %v7242 = vpop.f32.mrf.mxu0
      %7243 = vmatprep.mubr.f32.mxu0 0.0
      %7244 = vmatmul.mubr.f32.gmra.mxu0 %v3098
      %v7245 = vpop.f32.mrf.mxu0
      %v7246 = vadd.f32 %v7064, %v7245
      %v7247 = vpop.f32.mrf.mxu0
      %7248 = vmatprep.mubr.f32.mxu0 0.0
      %7249 = vmatmul.mubr.f32.gmra.mxu0 %v3100
      %v7250 = vpop.f32.mrf.mxu0
      %v7251 = vadd.f32 %v7064, %v7250
      %v7252 = vpop.f32.mrf.mxu0
      %7253 = vmatprep.mubr.f32.mxu0 0.0
      %7254 = vmatmul.mubr.f32.gmra.mxu0 %v3102
      %v7255 = vpop.f32.mrf.mxu0
      %v7256 = vadd.f32 %v7064, %v7255
      %v7257 = vpop.f32.mrf.mxu0
      %7258 = vmatprep.mubr.f32.mxu0 0.0
      %7259 = vmatmul.mubr.f32.gmra.mxu0 %v3104
      %v7260 = vpop.f32.mrf.mxu0
      %v7261 = vadd.f32 %v7064, %v7260
      %v7262 = vpop.f32.mrf.mxu0
      %7263 = vmatprep.mubr.f32.mxu0 0.0
      %7264 = vmatmul.mubr.f32.gmra.mxu0 %v3106
      %v7265 = vpop.f32.mrf.mxu0
      %v7266 = vadd.f32 %v7064, %v7265
      %v7267 = vpop.f32.mrf.mxu0
      %7268 = vmatprep.mubr.f32.mxu0 0.0
      %7269 = vmatmul.mubr.f32.gmra.mxu0 %v3108
      %v7270 = vpop.f32.mrf.mxu0
      %v7271 = vadd.f32 %v7064, %v7270
      %v7272 = vpop.f32.mrf.mxu0
      %7273 = vmatprep.mubr.f32.mxu0 0.0
      %7274 = vmatmul.mubr.f32.gmra.mxu0 %v3110
      %v7275 = vpop.f32.mrf.mxu0
      %v7276 = vadd.f32 %v7064, %v7275
      %v7277 = vpop.f32.mrf.mxu0
      %7278 = vmatprep.mubr.f32.mxu0 0.0
      %7279 = vmatmul.mubr.f32.gmra.mxu0 %v3112
      %v7280 = vpop.f32.mrf.mxu0
      %v7281 = vadd.f32 %v7064, %v7280
      %v7282 = vpop.f32.mrf.mxu0
      %7283 = vmatprep.mubr.f32.mxu0 0.0
      %7284 = vmatmul.mubr.f32.gmra.mxu0 %v3114
      %v7285 = vpop.f32.mrf.mxu0
      %v7286 = vadd.f32 %v7064, %v7285
      %v7287 = vpop.f32.mrf.mxu0
      %7288 = vmatprep.mubr.f32.mxu0 0.0
      %7289 = vmatmul.mubr.f32.gmra.mxu0 %v3116
      %v7290 = vpop.f32.mrf.mxu0
      %v7291 = vadd.f32 %v7064, %v7290
      %v7292 = vpop.f32.mrf.mxu0
      %7293 = vmatprep.mubr.f32.mxu0 0.0
      %7294 = vmatmul.mubr.f32.gmra.mxu0 %v3118
      %v7295 = vpop.f32.mrf.mxu0
      %v7296 = vadd.f32 %v7064, %v7295
      %v7297 = vpop.f32.mrf.mxu0
      %7298 = vmatprep.mubr.f32.mxu0 0.0
      %7299 = vmatmul.mubr.f32.gmra.mxu0 %v3120
      %v7300 = vpop.f32.mrf.mxu0
      %v7301 = vadd.f32 %v7064, %v7300
      %v7302 = vpop.f32.mrf.mxu0
      %7303 = vmatprep.mubr.f32.mxu0 0.0
      %7304 = vmatmul.mubr.f32.gmra.mxu0 %v3122
      %v7305 = vpop.f32.mrf.mxu0
      %v7306 = vadd.f32 %v7064, %v7305
      %v7307 = vpop.f32.mrf.mxu0
      %7308 = vmatprep.mubr.f32.mxu0 0.0
      %7309 = vmatmul.mubr.f32.gmra.mxu0 %v3124
      %v7310 = vpop.f32.mrf.mxu0
      %v7311 = vadd.f32 %v7064, %v7310
      %v7312 = vpop.f32.mrf.mxu0
      %7313 = vmatprep.mubr.f32.mxu0 0.0
      %7314 = vmatmul.mubr.f32.gmra.mxu0 %v3126
      %v7315 = vpop.f32.mrf.mxu0
      %v7316 = vadd.f32 %v7064, %v7315
      %v7317 = vpop.f32.mrf.mxu0
      %7318 = vmatprep.mubr.f32.mxu0 0.0
      %7319 = vmatmul.mubr.f32.gmra.mxu0 %v3128
      %v7320 = vpop.f32.mrf.mxu0
      %v7321 = vadd.f32 %v7064, %v7320
      %v7322 = vpop.f32.mrf.mxu0
      %7323 = vmatprep.mubr.f32.mxu0 0.0
      %7324 = vmatmul.mubr.f32.gmra.mxu0 %v3130
      %v7325 = vpop.f32.mrf.mxu0
      %v7326 = vadd.f32 %v7064, %v7325
      %v7327 = vpop.f32.mrf.mxu0
      %7328 = vmatprep.mubr.f32.mxu0 0.0
      %7329 = vmatmul.mubr.f32.gmra.mxu0 %v3132
      %v7330 = vpop.f32.mrf.mxu0
      %v7331 = vadd.f32 %v7064, %v7330
      %v7332 = vpop.f32.mrf.mxu0
      %7333 = vmatprep.mubr.f32.mxu0 0.0
      %7334 = vmatmul.mubr.f32.gmra.mxu0 %v3134
      %v7335 = vpop.f32.mrf.mxu0
      %v7336 = vadd.f32 %v7064, %v7335
      %v7337 = vpop.f32.mrf.mxu0
      %7338 = vmatprep.mubr.f32.mxu0 0.0
      %7339 = vmatmul.mubr.f32.gmra.mxu0 %v3136
      %v7340 = vpop.f32.mrf.mxu0
      %v7341 = vadd.f32 %v7064, %v7340
      %v7342 = vpop.f32.mrf.mxu0
      %7343 = vmatprep.mubr.f32.mxu0 0.0
      %7344 = vmatmul.mubr.f32.gmra.mxu0 %v3138
      %v7345 = vpop.f32.mrf.mxu0
      %v7346 = vadd.f32 %v7064, %v7345
      %v7347 = vpop.f32.mrf.mxu0
      %7348 = vmatprep.mubr.f32.mxu0 0.0
      %7349 = vmatmul.mubr.f32.gmra.mxu0 %v3140
      %v7350 = vpop.f32.mrf.mxu0
      %v7351 = vadd.f32 %v7064, %v7350
      %v7352 = vpop.f32.mrf.mxu0
      %7353 = vmatprep.mubr.f32.mxu0 0.0
      %7354 = vmatmul.mubr.f32.gmra.mxu0 %v3142
      %v7355 = vpop.f32.mrf.mxu0
      %v7356 = vadd.f32 %v7064, %v7355
      %v7357 = vpop.f32.mrf.mxu0
      %7358 = vmatprep.mubr.f32.mxu0 0.0
      %7359 = vmatmul.mubr.f32.gmra.mxu0 %v3144
      %v7360 = vpop.f32.mrf.mxu0
      %v7361 = vadd.f32 %v7064, %v7360
      %v7362 = vpop.f32.mrf.mxu0
      %7363 = vmatprep.mubr.f32.mxu0 0.0
      %7364 = vmatmul.mubr.f32.gmra.mxu0 %v3146
      %v7365 = vpop.f32.mrf.mxu0
      %v7366 = vadd.f32 %v7064, %v7365
      %v7367 = vpop.f32.mrf.mxu0
      %7368 = vmatprep.mubr.f32.mxu0 0.0
      %7369 = vmatmul.mubr.f32.gmra.mxu0 %v3148
      %v7370 = vpop.f32.mrf.mxu0
      %v7371 = vadd.f32 %v7064, %v7370
      %v7372 = vpop.f32.mrf.mxu0
      %7373 = vmatprep.mubr.f32.mxu0 0.0
      %7374 = vmatmul.mubr.f32.gmra.mxu0 %v3150
      %v7375 = vpop.f32.mrf.mxu0
      %v7376 = vadd.f32 %v7064, %v7375
      %v7377 = vpop.f32.mrf.mxu0
      %7378 = vmatprep.mubr.f32.mxu0 0.0
      %7379 = vmatmul.mubr.f32.gmra.mxu0 %v3152
      %v7380 = vpop.f32.mrf.mxu0
      %v7381 = vadd.f32 %v7064, %v7380
      %v7382 = vpop.f32.mrf.mxu0
      %7383 = vmatprep.mubr.f32.mxu0 0.0
      %7384 = vmatmul.mubr.f32.gmra.mxu0 %v3154
      %v7385 = vpop.f32.mrf.mxu0
      %v7386 = vadd.f32 %v7064, %v7385
      %v7387 = vpop.f32.mrf.mxu0
      %7388 = vmatprep.mubr.f32.mxu0 0.0
      %7389 = vmatmul.mubr.f32.gmra.mxu0 %v3156
      %v7390 = vpop.f32.mrf.mxu0
      %v7391 = vadd.f32 %v7064, %v7390
      %v7392 = vpop.f32.mrf.mxu0
      %7393 = vmatprep.mubr.f32.mxu0 0.0
      %7394 = vmatmul.mubr.f32.gmra.mxu0 %v3158
      %v7395 = vpop.f32.mrf.mxu0
      %v7396 = vadd.f32 %v7064, %v7395
      %v7397 = vpop.f32.mrf.mxu0
      %7398 = vmatprep.mubr.f32.mxu0 0.0
      %7399 = vmatmul.mubr.f32.gmra.mxu0 %v3160
      %v7400 = vpop.f32.mrf.mxu0
      %v7401 = vadd.f32 %v7064, %v7400
      %v7402 = vpop.f32.mrf.mxu0
      %7403 = vmatprep.mubr.f32.mxu0 0.0
      %7404 = vmatmul.mubr.f32.gmra.mxu0 %v3162
      %v7405 = vpop.f32.mrf.mxu0
      %v7406 = vadd.f32 %v7064, %v7405
      %v7407 = vpop.f32.mrf.mxu0
      %7408 = vmatprep.mubr.f32.mxu0 0.0
      %7409 = vmatmul.mubr.f32.gmra.mxu0 %v3164
      %v7410 = vpop.f32.mrf.mxu0
      %v7411 = vadd.f32 %v7064, %v7410
      %v7412 = vpop.f32.mrf.mxu0
      %7413 = vmatprep.mubr.f32.mxu0 0.0
      %7414 = vmatmul.mubr.f32.gmra.mxu0 %v3166
      %v7415 = vpop.f32.mrf.mxu0
      %v7416 = vadd.f32 %v7064, %v7415
      %v7417 = vpop.f32.mrf.mxu0
      %7418 = vmatprep.mubr.f32.mxu0 0.0
      %7419 = vmatmul.mubr.f32.gmra.mxu0 %v3168
      %v7420 = vpop.f32.mrf.mxu0
      %v7421 = vadd.f32 %v7064, %v7420
      %v7422 = vpop.f32.mrf.mxu0
      %7423 = vmatprep.mubr.f32.mxu0 0.0
      %7424 = vmatmul.mubr.f32.gmra.mxu0 %v3170
      %v7425 = vpop.f32.mrf.mxu0
      %v7426 = vadd.f32 %v7064, %v7425
      %v7427 = vpop.f32.mrf.mxu0
      %7428 = vmatprep.mubr.f32.mxu0 0.0
      %7429 = vmatmul.mubr.f32.gmra.mxu0 %v3172
      %v7430 = vpop.f32.mrf.mxu0
      %v7431 = vadd.f32 %v7064, %v7430
      %v7432 = vpop.f32.mrf.mxu0
      %7433 = vmatprep.mubr.f32.mxu0 0.0
      %7434 = vmatmul.mubr.f32.gmra.mxu0 %v3174
      %v7435 = vpop.f32.mrf.mxu0
      %v7436 = vadd.f32 %v7064, %v7435
      %v7437 = vpop.f32.mrf.mxu0
      %7438 = vmatprep.mubr.f32.mxu0 0.0
      %7439 = vmatmul.mubr.f32.gmra.mxu0 %v3176
      %v7440 = vpop.f32.mrf.mxu0
      %v7441 = vadd.f32 %v7064, %v7440
      %v7442 = vpop.f32.mrf.mxu0
      %7443 = vmatprep.mubr.f32.mxu0 0.0
      %7444 = vmatmul.mubr.f32.gmra.mxu0 %v3178
      %v7445 = vpop.f32.mrf.mxu0
      %v7446 = vadd.f32 %v7064, %v7445
      %v7447 = vpop.f32.mrf.mxu0
      %7448 = vmatprep.mubr.f32.mxu0 0.0
      %7449 = vmatmul.mubr.f32.gmra.mxu0 %v3180
      %v7450 = vpop.f32.mrf.mxu0
      %v7451 = vadd.f32 %v7064, %v7450
      %v7452 = vpop.f32.mrf.mxu0
      %7453 = vdwg.mxu0
      %v7454 = vtanh.pop %v7136
      %v7455 = vtanh.pop %v7141
      %v7456 = vtanh.pop %v7146
      %v7457 = vtanh.pop %v7151
      %v7458 = vtanh.pop %v7156
      %v7459 = vtanh.pop %v7161
      %v7460 = vtanh.pop %v7166
      %v7461 = vtanh.pop %v7171
      %v7462 = vtanh.pop %v7176
      %v7463 = vtanh.pop %v7181
      %v7464 = vtanh.pop %v7186
      %v7465 = vtanh.pop %v7191
      %v7466 = vtanh.pop %v7196
      %v7467 = vtanh.pop %v7201
      %v7468 = vtanh.pop %v7206
      %v7469 = vtanh.pop %v7211
      %v7470 = vtanh.pop %v7216
      %v7471 = vtanh.pop %v7221
      %v7472 = vtanh.pop %v7226
      %v7473 = vtanh.pop %v7231
      %v7474 = vtanh.pop %v7236
      %v7475 = vtanh.pop %v7241
      %v7476 = vtanh.pop %v7246
      %v7477 = vtanh.pop %v7251
      %v7478 = vtanh.pop %v7256
      %v7479 = vtanh.pop %v7261
      %v7480 = vtanh.pop %v7266
      %v7481 = vtanh.pop %v7271
      %v7482 = vtanh.pop %v7276
      %v7483 = vtanh.pop %v7281
      %v7484 = vtanh.pop %v7286
      %v7485 = vtanh.pop %v7291
      %v7486 = vtanh.pop %v7296
      %v7487 = vtanh.pop %v7301
      %v7488 = vtanh.pop %v7306
      %v7489 = vtanh.pop %v7311
      %v7490 = vtanh.pop %v7316
      %v7491 = vtanh.pop %v7321
      %v7492 = vtanh.pop %v7326
      %v7493 = vtanh.pop %v7331
      %v7494 = vtanh.pop %v7336
      %v7495 = vtanh.pop %v7341
      %v7496 = vtanh.pop %v7346
      %v7497 = vtanh.pop %v7351
      %v7498 = vtanh.pop %v7356
      %v7499 = vtanh.pop %v7361
      %v7500 = vtanh.pop %v7366
      %v7501 = vtanh.pop %v7371
      %v7502 = vtanh.pop %v7376
      %v7503 = vtanh.pop %v7381
      %v7504 = vtanh.pop %v7386
      %v7505 = vtanh.pop %v7391
      %v7506 = vtanh.pop %v7396
      %v7507 = vtanh.pop %v7401
      %v7508 = vtanh.pop %v7406
      %v7509 = vtanh.pop %v7411
      %v7510 = vtanh.pop %v7416
      %v7511 = vtanh.pop %v7421
      %v7512 = vtanh.pop %v7426
      %v7513 = vtanh.pop %v7431
      %v7514 = vtanh.pop %v7436
      %v7515 = vtanh.pop %v7441
      %v7516 = vtanh.pop %v7446
      %v7517 = vtanh.pop %v7451
      %v7518 = vpack.c.bf16 %v7455, %v7454
      %v7519 = vpack.c.bf16 %v7457, %v7456
      %v7520 = vpack.c.bf16 %v7459, %v7458
      %v7521 = vpack.c.bf16 %v7461, %v7460
      %v7522 = vpack.c.bf16 %v7463, %v7462
      %v7523 = vpack.c.bf16 %v7465, %v7464
      %v7524 = vpack.c.bf16 %v7467, %v7466
      %v7525 = vpack.c.bf16 %v7469, %v7468
      %v7526 = vpack.c.bf16 %v7471, %v7470
      %v7527 = vpack.c.bf16 %v7473, %v7472
      %v7528 = vpack.c.bf16 %v7475, %v7474
      %v7529 = vpack.c.bf16 %v7477, %v7476
      %v7530 = vpack.c.bf16 %v7479, %v7478
      %v7531 = vpack.c.bf16 %v7481, %v7480
      %v7532 = vpack.c.bf16 %v7483, %v7482
      %v7533 = vpack.c.bf16 %v7485, %v7484
      %v7534 = vpack.c.bf16 %v7487, %v7486
      %v7535 = vpack.c.bf16 %v7489, %v7488
      %v7536 = vpack.c.bf16 %v7491, %v7490
      %v7537 = vpack.c.bf16 %v7493, %v7492
      %v7538 = vpack.c.bf16 %v7495, %v7494
      %v7539 = vpack.c.bf16 %v7497, %v7496
      %v7540 = vpack.c.bf16 %v7499, %v7498
      %v7541 = vpack.c.bf16 %v7501, %v7500
      %v7542 = vpack.c.bf16 %v7503, %v7502
      %v7543 = vpack.c.bf16 %v7505, %v7504
      %v7544 = vpack.c.bf16 %v7507, %v7506
      %v7545 = vpack.c.bf16 %v7509, %v7508
      %v7546 = vpack.c.bf16 %v7511, %v7510
      %v7547 = vpack.c.bf16 %v7513, %v7512
      %v7548 = vpack.c.bf16 %v7515, %v7514
      %v7549 = vpack.c.bf16 %v7517, %v7516
      %s7550 = scalar_lea.vmem %s5, 64
      %v7551 = vld [vmem:[%s7550] sm:$0xf]
      %v7552 = vld [vmem:[%s7550 + $0x4] sm:$0xf]
      %v7553 = vld [vmem:[%s7550 + $0x8] sm:$0xf]
      %v7554 = vld [vmem:[%s7550 + $0xc] sm:$0xf]
      %v7555 = vld [vmem:[%s7550 + $0x10] sm:$0xf]
      %v7556 = vld [vmem:[%s7550 + $0x14] sm:$0xf]
      %v7557 = vld [vmem:[%s7550 + $0x18] sm:$0xf]
      %v7558 = vld [vmem:[%s7550 + $0x1c] sm:$0xf]
      %v7559 = vld [vmem:[%s7550 + $0x20] sm:$0xf]
      %v7560 = vld [vmem:[%s7550 + $0x24] sm:$0xf]
      %v7561 = vld [vmem:[%s7550 + $0x28] sm:$0xf]
      %v7562 = vld [vmem:[%s7550 + $0x2c] sm:$0xf]
      %v7563 = vld [vmem:[%s7550 + $0x30] sm:$0xf]
      %v7564 = vld [vmem:[%s7550 + $0x34] sm:$0xf]
      %v7565 = vld [vmem:[%s7550 + $0x38] sm:$0xf]
      %v7566 = vld [vmem:[%s7550 + $0x3c] sm:$0xf]
      %s7567 = scalar_lea.vmem %s6, 1
      %v7568 = vld [vmem:[%s7567] sm:$0x1]
      %v7570 = vlaneseq
      %v7571 = vshrl.u32 %v7570, 7
      %v7572 = vsub.s32 0, %v7571
      %v7573 = vrot.slane %v7568, %v7572
      %v7591 = vunpack.c.l.b16 %v7551
      %v7592 = vunpack.c.l.b16 %v7552
      %v7593 = vunpack.c.l.b16 %v7553
      %v7594 = vunpack.c.l.b16 %v7554
      %v7595 = vunpack.c.l.b16 %v7555
      %v7596 = vunpack.c.l.b16 %v7556
      %v7597 = vunpack.c.l.b16 %v7557
      %v7598 = vunpack.c.l.b16 %v7558
      %v7599 = vunpack.c.l.b16 %v7559
      %v7600 = vunpack.c.l.b16 %v7560
      %v7601 = vunpack.c.l.b16 %v7561
      %v7602 = vunpack.c.l.b16 %v7562
      %v7603 = vunpack.c.l.b16 %v7563
      %v7604 = vunpack.c.l.b16 %v7564
      %v7605 = vunpack.c.l.b16 %v7565
      %v7606 = vunpack.c.l.b16 %v7566
      %v7607 = vpack.c.b16 %v7592, %v7591
      %v7608 = vpack.c.b16 %v7594, %v7593
      %v7609 = vpack.c.b16 %v7596, %v7595
      %v7610 = vpack.c.b16 %v7598, %v7597
      %v7611 = vpack.c.b16 %v7600, %v7599
      %v7612 = vpack.c.b16 %v7602, %v7601
      %v7613 = vpack.c.b16 %v7604, %v7603
      %v7614 = vpack.c.b16 %v7606, %v7605
      %7623 = vmatprep.subr.bf16.mxu0 0
      %7624 = vmatpush1.bf16.msra.mxu0 %v7614
      %7625 = vmatprep.subr.bf16.mxu0 0
      %7626 = vmatpush1.bf16.msra.mxu0 %v7613
      %7627 = vmatprep.subr.bf16.mxu0 0
      %7628 = vmatpush1.bf16.msra.mxu0 %v7612
      %7629 = vmatprep.subr.bf16.mxu0 0
      %7630 = vmatpush1.bf16.msra.mxu0 %v7611
      %7631 = vmatprep.subr.bf16.mxu0 0
      %7632 = vmatpush1.bf16.msra.mxu0 %v7610
      %7633 = vmatprep.subr.bf16.mxu0 0
      %7634 = vmatpush1.bf16.msra.mxu0 %v7609
      %7635 = vmatprep.subr.bf16.mxu0 0
      %7636 = vmatpush1.bf16.msra.mxu0 %v7608
      %7637 = vmatprep.subr.bf16.mxu0 0
      %7638 = vmatpush1.bf16.msra.mxu0 %v7607
      %7639 = vmatprep.subr.bf16.mxu0 0
      %7640 = vmatpush2.bf16.msra.mxu0 0
      %7641 = vmatprep.subr.bf16.mxu0 0
      %7642 = vmatpush2.bf16.msra.mxu0 0
      %7643 = vmatprep.subr.bf16.mxu0 0
      %7644 = vmatpush2.bf16.msra.mxu0 0
      %7645 = vmatprep.subr.bf16.mxu0 0
      %7646 = vmatpush2.bf16.msra.mxu0 0
      %7647 = vmatprep.subr.bf16.mxu0 0
      %7648 = vmatpush2.bf16.msra.mxu0 0
      %7649 = vmatprep.subr.bf16.mxu0 0
      %7650 = vmatpush2.bf16.msra.mxu0 0
      %7651 = vmatprep.subr.bf16.mxu0 0
      %7652 = vmatpush2.bf16.msra.mxu0 0
      %7653 = vmatprep.subr.bf16.mxu0 0
      %7654 = vmatpush2.bf16.msra.mxu0 0
      %7655 = vmatprep.mubr.bf16.mxu0 0
      %7656 = vmatmul.mubr.bf16.gmra.mxu0 %v7518
      %v7657 = vpop.f32.mrf.mxu0
      %v7658 = vadd.f32 %v7573, %v7657
      %v7659 = vpop.f32.mrf.mxu0
      %v7660 = vpop.f32.mrf.mxu0
      %v7661 = vadd.f32 %v7573, %v7660
      %v7662 = vpop.f32.mrf.mxu0
      %7663 = vmatprep.mubr.bf16.mxu0 0
      %7664 = vmatmul.mubr.bf16.gmra.mxu0 %v7519
      %v7665 = vpop.f32.mrf.mxu0
      %v7666 = vadd.f32 %v7573, %v7665
      %v7667 = vpop.f32.mrf.mxu0
      %v7668 = vpop.f32.mrf.mxu0
      %v7669 = vadd.f32 %v7573, %v7668
      %v7670 = vpop.f32.mrf.mxu0
      %7671 = vmatprep.mubr.bf16.mxu0 0
      %7672 = vmatmul.mubr.bf16.gmra.mxu0 %v7520
      %v7673 = vpop.f32.mrf.mxu0
      %v7674 = vadd.f32 %v7573, %v7673
      %v7675 = vpop.f32.mrf.mxu0
      %v7676 = vpop.f32.mrf.mxu0
      %v7677 = vadd.f32 %v7573, %v7676
      %v7678 = vpop.f32.mrf.mxu0
      %7679 = vmatprep.mubr.bf16.mxu0 0
      %7680 = vmatmul.mubr.bf16.gmra.mxu0 %v7521
      %v7681 = vpop.f32.mrf.mxu0
      %v7682 = vadd.f32 %v7573, %v7681
      %v7683 = vpop.f32.mrf.mxu0
      %v7684 = vpop.f32.mrf.mxu0
      %v7685 = vadd.f32 %v7573, %v7684
      %v7686 = vpop.f32.mrf.mxu0
      %7687 = vmatprep.mubr.bf16.mxu0 0
      %7688 = vmatmul.mubr.bf16.gmra.mxu0 %v7522
      %v7689 = vpop.f32.mrf.mxu0
      %v7690 = vadd.f32 %v7573, %v7689
      %v7691 = vpop.f32.mrf.mxu0
      %v7692 = vpop.f32.mrf.mxu0
      %v7693 = vadd.f32 %v7573, %v7692
      %v7694 = vpop.f32.mrf.mxu0
      %7695 = vmatprep.mubr.bf16.mxu0 0
      %7696 = vmatmul.mubr.bf16.gmra.mxu0 %v7523
      %v7697 = vpop.f32.mrf.mxu0
      %v7698 = vadd.f32 %v7573, %v7697
      %v7699 = vpop.f32.mrf.mxu0
      %v7700 = vpop.f32.mrf.mxu0
      %v7701 = vadd.f32 %v7573, %v7700
      %v7702 = vpop.f32.mrf.mxu0
      %7703 = vmatprep.mubr.bf16.mxu0 0
      %7704 = vmatmul.mubr.bf16.gmra.mxu0 %v7524
      %v7705 = vpop.f32.mrf.mxu0
      %v7706 = vadd.f32 %v7573, %v7705
      %v7707 = vpop.f32.mrf.mxu0
      %v7708 = vpop.f32.mrf.mxu0
      %v7709 = vadd.f32 %v7573, %v7708
      %v7710 = vpop.f32.mrf.mxu0
      %7711 = vmatprep.mubr.bf16.mxu0 0
      %7712 = vmatmul.mubr.bf16.gmra.mxu0 %v7525
      %v7713 = vpop.f32.mrf.mxu0
      %v7714 = vadd.f32 %v7573, %v7713
      %v7715 = vpop.f32.mrf.mxu0
      %v7716 = vpop.f32.mrf.mxu0
      %v7717 = vadd.f32 %v7573, %v7716
      %v7718 = vpop.f32.mrf.mxu0
      %7719 = vmatprep.mubr.bf16.mxu0 0
      %7720 = vmatmul.mubr.bf16.gmra.mxu0 %v7526
      %v7721 = vpop.f32.mrf.mxu0
      %v7722 = vadd.f32 %v7573, %v7721
      %v7723 = vpop.f32.mrf.mxu0
      %v7724 = vpop.f32.mrf.mxu0
      %v7725 = vadd.f32 %v7573, %v7724
      %v7726 = vpop.f32.mrf.mxu0
      %7727 = vmatprep.mubr.bf16.mxu0 0
      %7728 = vmatmul.mubr.bf16.gmra.mxu0 %v7527
      %v7729 = vpop.f32.mrf.mxu0
      %v7730 = vadd.f32 %v7573, %v7729
      %v7731 = vpop.f32.mrf.mxu0
      %v7732 = vpop.f32.mrf.mxu0
      %v7733 = vadd.f32 %v7573, %v7732
      %v7734 = vpop.f32.mrf.mxu0
      %7735 = vmatprep.mubr.bf16.mxu0 0
      %7736 = vmatmul.mubr.bf16.gmra.mxu0 %v7528
      %v7737 = vpop.f32.mrf.mxu0
      %v7738 = vadd.f32 %v7573, %v7737
      %v7739 = vpop.f32.mrf.mxu0
      %v7740 = vpop.f32.mrf.mxu0
      %v7741 = vadd.f32 %v7573, %v7740
      %v7742 = vpop.f32.mrf.mxu0
      %7743 = vmatprep.mubr.bf16.mxu0 0
      %7744 = vmatmul.mubr.bf16.gmra.mxu0 %v7529
      %v7745 = vpop.f32.mrf.mxu0
      %v7746 = vadd.f32 %v7573, %v7745
      %v7747 = vpop.f32.mrf.mxu0
      %v7748 = vpop.f32.mrf.mxu0
      %v7749 = vadd.f32 %v7573, %v7748
      %v7750 = vpop.f32.mrf.mxu0
      %7751 = vmatprep.mubr.bf16.mxu0 0
      %7752 = vmatmul.mubr.bf16.gmra.mxu0 %v7530
      %v7753 = vpop.f32.mrf.mxu0
      %v7754 = vadd.f32 %v7573, %v7753
      %v7755 = vpop.f32.mrf.mxu0
      %v7756 = vpop.f32.mrf.mxu0
      %v7757 = vadd.f32 %v7573, %v7756
      %v7758 = vpop.f32.mrf.mxu0
      %7759 = vmatprep.mubr.bf16.mxu0 0
      %7760 = vmatmul.mubr.bf16.gmra.mxu0 %v7531
      %v7761 = vpop.f32.mrf.mxu0
      %v7762 = vadd.f32 %v7573, %v7761
      %v7763 = vpop.f32.mrf.mxu0
      %v7764 = vpop.f32.mrf.mxu0
      %v7765 = vadd.f32 %v7573, %v7764
      %v7766 = vpop.f32.mrf.mxu0
      %7767 = vmatprep.mubr.bf16.mxu0 0
      %7768 = vmatmul.mubr.bf16.gmra.mxu0 %v7532
      %v7769 = vpop.f32.mrf.mxu0
      %v7770 = vadd.f32 %v7573, %v7769
      %v7771 = vpop.f32.mrf.mxu0
      %v7772 = vpop.f32.mrf.mxu0
      %v7773 = vadd.f32 %v7573, %v7772
      %v7774 = vpop.f32.mrf.mxu0
      %7775 = vmatprep.mubr.bf16.mxu0 0
      %7776 = vmatmul.mubr.bf16.gmra.mxu0 %v7533
      %v7777 = vpop.f32.mrf.mxu0
      %v7778 = vadd.f32 %v7573, %v7777
      %v7779 = vpop.f32.mrf.mxu0
      %v7780 = vpop.f32.mrf.mxu0
      %v7781 = vadd.f32 %v7573, %v7780
      %v7782 = vpop.f32.mrf.mxu0
      %7783 = vmatprep.mubr.bf16.mxu0 0
      %7784 = vmatmul.mubr.bf16.gmra.mxu0 %v7534
      %v7785 = vpop.f32.mrf.mxu0
      %v7786 = vadd.f32 %v7573, %v7785
      %v7787 = vpop.f32.mrf.mxu0
      %v7788 = vpop.f32.mrf.mxu0
      %v7789 = vadd.f32 %v7573, %v7788
      %v7790 = vpop.f32.mrf.mxu0
      %7791 = vmatprep.mubr.bf16.mxu0 0
      %7792 = vmatmul.mubr.bf16.gmra.mxu0 %v7535
      %v7793 = vpop.f32.mrf.mxu0
      %v7794 = vadd.f32 %v7573, %v7793
      %v7795 = vpop.f32.mrf.mxu0
      %v7796 = vpop.f32.mrf.mxu0
      %v7797 = vadd.f32 %v7573, %v7796
      %v7798 = vpop.f32.mrf.mxu0
      %7799 = vmatprep.mubr.bf16.mxu0 0
      %7800 = vmatmul.mubr.bf16.gmra.mxu0 %v7536
      %v7801 = vpop.f32.mrf.mxu0
      %v7802 = vadd.f32 %v7573, %v7801
      %v7803 = vpop.f32.mrf.mxu0
      %v7804 = vpop.f32.mrf.mxu0
      %v7805 = vadd.f32 %v7573, %v7804
      %v7806 = vpop.f32.mrf.mxu0
      %7807 = vmatprep.mubr.bf16.mxu0 0
      %7808 = vmatmul.mubr.bf16.gmra.mxu0 %v7537
      %v7809 = vpop.f32.mrf.mxu0
      %v7810 = vadd.f32 %v7573, %v7809
      %v7811 = vpop.f32.mrf.mxu0
      %v7812 = vpop.f32.mrf.mxu0
      %v7813 = vadd.f32 %v7573, %v7812
      %v7814 = vpop.f32.mrf.mxu0
      %7815 = vmatprep.mubr.bf16.mxu0 0
      %7816 = vmatmul.mubr.bf16.gmra.mxu0 %v7538
      %v7817 = vpop.f32.mrf.mxu0
      %v7818 = vadd.f32 %v7573, %v7817
      %v7819 = vpop.f32.mrf.mxu0
      %v7820 = vpop.f32.mrf.mxu0
      %v7821 = vadd.f32 %v7573, %v7820
      %v7822 = vpop.f32.mrf.mxu0
      %7823 = vmatprep.mubr.bf16.mxu0 0
      %7824 = vmatmul.mubr.bf16.gmra.mxu0 %v7539
      %v7825 = vpop.f32.mrf.mxu0
      %v7826 = vadd.f32 %v7573, %v7825
      %v7827 = vpop.f32.mrf.mxu0
      %v7828 = vpop.f32.mrf.mxu0
      %v7829 = vadd.f32 %v7573, %v7828
      %v7830 = vpop.f32.mrf.mxu0
      %7831 = vmatprep.mubr.bf16.mxu0 0
      %7832 = vmatmul.mubr.bf16.gmra.mxu0 %v7540
      %v7833 = vpop.f32.mrf.mxu0
      %v7834 = vadd.f32 %v7573, %v7833
      %v7835 = vpop.f32.mrf.mxu0
      %v7836 = vpop.f32.mrf.mxu0
      %v7837 = vadd.f32 %v7573, %v7836
      %v7838 = vpop.f32.mrf.mxu0
      %7839 = vmatprep.mubr.bf16.mxu0 0
      %7840 = vmatmul.mubr.bf16.gmra.mxu0 %v7541
      %v7841 = vpop.f32.mrf.mxu0
      %v7842 = vadd.f32 %v7573, %v7841
      %v7843 = vpop.f32.mrf.mxu0
      %v7844 = vpop.f32.mrf.mxu0
      %v7845 = vadd.f32 %v7573, %v7844
      %v7846 = vpop.f32.mrf.mxu0
      %7847 = vmatprep.mubr.bf16.mxu0 0
      %7848 = vmatmul.mubr.bf16.gmra.mxu0 %v7542
      %v7849 = vpop.f32.mrf.mxu0
      %v7850 = vadd.f32 %v7573, %v7849
      %v7851 = vpop.f32.mrf.mxu0
      %v7852 = vpop.f32.mrf.mxu0
      %v7853 = vadd.f32 %v7573, %v7852
      %v7854 = vpop.f32.mrf.mxu0
      %7855 = vmatprep.mubr.bf16.mxu0 0
      %7856 = vmatmul.mubr.bf16.gmra.mxu0 %v7543
      %v7857 = vpop.f32.mrf.mxu0
      %v7858 = vadd.f32 %v7573, %v7857
      %v7859 = vpop.f32.mrf.mxu0
      %v7860 = vpop.f32.mrf.mxu0
      %v7861 = vadd.f32 %v7573, %v7860
      %v7862 = vpop.f32.mrf.mxu0
      %7863 = vmatprep.mubr.bf16.mxu0 0
      %7864 = vmatmul.mubr.bf16.gmra.mxu0 %v7544
      %v7865 = vpop.f32.mrf.mxu0
      %v7866 = vadd.f32 %v7573, %v7865
      %v7867 = vpop.f32.mrf.mxu0
      %v7868 = vpop.f32.mrf.mxu0
      %v7869 = vadd.f32 %v7573, %v7868
      %v7870 = vpop.f32.mrf.mxu0
      %7871 = vmatprep.mubr.bf16.mxu0 0
      %7872 = vmatmul.mubr.bf16.gmra.mxu0 %v7545
      %v7873 = vpop.f32.mrf.mxu0
      %v7874 = vadd.f32 %v7573, %v7873
      %v7875 = vpop.f32.mrf.mxu0
      %v7876 = vpop.f32.mrf.mxu0
      %v7877 = vadd.f32 %v7573, %v7876
      %v7878 = vpop.f32.mrf.mxu0
      %7879 = vmatprep.mubr.bf16.mxu0 0
      %7880 = vmatmul.mubr.bf16.gmra.mxu0 %v7546
      %v7881 = vpop.f32.mrf.mxu0
      %v7882 = vadd.f32 %v7573, %v7881
      %v7883 = vpop.f32.mrf.mxu0
      %v7884 = vpop.f32.mrf.mxu0
      %v7885 = vadd.f32 %v7573, %v7884
      %v7886 = vpop.f32.mrf.mxu0
      %7887 = vmatprep.mubr.bf16.mxu0 0
      %7888 = vmatmul.mubr.bf16.gmra.mxu0 %v7547
      %v7889 = vpop.f32.mrf.mxu0
      %v7890 = vadd.f32 %v7573, %v7889
      %v7891 = vpop.f32.mrf.mxu0
      %v7892 = vpop.f32.mrf.mxu0
      %v7893 = vadd.f32 %v7573, %v7892
      %v7894 = vpop.f32.mrf.mxu0
      %7895 = vmatprep.mubr.bf16.mxu0 0
      %7896 = vmatmul.mubr.bf16.gmra.mxu0 %v7548
      %v7897 = vpop.f32.mrf.mxu0
      %v7898 = vadd.f32 %v7573, %v7897
      %v7899 = vpop.f32.mrf.mxu0
      %v7900 = vpop.f32.mrf.mxu0
      %v7901 = vadd.f32 %v7573, %v7900
      %v7902 = vpop.f32.mrf.mxu0
      %7903 = vmatprep.mubr.bf16.mxu0 0
      %7904 = vmatmul.mubr.bf16.gmra.mxu0 %v7549
      %v7905 = vpop.f32.mrf.mxu0
      %v7906 = vadd.f32 %v7573, %v7905
      %v7907 = vpop.f32.mrf.mxu0
      %v7908 = vpop.f32.mrf.mxu0
      %v7909 = vadd.f32 %v7573, %v7908
      %v7910 = vpop.f32.mrf.mxu0
      %7911 = vdwg.mxu0
      %v7912 = vtanh.pop %v7658
      %v7913 = vtanh.pop %v7661
      %v7914 = vtanh.pop %v7666
      %v7915 = vtanh.pop %v7669
      %v7916 = vtanh.pop %v7674
      %v7917 = vtanh.pop %v7677
      %v7918 = vtanh.pop %v7682
      %v7919 = vtanh.pop %v7685
      %v7920 = vtanh.pop %v7690
      %v7921 = vtanh.pop %v7693
      %v7922 = vtanh.pop %v7698
      %v7923 = vtanh.pop %v7701
      %v7924 = vtanh.pop %v7706
      %v7925 = vtanh.pop %v7709
      %v7926 = vtanh.pop %v7714
      %v7927 = vtanh.pop %v7717
      %v7928 = vtanh.pop %v7722
      %v7929 = vtanh.pop %v7725
      %v7930 = vtanh.pop %v7730
      %v7931 = vtanh.pop %v7733
      %v7932 = vtanh.pop %v7738
      %v7933 = vtanh.pop %v7741
      %v7934 = vtanh.pop %v7746
      %v7935 = vtanh.pop %v7749
      %v7936 = vtanh.pop %v7754
      %v7937 = vtanh.pop %v7757
      %v7938 = vtanh.pop %v7762
      %v7939 = vtanh.pop %v7765
      %v7940 = vtanh.pop %v7770
      %v7941 = vtanh.pop %v7773
      %v7942 = vtanh.pop %v7778
      %v7943 = vtanh.pop %v7781
      %v7944 = vtanh.pop %v7786
      %v7945 = vtanh.pop %v7789
      %v7946 = vtanh.pop %v7794
      %v7947 = vtanh.pop %v7797
      %v7948 = vtanh.pop %v7802
      %v7949 = vtanh.pop %v7805
      %v7950 = vtanh.pop %v7810
      %v7951 = vtanh.pop %v7813
      %v7952 = vtanh.pop %v7818
      %v7953 = vtanh.pop %v7821
      %v7954 = vtanh.pop %v7826
      %v7955 = vtanh.pop %v7829
      %v7956 = vtanh.pop %v7834
      %v7957 = vtanh.pop %v7837
      %v7958 = vtanh.pop %v7842
      %v7959 = vtanh.pop %v7845
      %v7960 = vtanh.pop %v7850
      %v7961 = vtanh.pop %v7853
      %v7962 = vtanh.pop %v7858
      %v7963 = vtanh.pop %v7861
      %v7964 = vtanh.pop %v7866
      %v7965 = vtanh.pop %v7869
      %v7966 = vtanh.pop %v7874
      %v7967 = vtanh.pop %v7877
      %v7968 = vtanh.pop %v7882
      %v7969 = vtanh.pop %v7885
      %v7970 = vtanh.pop %v7890
      %v7971 = vtanh.pop %v7893
      %v7972 = vtanh.pop %v7898
      %v7973 = vtanh.pop %v7901
      %v7974 = vtanh.pop %v7906
      %v7975 = vtanh.pop %v7909
      %v7976 = vmul.f32 %v7912, %v6738
      %v7977 = vmul.f32 %v7913, %v6743
      %v7978 = vmul.f32 %v7914, %v6748
      %v7979 = vmul.f32 %v7915, %v6753
      %v7980 = vmul.f32 %v7916, %v6758
      %v7981 = vmul.f32 %v7917, %v6763
      %v7982 = vmul.f32 %v7918, %v6768
      %v7983 = vmul.f32 %v7919, %v6773
      %v7984 = vmul.f32 %v7920, %v6778
      %v7985 = vmul.f32 %v7921, %v6783
      %v7986 = vmul.f32 %v7922, %v6788
      %v7987 = vmul.f32 %v7923, %v6793
      %v7988 = vmul.f32 %v7924, %v6798
      %v7989 = vmul.f32 %v7925, %v6803
      %v7990 = vmul.f32 %v7926, %v6808
      %v7991 = vmul.f32 %v7927, %v6813
      %v7992 = vmul.f32 %v7928, %v6818
      %v7993 = vmul.f32 %v7929, %v6823
      %v7994 = vmul.f32 %v7930, %v6828
      %v7995 = vmul.f32 %v7931, %v6833
      %v7996 = vmul.f32 %v7932, %v6838
      %v7997 = vmul.f32 %v7933, %v6843
      %v7998 = vmul.f32 %v7934, %v6848
      %v7999 = vmul.f32 %v7935, %v6853
      %v8000 = vmul.f32 %v7936, %v6858
      %v8001 = vmul.f32 %v7937, %v6863
      %v8002 = vmul.f32 %v7938, %v6868
      %v8003 = vmul.f32 %v7939, %v6873
      %v8004 = vmul.f32 %v7940, %v6878
      %v8005 = vmul.f32 %v7941, %v6883
      %v8006 = vmul.f32 %v7942, %v6888
      %v8007 = vmul.f32 %v7943, %v6893
      %v8008 = vmul.f32 %v7944, %v6898
      %v8009 = vmul.f32 %v7945, %v6903
      %v8010 = vmul.f32 %v7946, %v6908
      %v8011 = vmul.f32 %v7947, %v6913
      %v8012 = vmul.f32 %v7948, %v6918
      %v8013 = vmul.f32 %v7949, %v6923
      %v8014 = vmul.f32 %v7950, %v6928
      %v8015 = vmul.f32 %v7951, %v6933
      %v8016 = vmul.f32 %v7952, %v6938
      %v8017 = vmul.f32 %v7953, %v6943
      %v8018 = vmul.f32 %v7954, %v6948
      %v8019 = vmul.f32 %v7955, %v6953
      %v8020 = vmul.f32 %v7956, %v6958
      %v8021 = vmul.f32 %v7957, %v6963
      %v8022 = vmul.f32 %v7958, %v6968
      %v8023 = vmul.f32 %v7959, %v6973
      %v8024 = vmul.f32 %v7960, %v6978
      %v8025 = vmul.f32 %v7961, %v6983
      %v8026 = vmul.f32 %v7962, %v6988
      %v8027 = vmul.f32 %v7963, %v6993
      %v8028 = vmul.f32 %v7964, %v6998
      %v8029 = vmul.f32 %v7965, %v7003
      %v8030 = vmul.f32 %v7966, %v7008
      %v8031 = vmul.f32 %v7967, %v7013
      %v8032 = vmul.f32 %v7968, %v7018
      %v8033 = vmul.f32 %v7969, %v7023
      %v8034 = vmul.f32 %v7970, %v7028
      %v8035 = vmul.f32 %v7971, %v7033
      %v8036 = vmul.f32 %v7972, %v7038
      %v8037 = vmul.f32 %v7973, %v7043
      %v8038 = vmul.f32 %v7974, %v7048
      %v8039 = vmul.f32 %v7975, %v7053
      %v8040 = vpack.c.bf16 %v7977, %v7976
      %v8041 = vpack.c.bf16 %v7979, %v7978
      %v8042 = vpack.c.bf16 %v7981, %v7980
      %v8043 = vpack.c.bf16 %v7983, %v7982
      %v8044 = vpack.c.bf16 %v7985, %v7984
      %v8045 = vpack.c.bf16 %v7987, %v7986
      %v8046 = vpack.c.bf16 %v7989, %v7988
      %v8047 = vpack.c.bf16 %v7991, %v7990
      %v8048 = vpack.c.bf16 %v7993, %v7992
      %v8049 = vpack.c.bf16 %v7995, %v7994
      %v8050 = vpack.c.bf16 %v7997, %v7996
      %v8051 = vpack.c.bf16 %v7999, %v7998
      %v8052 = vpack.c.bf16 %v8001, %v8000
      %v8053 = vpack.c.bf16 %v8003, %v8002
      %v8054 = vpack.c.bf16 %v8005, %v8004
      %v8055 = vpack.c.bf16 %v8007, %v8006
      %v8056 = vpack.c.bf16 %v8009, %v8008
      %v8057 = vpack.c.bf16 %v8011, %v8010
      %v8058 = vpack.c.bf16 %v8013, %v8012
      %v8059 = vpack.c.bf16 %v8015, %v8014
      %v8060 = vpack.c.bf16 %v8017, %v8016
      %v8061 = vpack.c.bf16 %v8019, %v8018
      %v8062 = vpack.c.bf16 %v8021, %v8020
      %v8063 = vpack.c.bf16 %v8023, %v8022
      %v8064 = vpack.c.bf16 %v8025, %v8024
      %v8065 = vpack.c.bf16 %v8027, %v8026
      %v8066 = vpack.c.bf16 %v8029, %v8028
      %v8067 = vpack.c.bf16 %v8031, %v8030
      %v8068 = vpack.c.bf16 %v8033, %v8032
      %v8069 = vpack.c.bf16 %v8035, %v8034
      %v8070 = vpack.c.bf16 %v8037, %v8036
      %v8071 = vpack.c.bf16 %v8039, %v8038
      %s8072 = scalar_lea.vmem %s7, 64
      %v8073 = vld [vmem:[%s8072] sm:$0xf]
      %v8074 = vld [vmem:[%s8072 + $0x4] sm:$0xf]
      %v8075 = vld [vmem:[%s8072 + $0x8] sm:$0xf]
      %v8076 = vld [vmem:[%s8072 + $0xc] sm:$0xf]
      %v8077 = vld [vmem:[%s8072 + $0x10] sm:$0xf]
      %v8078 = vld [vmem:[%s8072 + $0x14] sm:$0xf]
      %v8079 = vld [vmem:[%s8072 + $0x18] sm:$0xf]
      %v8080 = vld [vmem:[%s8072 + $0x1c] sm:$0xf]
      %v8081 = vld [vmem:[%s8072 + $0x20] sm:$0xf]
      %v8082 = vld [vmem:[%s8072 + $0x24] sm:$0xf]
      %v8083 = vld [vmem:[%s8072 + $0x28] sm:$0xf]
      %v8084 = vld [vmem:[%s8072 + $0x2c] sm:$0xf]
      %v8085 = vld [vmem:[%s8072 + $0x30] sm:$0xf]
      %v8086 = vld [vmem:[%s8072 + $0x34] sm:$0xf]
      %v8087 = vld [vmem:[%s8072 + $0x38] sm:$0xf]
      %v8088 = vld [vmem:[%s8072 + $0x3c] sm:$0xf]
      %s8089 = scalar_lea.vmem %s8, 4
      %v8090 = vld [vmem:[%s8089] sm:$0xf]
      %v8092 = vsel %vm2656, %v8090, 0
      %8094 = vmatprep.subr.mxu0 0.0
      %8095 = vmatpush1.msra.mxu0 0.0
      %8096 = vmatprep.subr.mxu0 0.0
      %8097 = vmatpush1.msra.mxu0 0.0
      %8098 = vmatprep.subr.mxu0 0.0
      %8099 = vmatpush1.msra.mxu0 0.0
      %8100 = vmatprep.subr.mxu0 0.0
      %8101 = vmatpush1.msra.mxu0 0.0
      %8102 = vmatprep.subr.mxu0 0.0
      %8103 = vmatpush1.msra.mxu0 0.0
      %8104 = vmatprep.subr.mxu0 0.0
      %8105 = vmatpush1.msra.mxu0 0.0
      %8106 = vmatprep.subr.mxu0 0.0
      %8107 = vmatpush1.msra.mxu0 0.0
      %8108 = vmatprep.subr.mxu0 0.0
      %8109 = vmatpush1.msra.mxu0 0.0
      %8110 = vmatprep.subr.mxu0 0.0
      %8111 = vmatpush1.msra.mxu0 0.0
      %8112 = vmatprep.subr.mxu0 0.0
      %8113 = vmatpush1.msra.mxu0 0.0
      %8114 = vmatprep.subr.mxu0 0.0
      %8115 = vmatpush1.msra.mxu0 0.0
      %8116 = vmatprep.subr.mxu0 0.0
      %8117 = vmatpush1.msra.mxu0 0.0
      %8118 = vmatprep.subr.mxu0 0.0
      %8119 = vmatpush1.msra.mxu0 0.0
      %8120 = vmatprep.subr.mxu0 0.0
      %8121 = vmatpush1.msra.mxu0 0.0
      %8122 = vmatprep.subr.mxu0 0.0
      %8123 = vmatpush1.msra.mxu0 0.0
      %8124 = vmatprep.subr.mxu0 0.0
      %8125 = vmatpush1.msra.mxu0 %v8092
      %8126 = vmatprep.subr.mxu0 0.0
      %8127 = vmatpush2.msra.mxu0 0.0
      %8128 = vmatprep.subr.mxu0 0.0
      %8129 = vmatpush2.msra.mxu0 0.0
      %8130 = vmatprep.subr.mxu0 0.0
      %8131 = vmatpush2.msra.mxu0 0.0
      %8132 = vmatprep.subr.mxu0 0.0
      %8133 = vmatpush2.msra.mxu0 0.0
      %8134 = vmatprep.subr.mxu0 0.0
      %8135 = vmatpush2.msra.mxu0 0.0
      %8136 = vmatprep.subr.mxu0 0.0
      %8137 = vmatpush2.msra.mxu0 0.0
      %8138 = vmatprep.subr.mxu0 0.0
      %8139 = vmatpush2.msra.mxu0 0.0
      %8140 = vmatprep.subr.mxu0 0.0
      %8141 = vmatpush2.msra.mxu0 0.0
      %8142 = vmatprep.subr.mxu0 0.0
      %8143 = vmatpush2.msra.mxu0 0.0
      %8144 = vmatprep.subr.mxu0 0.0
      %8145 = vmatpush2.msra.mxu0 0.0
      %8146 = vmatprep.subr.mxu0 0.0
      %8147 = vmatpush2.msra.mxu0 0.0
      %8148 = vmatprep.subr.mxu0 0.0
      %8149 = vmatpush2.msra.mxu0 0.0
      %8150 = vmatprep.subr.mxu0 0.0
      %8151 = vmatpush2.msra.mxu0 0.0
      %8152 = vmatprep.subr.mxu0 0.0
      %8153 = vmatpush2.msra.mxu0 0.0
      %8154 = vmatprep.subr.mxu0 0.0
      %8155 = vmatpush2.msra.mxu0 0.0
      %8156 = vmatprep.subr.mxu0 0.0
      %8157 = vmatpush2.msra.mxu0 0.0
      %8158 = vmatprep.mubr.f32.mxu0 0.0
      %8159 = vmatmul.mubr.f32.gmra.mxu0 %v6480
      %v8160 = vpop.f32.mrf.mxu0
      %v8161 = vadd.f32 0.0, %v8160
      %v8162 = vpop.f32.mrf.mxu0
      %8163 = vmatprep.mubr.f32.mxu0 0.0
      %8164 = vmatmul.mubr.f32.gmra.mxu0 %v6483
      %v8165 = vpop.f32.mrf.mxu0
      %v8166 = vadd.f32 0.0, %v8165
      %v8167 = vpop.f32.mrf.mxu0
      %8168 = vmatprep.mubr.f32.mxu0 0.0
      %8169 = vmatmul.mubr.f32.gmra.mxu0 %v6486
      %v8170 = vpop.f32.mrf.mxu0
      %v8171 = vadd.f32 0.0, %v8170
      %v8172 = vpop.f32.mrf.mxu0
      %8173 = vmatprep.mubr.f32.mxu0 0.0
      %8174 = vmatmul.mubr.f32.gmra.mxu0 %v6489
      %v8175 = vpop.f32.mrf.mxu0
      %v8176 = vadd.f32 0.0, %v8175
      %v8177 = vpop.f32.mrf.mxu0
      %8178 = vmatprep.mubr.f32.mxu0 0.0
      %8179 = vmatmul.mubr.f32.gmra.mxu0 %v6492
      %v8180 = vpop.f32.mrf.mxu0
      %v8181 = vadd.f32 0.0, %v8180
      %v8182 = vpop.f32.mrf.mxu0
      %8183 = vmatprep.mubr.f32.mxu0 0.0
      %8184 = vmatmul.mubr.f32.gmra.mxu0 %v6495
      %v8185 = vpop.f32.mrf.mxu0
      %v8186 = vadd.f32 0.0, %v8185
      %v8187 = vpop.f32.mrf.mxu0
      %8188 = vmatprep.mubr.f32.mxu0 0.0
      %8189 = vmatmul.mubr.f32.gmra.mxu0 %v6498
      %v8190 = vpop.f32.mrf.mxu0
      %v8191 = vadd.f32 0.0, %v8190
      %v8192 = vpop.f32.mrf.mxu0
      %8193 = vmatprep.mubr.f32.mxu0 0.0
      %8194 = vmatmul.mubr.f32.gmra.mxu0 %v6501
      %v8195 = vpop.f32.mrf.mxu0
      %v8196 = vadd.f32 0.0, %v8195
      %v8197 = vpop.f32.mrf.mxu0
      %8198 = vmatprep.mubr.f32.mxu0 0.0
      %8199 = vmatmul.mubr.f32.gmra.mxu0 %v6504
      %v8200 = vpop.f32.mrf.mxu0
      %v8201 = vadd.f32 0.0, %v8200
      %v8202 = vpop.f32.mrf.mxu0
      %8203 = vmatprep.mubr.f32.mxu0 0.0
      %8204 = vmatmul.mubr.f32.gmra.mxu0 %v6507
      %v8205 = vpop.f32.mrf.mxu0
      %v8206 = vadd.f32 0.0, %v8205
      %v8207 = vpop.f32.mrf.mxu0
      %8208 = vmatprep.mubr.f32.mxu0 0.0
      %8209 = vmatmul.mubr.f32.gmra.mxu0 %v6510
      %v8210 = vpop.f32.mrf.mxu0
      %v8211 = vadd.f32 0.0, %v8210
      %v8212 = vpop.f32.mrf.mxu0
      %8213 = vmatprep.mubr.f32.mxu0 0.0
      %8214 = vmatmul.mubr.f32.gmra.mxu0 %v6513
      %v8215 = vpop.f32.mrf.mxu0
      %v8216 = vadd.f32 0.0, %v8215
      %v8217 = vpop.f32.mrf.mxu0
      %8218 = vmatprep.mubr.f32.mxu0 0.0
      %8219 = vmatmul.mubr.f32.gmra.mxu0 %v6516
      %v8220 = vpop.f32.mrf.mxu0
      %v8221 = vadd.f32 0.0, %v8220
      %v8222 = vpop.f32.mrf.mxu0
      %8223 = vmatprep.mubr.f32.mxu0 0.0
      %8224 = vmatmul.mubr.f32.gmra.mxu0 %v6519
      %v8225 = vpop.f32.mrf.mxu0
      %v8226 = vadd.f32 0.0, %v8225
      %v8227 = vpop.f32.mrf.mxu0
      %8228 = vmatprep.mubr.f32.mxu0 0.0
      %8229 = vmatmul.mubr.f32.gmra.mxu0 %v6522
      %v8230 = vpop.f32.mrf.mxu0
      %v8231 = vadd.f32 0.0, %v8230
      %v8232 = vpop.f32.mrf.mxu0
      %8233 = vmatprep.mubr.f32.mxu0 0.0
      %8234 = vmatmul.mubr.f32.gmra.mxu0 %v6525
      %v8235 = vpop.f32.mrf.mxu0
      %v8236 = vadd.f32 0.0, %v8235
      %v8237 = vpop.f32.mrf.mxu0
      %8238 = vmatprep.mubr.f32.mxu0 0.0
      %8239 = vmatmul.mubr.f32.gmra.mxu0 %v6528
      %v8240 = vpop.f32.mrf.mxu0
      %v8241 = vadd.f32 0.0, %v8240
      %v8242 = vpop.f32.mrf.mxu0
      %8243 = vmatprep.mubr.f32.mxu0 0.0
      %8244 = vmatmul.mubr.f32.gmra.mxu0 %v6531
      %v8245 = vpop.f32.mrf.mxu0
      %v8246 = vadd.f32 0.0, %v8245
      %v8247 = vpop.f32.mrf.mxu0
      %8248 = vmatprep.mubr.f32.mxu0 0.0
      %8249 = vmatmul.mubr.f32.gmra.mxu0 %v6534
      %v8250 = vpop.f32.mrf.mxu0
      %v8251 = vadd.f32 0.0, %v8250
      %v8252 = vpop.f32.mrf.mxu0
      %8253 = vmatprep.mubr.f32.mxu0 0.0
      %8254 = vmatmul.mubr.f32.gmra.mxu0 %v6537
      %v8255 = vpop.f32.mrf.mxu0
      %v8256 = vadd.f32 0.0, %v8255
      %v8257 = vpop.f32.mrf.mxu0
      %8258 = vmatprep.mubr.f32.mxu0 0.0
      %8259 = vmatmul.mubr.f32.gmra.mxu0 %v6540
      %v8260 = vpop.f32.mrf.mxu0
      %v8261 = vadd.f32 0.0, %v8260
      %v8262 = vpop.f32.mrf.mxu0
      %8263 = vmatprep.mubr.f32.mxu0 0.0
      %8264 = vmatmul.mubr.f32.gmra.mxu0 %v6543
      %v8265 = vpop.f32.mrf.mxu0
      %v8266 = vadd.f32 0.0, %v8265
      %v8267 = vpop.f32.mrf.mxu0
      %8268 = vmatprep.mubr.f32.mxu0 0.0
      %8269 = vmatmul.mubr.f32.gmra.mxu0 %v6546
      %v8270 = vpop.f32.mrf.mxu0
      %v8271 = vadd.f32 0.0, %v8270
      %v8272 = vpop.f32.mrf.mxu0
      %8273 = vmatprep.mubr.f32.mxu0 0.0
      %8274 = vmatmul.mubr.f32.gmra.mxu0 %v6549
      %v8275 = vpop.f32.mrf.mxu0
      %v8276 = vadd.f32 0.0, %v8275
      %v8277 = vpop.f32.mrf.mxu0
      %8278 = vmatprep.mubr.f32.mxu0 0.0
      %8279 = vmatmul.mubr.f32.gmra.mxu0 %v6552
      %v8280 = vpop.f32.mrf.mxu0
      %v8281 = vadd.f32 0.0, %v8280
      %v8282 = vpop.f32.mrf.mxu0
      %8283 = vmatprep.mubr.f32.mxu0 0.0
      %8284 = vmatmul.mubr.f32.gmra.mxu0 %v6555
      %v8285 = vpop.f32.mrf.mxu0
      %v8286 = vadd.f32 0.0, %v8285
      %v8287 = vpop.f32.mrf.mxu0
      %8288 = vmatprep.mubr.f32.mxu0 0.0
      %8289 = vmatmul.mubr.f32.gmra.mxu0 %v6558
      %v8290 = vpop.f32.mrf.mxu0
      %v8291 = vadd.f32 0.0, %v8290
      %v8292 = vpop.f32.mrf.mxu0
      %8293 = vmatprep.mubr.f32.mxu0 0.0
      %8294 = vmatmul.mubr.f32.gmra.mxu0 %v6561
      %v8295 = vpop.f32.mrf.mxu0
      %v8296 = vadd.f32 0.0, %v8295
      %v8297 = vpop.f32.mrf.mxu0
      %8298 = vmatprep.mubr.f32.mxu0 0.0
      %8299 = vmatmul.mubr.f32.gmra.mxu0 %v6564
      %v8300 = vpop.f32.mrf.mxu0
      %v8301 = vadd.f32 0.0, %v8300
      %v8302 = vpop.f32.mrf.mxu0
      %8303 = vmatprep.mubr.f32.mxu0 0.0
      %8304 = vmatmul.mubr.f32.gmra.mxu0 %v6567
      %v8305 = vpop.f32.mrf.mxu0
      %v8306 = vadd.f32 0.0, %v8305
      %v8307 = vpop.f32.mrf.mxu0
      %8308 = vmatprep.mubr.f32.mxu0 0.0
      %8309 = vmatmul.mubr.f32.gmra.mxu0 %v6570
      %v8310 = vpop.f32.mrf.mxu0
      %v8311 = vadd.f32 0.0, %v8310
      %v8312 = vpop.f32.mrf.mxu0
      %8313 = vmatprep.mubr.f32.mxu0 0.0
      %8314 = vmatmul.mubr.f32.gmra.mxu0 %v6573
      %v8315 = vpop.f32.mrf.mxu0
      %v8316 = vadd.f32 0.0, %v8315
      %v8317 = vpop.f32.mrf.mxu0
      %8318 = vmatprep.mubr.f32.mxu0 0.0
      %8319 = vmatmul.mubr.f32.gmra.mxu0 %v6576
      %v8320 = vpop.f32.mrf.mxu0
      %v8321 = vadd.f32 0.0, %v8320
      %v8322 = vpop.f32.mrf.mxu0
      %8323 = vmatprep.mubr.f32.mxu0 0.0
      %8324 = vmatmul.mubr.f32.gmra.mxu0 %v6579
      %v8325 = vpop.f32.mrf.mxu0
      %v8326 = vadd.f32 0.0, %v8325
      %v8327 = vpop.f32.mrf.mxu0
      %8328 = vmatprep.mubr.f32.mxu0 0.0
      %8329 = vmatmul.mubr.f32.gmra.mxu0 %v6582
      %v8330 = vpop.f32.mrf.mxu0
      %v8331 = vadd.f32 0.0, %v8330
      %v8332 = vpop.f32.mrf.mxu0
      %8333 = vmatprep.mubr.f32.mxu0 0.0
      %8334 = vmatmul.mubr.f32.gmra.mxu0 %v6585
      %v8335 = vpop.f32.mrf.mxu0
      %v8336 = vadd.f32 0.0, %v8335
      %v8337 = vpop.f32.mrf.mxu0
      %8338 = vmatprep.mubr.f32.mxu0 0.0
      %8339 = vmatmul.mubr.f32.gmra.mxu0 %v6588
      %v8340 = vpop.f32.mrf.mxu0
      %v8341 = vadd.f32 0.0, %v8340
      %v8342 = vpop.f32.mrf.mxu0
      %8343 = vmatprep.mubr.f32.mxu0 0.0
      %8344 = vmatmul.mubr.f32.gmra.mxu0 %v6591
      %v8345 = vpop.f32.mrf.mxu0
      %v8346 = vadd.f32 0.0, %v8345
      %v8347 = vpop.f32.mrf.mxu0
      %8348 = vmatprep.mubr.f32.mxu0 0.0
      %8349 = vmatmul.mubr.f32.gmra.mxu0 %v6594
      %v8350 = vpop.f32.mrf.mxu0
      %v8351 = vadd.f32 0.0, %v8350
      %v8352 = vpop.f32.mrf.mxu0
      %8353 = vmatprep.mubr.f32.mxu0 0.0
      %8354 = vmatmul.mubr.f32.gmra.mxu0 %v6597
      %v8355 = vpop.f32.mrf.mxu0
      %v8356 = vadd.f32 0.0, %v8355
      %v8357 = vpop.f32.mrf.mxu0
      %8358 = vmatprep.mubr.f32.mxu0 0.0
      %8359 = vmatmul.mubr.f32.gmra.mxu0 %v6600
      %v8360 = vpop.f32.mrf.mxu0
      %v8361 = vadd.f32 0.0, %v8360
      %v8362 = vpop.f32.mrf.mxu0
      %8363 = vmatprep.mubr.f32.mxu0 0.0
      %8364 = vmatmul.mubr.f32.gmra.mxu0 %v6603
      %v8365 = vpop.f32.mrf.mxu0
      %v8366 = vadd.f32 0.0, %v8365
      %v8367 = vpop.f32.mrf.mxu0
      %8368 = vmatprep.mubr.f32.mxu0 0.0
      %8369 = vmatmul.mubr.f32.gmra.mxu0 %v6606
      %v8370 = vpop.f32.mrf.mxu0
      %v8371 = vadd.f32 0.0, %v8370
      %v8372 = vpop.f32.mrf.mxu0
      %8373 = vmatprep.mubr.f32.mxu0 0.0
      %8374 = vmatmul.mubr.f32.gmra.mxu0 %v6609
      %v8375 = vpop.f32.mrf.mxu0
      %v8376 = vadd.f32 0.0, %v8375
      %v8377 = vpop.f32.mrf.mxu0
      %8378 = vmatprep.mubr.f32.mxu0 0.0
      %8379 = vmatmul.mubr.f32.gmra.mxu0 %v6612
      %v8380 = vpop.f32.mrf.mxu0
      %v8381 = vadd.f32 0.0, %v8380
      %v8382 = vpop.f32.mrf.mxu0
      %8383 = vmatprep.mubr.f32.mxu0 0.0
      %8384 = vmatmul.mubr.f32.gmra.mxu0 %v6615
      %v8385 = vpop.f32.mrf.mxu0
      %v8386 = vadd.f32 0.0, %v8385
      %v8387 = vpop.f32.mrf.mxu0
      %8388 = vmatprep.mubr.f32.mxu0 0.0
      %8389 = vmatmul.mubr.f32.gmra.mxu0 %v6618
      %v8390 = vpop.f32.mrf.mxu0
      %v8391 = vadd.f32 0.0, %v8390
      %v8392 = vpop.f32.mrf.mxu0
      %8393 = vmatprep.mubr.f32.mxu0 0.0
      %8394 = vmatmul.mubr.f32.gmra.mxu0 %v6621
      %v8395 = vpop.f32.mrf.mxu0
      %v8396 = vadd.f32 0.0, %v8395
      %v8397 = vpop.f32.mrf.mxu0
      %8398 = vmatprep.mubr.f32.mxu0 0.0
      %8399 = vmatmul.mubr.f32.gmra.mxu0 %v6624
      %v8400 = vpop.f32.mrf.mxu0
      %v8401 = vadd.f32 0.0, %v8400
      %v8402 = vpop.f32.mrf.mxu0
      %8403 = vmatprep.mubr.f32.mxu0 0.0
      %8404 = vmatmul.mubr.f32.gmra.mxu0 %v6627
      %v8405 = vpop.f32.mrf.mxu0
      %v8406 = vadd.f32 0.0, %v8405
      %v8407 = vpop.f32.mrf.mxu0
      %8408 = vmatprep.mubr.f32.mxu0 0.0
      %8409 = vmatmul.mubr.f32.gmra.mxu0 %v6630
      %v8410 = vpop.f32.mrf.mxu0
      %v8411 = vadd.f32 0.0, %v8410
      %v8412 = vpop.f32.mrf.mxu0
      %8413 = vmatprep.mubr.f32.mxu0 0.0
      %8414 = vmatmul.mubr.f32.gmra.mxu0 %v6633
      %v8415 = vpop.f32.mrf.mxu0
      %v8416 = vadd.f32 0.0, %v8415
      %v8417 = vpop.f32.mrf.mxu0
      %8418 = vmatprep.mubr.f32.mxu0 0.0
      %8419 = vmatmul.mubr.f32.gmra.mxu0 %v6636
      %v8420 = vpop.f32.mrf.mxu0
      %v8421 = vadd.f32 0.0, %v8420
      %v8422 = vpop.f32.mrf.mxu0
      %8423 = vmatprep.mubr.f32.mxu0 0.0
      %8424 = vmatmul.mubr.f32.gmra.mxu0 %v6639
      %v8425 = vpop.f32.mrf.mxu0
      %v8426 = vadd.f32 0.0, %v8425
      %v8427 = vpop.f32.mrf.mxu0
      %8428 = vmatprep.mubr.f32.mxu0 0.0
      %8429 = vmatmul.mubr.f32.gmra.mxu0 %v6642
      %v8430 = vpop.f32.mrf.mxu0
      %v8431 = vadd.f32 0.0, %v8430
      %v8432 = vpop.f32.mrf.mxu0
      %8433 = vmatprep.mubr.f32.mxu0 0.0
      %8434 = vmatmul.mubr.f32.gmra.mxu0 %v6645
      %v8435 = vpop.f32.mrf.mxu0
      %v8436 = vadd.f32 0.0, %v8435
      %v8437 = vpop.f32.mrf.mxu0
      %8438 = vmatprep.mubr.f32.mxu0 0.0
      %8439 = vmatmul.mubr.f32.gmra.mxu0 %v6648
      %v8440 = vpop.f32.mrf.mxu0
      %v8441 = vadd.f32 0.0, %v8440
      %v8442 = vpop.f32.mrf.mxu0
      %8443 = vmatprep.mubr.f32.mxu0 0.0
      %8444 = vmatmul.mubr.f32.gmra.mxu0 %v6651
      %v8445 = vpop.f32.mrf.mxu0
      %v8446 = vadd.f32 0.0, %v8445
      %v8447 = vpop.f32.mrf.mxu0
      %8448 = vmatprep.mubr.f32.mxu0 0.0
      %8449 = vmatmul.mubr.f32.gmra.mxu0 %v6654
      %v8450 = vpop.f32.mrf.mxu0
      %v8451 = vadd.f32 0.0, %v8450
      %v8452 = vpop.f32.mrf.mxu0
      %8453 = vmatprep.mubr.f32.mxu0 0.0
      %8454 = vmatmul.mubr.f32.gmra.mxu0 %v6657
      %v8455 = vpop.f32.mrf.mxu0
      %v8456 = vadd.f32 0.0, %v8455
      %v8457 = vpop.f32.mrf.mxu0
      %8458 = vmatprep.mubr.f32.mxu0 0.0
      %8459 = vmatmul.mubr.f32.gmra.mxu0 %v6660
      %v8460 = vpop.f32.mrf.mxu0
      %v8461 = vadd.f32 0.0, %v8460
      %v8462 = vpop.f32.mrf.mxu0
      %8463 = vmatprep.mubr.f32.mxu0 0.0
      %8464 = vmatmul.mubr.f32.gmra.mxu0 %v6663
      %v8465 = vpop.f32.mrf.mxu0
      %v8466 = vadd.f32 0.0, %v8465
      %v8467 = vpop.f32.mrf.mxu0
      %8468 = vmatprep.mubr.f32.mxu0 0.0
      %8469 = vmatmul.mubr.f32.gmra.mxu0 %v6666
      %v8470 = vpop.f32.mrf.mxu0
      %v8471 = vadd.f32 0.0, %v8470
      %v8472 = vpop.f32.mrf.mxu0
      %8473 = vmatprep.mubr.f32.mxu0 0.0
      %8474 = vmatmul.mubr.f32.gmra.mxu0 %v6669
      %v8475 = vpop.f32.mrf.mxu0
      %v8476 = vadd.f32 0.0, %v8475
      %v8477 = vpop.f32.mrf.mxu0
      %8478 = vdwg.mxu0
      %v8495 = vunpack.c.l.b16 %v8073
      %v8496 = vunpack.c.l.b16 %v8074
      %v8497 = vunpack.c.l.b16 %v8075
      %v8498 = vunpack.c.l.b16 %v8076
      %v8499 = vunpack.c.l.b16 %v8077
      %v8500 = vunpack.c.l.b16 %v8078
      %v8501 = vunpack.c.l.b16 %v8079
      %v8502 = vunpack.c.l.b16 %v8080
      %v8503 = vunpack.c.l.b16 %v8081
      %v8504 = vunpack.c.l.b16 %v8082
      %v8505 = vunpack.c.l.b16 %v8083
      %v8506 = vunpack.c.l.b16 %v8084
      %v8507 = vunpack.c.l.b16 %v8085
      %v8508 = vunpack.c.l.b16 %v8086
      %v8509 = vunpack.c.l.b16 %v8087
      %v8510 = vunpack.c.l.b16 %v8088
      %v8511 = vpack.c.b16 %v8496, %v8495
      %v8512 = vpack.c.b16 %v8498, %v8497
      %v8513 = vpack.c.b16 %v8500, %v8499
      %v8514 = vpack.c.b16 %v8502, %v8501
      %v8515 = vpack.c.b16 %v8504, %v8503
      %v8516 = vpack.c.b16 %v8506, %v8505
      %v8517 = vpack.c.b16 %v8508, %v8507
      %v8518 = vpack.c.b16 %v8510, %v8509
      %8527 = vmatprep.subr.bf16.mxu0 0
      %8528 = vmatpush1.bf16.msra.mxu0 %v8518
      %8529 = vmatprep.subr.bf16.mxu0 0
      %8530 = vmatpush1.bf16.msra.mxu0 %v8517
      %8531 = vmatprep.subr.bf16.mxu0 0
      %8532 = vmatpush1.bf16.msra.mxu0 %v8516
      %8533 = vmatprep.subr.bf16.mxu0 0
      %8534 = vmatpush1.bf16.msra.mxu0 %v8515
      %8535 = vmatprep.subr.bf16.mxu0 0
      %8536 = vmatpush1.bf16.msra.mxu0 %v8514
      %8537 = vmatprep.subr.bf16.mxu0 0
      %8538 = vmatpush1.bf16.msra.mxu0 %v8513
      %8539 = vmatprep.subr.bf16.mxu0 0
      %8540 = vmatpush1.bf16.msra.mxu0 %v8512
      %8541 = vmatprep.subr.bf16.mxu0 0
      %8542 = vmatpush1.bf16.msra.mxu0 %v8511
      %8543 = vmatprep.subr.bf16.mxu0 0
      %8544 = vmatpush2.bf16.msra.mxu0 0
      %8545 = vmatprep.subr.bf16.mxu0 0
      %8546 = vmatpush2.bf16.msra.mxu0 0
      %8547 = vmatprep.subr.bf16.mxu0 0
      %8548 = vmatpush2.bf16.msra.mxu0 0
      %8549 = vmatprep.subr.bf16.mxu0 0
      %8550 = vmatpush2.bf16.msra.mxu0 0
      %8551 = vmatprep.subr.bf16.mxu0 0
      %8552 = vmatpush2.bf16.msra.mxu0 0
      %8553 = vmatprep.subr.bf16.mxu0 0
      %8554 = vmatpush2.bf16.msra.mxu0 0
      %8555 = vmatprep.subr.bf16.mxu0 0
      %8556 = vmatpush2.bf16.msra.mxu0 0
      %8557 = vmatprep.subr.bf16.mxu0 0
      %8558 = vmatpush2.bf16.msra.mxu0 0
      %8559 = vmatprep.mubr.bf16.mxu0 0
      %8560 = vmatmul.mubr.bf16.gmra.mxu0 %v8040
      %v8561 = vpop.f32.mrf.mxu0
      %v8562 = vadd.f32 %v8161, %v8561
      %v8563 = vpop.f32.mrf.mxu0
      %v8564 = vpop.f32.mrf.mxu0
      %v8565 = vadd.f32 %v8166, %v8564
      %v8566 = vpop.f32.mrf.mxu0
      %8567 = vmatprep.mubr.bf16.mxu0 0
      %8568 = vmatmul.mubr.bf16.gmra.mxu0 %v8041
      %v8569 = vpop.f32.mrf.mxu0
      %v8570 = vadd.f32 %v8171, %v8569
      %v8571 = vpop.f32.mrf.mxu0
      %v8572 = vpop.f32.mrf.mxu0
      %v8573 = vadd.f32 %v8176, %v8572
      %v8574 = vpop.f32.mrf.mxu0
      %8575 = vmatprep.mubr.bf16.mxu0 0
      %8576 = vmatmul.mubr.bf16.gmra.mxu0 %v8042
      %v8577 = vpop.f32.mrf.mxu0
      %v8578 = vadd.f32 %v8181, %v8577
      %v8579 = vpop.f32.mrf.mxu0
      %v8580 = vpop.f32.mrf.mxu0
      %v8581 = vadd.f32 %v8186, %v8580
      %v8582 = vpop.f32.mrf.mxu0
      %8583 = vmatprep.mubr.bf16.mxu0 0
      %8584 = vmatmul.mubr.bf16.gmra.mxu0 %v8043
      %v8585 = vpop.f32.mrf.mxu0
      %v8586 = vadd.f32 %v8191, %v8585
      %v8587 = vpop.f32.mrf.mxu0
      %v8588 = vpop.f32.mrf.mxu0
      %v8589 = vadd.f32 %v8196, %v8588
      %v8590 = vpop.f32.mrf.mxu0
      %8591 = vmatprep.mubr.bf16.mxu0 0
      %8592 = vmatmul.mubr.bf16.gmra.mxu0 %v8044
      %v8593 = vpop.f32.mrf.mxu0
      %v8594 = vadd.f32 %v8201, %v8593
      %v8595 = vpop.f32.mrf.mxu0
      %v8596 = vpop.f32.mrf.mxu0
      %v8597 = vadd.f32 %v8206, %v8596
      %v8598 = vpop.f32.mrf.mxu0
      %8599 = vmatprep.mubr.bf16.mxu0 0
      %8600 = vmatmul.mubr.bf16.gmra.mxu0 %v8045
      %v8601 = vpop.f32.mrf.mxu0
      %v8602 = vadd.f32 %v8211, %v8601
      %v8603 = vpop.f32.mrf.mxu0
      %v8604 = vpop.f32.mrf.mxu0
      %v8605 = vadd.f32 %v8216, %v8604
      %v8606 = vpop.f32.mrf.mxu0
      %8607 = vmatprep.mubr.bf16.mxu0 0
      %8608 = vmatmul.mubr.bf16.gmra.mxu0 %v8046
      %v8609 = vpop.f32.mrf.mxu0
      %v8610 = vadd.f32 %v8221, %v8609
      %v8611 = vpop.f32.mrf.mxu0
      %v8612 = vpop.f32.mrf.mxu0
      %v8613 = vadd.f32 %v8226, %v8612
      %v8614 = vpop.f32.mrf.mxu0
      %8615 = vmatprep.mubr.bf16.mxu0 0
      %8616 = vmatmul.mubr.bf16.gmra.mxu0 %v8047
      %v8617 = vpop.f32.mrf.mxu0
      %v8618 = vadd.f32 %v8231, %v8617
      %v8619 = vpop.f32.mrf.mxu0
      %v8620 = vpop.f32.mrf.mxu0
      %v8621 = vadd.f32 %v8236, %v8620
      %v8622 = vpop.f32.mrf.mxu0
      %8623 = vmatprep.mubr.bf16.mxu0 0
      %8624 = vmatmul.mubr.bf16.gmra.mxu0 %v8048
      %v8625 = vpop.f32.mrf.mxu0
      %v8626 = vadd.f32 %v8241, %v8625
      %v8627 = vpop.f32.mrf.mxu0
      %v8628 = vpop.f32.mrf.mxu0
      %v8629 = vadd.f32 %v8246, %v8628
      %v8630 = vpop.f32.mrf.mxu0
      %8631 = vmatprep.mubr.bf16.mxu0 0
      %8632 = vmatmul.mubr.bf16.gmra.mxu0 %v8049
      %v8633 = vpop.f32.mrf.mxu0
      %v8634 = vadd.f32 %v8251, %v8633
      %v8635 = vpop.f32.mrf.mxu0
      %v8636 = vpop.f32.mrf.mxu0
      %v8637 = vadd.f32 %v8256, %v8636
      %v8638 = vpop.f32.mrf.mxu0
      %8639 = vmatprep.mubr.bf16.mxu0 0
      %8640 = vmatmul.mubr.bf16.gmra.mxu0 %v8050
      %v8641 = vpop.f32.mrf.mxu0
      %v8642 = vadd.f32 %v8261, %v8641
      %v8643 = vpop.f32.mrf.mxu0
      %v8644 = vpop.f32.mrf.mxu0
      %v8645 = vadd.f32 %v8266, %v8644
      %v8646 = vpop.f32.mrf.mxu0
      %8647 = vmatprep.mubr.bf16.mxu0 0
      %8648 = vmatmul.mubr.bf16.gmra.mxu0 %v8051
      %v8649 = vpop.f32.mrf.mxu0
      %v8650 = vadd.f32 %v8271, %v8649
      %v8651 = vpop.f32.mrf.mxu0
      %v8652 = vpop.f32.mrf.mxu0
      %v8653 = vadd.f32 %v8276, %v8652
      %v8654 = vpop.f32.mrf.mxu0
      %8655 = vmatprep.mubr.bf16.mxu0 0
      %8656 = vmatmul.mubr.bf16.gmra.mxu0 %v8052
      %v8657 = vpop.f32.mrf.mxu0
      %v8658 = vadd.f32 %v8281, %v8657
      %v8659 = vpop.f32.mrf.mxu0
      %v8660 = vpop.f32.mrf.mxu0
      %v8661 = vadd.f32 %v8286, %v8660
      %v8662 = vpop.f32.mrf.mxu0
      %8663 = vmatprep.mubr.bf16.mxu0 0
      %8664 = vmatmul.mubr.bf16.gmra.mxu0 %v8053
      %v8665 = vpop.f32.mrf.mxu0
      %v8666 = vadd.f32 %v8291, %v8665
      %v8667 = vpop.f32.mrf.mxu0
      %v8668 = vpop.f32.mrf.mxu0
      %v8669 = vadd.f32 %v8296, %v8668
      %v8670 = vpop.f32.mrf.mxu0
      %8671 = vmatprep.mubr.bf16.mxu0 0
      %8672 = vmatmul.mubr.bf16.gmra.mxu0 %v8054
      %v8673 = vpop.f32.mrf.mxu0
      %v8674 = vadd.f32 %v8301, %v8673
      %v8675 = vpop.f32.mrf.mxu0
      %v8676 = vpop.f32.mrf.mxu0
      %v8677 = vadd.f32 %v8306, %v8676
      %v8678 = vpop.f32.mrf.mxu0
      %8679 = vmatprep.mubr.bf16.mxu0 0
      %8680 = vmatmul.mubr.bf16.gmra.mxu0 %v8055
      %v8681 = vpop.f32.mrf.mxu0
      %v8682 = vadd.f32 %v8311, %v8681
      %v8683 = vpop.f32.mrf.mxu0
      %v8684 = vpop.f32.mrf.mxu0
      %v8685 = vadd.f32 %v8316, %v8684
      %v8686 = vpop.f32.mrf.mxu0
      %8687 = vmatprep.mubr.bf16.mxu0 0
      %8688 = vmatmul.mubr.bf16.gmra.mxu0 %v8056
      %v8689 = vpop.f32.mrf.mxu0
      %v8690 = vadd.f32 %v8321, %v8689
      %v8691 = vpop.f32.mrf.mxu0
      %v8692 = vpop.f32.mrf.mxu0
      %v8693 = vadd.f32 %v8326, %v8692
      %v8694 = vpop.f32.mrf.mxu0
      %8695 = vmatprep.mubr.bf16.mxu0 0
      %8696 = vmatmul.mubr.bf16.gmra.mxu0 %v8057
      %v8697 = vpop.f32.mrf.mxu0
      %v8698 = vadd.f32 %v8331, %v8697
      %v8699 = vpop.f32.mrf.mxu0
      %v8700 = vpop.f32.mrf.mxu0
      %v8701 = vadd.f32 %v8336, %v8700
      %v8702 = vpop.f32.mrf.mxu0
      %8703 = vmatprep.mubr.bf16.mxu0 0
      %8704 = vmatmul.mubr.bf16.gmra.mxu0 %v8058
      %v8705 = vpop.f32.mrf.mxu0
      %v8706 = vadd.f32 %v8341, %v8705
      %v8707 = vpop.f32.mrf.mxu0
      %v8708 = vpop.f32.mrf.mxu0
      %v8709 = vadd.f32 %v8346, %v8708
      %v8710 = vpop.f32.mrf.mxu0
      %8711 = vmatprep.mubr.bf16.mxu0 0
      %8712 = vmatmul.mubr.bf16.gmra.mxu0 %v8059
      %v8713 = vpop.f32.mrf.mxu0
      %v8714 = vadd.f32 %v8351, %v8713
      %v8715 = vpop.f32.mrf.mxu0
      %v8716 = vpop.f32.mrf.mxu0
      %v8717 = vadd.f32 %v8356, %v8716
      %v8718 = vpop.f32.mrf.mxu0
      %8719 = vmatprep.mubr.bf16.mxu0 0
      %8720 = vmatmul.mubr.bf16.gmra.mxu0 %v8060
      %v8721 = vpop.f32.mrf.mxu0
      %v8722 = vadd.f32 %v8361, %v8721
      %v8723 = vpop.f32.mrf.mxu0
      %v8724 = vpop.f32.mrf.mxu0
      %v8725 = vadd.f32 %v8366, %v8724
      %v8726 = vpop.f32.mrf.mxu0
      %8727 = vmatprep.mubr.bf16.mxu0 0
      %8728 = vmatmul.mubr.bf16.gmra.mxu0 %v8061
      %v8729 = vpop.f32.mrf.mxu0
      %v8730 = vadd.f32 %v8371, %v8729
      %v8731 = vpop.f32.mrf.mxu0
      %v8732 = vpop.f32.mrf.mxu0
      %v8733 = vadd.f32 %v8376, %v8732
      %v8734 = vpop.f32.mrf.mxu0
      %8735 = vmatprep.mubr.bf16.mxu0 0
      %8736 = vmatmul.mubr.bf16.gmra.mxu0 %v8062
      %v8737 = vpop.f32.mrf.mxu0
      %v8738 = vadd.f32 %v8381, %v8737
      %v8739 = vpop.f32.mrf.mxu0
      %v8740 = vpop.f32.mrf.mxu0
      %v8741 = vadd.f32 %v8386, %v8740
      %v8742 = vpop.f32.mrf.mxu0
      %8743 = vmatprep.mubr.bf16.mxu0 0
      %8744 = vmatmul.mubr.bf16.gmra.mxu0 %v8063
      %v8745 = vpop.f32.mrf.mxu0
      %v8746 = vadd.f32 %v8391, %v8745
      %v8747 = vpop.f32.mrf.mxu0
      %v8748 = vpop.f32.mrf.mxu0
      %v8749 = vadd.f32 %v8396, %v8748
      %v8750 = vpop.f32.mrf.mxu0
      %8751 = vmatprep.mubr.bf16.mxu0 0
      %8752 = vmatmul.mubr.bf16.gmra.mxu0 %v8064
      %v8753 = vpop.f32.mrf.mxu0
      %v8754 = vadd.f32 %v8401, %v8753
      %v8755 = vpop.f32.mrf.mxu0
      %v8756 = vpop.f32.mrf.mxu0
      %v8757 = vadd.f32 %v8406, %v8756
      %v8758 = vpop.f32.mrf.mxu0
      %8759 = vmatprep.mubr.bf16.mxu0 0
      %8760 = vmatmul.mubr.bf16.gmra.mxu0 %v8065
      %v8761 = vpop.f32.mrf.mxu0
      %v8762 = vadd.f32 %v8411, %v8761
      %v8763 = vpop.f32.mrf.mxu0
      %v8764 = vpop.f32.mrf.mxu0
      %v8765 = vadd.f32 %v8416, %v8764
      %v8766 = vpop.f32.mrf.mxu0
      %8767 = vmatprep.mubr.bf16.mxu0 0
      %8768 = vmatmul.mubr.bf16.gmra.mxu0 %v8066
      %v8769 = vpop.f32.mrf.mxu0
      %v8770 = vadd.f32 %v8421, %v8769
      %v8771 = vpop.f32.mrf.mxu0
      %v8772 = vpop.f32.mrf.mxu0
      %v8773 = vadd.f32 %v8426, %v8772
      %v8774 = vpop.f32.mrf.mxu0
      %8775 = vmatprep.mubr.bf16.mxu0 0
      %8776 = vmatmul.mubr.bf16.gmra.mxu0 %v8067
      %v8777 = vpop.f32.mrf.mxu0
      %v8778 = vadd.f32 %v8431, %v8777
      %v8779 = vpop.f32.mrf.mxu0
      %v8780 = vpop.f32.mrf.mxu0
      %v8781 = vadd.f32 %v8436, %v8780
      %v8782 = vpop.f32.mrf.mxu0
      %8783 = vmatprep.mubr.bf16.mxu0 0
      %8784 = vmatmul.mubr.bf16.gmra.mxu0 %v8068
      %v8785 = vpop.f32.mrf.mxu0
      %v8786 = vadd.f32 %v8441, %v8785
      %v8787 = vpop.f32.mrf.mxu0
      %v8788 = vpop.f32.mrf.mxu0
      %v8789 = vadd.f32 %v8446, %v8788
      %v8790 = vpop.f32.mrf.mxu0
      %8791 = vmatprep.mubr.bf16.mxu0 0
      %8792 = vmatmul.mubr.bf16.gmra.mxu0 %v8069
      %v8793 = vpop.f32.mrf.mxu0
      %v8794 = vadd.f32 %v8451, %v8793
      %v8795 = vpop.f32.mrf.mxu0
      %v8796 = vpop.f32.mrf.mxu0
      %v8797 = vadd.f32 %v8456, %v8796
      %v8798 = vpop.f32.mrf.mxu0
      %8799 = vmatprep.mubr.bf16.mxu0 0
      %8800 = vmatmul.mubr.bf16.gmra.mxu0 %v8070
      %v8801 = vpop.f32.mrf.mxu0
      %v8802 = vadd.f32 %v8461, %v8801
      %v8803 = vpop.f32.mrf.mxu0
      %v8804 = vpop.f32.mrf.mxu0
      %v8805 = vadd.f32 %v8466, %v8804
      %v8806 = vpop.f32.mrf.mxu0
      %8807 = vmatprep.mubr.bf16.mxu0 0
      %8808 = vmatmul.mubr.bf16.gmra.mxu0 %v8071
      %v8809 = vpop.f32.mrf.mxu0
      %v8810 = vadd.f32 %v8471, %v8809
      %v8811 = vpop.f32.mrf.mxu0
      %v8812 = vpop.f32.mrf.mxu0
      %v8813 = vadd.f32 %v8476, %v8812
      %v8814 = vpop.f32.mrf.mxu0
      %8815 = vdwg.mxu0
      %v8816 = vadd.f32 %v4929, %v8562
      %v8817 = vadd.f32 %v4930, %v8565
      %v8818 = vadd.f32 %v4931, %v8570
      %v8819 = vadd.f32 %v4932, %v8573
      %v8820 = vadd.f32 %v4933, %v8578
      %v8821 = vadd.f32 %v4934, %v8581
      %v8822 = vadd.f32 %v4935, %v8586
      %v8823 = vadd.f32 %v4936, %v8589
      %v8824 = vadd.f32 %v4937, %v8594
      %v8825 = vadd.f32 %v4938, %v8597
      %v8826 = vadd.f32 %v4939, %v8602
      %v8827 = vadd.f32 %v4940, %v8605
      %v8828 = vadd.f32 %v4941, %v8610
      %v8829 = vadd.f32 %v4942, %v8613
      %v8830 = vadd.f32 %v4943, %v8618
      %v8831 = vadd.f32 %v4944, %v8621
      %v8832 = vadd.f32 %v4945, %v8626
      %v8833 = vadd.f32 %v4946, %v8629
      %v8834 = vadd.f32 %v4947, %v8634
      %v8835 = vadd.f32 %v4948, %v8637
      %v8836 = vadd.f32 %v4949, %v8642
      %v8837 = vadd.f32 %v4950, %v8645
      %v8838 = vadd.f32 %v4951, %v8650
      %v8839 = vadd.f32 %v4952, %v8653
      %v8840 = vadd.f32 %v4953, %v8658
      %v8841 = vadd.f32 %v4954, %v8661
      %v8842 = vadd.f32 %v4955, %v8666
      %v8843 = vadd.f32 %v4956, %v8669
      %v8844 = vadd.f32 %v4957, %v8674
      %v8845 = vadd.f32 %v4958, %v8677
      %v8846 = vadd.f32 %v4959, %v8682
      %v8847 = vadd.f32 %v4960, %v8685
      %v8848 = vadd.f32 %v4961, %v8690
      %v8849 = vadd.f32 %v4962, %v8693
      %v8850 = vadd.f32 %v4963, %v8698
      %v8851 = vadd.f32 %v4964, %v8701
      %v8852 = vadd.f32 %v4965, %v8706
      %v8853 = vadd.f32 %v4966, %v8709
      %v8854 = vadd.f32 %v4967, %v8714
      %v8855 = vadd.f32 %v4968, %v8717
      %v8856 = vadd.f32 %v4969, %v8722
      %v8857 = vadd.f32 %v4970, %v8725
      %v8858 = vadd.f32 %v4971, %v8730
      %v8859 = vadd.f32 %v4972, %v8733
      %v8860 = vadd.f32 %v4973, %v8738
      %v8861 = vadd.f32 %v4974, %v8741
      %v8862 = vadd.f32 %v4975, %v8746
      %v8863 = vadd.f32 %v4976, %v8749
      %v8864 = vadd.f32 %v4977, %v8754
      %v8865 = vadd.f32 %v4978, %v8757
      %v8866 = vadd.f32 %v4979, %v8762
      %v8867 = vadd.f32 %v4980, %v8765
      %v8868 = vadd.f32 %v4981, %v8770
      %v8869 = vadd.f32 %v4982, %v8773
      %v8870 = vadd.f32 %v4983, %v8778
      %v8871 = vadd.f32 %v4984, %v8781
      %v8872 = vadd.f32 %v4985, %v8786
      %v8873 = vadd.f32 %v4986, %v8789
      %v8874 = vadd.f32 %v4987, %v8794
      %v8875 = vadd.f32 %v4988, %v8797
      %v8876 = vadd.f32 %v4989, %v8802
      %v8877 = vadd.f32 %v4990, %v8805
      %v8878 = vadd.f32 %v4991, %v8810
      %v8879 = vadd.f32 %v4992, %v8813
      %vm8880 = vcmask 7168
      %8881 = vst.msk [vmem:[%s334] sm:$0xff] %vm8880, %v8816
      %8882 = vst.msk [vmem:[%s334 + $0x8] sm:$0xff] %vm8880, %v8817
      %8883 = vst.msk [vmem:[%s334 + $0x10] sm:$0xff] %vm8880, %v8818
      %8884 = vst.msk [vmem:[%s334 + $0x18] sm:$0xff] %vm8880, %v8819
      %8885 = vst.msk [vmem:[%s334 + $0x20] sm:$0xff] %vm8880, %v8820
      %8886 = vst.msk [vmem:[%s334 + $0x28] sm:$0xff] %vm8880, %v8821
      %8887 = vst.msk [vmem:[%s334 + $0x30] sm:$0xff] %vm8880, %v8822
      %8888 = vst.msk [vmem:[%s334 + $0x38] sm:$0xff] %vm8880, %v8823
      %8889 = vst.msk [vmem:[%s334 + $0x40] sm:$0xff] %vm8880, %v8824
      %8890 = vst.msk [vmem:[%s334 + $0x48] sm:$0xff] %vm8880, %v8825
      %8891 = vst.msk [vmem:[%s334 + $0x50] sm:$0xff] %vm8880, %v8826
      %8892 = vst.msk [vmem:[%s334 + $0x58] sm:$0xff] %vm8880, %v8827
      %8893 = vst.msk [vmem:[%s334 + $0x60] sm:$0xff] %vm8880, %v8828
      %8894 = vst.msk [vmem:[%s334 + $0x68] sm:$0xff] %vm8880, %v8829
      %8895 = vst.msk [vmem:[%s334 + $0x70] sm:$0xff] %vm8880, %v8830
      %8896 = vst.msk [vmem:[%s334 + $0x78] sm:$0xff] %vm8880, %v8831
      %8897 = vst.msk [vmem:[%s334 + $0x80] sm:$0xff] %vm8880, %v8832
      %8898 = vst.msk [vmem:[%s334 + $0x88] sm:$0xff] %vm8880, %v8833
      %8899 = vst.msk [vmem:[%s334 + $0x90] sm:$0xff] %vm8880, %v8834
      %8900 = vst.msk [vmem:[%s334 + $0x98] sm:$0xff] %vm8880, %v8835
      %8901 = vst.msk [vmem:[%s334 + $0xa0] sm:$0xff] %vm8880, %v8836
      %8902 = vst.msk [vmem:[%s334 + $0xa8] sm:$0xff] %vm8880, %v8837
      %8903 = vst.msk [vmem:[%s334 + $0xb0] sm:$0xff] %vm8880, %v8838
      %8904 = vst.msk [vmem:[%s334 + $0xb8] sm:$0xff] %vm8880, %v8839
      %8905 = vst.msk [vmem:[%s334 + $0xc0] sm:$0xff] %vm8880, %v8840
      %8906 = vst.msk [vmem:[%s334 + $0xc8] sm:$0xff] %vm8880, %v8841
      %8907 = vst.msk [vmem:[%s334 + $0xd0] sm:$0xff] %vm8880, %v8842
      %8908 = vst.msk [vmem:[%s334 + $0xd8] sm:$0xff] %vm8880, %v8843
      %8909 = vst.msk [vmem:[%s334 + $0xe0] sm:$0xff] %vm8880, %v8844
      %8910 = vst.msk [vmem:[%s334 + $0xe8] sm:$0xff] %vm8880, %v8845
      %8911 = vst.msk [vmem:[%s334 + $0xf0] sm:$0xff] %vm8880, %v8846
      %8912 = vst.msk [vmem:[%s334 + $0xf8] sm:$0xff] %vm8880, %v8847
      %8913 = vst.msk [vmem:[%s334 + $0x100] sm:$0xff] %vm8880, %v8848
      %8914 = vst.msk [vmem:[%s334 + $0x108] sm:$0xff] %vm8880, %v8849
      %8915 = vst.msk [vmem:[%s334 + $0x110] sm:$0xff] %vm8880, %v8850
      %8916 = vst.msk [vmem:[%s334 + $0x118] sm:$0xff] %vm8880, %v8851
      %8917 = vst.msk [vmem:[%s334 + $0x120] sm:$0xff] %vm8880, %v8852
      %8918 = vst.msk [vmem:[%s334 + $0x128] sm:$0xff] %vm8880, %v8853
      %8919 = vst.msk [vmem:[%s334 + $0x130] sm:$0xff] %vm8880, %v8854
      %8920 = vst.msk [vmem:[%s334 + $0x138] sm:$0xff] %vm8880, %v8855
      %8921 = vst.msk [vmem:[%s334 + $0x140] sm:$0xff] %vm8880, %v8856
      %8922 = vst.msk [vmem:[%s334 + $0x148] sm:$0xff] %vm8880, %v8857
      %8923 = vst.msk [vmem:[%s334 + $0x150] sm:$0xff] %vm8880, %v8858
      %8924 = vst.msk [vmem:[%s334 + $0x158] sm:$0xff] %vm8880, %v8859
      %8925 = vst.msk [vmem:[%s334 + $0x160] sm:$0xff] %vm8880, %v8860
      %8926 = vst.msk [vmem:[%s334 + $0x168] sm:$0xff] %vm8880, %v8861
      %8927 = vst.msk [vmem:[%s334 + $0x170] sm:$0xff] %vm8880, %v8862
      %8928 = vst.msk [vmem:[%s334 + $0x178] sm:$0xff] %vm8880, %v8863
      %8929 = vst.msk [vmem:[%s334 + $0x180] sm:$0xff] %vm8880, %v8864
      %8930 = vst.msk [vmem:[%s334 + $0x188] sm:$0xff] %vm8880, %v8865
      %8931 = vst.msk [vmem:[%s334 + $0x190] sm:$0xff] %vm8880, %v8866
      %8932 = vst.msk [vmem:[%s334 + $0x198] sm:$0xff] %vm8880, %v8867
      %8933 = vst.msk [vmem:[%s334 + $0x1a0] sm:$0xff] %vm8880, %v8868
      %8934 = vst.msk [vmem:[%s334 + $0x1a8] sm:$0xff] %vm8880, %v8869
      %8935 = vst.msk [vmem:[%s334 + $0x1b0] sm:$0xff] %vm8880, %v8870
      %8936 = vst.msk [vmem:[%s334 + $0x1b8] sm:$0xff] %vm8880, %v8871
      %8937 = vst.msk [vmem:[%s334 + $0x1c0] sm:$0xff] %vm8880, %v8872
      %8938 = vst.msk [vmem:[%s334 + $0x1c8] sm:$0xff] %vm8880, %v8873
      %8939 = vst.msk [vmem:[%s334 + $0x1d0] sm:$0xff] %vm8880, %v8874
      %8940 = vst.msk [vmem:[%s334 + $0x1d8] sm:$0xff] %vm8880, %v8875
      %8941 = vst.msk [vmem:[%s334 + $0x1e0] sm:$0xff] %vm8880, %v8876
      %8942 = vst.msk [vmem:[%s334 + $0x1e8] sm:$0xff] %vm8880, %v8877
      %8943 = vst.msk [vmem:[%s334 + $0x1f0] sm:$0xff] %vm8880, %v8878
      %8944 = vst.msk [vmem:[%s334 + $0x1f8] sm:$0xff] %vm8880, %v8879
      %s8945 = smul.u32 64, %s20
      %p8946 = scmp.lt.s32.totalorder %s8945, 127
      %s8947 = scalar_select %p8946, %s8945, 127
      %s8948 = smul.addr %s8947, 8
      %s8949 = scalar_lea.vmem %s9, %s8948
      // Predicated region
      $region57: #{tpu_custom_call.1} parent=55 // pred_check
        %p8950 = pneg %p232
      $region58: #{tpu_custom_call.1} parent=55 // pred_check_branch
        %8952 = sbr.rel (%p8950) target = $region60
      $region59: #{tpu_custom_call.1} parent=55 // pred_region
        %s8953 = smul.u32 64, %s20
      $region60: #{tpu_custom_call.1} parent=55 // pred_fallthru
        _
    $region56: #{tpu_custom_call.1} parent=5 // pred_fallthru
      _
    %p8954 = scmp.le.s32.totalorder 2, %s15
    // Predicated region
    $region61: #{tpu_custom_call.1} parent=5 // pred_check
      %p8955 = pneg %p8954
    $region62: #{tpu_custom_call.1} parent=5 // pred_check_branch
      %8957 = sbr.rel (%p8955) target = $region64
    $region63: #{tpu_custom_call.1} parent=5 // pred_region
      %s8958 = ssub.s32 %s15, 2
      // Predicated region
      $region65: #{tpu_custom_call.1} parent=63 // pred_check
        %p8959 = pneg %p238
      $region66: #{tpu_custom_call.1} parent=63 // pred_check_branch
        %8961 = sbr.rel (%p8959) target = $region68
      $region67: #{tpu_custom_call.1} parent=63 // pred_region
        %s8962 = smul.u32 64, %s21
        %p8963 = scmp.lt.s32.totalorder %s8962, 127
        %s8964 = scalar_select %p8963, %s8962, 127
        %s8965 = smul.addr %s8964, 8
        %s8966 = scalar_lea.vmem %s9, %s8965
      $region68: #{tpu_custom_call.1} parent=63 // pred_fallthru
        _
    $region64: #{tpu_custom_call.1} parent=5 // pred_fallthru
      _
  $region6: #{tpu_custom_call.1} parent=0 // loop_footer
    %s19 = sadd.s32 1, %s15
  $region7: #{tpu_custom_call.1} parent=0 // loop_footer_branch
    %14 = sbr.rel target = $region3
  $region8: #{tpu_custom_call.1} parent=0 // loop_exit
    _

</llo_original>
